<compile_context>
chip_gen: v6e
topology: v6e:2x2x1
jax: 0.10.0
libtpu: 0.0.40
codegen_flags: <defaults>
</compile_context>

<pallas_src>
import functools
import random

import jax
import jax.numpy as jnp
from jax.experimental import pallas as pl
from jax.experimental.pallas import tpu as pltpu

# ----------------------- config (small shapes, consistent with module) -------
B = 1                 # WSI-style batch of 1 (matches survival_labels[0] = stage_labels)
N_NODES = 16          # graph nodes
INPUT_DIM = 128       # node feature dim (torch default 512; small here)
EMBED_DIM = 64        # args.embed_dim
NUM_HEADS = 8
HEAD_DIM = EMBED_DIM // NUM_HEADS
PHASE1_NODE_NUM = 8   # number of task prototypes
PHASE2_NODE_NUM = 4   # pooled / sampled node count
SUBTYPE_CLASS = 3
STAGE_CLASS = 2
GCN_DEPTH = 2         # args.GCN_depth
VIT_DEPTH = 1         # args.subtypeT_depth == args.stageT_depth
MLP_RATIO = 4
LN_EPS = 1e-6
VEC_W = max(MLP_RATIO * EMBED_DIM, 3 * EMBED_DIM, 256)   # 256-lane vec slab


# ----------------------- packed-parameter slab layouts -----------------------
def _align128(n):
    return ((n + 127) // 128) * 128


def _build_w64_layout():
    """All matmul weights whose input dim is EMBED_DIM, packed along lanes
    (each segment starts at a 128-lane-aligned offset)."""
    entries = []
    for i in range(GCN_DEPTH - 1):
        entries.append((f'gcn{i}_w', EMBED_DIM))
    entries += [('mincut_w', EMBED_DIM), ('pool_w', PHASE2_NODE_NUM)]
    for t in ('sub', 'stage'):
        entries += [(f'{t}_kv_w', 2 * EMBED_DIM),
                    (f'{t}_q_w', EMBED_DIM),
                    (f'{t}_proj_w', EMBED_DIM)]          # att proj with att_W folded in
    for t, ncls in (('sub', SUBTYPE_CLASS), ('stage', STAGE_CLASS)):
        for d in range(VIT_DEPTH):
            entries += [(f'{t}_vit{d}_qkv_w', 3 * EMBED_DIM),
                        (f'{t}_vit{d}_proj_w', EMBED_DIM),
                        (f'{t}_vit{d}_fc1_w', MLP_RATIO * EMBED_DIM)]
        entries.append((f'{t}_head_w', ncls))
    layout, off = {}, 0
    for name, w in entries:
        layout[name] = (off, w)
        off += _align128(w)
    return layout, off


def _build_w256_layout():
    """ViT MLP fc2 weights (input dim MLP_RATIO*EMBED_DIM), packed along lanes."""
    layout, off = {}, 0
    for t in ('sub', 'stage'):
        for d in range(VIT_DEPTH):
            layout[f'{t}_vit{d}_fc2_w'] = (off, EMBED_DIM)
            off += _align128(EMBED_DIM)
    return layout, off


def _build_vec_layout():
    """All 1-D biases / LN params / prototypes / cls tokens packed as rows of a
    single (rows, VEC_W) slab: one DMA instead of ~40 padded (1,X) tiles."""
    E = EMBED_DIM
    entries = [('conv1_b', 1, E)]
    for i in range(GCN_DEPTH - 1):
        entries.append((f'gcn{i}_b', 1, E))
    entries += [('mincut_b', 1, E), ('pool_b', 1, PHASE2_NODE_NUM)]
    for t in ('sub', 'stage'):
        entries += [(f'{t}_proto', PHASE1_NODE_NUM, E),
                    (f'{t}_kv_b', 1, 2 * E),
                    (f'{t}_q_b', 1, E),
                    (f'{t}_proj_b', 1, E),               # folded proj bias
                    (f'{t}_cls', 1, E)]
    for n in ('tn1', 'tn2', 'tn3', 'tn4'):
        entries += [(f'{n}_g', 1, E), (f'{n}_b', 1, E)]
    for t, ncls in (('sub', SUBTYPE_CLASS), ('stage', STAGE_CLASS)):
        for d in range(VIT_DEPTH):
            entries += [(f'{t}_vit{d}_ln1_g', 1, E), (f'{t}_vit{d}_ln1_b', 1, E),
                        (f'{t}_vit{d}_qkv_b', 1, 3 * E),
                        (f'{t}_vit{d}_proj_b', 1, E),
                        (f'{t}_vit{d}_ln2_g', 1, E), (f'{t}_vit{d}_ln2_b', 1, E),
                        (f'{t}_vit{d}_fc1_b', 1, MLP_RATIO * E),
                        (f'{t}_vit{d}_fc2_b', 1, E)]
        entries += [(f'{t}_norm_g', 1, E), (f'{t}_norm_b', 1, E),
                    (f'{t}_head_b', 1, ncls)]
    layout, row = {}, 0
    for name, r, w in entries:
        layout[name] = (row, r, w)
        row += r
    return layout, row


W64_LAYOUT, W64_WIDTH = _build_w64_layout()
W256_LAYOUT, W256_WIDTH = _build_w256_layout()
VEC_LAYOUT, VEC_ROWS = _build_vec_layout()


# ----------------------- in-kernel helper functions (trace-time) -------------
def _ln(x, g, b):
    mu = jnp.mean(x, axis=-1, keepdims=True)
    var = jnp.mean((x - mu) ** 2, axis=-1, keepdims=True)
    return (x - mu) * jax.lax.rsqrt(var + LN_EPS) * g + b


def _sum_all(x):
    # full 2-D reduction as two single-axis reduces (lane reduce, then sublane)
    return jnp.sum(jnp.sum(x, axis=-1, keepdims=True), axis=-2, keepdims=True)


def _gcn_layer(x, a, m, w, b):
    # y = (A @ x + x) @ W + b ; row-wise L2 normalize ; zero masked-out nodes.
    # TODO(synk): GCNBlock's masked BatchNorm and dropout are identity (eval mode).
    y = jnp.dot(a, x, preferred_element_type=jnp.float32) + x
    y = jnp.dot(y, w, preferred_element_type=jnp.float32) + b
    nrm = jnp.sqrt(jnp.sum(y * y, axis=-1, keepdims=True))
    y = y / jnp.maximum(nrm, 1e-12)
    return y * m


def _mha(q, k, v, proj_w, proj_b, scr_ref):
    """Multi-head attention via static lane slices.  Per-head outputs are
    written into lane slices of a VMEM scratch so the output projection is a
    single full-contraction (N, C) @ (C, C) matmul (instead of 8 k=8 matmuls).
    Softmax uses exact division for fidelity with the torch reference."""
    n = q.shape[0]
    scale = HEAD_DIM ** -0.5
    for h in range(NUM_HEADS):
        lo = h * HEAD_DIM
        qh = q[:, lo:lo + HEAD_DIM]
        kh = k[:, lo:lo + HEAD_DIM]
        vh = v[:, lo:lo + HEAD_DIM]
        s = jax.lax.dot_general(qh, kh, (((1,), (1,)), ((), ())),
                                preferred_element_type=jnp.float32) * scale
        s = s - jnp.max(s, axis=-1, keepdims=True)
        p = jnp.exp(s)
        p = p / jnp.sum(p, axis=-1, keepdims=True)
        scr_ref[0:n, lo:lo + HEAD_DIM] = jnp.dot(p, vh,
                                                 preferred_element_type=jnp.float32)
    o = scr_ref[0:n, :]
    return jnp.dot(o, proj_w, preferred_element_type=jnp.float32) + proj_b


# ----------------------------- fused forward kernel --------------------------
def make_fused_kernel(idx_list):
    E = EMBED_DIM
    K = PHASE2_NODE_NUM

    def kernel(x_ref, adj_ref, mask_ref, conv1w_ref, w64_ref, w256_ref, vec_ref,
               sub_logits_ref, stage_logits_ref, ml_ref, ol_ref, scr_ref):
        def w64(name):
            off, w = W64_LAYOUT[name]
            return w64_ref[:, off:off + w]

        def w256(name):
            off, w = W256_LAYOUT[name]
            return w256_ref[:, off:off + w]

        def vec(name):
            r, rows, w = VEC_LAYOUT[name]
            return vec_ref[r:r + rows, 0:w]

        a = adj_ref[...]
        m = mask_ref[...]

        # ---------------- GCN stack: X = mask * X ; conv1 ; extra GCN layers --
        x = x_ref[...] * m                               # X = mask.unsqueeze(2) * X
        x = _gcn_layer(x, a, m, conv1w_ref[...], vec('conv1_b'))
        for i in range(GCN_DEPTH - 1):
            x = _gcn_layer(x, a, m, w64(f'gcn{i}_w'), vec(f'gcn{i}_b'))

        # ---------------- two prototype cross-attention task branches --------
        def task_branch(t, n2, n1):
            # rearrange 'b n (qkv h d) -> qkv b h n d', qkv=2, h=8: channel
            # layout is [qkv, head, d] -> k = first E lanes, v = last E lanes.
            proto = vec(f'{t}_proto')                                   # (P1, E)
            kv = jnp.dot(proto, w64(f'{t}_kv_w'),
                         preferred_element_type=jnp.float32) + vec(f'{t}_kv_b')
            k = kv[:, :E]
            v = kv[:, E:]
            # timm Attention with external k/v: only q is taken from x
            # (q weights pre-sliced at pack time).
            q = jnp.dot(x, w64(f'{t}_q_w'),
                        preferred_element_type=jnp.float32) + vec(f'{t}_q_b')
            # attention projection already has att_W folded in (pack time).
            att = _mha(q, k, v, w64(f'{t}_proj_w'), vec(f'{t}_proj_b'), scr_ref)
            y = x + att
            y = _ln(y, vec(f'{n2}_g'), vec(f'{n2}_b'))                  # task_norm_2 / _4
            y = _ln(y + jnp.maximum(y, 0.0),
                    vec(f'{n1}_g'), vec(f'{n1}_b'))                     # task_norm_1 / _3
            return y

        x_sub = task_branch('sub', 'tn2', 'tn1')
        x_stage = task_branch('stage', 'tn4', 'tn3')

        # ---------------- mincut pooling on the stage branch -----------------
        xg = _gcn_layer(x_stage, a, m, w64('mincut_w'), vec('mincut_b'))
        sl = jnp.dot(xg, w64('pool_w'),
                     preferred_element_type=jnp.float32) + vec('pool_b')
        sl = sl - jnp.max(sl, axis=-1, keepdims=True)
        s = jnp.exp(sl)
        s = s / jnp.sum(s, axis=-1, keepdims=True)                      # assignment softmax
        xm = x_stage * m
        s = s * m
        st = s.T                                                        # (K, N)
        pooled = jnp.dot(st, xm, preferred_element_type=jnp.float32)    # S^T X   (K, E)
        sa = jnp.dot(st, a, preferred_element_type=jnp.float32)         # S^T A   (K, N)
        oadj = jnp.dot(sa, s, preferred_element_type=jnp.float32)       # S^T A S (K, K)
        rows_i = jax.lax.broadcasted_iota(jnp.int32, (K, K), 0)
        cols_i = jax.lax.broadcasted_iota(jnp.int32, (K, K), 1)
        eye = (rows_i == cols_i).astype(jnp.float32)                    # in-kernel eye(K)
        num = _sum_all(oadj * eye)                                      # trace(S^T A S)
        d_col = jnp.sum(a, axis=-1, keepdims=True)                      # node degrees (N, 1)
        den = _sum_all(d_col * s * s)                                   # trace(S^T D S)
        ml = -(num / den)                                               # mincut loss (1, 1)
        ss = jnp.dot(st, s, preferred_element_type=jnp.float32)         # S^T S   (K, K)
        ss_norm = jnp.sqrt(_sum_all(ss * ss))
        diff = ss / ss_norm - eye * (1.0 / (float(K) ** 0.5))
        ol = jnp.sqrt(_sum_all(diff * diff))                            # ortho loss (1, 1)
        ml_ref[...] = ml
        ol_ref[...] = ol
        # TODO(synk): normalized coarsened adjacency is unused downstream; not computed.

        # ---------------- ViT encoders (pre-norm, standard block) ------------
        # TODO(synk): VisionTransformer source not provided; implemented as a
        # standard pre-norm ViT encoder (no patch/pos embed, dropout off)
        # returning head(cls).
        def vit(t, tokens, logits_ref):
            xv = tokens
            for d in range(VIT_DEPTH):
                y = _ln(xv, vec(f'{t}_vit{d}_ln1_g'), vec(f'{t}_vit{d}_ln1_b'))
                qkv = jnp.dot(y, w64(f'{t}_vit{d}_qkv_w'),
                              preferred_element_type=jnp.float32) + vec(f'{t}_vit{d}_qkv_b')
                q = qkv[:, :E]
                k = qkv[:, E:2 * E]
                v = qkv[:, 2 * E:3 * E]
                xv = xv + _mha(q, k, v, w64(f'{t}_vit{d}_proj_w'),
                               vec(f'{t}_vit{d}_proj_b'), scr_ref)
                y = _ln(xv, vec(f'{t}_vit{d}_ln2_g'), vec(f'{t}_vit{d}_ln2_b'))
                # TODO(synk): torch GELU default is exact erf; tanh approximation used here.
                h = jax.nn.gelu(jnp.dot(y, w64(f'{t}_vit{d}_fc1_w'),
                                        preferred_element_type=jnp.float32)
                                + vec(f'{t}_vit{d}_fc1_b'), approximate=True)
                xv = xv + jnp.dot(h, w256(f'{t}_vit{d}_fc2_w'),
                                  preferred_element_type=jnp.float32) + vec(f'{t}_vit{d}_fc2_b')
            xv = _ln(xv, vec(f'{t}_norm_g'), vec(f'{t}_norm_b'))
            cls = xv[0:1, :]                                            # cls token (1, E)
            logits_ref[...] = jnp.dot(cls, w64(f'{t}_head_w'),
                                      preferred_element_type=jnp.float32) + vec(f'{t}_head_b')

        # subtype tokens: cls + static idx_list gather (torch.index_select),
        # assembled in VMEM scratch (no HBM round-trip, no concat op).
        scr_ref[0:1, :] = vec('sub_cls')
        for j, i in enumerate(idx_list):
            scr_ref[1 + j:2 + j, :] = x_sub[i:i + 1, :]
        sub_tokens = scr_ref[0:1 + K, :]
        vit('sub', sub_tokens, sub_logits_ref)

        # stage tokens: cls + mincut-pooled nodes.
        scr_ref[0:1, :] = vec('stage_cls')
        scr_ref[1:1 + K, :] = pooled
        stage_tokens = scr_ref[0:1 + K, :]
        vit('stage', stage_tokens, stage_logits_ref)

    return kernel


# ----------------------------- kernel wrapper ---------------------------------
def mulgt_fused(node_feat, adj, mask, packed, idx_list):
    """One fused pallas_call per batch element (B=1 here).
    TODO(synk): for B > 1 switch to grid=(B,) + BlockSpec index_maps (batch axis
    marked "parallel") instead of per-batch launches."""
    kernel = make_fused_kernel(idx_list)
    Bx = node_feat.shape[0]
    sub_logits, stage_logits, mls, ols = [], [], [], []
    for bi in range(Bx):
        sl, stl, ml, ol = pl.pallas_call(
            kernel,
            out_shape=(jax.ShapeDtypeStruct((1, SUBTYPE_CLASS), jnp.float32),
                       jax.ShapeDtypeStruct((1, STAGE_CLASS), jnp.float32),
                       jax.ShapeDtypeStruct((1, 1), jnp.float32),
                       jax.ShapeDtypeStruct((1, 1), jnp.float32)),
            scratch_shapes=[pltpu.VMEM((N_NODES, EMBED_DIM), jnp.float32)],
        )(node_feat[bi], adj[bi], mask[bi].reshape(-1, 1),
          packed['conv1_w'], packed['w64'], packed['w256'], packed['vec'])
        sub_logits.append(sl[0])
        stage_logits.append(stl[0])
        mls.append(ml[0, 0])
        ols.append(ol[0, 0])
    return (jnp.stack(sub_logits, axis=0), jnp.stack(stage_logits, axis=0),
            jnp.mean(jnp.stack(mls)), jnp.mean(jnp.stack(ols)))


def cross_entropy(logits, labels):
    logp = jax.nn.log_softmax(logits, axis=-1)
    return -jnp.mean(jnp.take_along_axis(logp, labels[:, None], axis=-1))


# ------------------------------ parameters ------------------------------------
def init_params(key):
    keys = iter(jax.random.split(key, 256))

    def w(shape, scale=0.02):
        return scale * jax.random.normal(next(keys), shape, dtype=jnp.float32)

    def zeros(shape):
        return jnp.zeros(shape, jnp.float32)

    def ones(shape):
        return jnp.ones(shape, jnp.float32)

    def attn_params():
        return {'qkv_w': w((EMBED_DIM, 3 * EMBED_DIM)),
                'qkv_b': zeros((3 * EMBED_DIM,)),     # qkv_bias=False
                'proj_w': w((EMBED_DIM, EMBED_DIM)),
                'proj_b': zeros((EMBED_DIM,))}

    def vit_params(num_classes, depth):
        blocks = []
        for _ in range(depth):
            blocks.append({'ln1_g': ones((EMBED_DIM,)), 'ln1_b': zeros((EMBED_DIM,)),
                           'attn': attn_params(),
                           'ln2_g': ones((EMBED_DIM,)), 'ln2_b': zeros((EMBED_DIM,)),
                           'fc1_w': w((EMBED_DIM, MLP_RATIO * EMBED_DIM)),
                           'fc1_b': zeros((MLP_RATIO * EMBED_DIM,)),
                           'fc2_w': w((MLP_RATIO * EMBED_DIM, EMBED_DIM)),
                           'fc2_b': zeros((EMBED_DIM,))})
        return {'blocks': blocks,
                'norm_g': ones((EMBED_DIM,)), 'norm_b': zeros((EMBED_DIM,)),
                'head_w': w((EMBED_DIM, num_classes)),
                'head_b': zeros((num_classes,))}

    params = {
        'subtype_cls_token': zeros((1, 1, EMBED_DIM)),   # torch.zeros in module
        'stage_cls_token': zeros((1, 1, EMBED_DIM)),
        'subtype_proto': w((1, PHASE1_NODE_NUM, EMBED_DIM), 0.1),  # xavier stand-in
        'stage_proto': w((1, PHASE1_NODE_NUM, EMBED_DIM), 0.1),
        'conv1': {'w': w((INPUT_DIM, EMBED_DIM)), 'b': zeros((EMBED_DIM,))},
        'gcns': [{'w': w((EMBED_DIM, EMBED_DIM)), 'b': zeros((EMBED_DIM,))}
                 for _ in range(GCN_DEPTH - 1)],
        'gcn_mincut': {'w': w((EMBED_DIM, EMBED_DIM)), 'b': zeros((EMBED_DIM,))},
        'separate_stage_pool': {'w': w((EMBED_DIM, PHASE2_NODE_NUM)),
                                'b': zeros((PHASE2_NODE_NUM,))},
        'subtype_qkv': {'w': w((EMBED_DIM, 2 * EMBED_DIM)), 'b': zeros((2 * EMBED_DIM,))},
        'stage_qkv': {'w': w((EMBED_DIM, 2 * EMBED_DIM)), 'b': zeros((2 * EMBED_DIM,))},
        'subtype_att': attn_params(),
        'stage_att': attn_params(),
        'subtype_att_W': {'w': w((EMBED_DIM, EMBED_DIM)), 'b': zeros((EMBED_DIM,))},
        'stage_att_W': {'w': w((EMBED_DIM, EMBED_DIM)), 'b': zeros((EMBED_DIM,))},
        'task_norm_1': (ones((EMBED_DIM,)), zeros((EMBED_DIM,))),
        'task_norm_2': (ones((EMBED_DIM,)), zeros((EMBED_DIM,))),
        'task_norm_3': (ones((EMBED_DIM,)), zeros((EMBED_DIM,))),
        'task_norm_4': (ones((EMBED_DIM,)), zeros((EMBED_DIM,))),
        'subtype_vit': vit_params(SUBTYPE_CLASS, VIT_DEPTH),
        'stage_vit': vit_params(STAGE_CLASS, VIT_DEPTH),
    }
    return params


def pack_params(params):
    """One-time packing of all parameters into 4 slabs (and the att_W fold)."""
    w64 = jnp.zeros((EMBED_DIM, W64_WIDTH), jnp.float32)
    w256 = jnp.zeros((MLP_RATIO * EMBED_DIM, W256_WIDTH), jnp.float32)
    vec = jnp.zeros((VEC_ROWS, VEC_W), jnp.float32)

    def put64(buf, name, mat):
        off, w = W64_LAYOUT[name]
        return buf.at[:, off:off + w].set(mat)

    def put256(buf, name, mat):
        off, w = W256_LAYOUT[name]
        return buf.at[:, off:off + w].set(mat)

    def putv(buf, name, arr):
        r, rows, w = VEC_LAYOUT[name]
        return buf.at[r:r + rows, :w].set(jnp.reshape(arr, (rows, w)))

    vec = putv(vec, 'conv1_b', params['conv1']['b'])
    for i, lp in enumerate(params['gcns']):
        w64 = put64(w64, f'gcn{i}_w', lp['w'])
        vec = putv(vec, f'gcn{i}_b', lp['b'])
    w64 = put64(w64, 'mincut_w', params['gcn_mincut']['w'])
    vec = putv(vec, 'mincut_b', params['gcn_mincut']['b'])
    w64 = put64(w64, 'pool_w', params['separate_stage_pool']['w'])
    vec = putv(vec, 'pool_b', params['separate_stage_pool']['b'])

    for t, qkv_p, att_p, attw_p, proto, cls in (
            ('sub', params['subtype_qkv'], params['subtype_att'],
             params['subtype_att_W'], params['subtype_proto'],
             params['subtype_cls_token']),
            ('stage', params['stage_qkv'], params['stage_att'],
             params['stage_att_W'], params['stage_proto'],
             params['stage_cls_token'])):
        w64 = put64(w64, f'{t}_kv_w', qkv_p['w'])
        vec = putv(vec, f'{t}_kv_b', qkv_p['b'])
        # only the q third of the attention qkv is used (k/v come from prototypes)
        w64 = put64(w64, f'{t}_q_w', att_p['qkv_w'][:, :EMBED_DIM])
        vec = putv(vec, f'{t}_q_b', att_p['qkv_b'][:EMBED_DIM])
        # fold att_W into the attention output projection:
        # (o @ P + pb) @ W + wb == o @ (P @ W) + (pb @ W + wb)
        w64 = put64(w64, f'{t}_proj_w', att_p['proj_w'] @ attw_p['w'])
        vec = putv(vec, f'{t}_proj_b', att_p['proj_b'] @ attw_p['w'] + attw_p['b'])
        vec = putv(vec, f'{t}_proto', proto[0])
        vec = putv(vec, f'{t}_cls', cls[0, 0])

    for i, name in enumerate(('tn1', 'tn2', 'tn3', 'tn4')):
        g, b = params[f'task_norm_{i + 1}']
        vec = putv(vec, f'{name}_g', g)
        vec = putv(vec, f'{name}_b', b)

    for t, vit in (('sub', params['subtype_vit']), ('stage', params['stage_vit'])):
        for d, blk in enumerate(vit['blocks']):
            vec = putv(vec, f'{t}_vit{d}_ln1_g', blk['ln1_g'])
            vec = putv(vec, f'{t}_vit{d}_ln1_b', blk['ln1_b'])
            w64 = put64(w64, f'{t}_vit{d}_qkv_w', blk['attn']['qkv_w'])
            vec = putv(vec, f'{t}_vit{d}_qkv_b', blk['attn']['qkv_b'])
            w64 = put64(w64, f'{t}_vit{d}_proj_w', blk['attn']['proj_w'])
            vec = putv(vec, f'{t}_vit{d}_proj_b', blk['attn']['proj_b'])
            vec = putv(vec, f'{t}_vit{d}_ln2_g', blk['ln2_g'])
            vec = putv(vec, f'{t}_vit{d}_ln2_b', blk['ln2_b'])
            w64 = put64(w64, f'{t}_vit{d}_fc1_w', blk['fc1_w'])
            vec = putv(vec, f'{t}_vit{d}_fc1_b', blk['fc1_b'])
            w256 = put256(w256, f'{t}_vit{d}_fc2_w', blk['fc2_w'])
            vec = putv(vec, f'{t}_vit{d}_fc2_b', blk['fc2_b'])
        vec = putv(vec, f'{t}_norm_g', vit['norm_g'])
        vec = putv(vec, f'{t}_norm_b', vit['norm_b'])
        w64 = put64(w64, f'{t}_head_w', vit['head_w'])
        vec = putv(vec, f'{t}_head_b', vit['head_b'])

    return {'conv1_w': params['conv1']['w'], 'w64': w64, 'w256': w256, 'vec': vec}


# ------------------------------ MulGT forward ----------------------------------
@functools.partial(jax.jit, static_argnames=("stage_labels", "idx_list"))
def mulgt_forward(packed, node_feat, subtype_labels, adj, mask, stage_labels, idx_list):
    subtype_out, stage_out, mc1, o1 = mulgt_fused(node_feat, adj, mask, packed, idx_list)

    subtype_loss = cross_entropy(subtype_out, subtype_labels)
    reg_loss = mc1 + o1
    stage_label = jnp.asarray([stage_labels], dtype=jnp.int32)
    stage_loss = cross_entropy(stage_out, stage_label)

    subtype_prob = subtype_out
    subtype_pred = jnp.argmax(subtype_out, axis=1)
    prob_stage = stage_out
    preds_stage = jnp.argmax(stage_out, axis=1)
    return (subtype_prob, subtype_pred, subtype_labels, prob_stage, preds_stage,
            stage_label, stage_loss, subtype_loss, reg_loss)


# ----------------------------------- main --------------------------------------
if __name__ == "__main__":
    # deterministic replacement of `random.sample(range(0, N-1), k=phase2_node_num)`
    # (range(0, N-1) matches the torch reference exactly).
    random.seed(0)
    idx_list = random.sample(range(0, N_NODES - 1), k=PHASE2_NODE_NUM)

    key = jax.random.PRNGKey(0)
    kx, ka, kp = jax.random.split(key, 3)
    node_feat = jax.random.normal(kx, (B, N_NODES, INPUT_DIM), dtype=jnp.float32)
    a_rand = jax.random.uniform(ka, (B, N_NODES, N_NODES), dtype=jnp.float32)
    adj = 0.5 * (a_rand + jnp.swapaxes(a_rand, 1, 2))           # symmetric adjacency
    mask = jnp.ones((B, N_NODES), dtype=jnp.float32)
    subtype_labels = jnp.array([1], dtype=jnp.int32)
    stage_labels = 1

    params = init_params(kp)
    packed = pack_params(params)   # one-time slab packing + att_W fold (outside jit)
    outputs = mulgt_forward(packed, node_feat, subtype_labels, adj, mask,
                            stage_labels=stage_labels, idx_list=tuple(idx_list))
    jax.block_until_ready(outputs)
    print("KERNEL_OK")
</pallas_src>

<mosaic_0001>
module attributes {stable_mosaic.version = 11 : i64} {
  func.func @kernel(%arg0: memref<16x128xf32, #tpu.memory_space<vmem>>, %arg1: memref<16x16xf32, #tpu.memory_space<vmem>>, %arg2: memref<16x1xf32, #tpu.memory_space<vmem>>, %arg3: memref<128x64xf32, #tpu.memory_space<vmem>>, %arg4: memref<64x2688xf32, #tpu.memory_space<vmem>>, %arg5: memref<256x256xf32, #tpu.memory_space<vmem>>, %arg6: memref<58x256xf32, #tpu.memory_space<vmem>>, %arg7: memref<1x3xf32, #tpu.memory_space<vmem>>, %arg8: memref<1x2xf32, #tpu.memory_space<vmem>>, %arg9: memref<1x1xf32, #tpu.memory_space<vmem>>, %arg10: memref<1x1xf32, #tpu.memory_space<vmem>>, %arg11: memref<16x64xf32, #tpu.memory_space<vmem>>) attributes {dimension_semantics = [], scalar_prefetch = 0 : i64, scratch_operands = 1 : i64, tpu.core_type = #tpu.core_type<tc>} {
    %c0 = arith.constant 0 : index
    %c0_0 = arith.constant 0 : index
    %0 = vector.load %arg1[%c0, %c0_0] : memref<16x16xf32, #tpu.memory_space<vmem>>, vector<16x16xf32>
    %c0_1 = arith.constant 0 : index
    %c0_2 = arith.constant 0 : index
    %1 = vector.load %arg2[%c0_1, %c0_2] : memref<16x1xf32, #tpu.memory_space<vmem>>, vector<16x1xf32>
    %c0_3 = arith.constant 0 : index
    %c0_4 = arith.constant 0 : index
    %2 = vector.load %arg0[%c0_3, %c0_4] : memref<16x128xf32, #tpu.memory_space<vmem>>, vector<16x128xf32>
    %3 = vector.broadcast %1 : vector<16x1xf32> to vector<16x128xf32>
    %4 = arith.mulf %2, %3 : vector<16x128xf32>
    %c0_5 = arith.constant 0 : index
    %c0_6 = arith.constant 0 : index
    %5 = vector.load %arg3[%c0_5, %c0_6] : memref<128x64xf32, #tpu.memory_space<vmem>>, vector<128x64xf32>
    %c0_7 = arith.constant 0 : index
    %c0_8 = arith.constant 0 : index
    %6 = vector.load %arg6[%c0_7, %c0_8] : memref<58x256xf32, #tpu.memory_space<vmem>>, vector<1x64xf32>
    %cst = arith.constant dense<0.000000e+00> : vector<16x128xf32>
    %7 = tpu.matmul %0, %4, %cst {dimension_numbers = #tpu.dot_dimension_numbers<[1], [0], [0], [1], [0, 0, 1, 1], [], []>} : vector<16x16xf32>, vector<16x128xf32>, vector<16x128xf32> -> vector<16x128xf32>
    %8 = arith.addf %7, %4 : vector<16x128xf32>
    %cst_9 = arith.constant dense<0.000000e+00> : vector<16x64xf32>
    %9 = tpu.matmul %8, %5, %cst_9 {dimension_numbers = #tpu.dot_dimension_numbers<[1], [0], [0], [1], [0, 0, 1, 1], [], []>} : vector<16x128xf32>, vector<128x64xf32>, vector<16x64xf32> -> vector<16x64xf32>
    %10 = vector.broadcast %6 : vector<1x64xf32> to vector<16x64xf32>
    %11 = arith.addf %9, %10 : vector<16x64xf32>
    %12 = arith.mulf %11, %11 : vector<16x64xf32>
    %cst_10 = arith.constant dense<0.000000e+00> : vector<16xf32>
    %13 = vector.multi_reduction <add>, %12, %cst_10 [1] : vector<16x64xf32> to vector<16xf32>
    %14 = vector.shape_cast %13 : vector<16xf32> to vector<16x1xf32>
    %15 = math.sqrt %14 : vector<16x1xf32>
    %cst_11 = arith.constant 9.99999996E-13 : f32
    %16 = vector.broadcast %cst_11 : f32 to vector<16x1xf32>
    %17 = arith.maximumf %15, %16 : vector<16x1xf32>
    %18 = vector.broadcast %17 : vector<16x1xf32> to vector<16x64xf32>
    %19 = arith.divf %11, %18 : vector<16x64xf32>
    %20 = vector.broadcast %1 : vector<16x1xf32> to vector<16x64xf32>
    %21 = arith.mulf %19, %20 : vector<16x64xf32>
    %c0_12 = arith.constant 0 : index
    %c0_13 = arith.constant 0 : index
    %22 = vector.load %arg4[%c0_12, %c0_13] : memref<64x2688xf32, #tpu.memory_space<vmem>>, vector<64x64xf32>
    %c1 = arith.constant 1 : index
    %c0_14 = arith.constant 0 : index
    %23 = vector.load %arg6[%c1, %c0_14] : memref<58x256xf32, #tpu.memory_space<vmem>>, vector<1x64xf32>
    %cst_15 = arith.constant dense<0.000000e+00> : vector<16x64xf32>
    %24 = tpu.matmul %0, %21, %cst_15 {dimension_numbers = #tpu.dot_dimension_numbers<[1], [0], [0], [1], [0, 0, 1, 1], [], []>} : vector<16x16xf32>, vector<16x64xf32>, vector<16x64xf32> -> vector<16x64xf32>
    %25 = arith.addf %24, %21 : vector<16x64xf32>
    %cst_16 = arith.constant dense<0.000000e+00> : vector<16x64xf32>
    %26 = tpu.matmul %25, %22, %cst_16 {dimension_numbers = #tpu.dot_dimension_numbers<[1], [0], [0], [1], [0, 0, 1, 1], [], []>} : vector<16x64xf32>, vector<64x64xf32>, vector<16x64xf32> -> vector<16x64xf32>
    %27 = vector.broadcast %23 : vector<1x64xf32> to vector<16x64xf32>
    %28 = arith.addf %26, %27 : vector<16x64xf32>
    %29 = arith.mulf %28, %28 : vector<16x64xf32>
    %cst_17 = arith.constant dense<0.000000e+00> : vector<16xf32>
    %30 = vector.multi_reduction <add>, %29, %cst_17 [1] : vector<16x64xf32> to vector<16xf32>
    %31 = vector.shape_cast %30 : vector<16xf32> to vector<16x1xf32>
    %32 = math.sqrt %31 : vector<16x1xf32>
    %cst_18 = arith.constant 9.99999996E-13 : f32
    %33 = vector.broadcast %cst_18 : f32 to vector<16x1xf32>
    %34 = arith.maximumf %32, %33 : vector<16x1xf32>
    %35 = vector.broadcast %34 : vector<16x1xf32> to vector<16x64xf32>
    %36 = arith.divf %28, %35 : vector<16x64xf32>
    %37 = vector.broadcast %1 : vector<16x1xf32> to vector<16x64xf32>
    %38 = arith.mulf %36, %37 : vector<16x64xf32>
    %c4 = arith.constant 4 : index
    %c0_19 = arith.constant 0 : index
    %39 = vector.load %arg6[%c4, %c0_19] : memref<58x256xf32, #tpu.memory_space<vmem>>, vector<8x64xf32>
    %c0_20 = arith.constant 0 : index
    %c384 = arith.constant 384 : index
    %40 = vector.load %arg4[%c0_20, %c384] : memref<64x2688xf32, #tpu.memory_space<vmem>>, vector<64x128xf32>
    %cst_21 = arith.constant dense<0.000000e+00> : vector<8x128xf32>
    %41 = tpu.matmul %39, %40, %cst_21 {dimension_numbers = #tpu.dot_dimension_numbers<[1], [0], [0], [1], [0, 0, 1, 1], [], []>} : vector<8x64xf32>, vector<64x128xf32>, vector<8x128xf32> -> vector<8x128xf32>
    %c12 = arith.constant 12 : index
    %c0_22 = arith.constant 0 : index
    %42 = vector.load %arg6[%c12, %c0_22] : memref<58x256xf32, #tpu.memory_space<vmem>>, vector<1x128xf32>
    %43 = vector.broadcast %42 : vector<1x128xf32> to vector<8x128xf32>
    %44 = arith.addf %41, %43 : vector<8x128xf32>
    %45 = vector.extract_strided_slice %44 {offsets = [0, 0], sizes = [8, 64], strides = [1, 1]} : vector<8x128xf32> to vector<8x64xf32>
    %46 = vector.extract_strided_slice %44 {offsets = [0, 64], sizes = [8, 64], strides = [1, 1]} : vector<8x128xf32> to vector<8x64xf32>
    %c0_23 = arith.constant 0 : index
    %c512 = arith.constant 512 : index
    %47 = vector.load %arg4[%c0_23, %c512] : memref<64x2688xf32, #tpu.memory_space<vmem>>, vector<64x64xf32>
    %cst_24 = arith.constant dense<0.000000e+00> : vector<16x64xf32>
    %48 = tpu.matmul %38, %47, %cst_24 {dimension_numbers = #tpu.dot_dimension_numbers<[1], [0], [0], [1], [0, 0, 1, 1], [], []>} : vector<16x64xf32>, vector<64x64xf32>, vector<16x64xf32> -> vector<16x64xf32>
    %c13 = arith.constant 13 : index
    %c0_25 = arith.constant 0 : index
    %49 = vector.load %arg6[%c13, %c0_25] : memref<58x256xf32, #tpu.memory_space<vmem>>, vector<1x64xf32>
    %50 = vector.broadcast %49 : vector<1x64xf32> to vector<16x64xf32>
    %51 = arith.addf %48, %50 : vector<16x64xf32>
    %c0_26 = arith.constant 0 : index
    %c640 = arith.constant 640 : index
    %52 = vector.load %arg4[%c0_26, %c640] : memref<64x2688xf32, #tpu.memory_space<vmem>>, vector<64x64xf32>
    %c14 = arith.constant 14 : index
    %c0_27 = arith.constant 0 : index
    %53 = vector.load %arg6[%c14, %c0_27] : memref<58x256xf32, #tpu.memory_space<vmem>>, vector<1x64xf32>
    %54 = vector.extract_strided_slice %51 {offsets = [0, 0], sizes = [16, 8], strides = [1, 1]} : vector<16x64xf32> to vector<16x8xf32>
    %55 = vector.extract_strided_slice %45 {offsets = [0, 0], sizes = [8, 8], strides = [1, 1]} : vector<8x64xf32> to vector<8x8xf32>
    %56 = vector.extract_strided_slice %46 {offsets = [0, 0], sizes = [8, 8], strides = [1, 1]} : vector<8x64xf32> to vector<8x8xf32>
    %cst_28 = arith.constant dense<0.000000e+00> : vector<16x8xf32>
    %57 = tpu.matmul %54, %55, %cst_28 {dimension_numbers = #tpu.dot_dimension_numbers<[1], [1], [0], [0], [0, 0, 1, 0], [], []>} : vector<16x8xf32>, vector<8x8xf32>, vector<16x8xf32> -> vector<16x8xf32>
    %cst_29 = arith.constant 0.353553385 : f32
    %58 = vector.broadcast %cst_29 : f32 to vector<16x8xf32>
    %59 = arith.mulf %57, %58 : vector<16x8xf32>
    %cst_30 = arith.constant dense<0xFF800000> : vector<16xf32>
    %60 = vector.multi_reduction <maximumf>, %59, %cst_30 [1] : vector<16x8xf32> to vector<16xf32>
    %61 = vector.shape_cast %60 : vector<16xf32> to vector<16x1xf32>
    %62 = vector.broadcast %61 : vector<16x1xf32> to vector<16x8xf32>
    %63 = arith.subf %59, %62 : vector<16x8xf32>
    %64 = math.exp %63 : vector<16x8xf32>
    %cst_31 = arith.constant dense<0.000000e+00> : vector<16xf32>
    %65 = vector.multi_reduction <add>, %64, %cst_31 [1] : vector<16x8xf32> to vector<16xf32>
    %66 = vector.shape_cast %65 : vector<16xf32> to vector<16x1xf32>
    %67 = vector.broadcast %66 : vector<16x1xf32> to vector<16x8xf32>
    %68 = arith.divf %64, %67 : vector<16x8xf32>
    %cst_32 = arith.constant dense<0.000000e+00> : vector<16x8xf32>
    %69 = tpu.matmul %68, %56, %cst_32 {dimension_numbers = #tpu.dot_dimension_numbers<[1], [0], [0], [1], [0, 0, 1, 1], [], []>} : vector<16x8xf32>, vector<8x8xf32>, vector<16x8xf32> -> vector<16x8xf32>
    %c0_33 = arith.constant 0 : index
    %c0_34 = arith.constant 0 : index
    %70 = vector.load %arg11[%c0_33, %c0_34] : memref<16x64xf32, #tpu.memory_space<vmem>>, vector<16x8xf32>
    tpu.vector_store %arg11[%c0_33, %c0_34], %69 {strides = array<i32>} : memref<16x64xf32, #tpu.memory_space<vmem>>, vector<16x8xf32>,
    %71 = vector.extract_strided_slice %51 {offsets = [0, 8], sizes = [16, 8], strides = [1, 1]} : vector<16x64xf32> to vector<16x8xf32>
    %72 = vector.extract_strided_slice %45 {offsets = [0, 8], sizes = [8, 8], strides = [1, 1]} : vector<8x64xf32> to vector<8x8xf32>
    %73 = vector.extract_strided_slice %46 {offsets = [0, 8], sizes = [8, 8], strides = [1, 1]} : vector<8x64xf32> to vector<8x8xf32>
    %cst_35 = arith.constant dense<0.000000e+00> : vector<16x8xf32>
    %74 = tpu.matmul %71, %72, %cst_35 {dimension_numbers = #tpu.dot_dimension_numbers<[1], [1], [0], [0], [0, 0, 1, 0], [], []>} : vector<16x8xf32>, vector<8x8xf32>, vector<16x8xf32> -> vector<16x8xf32>
    %cst_36 = arith.constant 0.353553385 : f32
    %75 = vector.broadcast %cst_36 : f32 to vector<16x8xf32>
    %76 = arith.mulf %74, %75 : vector<16x8xf32>
    %cst_37 = arith.constant dense<0xFF800000> : vector<16xf32>
    %77 = vector.multi_reduction <maximumf>, %76, %cst_37 [1] : vector<16x8xf32> to vector<16xf32>
    %78 = vector.shape_cast %77 : vector<16xf32> to vector<16x1xf32>
    %79 = vector.broadcast %78 : vector<16x1xf32> to vector<16x8xf32>
    %80 = arith.subf %76, %79 : vector<16x8xf32>
    %81 = math.exp %80 : vector<16x8xf32>
    %cst_38 = arith.constant dense<0.000000e+00> : vector<16xf32>
    %82 = vector.multi_reduction <add>, %81, %cst_38 [1] : vector<16x8xf32> to vector<16xf32>
    %83 = vector.shape_cast %82 : vector<16xf32> to vector<16x1xf32>
    %84 = vector.broadcast %83 : vector<16x1xf32> to vector<16x8xf32>
    %85 = arith.divf %81, %84 : vector<16x8xf32>
    %cst_39 = arith.constant dense<0.000000e+00> : vector<16x8xf32>
    %86 = tpu.matmul %85, %73, %cst_39 {dimension_numbers = #tpu.dot_dimension_numbers<[1], [0], [0], [1], [0, 0, 1, 1], [], []>} : vector<16x8xf32>, vector<8x8xf32>, vector<16x8xf32> -> vector<16x8xf32>
    %c0_40 = arith.constant 0 : index
    %c8 = arith.constant 8 : index
    %87 = vector.load %arg11[%c0_40, %c8] : memref<16x64xf32, #tpu.memory_space<vmem>>, vector<16x8xf32>
    tpu.vector_store %arg11[%c0_40, %c8], %86 {strides = array<i32>} : memref<16x64xf32, #tpu.memory_space<vmem>>, vector<16x8xf32>,
    %88 = vector.extract_strided_slice %51 {offsets = [0, 16], sizes = [16, 8], strides = [1, 1]} : vector<16x64xf32> to vector<16x8xf32>
    %89 = vector.extract_strided_slice %45 {offsets = [0, 16], sizes = [8, 8], strides = [1, 1]} : vector<8x64xf32> to vector<8x8xf32>
    %90 = vector.extract_strided_slice %46 {offsets = [0, 16], sizes = [8, 8], strides = [1, 1]} : vector<8x64xf32> to vector<8x8xf32>
    %cst_41 = arith.constant dense<0.000000e+00> : vector<16x8xf32>
    %91 = tpu.matmul %88, %89, %cst_41 {dimension_numbers = #tpu.dot_dimension_numbers<[1], [1], [0], [0], [0, 0, 1, 0], [], []>} : vector<16x8xf32>, vector<8x8xf32>, vector<16x8xf32> -> vector<16x8xf32>
    %cst_42 = arith.constant 0.353553385 : f32
    %92 = vector.broadcast %cst_42 : f32 to vector<16x8xf32>
    %93 = arith.mulf %91, %92 : vector<16x8xf32>
    %cst_43 = arith.constant dense<0xFF800000> : vector<16xf32>
    %94 = vector.multi_reduction <maximumf>, %93, %cst_43 [1] : vector<16x8xf32> to vector<16xf32>
    %95 = vector.shape_cast %94 : vector<16xf32> to vector<16x1xf32>
    %96 = vector.broadcast %95 : vector<16x1xf32> to vector<16x8xf32>
    %97 = arith.subf %93, %96 : vector<16x8xf32>
    %98 = math.exp %97 : vector<16x8xf32>
    %cst_44 = arith.constant dense<0.000000e+00> : vector<16xf32>
    %99 = vector.multi_reduction <add>, %98, %cst_44 [1] : vector<16x8xf32> to vector<16xf32>
    %100 = vector.shape_cast %99 : vector<16xf32> to vector<16x1xf32>
    %101 = vector.broadcast %100 : vector<16x1xf32> to vector<16x8xf32>
    %102 = arith.divf %98, %101 : vector<16x8xf32>
    %cst_45 = arith.constant dense<0.000000e+00> : vector<16x8xf32>
    %103 = tpu.matmul %102, %90, %cst_45 {dimension_numbers = #tpu.dot_dimension_numbers<[1], [0], [0], [1], [0, 0, 1, 1], [], []>} : vector<16x8xf32>, vector<8x8xf32>, vector<16x8xf32> -> vector<16x8xf32>
    %c0_46 = arith.constant 0 : index
    %c16 = arith.constant 16 : index
    %104 = vector.load %arg11[%c0_46, %c16] : memref<16x64xf32, #tpu.memory_space<vmem>>, vector<16x8xf32>
    tpu.vector_store %arg11[%c0_46, %c16], %103 {strides = array<i32>} : memref<16x64xf32, #tpu.memory_space<vmem>>, vector<16x8xf32>,
    %105 = vector.extract_strided_slice %51 {offsets = [0, 24], sizes = [16, 8], strides = [1, 1]} : vector<16x64xf32> to vector<16x8xf32>
    %106 = vector.extract_strided_slice %45 {offsets = [0, 24], sizes = [8, 8], strides = [1, 1]} : vector<8x64xf32> to vector<8x8xf32>
    %107 = vector.extract_strided_slice %46 {offsets = [0, 24], sizes = [8, 8], strides = [1, 1]} : vector<8x64xf32> to vector<8x8xf32>
    %cst_47 = arith.constant dense<0.000000e+00> : vector<16x8xf32>
    %108 = tpu.matmul %105, %106, %cst_47 {dimension_numbers = #tpu.dot_dimension_numbers<[1], [1], [0], [0], [0, 0, 1, 0], [], []>} : vector<16x8xf32>, vector<8x8xf32>, vector<16x8xf32> -> vector<16x8xf32>
    %cst_48 = arith.constant 0.353553385 : f32
    %109 = vector.broadcast %cst_48 : f32 to vector<16x8xf32>
    %110 = arith.mulf %108, %109 : vector<16x8xf32>
    %cst_49 = arith.constant dense<0xFF800000> : vector<16xf32>
    %111 = vector.multi_reduction <maximumf>, %110, %cst_49 [1] : vector<16x8xf32> to vector<16xf32>
    %112 = vector.shape_cast %111 : vector<16xf32> to vector<16x1xf32>
    %113 = vector.broadcast %112 : vector<16x1xf32> to vector<16x8xf32>
    %114 = arith.subf %110, %113 : vector<16x8xf32>
    %115 = math.exp %114 : vector<16x8xf32>
    %cst_50 = arith.constant dense<0.000000e+00> : vector<16xf32>
    %116 = vector.multi_reduction <add>, %115, %cst_50 [1] : vector<16x8xf32> to vector<16xf32>
    %117 = vector.shape_cast %116 : vector<16xf32> to vector<16x1xf32>
    %118 = vector.broadcast %117 : vector<16x1xf32> to vector<16x8xf32>
    %119 = arith.divf %115, %118 : vector<16x8xf32>
    %cst_51 = arith.constant dense<0.000000e+00> : vector<16x8xf32>
    %120 = tpu.matmul %119, %107, %cst_51 {dimension_numbers = #tpu.dot_dimension_numbers<[1], [0], [0], [1], [0, 0, 1, 1], [], []>} : vector<16x8xf32>, vector<8x8xf32>, vector<16x8xf32> -> vector<16x8xf32>
    %c0_52 = arith.constant 0 : index
    %c24 = arith.constant 24 : index
    %121 = vector.load %arg11[%c0_52, %c24] : memref<16x64xf32, #tpu.memory_space<vmem>>, vector<16x8xf32>
    tpu.vector_store %arg11[%c0_52, %c24], %120 {strides = array<i32>} : memref<16x64xf32, #tpu.memory_space<vmem>>, vector<16x8xf32>,
    %122 = vector.extract_strided_slice %51 {offsets = [0, 32], sizes = [16, 8], strides = [1, 1]} : vector<16x64xf32> to vector<16x8xf32>
    %123 = vector.extract_strided_slice %45 {offsets = [0, 32], sizes = [8, 8], strides = [1, 1]} : vector<8x64xf32> to vector<8x8xf32>
    %124 = vector.extract_strided_slice %46 {offsets = [0, 32], sizes = [8, 8], strides = [1, 1]} : vector<8x64xf32> to vector<8x8xf32>
    %cst_53 = arith.constant dense<0.000000e+00> : vector<16x8xf32>
    %125 = tpu.matmul %122, %123, %cst_53 {dimension_numbers = #tpu.dot_dimension_numbers<[1], [1], [0], [0], [0, 0, 1, 0], [], []>} : vector<16x8xf32>, vector<8x8xf32>, vector<16x8xf32> -> vector<16x8xf32>
    %cst_54 = arith.constant 0.353553385 : f32
    %126 = vector.broadcast %cst_54 : f32 to vector<16x8xf32>
    %127 = arith.mulf %125, %126 : vector<16x8xf32>
    %cst_55 = arith.constant dense<0xFF800000> : vector<16xf32>
    %128 = vector.multi_reduction <maximumf>, %127, %cst_55 [1] : vector<16x8xf32> to vector<16xf32>
    %129 = vector.shape_cast %128 : vector<16xf32> to vector<16x1xf32>
    %130 = vector.broadcast %129 : vector<16x1xf32> to vector<16x8xf32>
    %131 = arith.subf %127, %130 : vector<16x8xf32>
    %132 = math.exp %131 : vector<16x8xf32>
    %cst_56 = arith.constant dense<0.000000e+00> : vector<16xf32>
    %133 = vector.multi_reduction <add>, %132, %cst_56 [1] : vector<16x8xf32> to vector<16xf32>
    %134 = vector.shape_cast %133 : vector<16xf32> to vector<16x1xf32>
    %135 = vector.broadcast %134 : vector<16x1xf32> to vector<16x8xf32>
    %136 = arith.divf %132, %135 : vector<16x8xf32>
    %cst_57 = arith.constant dense<0.000000e+00> : vector<16x8xf32>
    %137 = tpu.matmul %136, %124, %cst_57 {dimension_numbers = #tpu.dot_dimension_numbers<[1], [0], [0], [1], [0, 0, 1, 1], [], []>} : vector<16x8xf32>, vector<8x8xf32>, vector<16x8xf32> -> vector<16x8xf32>
    %c0_58 = arith.constant 0 : index
    %c32 = arith.constant 32 : index
    %138 = vector.load %arg11[%c0_58, %c32] : memref<16x64xf32, #tpu.memory_space<vmem>>, vector<16x8xf32>
    tpu.vector_store %arg11[%c0_58, %c32], %137 {strides = array<i32>} : memref<16x64xf32, #tpu.memory_space<vmem>>, vector<16x8xf32>,
    %139 = vector.extract_strided_slice %51 {offsets = [0, 40], sizes = [16, 8], strides = [1, 1]} : vector<16x64xf32> to vector<16x8xf32>
    %140 = vector.extract_strided_slice %45 {offsets = [0, 40], sizes = [8, 8], strides = [1, 1]} : vector<8x64xf32> to vector<8x8xf32>
    %141 = vector.extract_strided_slice %46 {offsets = [0, 40], sizes = [8, 8], strides = [1, 1]} : vector<8x64xf32> to vector<8x8xf32>
    %cst_59 = arith.constant dense<0.000000e+00> : vector<16x8xf32>
    %142 = tpu.matmul %139, %140, %cst_59 {dimension_numbers = #tpu.dot_dimension_numbers<[1], [1], [0], [0], [0, 0, 1, 0], [], []>} : vector<16x8xf32>, vector<8x8xf32>, vector<16x8xf32> -> vector<16x8xf32>
    %cst_60 = arith.constant 0.353553385 : f32
    %143 = vector.broadcast %cst_60 : f32 to vector<16x8xf32>
    %144 = arith.mulf %142, %143 : vector<16x8xf32>
    %cst_61 = arith.constant dense<0xFF800000> : vector<16xf32>
    %145 = vector.multi_reduction <maximumf>, %144, %cst_61 [1] : vector<16x8xf32> to vector<16xf32>
    %146 = vector.shape_cast %145 : vector<16xf32> to vector<16x1xf32>
    %147 = vector.broadcast %146 : vector<16x1xf32> to vector<16x8xf32>
    %148 = arith.subf %144, %147 : vector<16x8xf32>
    %149 = math.exp %148 : vector<16x8xf32>
    %cst_62 = arith.constant dense<0.000000e+00> : vector<16xf32>
    %150 = vector.multi_reduction <add>, %149, %cst_62 [1] : vector<16x8xf32> to vector<16xf32>
    %151 = vector.shape_cast %150 : vector<16xf32> to vector<16x1xf32>
    %152 = vector.broadcast %151 : vector<16x1xf32> to vector<16x8xf32>
    %153 = arith.divf %149, %152 : vector<16x8xf32>
    %cst_63 = arith.constant dense<0.000000e+00> : vector<16x8xf32>
    %154 = tpu.matmul %153, %141, %cst_63 {dimension_numbers = #tpu.dot_dimension_numbers<[1], [0], [0], [1], [0, 0, 1, 1], [], []>} : vector<16x8xf32>, vector<8x8xf32>, vector<16x8xf32> -> vector<16x8xf32>
    %c0_64 = arith.constant 0 : index
    %c40 = arith.constant 40 : index
    %155 = vector.load %arg11[%c0_64, %c40] : memref<16x64xf32, #tpu.memory_space<vmem>>, vector<16x8xf32>
    tpu.vector_store %arg11[%c0_64, %c40], %154 {strides = array<i32>} : memref<16x64xf32, #tpu.memory_space<vmem>>, vector<16x8xf32>,
    %156 = vector.extract_strided_slice %51 {offsets = [0, 48], sizes = [16, 8], strides = [1, 1]} : vector<16x64xf32> to vector<16x8xf32>
    %157 = vector.extract_strided_slice %45 {offsets = [0, 48], sizes = [8, 8], strides = [1, 1]} : vector<8x64xf32> to vector<8x8xf32>
    %158 = vector.extract_strided_slice %46 {offsets = [0, 48], sizes = [8, 8], strides = [1, 1]} : vector<8x64xf32> to vector<8x8xf32>
    %cst_65 = arith.constant dense<0.000000e+00> : vector<16x8xf32>
    %159 = tpu.matmul %156, %157, %cst_65 {dimension_numbers = #tpu.dot_dimension_numbers<[1], [1], [0], [0], [0, 0, 1, 0], [], []>} : vector<16x8xf32>, vector<8x8xf32>, vector<16x8xf32> -> vector<16x8xf32>
    %cst_66 = arith.constant 0.353553385 : f32
    %160 = vector.broadcast %cst_66 : f32 to vector<16x8xf32>
    %161 = arith.mulf %159, %160 : vector<16x8xf32>
    %cst_67 = arith.constant dense<0xFF800000> : vector<16xf32>
    %162 = vector.multi_reduction <maximumf>, %161, %cst_67 [1] : vector<16x8xf32> to vector<16xf32>
    %163 = vector.shape_cast %162 : vector<16xf32> to vector<16x1xf32>
    %164 = vector.broadcast %163 : vector<16x1xf32> to vector<16x8xf32>
    %165 = arith.subf %161, %164 : vector<16x8xf32>
    %166 = math.exp %165 : vector<16x8xf32>
    %cst_68 = arith.constant dense<0.000000e+00> : vector<16xf32>
    %167 = vector.multi_reduction <add>, %166, %cst_68 [1] : vector<16x8xf32> to vector<16xf32>
    %168 = vector.shape_cast %167 : vector<16xf32> to vector<16x1xf32>
    %169 = vector.broadcast %168 : vector<16x1xf32> to vector<16x8xf32>
    %170 = arith.divf %166, %169 : vector<16x8xf32>
    %cst_69 = arith.constant dense<0.000000e+00> : vector<16x8xf32>
    %171 = tpu.matmul %170, %158, %cst_69 {dimension_numbers = #tpu.dot_dimension_numbers<[1], [0], [0], [1], [0, 0, 1, 1], [], []>} : vector<16x8xf32>, vector<8x8xf32>, vector<16x8xf32> -> vector<16x8xf32>
    %c0_70 = arith.constant 0 : index
    %c48 = arith.constant 48 : index
    %172 = vector.load %arg11[%c0_70, %c48] : memref<16x64xf32, #tpu.memory_space<vmem>>, vector<16x8xf32>
    tpu.vector_store %arg11[%c0_70, %c48], %171 {strides = array<i32>} : memref<16x64xf32, #tpu.memory_space<vmem>>, vector<16x8xf32>,
    %173 = vector.extract_strided_slice %51 {offsets = [0, 56], sizes = [16, 8], strides = [1, 1]} : vector<16x64xf32> to vector<16x8xf32>
    %174 = vector.extract_strided_slice %45 {offsets = [0, 56], sizes = [8, 8], strides = [1, 1]} : vector<8x64xf32> to vector<8x8xf32>
    %175 = vector.extract_strided_slice %46 {offsets = [0, 56], sizes = [8, 8], strides = [1, 1]} : vector<8x64xf32> to vector<8x8xf32>
    %cst_71 = arith.constant dense<0.000000e+00> : vector<16x8xf32>
    %176 = tpu.matmul %173, %174, %cst_71 {dimension_numbers = #tpu.dot_dimension_numbers<[1], [1], [0], [0], [0, 0, 1, 0], [], []>} : vector<16x8xf32>, vector<8x8xf32>, vector<16x8xf32> -> vector<16x8xf32>
    %cst_72 = arith.constant 0.353553385 : f32
    %177 = vector.broadcast %cst_72 : f32 to vector<16x8xf32>
    %178 = arith.mulf %176, %177 : vector<16x8xf32>
    %cst_73 = arith.constant dense<0xFF800000> : vector<16xf32>
    %179 = vector.multi_reduction <maximumf>, %178, %cst_73 [1] : vector<16x8xf32> to vector<16xf32>
    %180 = vector.shape_cast %179 : vector<16xf32> to vector<16x1xf32>
    %181 = vector.broadcast %180 : vector<16x1xf32> to vector<16x8xf32>
    %182 = arith.subf %178, %181 : vector<16x8xf32>
    %183 = math.exp %182 : vector<16x8xf32>
    %cst_74 = arith.constant dense<0.000000e+00> : vector<16xf32>
    %184 = vector.multi_reduction <add>, %183, %cst_74 [1] : vector<16x8xf32> to vector<16xf32>
    %185 = vector.shape_cast %184 : vector<16xf32> to vector<16x1xf32>
    %186 = vector.broadcast %185 : vector<16x1xf32> to vector<16x8xf32>
    %187 = arith.divf %183, %186 : vector<16x8xf32>
    %cst_75 = arith.constant dense<0.000000e+00> : vector<16x8xf32>
    %188 = tpu.matmul %187, %175, %cst_75 {dimension_numbers = #tpu.dot_dimension_numbers<[1], [0], [0], [1], [0, 0, 1, 1], [], []>} : vector<16x8xf32>, vector<8x8xf32>, vector<16x8xf32> -> vector<16x8xf32>
    %c0_76 = arith.constant 0 : index
    %c56 = arith.constant 56 : index
    %189 = vector.load %arg11[%c0_76, %c56] : memref<16x64xf32, #tpu.memory_space<vmem>>, vector<16x8xf32>
    tpu.vector_store %arg11[%c0_76, %c56], %188 {strides = array<i32>} : memref<16x64xf32, #tpu.memory_space<vmem>>, vector<16x8xf32>,
    %c0_77 = arith.constant 0 : index
    %c0_78 = arith.constant 0 : index
    %190 = vector.load %arg11[%c0_77, %c0_78] : memref<16x64xf32, #tpu.memory_space<vmem>>, vector<16x64xf32>
    %cst_79 = arith.constant dense<0.000000e+00> : vector<16x64xf32>
    %191 = tpu.matmul %190, %52, %cst_79 {dimension_numbers = #tpu.dot_dimension_numbers<[1], [0], [0], [1], [0, 0, 1, 1], [], []>} : vector<16x64xf32>, vector<64x64xf32>, vector<16x64xf32> -> vector<16x64xf32>
    %192 = vector.broadcast %53 : vector<1x64xf32> to vector<16x64xf32>
    %193 = arith.addf %191, %192 : vector<16x64xf32>
    %194 = arith.addf %38, %193 : vector<16x64xf32>
    %c30 = arith.constant 30 : index
    %c0_80 = arith.constant 0 : index
    %195 = vector.load %arg6[%c30, %c0_80] : memref<58x256xf32, #tpu.memory_space<vmem>>, vector<1x64xf32>
    %c31 = arith.constant 31 : index
    %c0_81 = arith.constant 0 : index
    %196 = vector.load %arg6[%c31, %c0_81] : memref<58x256xf32, #tpu.memory_space<vmem>>, vector<1x64xf32>
    %cst_82 = arith.constant dense<0.000000e+00> : vector<16xf32>
    %197 = vector.multi_reduction <add>, %194, %cst_82 [1] : vector<16x64xf32> to vector<16xf32>
    %198 = vector.shape_cast %197 : vector<16xf32> to vector<16x1xf32>
    %cst_83 = arith.constant 6.400000e+01 : f32
    %199 = vector.broadcast %cst_83 : f32 to vector<16x1xf32>
    %200 = arith.divf %198, %199 : vector<16x1xf32>
    %201 = vector.broadcast %200 : vector<16x1xf32> to vector<16x64xf32>
    %202 = arith.subf %194, %201 : vector<16x64xf32>
    %203 = arith.mulf %202, %202 : vector<16x64xf32>
    %cst_84 = arith.constant dense<0.000000e+00> : vector<16xf32>
    %204 = vector.multi_reduction <add>, %203, %cst_84 [1] : vector<16x64xf32> to vector<16xf32>
    %205 = vector.shape_cast %204 : vector<16xf32> to vector<16x1xf32>
    %cst_85 = arith.constant 6.400000e+01 : f32
    %206 = vector.broadcast %cst_85 : f32 to vector<16x1xf32>
    %207 = arith.divf %205, %206 : vector<16x1xf32>
    %208 = vector.broadcast %200 : vector<16x1xf32> to vector<16x64xf32>
    %209 = arith.subf %194, %208 : vector<16x64xf32>
    %cst_86 = arith.constant 9.99999997E-7 : f32
    %210 = vector.broadcast %cst_86 : f32 to vector<16x1xf32>
    %211 = arith.addf %207, %210 : vector<16x1xf32>
    %212 = math.rsqrt %211 : vector<16x1xf32>
    %213 = vector.broadcast %212 : vector<16x1xf32> to vector<16x64xf32>
    %214 = arith.mulf %209, %213 : vector<16x64xf32>
    %215 = vector.broadcast %195 : vector<1x64xf32> to vector<16x64xf32>
    %216 = arith.mulf %214, %215 : vector<16x64xf32>
    %217 = vector.broadcast %196 : vector<1x64xf32> to vector<16x64xf32>
    %218 = arith.addf %216, %217 : vector<16x64xf32>
    %cst_87 = arith.constant 0.000000e+00 : f32
    %219 = vector.broadcast %cst_87 : f32 to vector<16x64xf32>
    %220 = arith.maximumf %218, %219 : vector<16x64xf32>
    %221 = arith.addf %218, %220 : vector<16x64xf32>
    %c28 = arith.constant 28 : index
    %c0_88 = arith.constant 0 : index
    %222 = vector.load %arg6[%c28, %c0_88] : memref<58x256xf32, #tpu.memory_space<vmem>>, vector<1x64xf32>
    %c29 = arith.constant 29 : index
    %c0_89 = arith.constant 0 : index
    %223 = vector.load %arg6[%c29, %c0_89] : memref<58x256xf32, #tpu.memory_space<vmem>>, vector<1x64xf32>
    %cst_90 = arith.constant dense<0.000000e+00> : vector<16xf32>
    %224 = vector.multi_reduction <add>, %221, %cst_90 [1] : vector<16x64xf32> to vector<16xf32>
    %225 = vector.shape_cast %224 : vector<16xf32> to vector<16x1xf32>
    %cst_91 = arith.constant 6.400000e+01 : f32
    %226 = vector.broadcast %cst_91 : f32 to vector<16x1xf32>
    %227 = arith.divf %225, %226 : vector<16x1xf32>
    %228 = vector.broadcast %227 : vector<16x1xf32> to vector<16x64xf32>
    %229 = arith.subf %221, %228 : vector<16x64xf32>
    %230 = arith.mulf %229, %229 : vector<16x64xf32>
    %cst_92 = arith.constant dense<0.000000e+00> : vector<16xf32>
    %231 = vector.multi_reduction <add>, %230, %cst_92 [1] : vector<16x64xf32> to vector<16xf32>
    %232 = vector.shape_cast %231 : vector<16xf32> to vector<16x1xf32>
    %cst_93 = arith.constant 6.400000e+01 : f32
    %233 = vector.broadcast %cst_93 : f32 to vector<16x1xf32>
    %234 = arith.divf %232, %233 : vector<16x1xf32>
    %235 = vector.broadcast %227 : vector<16x1xf32> to vector<16x64xf32>
    %236 = arith.subf %221, %235 : vector<16x64xf32>
    %cst_94 = arith.constant 9.99999997E-7 : f32
    %237 = vector.broadcast %cst_94 : f32 to vector<16x1xf32>
    %238 = arith.addf %234, %237 : vector<16x1xf32>
    %239 = math.rsqrt %238 : vector<16x1xf32>
    %240 = vector.broadcast %239 : vector<16x1xf32> to vector<16x64xf32>
    %241 = arith.mulf %236, %240 : vector<16x64xf32>
    %242 = vector.broadcast %222 : vector<1x64xf32> to vector<16x64xf32>
    %243 = arith.mulf %241, %242 : vector<16x64xf32>
    %244 = vector.broadcast %223 : vector<1x64xf32> to vector<16x64xf32>
    %245 = arith.addf %243, %244 : vector<16x64xf32>
    %c16_95 = arith.constant 16 : index
    %c0_96 = arith.constant 0 : index
    %246 = vector.load %arg6[%c16_95, %c0_96] : memref<58x256xf32, #tpu.memory_space<vmem>>, vector<8x64xf32>
    %c0_97 = arith.constant 0 : index
    %c768 = arith.constant 768 : index
    %247 = vector.load %arg4[%c0_97, %c768] : memref<64x2688xf32, #tpu.memory_space<vmem>>, vector<64x128xf32>
    %cst_98 = arith.constant dense<0.000000e+00> : vector<8x128xf32>
    %248 = tpu.matmul %246, %247, %cst_98 {dimension_numbers = #tpu.dot_dimension_numbers<[1], [0], [0], [1], [0, 0, 1, 1], [], []>} : vector<8x64xf32>, vector<64x128xf32>, vector<8x128xf32> -> vector<8x128xf32>
    %c24_99 = arith.constant 24 : index
    %c0_100 = arith.constant 0 : index
    %249 = vector.load %arg6[%c24_99, %c0_100] : memref<58x256xf32, #tpu.memory_space<vmem>>, vector<1x128xf32>
    %250 = vector.broadcast %249 : vector<1x128xf32> to vector<8x128xf32>
    %251 = arith.addf %248, %250 : vector<8x128xf32>
    %252 = vector.extract_strided_slice %251 {offsets = [0, 0], sizes = [8, 64], strides = [1, 1]} : vector<8x128xf32> to vector<8x64xf32>
    %253 = vector.extract_strided_slice %251 {offsets = [0, 64], sizes = [8, 64], strides = [1, 1]} : vector<8x128xf32> to vector<8x64xf32>
    %c0_101 = arith.constant 0 : index
    %c896 = arith.constant 896 : index
    %254 = vector.load %arg4[%c0_101, %c896] : memref<64x2688xf32, #tpu.memory_space<vmem>>, vector<64x64xf32>
    %cst_102 = arith.constant dense<0.000000e+00> : vector<16x64xf32>
    %255 = tpu.matmul %38, %254, %cst_102 {dimension_numbers = #tpu.dot_dimension_numbers<[1], [0], [0], [1], [0, 0, 1, 1], [], []>} : vector<16x64xf32>, vector<64x64xf32>, vector<16x64xf32> -> vector<16x64xf32>
    %c25 = arith.constant 25 : index
    %c0_103 = arith.constant 0 : index
    %256 = vector.load %arg6[%c25, %c0_103] : memref<58x256xf32, #tpu.memory_space<vmem>>, vector<1x64xf32>
    %257 = vector.broadcast %256 : vector<1x64xf32> to vector<16x64xf32>
    %258 = arith.addf %255, %257 : vector<16x64xf32>
    %c0_104 = arith.constant 0 : index
    %c1024 = arith.constant 1024 : index
    %259 = vector.load %arg4[%c0_104, %c1024] : memref<64x2688xf32, #tpu.memory_space<vmem>>, vector<64x64xf32>
    %c26 = arith.constant 26 : index
    %c0_105 = arith.constant 0 : index
    %260 = vector.load %arg6[%c26, %c0_105] : memref<58x256xf32, #tpu.memory_space<vmem>>, vector<1x64xf32>
    %261 = vector.extract_strided_slice %258 {offsets = [0, 0], sizes = [16, 8], strides = [1, 1]} : vector<16x64xf32> to vector<16x8xf32>
    %262 = vector.extract_strided_slice %252 {offsets = [0, 0], sizes = [8, 8], strides = [1, 1]} : vector<8x64xf32> to vector<8x8xf32>
    %263 = vector.extract_strided_slice %253 {offsets = [0, 0], sizes = [8, 8], strides = [1, 1]} : vector<8x64xf32> to vector<8x8xf32>
    %cst_106 = arith.constant dense<0.000000e+00> : vector<16x8xf32>
    %264 = tpu.matmul %261, %262, %cst_106 {dimension_numbers = #tpu.dot_dimension_numbers<[1], [1], [0], [0], [0, 0, 1, 0], [], []>} : vector<16x8xf32>, vector<8x8xf32>, vector<16x8xf32> -> vector<16x8xf32>
    %cst_107 = arith.constant 0.353553385 : f32
    %265 = vector.broadcast %cst_107 : f32 to vector<16x8xf32>
    %266 = arith.mulf %264, %265 : vector<16x8xf32>
    %cst_108 = arith.constant dense<0xFF800000> : vector<16xf32>
    %267 = vector.multi_reduction <maximumf>, %266, %cst_108 [1] : vector<16x8xf32> to vector<16xf32>
    %268 = vector.shape_cast %267 : vector<16xf32> to vector<16x1xf32>
    %269 = vector.broadcast %268 : vector<16x1xf32> to vector<16x8xf32>
    %270 = arith.subf %266, %269 : vector<16x8xf32>
    %271 = math.exp %270 : vector<16x8xf32>
    %cst_109 = arith.constant dense<0.000000e+00> : vector<16xf32>
    %272 = vector.multi_reduction <add>, %271, %cst_109 [1] : vector<16x8xf32> to vector<16xf32>
    %273 = vector.shape_cast %272 : vector<16xf32> to vector<16x1xf32>
    %274 = vector.broadcast %273 : vector<16x1xf32> to vector<16x8xf32>
    %275 = arith.divf %271, %274 : vector<16x8xf32>
    %cst_110 = arith.constant dense<0.000000e+00> : vector<16x8xf32>
    %276 = tpu.matmul %275, %263, %cst_110 {dimension_numbers = #tpu.dot_dimension_numbers<[1], [0], [0], [1], [0, 0, 1, 1], [], []>} : vector<16x8xf32>, vector<8x8xf32>, vector<16x8xf32> -> vector<16x8xf32>
    %c0_111 = arith.constant 0 : index
    %c0_112 = arith.constant 0 : index
    %277 = vector.load %arg11[%c0_111, %c0_112] : memref<16x64xf32, #tpu.memory_space<vmem>>, vector<16x8xf32>
    tpu.vector_store %arg11[%c0_111, %c0_112], %276 {strides = array<i32>} : memref<16x64xf32, #tpu.memory_space<vmem>>, vector<16x8xf32>,
    %278 = vector.extract_strided_slice %258 {offsets = [0, 8], sizes = [16, 8], strides = [1, 1]} : vector<16x64xf32> to vector<16x8xf32>
    %279 = vector.extract_strided_slice %252 {offsets = [0, 8], sizes = [8, 8], strides = [1, 1]} : vector<8x64xf32> to vector<8x8xf32>
    %280 = vector.extract_strided_slice %253 {offsets = [0, 8], sizes = [8, 8], strides = [1, 1]} : vector<8x64xf32> to vector<8x8xf32>
    %cst_113 = arith.constant dense<0.000000e+00> : vector<16x8xf32>
    %281 = tpu.matmul %278, %279, %cst_113 {dimension_numbers = #tpu.dot_dimension_numbers<[1], [1], [0], [0], [0, 0, 1, 0], [], []>} : vector<16x8xf32>, vector<8x8xf32>, vector<16x8xf32> -> vector<16x8xf32>
    %cst_114 = arith.constant 0.353553385 : f32
    %282 = vector.broadcast %cst_114 : f32 to vector<16x8xf32>
    %283 = arith.mulf %281, %282 : vector<16x8xf32>
    %cst_115 = arith.constant dense<0xFF800000> : vector<16xf32>
    %284 = vector.multi_reduction <maximumf>, %283, %cst_115 [1] : vector<16x8xf32> to vector<16xf32>
    %285 = vector.shape_cast %284 : vector<16xf32> to vector<16x1xf32>
    %286 = vector.broadcast %285 : vector<16x1xf32> to vector<16x8xf32>
    %287 = arith.subf %283, %286 : vector<16x8xf32>
    %288 = math.exp %287 : vector<16x8xf32>
    %cst_116 = arith.constant dense<0.000000e+00> : vector<16xf32>
    %289 = vector.multi_reduction <add>, %288, %cst_116 [1] : vector<16x8xf32> to vector<16xf32>
    %290 = vector.shape_cast %289 : vector<16xf32> to vector<16x1xf32>
    %291 = vector.broadcast %290 : vector<16x1xf32> to vector<16x8xf32>
    %292 = arith.divf %288, %291 : vector<16x8xf32>
    %cst_117 = arith.constant dense<0.000000e+00> : vector<16x8xf32>
    %293 = tpu.matmul %292, %280, %cst_117 {dimension_numbers = #tpu.dot_dimension_numbers<[1], [0], [0], [1], [0, 0, 1, 1], [], []>} : vector<16x8xf32>, vector<8x8xf32>, vector<16x8xf32> -> vector<16x8xf32>
    %c0_118 = arith.constant 0 : index
    %c8_119 = arith.constant 8 : index
    %294 = vector.load %arg11[%c0_118, %c8_119] : memref<16x64xf32, #tpu.memory_space<vmem>>, vector<16x8xf32>
    tpu.vector_store %arg11[%c0_118, %c8_119], %293 {strides = array<i32>} : memref<16x64xf32, #tpu.memory_space<vmem>>, vector<16x8xf32>,
    %295 = vector.extract_strided_slice %258 {offsets = [0, 16], sizes = [16, 8], strides = [1, 1]} : vector<16x64xf32> to vector<16x8xf32>
    %296 = vector.extract_strided_slice %252 {offsets = [0, 16], sizes = [8, 8], strides = [1, 1]} : vector<8x64xf32> to vector<8x8xf32>
    %297 = vector.extract_strided_slice %253 {offsets = [0, 16], sizes = [8, 8], strides = [1, 1]} : vector<8x64xf32> to vector<8x8xf32>
    %cst_120 = arith.constant dense<0.000000e+00> : vector<16x8xf32>
    %298 = tpu.matmul %295, %296, %cst_120 {dimension_numbers = #tpu.dot_dimension_numbers<[1], [1], [0], [0], [0, 0, 1, 0], [], []>} : vector<16x8xf32>, vector<8x8xf32>, vector<16x8xf32> -> vector<16x8xf32>
    %cst_121 = arith.constant 0.353553385 : f32
    %299 = vector.broadcast %cst_121 : f32 to vector<16x8xf32>
    %300 = arith.mulf %298, %299 : vector<16x8xf32>
    %cst_122 = arith.constant dense<0xFF800000> : vector<16xf32>
    %301 = vector.multi_reduction <maximumf>, %300, %cst_122 [1] : vector<16x8xf32> to vector<16xf32>
    %302 = vector.shape_cast %301 : vector<16xf32> to vector<16x1xf32>
    %303 = vector.broadcast %302 : vector<16x1xf32> to vector<16x8xf32>
    %304 = arith.subf %300, %303 : vector<16x8xf32>
    %305 = math.exp %304 : vector<16x8xf32>
    %cst_123 = arith.constant dense<0.000000e+00> : vector<16xf32>
    %306 = vector.multi_reduction <add>, %305, %cst_123 [1] : vector<16x8xf32> to vector<16xf32>
    %307 = vector.shape_cast %306 : vector<16xf32> to vector<16x1xf32>
    %308 = vector.broadcast %307 : vector<16x1xf32> to vector<16x8xf32>
    %309 = arith.divf %305, %308 : vector<16x8xf32>
    %cst_124 = arith.constant dense<0.000000e+00> : vector<16x8xf32>
    %310 = tpu.matmul %309, %297, %cst_124 {dimension_numbers = #tpu.dot_dimension_numbers<[1], [0], [0], [1], [0, 0, 1, 1], [], []>} : vector<16x8xf32>, vector<8x8xf32>, vector<16x8xf32> -> vector<16x8xf32>
    %c0_125 = arith.constant 0 : index
    %c16_126 = arith.constant 16 : index
    %311 = vector.load %arg11[%c0_125, %c16_126] : memref<16x64xf32, #tpu.memory_space<vmem>>, vector<16x8xf32>
    tpu.vector_store %arg11[%c0_125, %c16_126], %310 {strides = array<i32>} : memref<16x64xf32, #tpu.memory_space<vmem>>, vector<16x8xf32>,
    %312 = vector.extract_strided_slice %258 {offsets = [0, 24], sizes = [16, 8], strides = [1, 1]} : vector<16x64xf32> to vector<16x8xf32>
    %313 = vector.extract_strided_slice %252 {offsets = [0, 24], sizes = [8, 8], strides = [1, 1]} : vector<8x64xf32> to vector<8x8xf32>
    %314 = vector.extract_strided_slice %253 {offsets = [0, 24], sizes = [8, 8], strides = [1, 1]} : vector<8x64xf32> to vector<8x8xf32>
    %cst_127 = arith.constant dense<0.000000e+00> : vector<16x8xf32>
    %315 = tpu.matmul %312, %313, %cst_127 {dimension_numbers = #tpu.dot_dimension_numbers<[1], [1], [0], [0], [0, 0, 1, 0], [], []>} : vector<16x8xf32>, vector<8x8xf32>, vector<16x8xf32> -> vector<16x8xf32>
    %cst_128 = arith.constant 0.353553385 : f32
    %316 = vector.broadcast %cst_128 : f32 to vector<16x8xf32>
    %317 = arith.mulf %315, %316 : vector<16x8xf32>
    %cst_129 = arith.constant dense<0xFF800000> : vector<16xf32>
    %318 = vector.multi_reduction <maximumf>, %317, %cst_129 [1] : vector<16x8xf32> to vector<16xf32>
    %319 = vector.shape_cast %318 : vector<16xf32> to vector<16x1xf32>
    %320 = vector.broadcast %319 : vector<16x1xf32> to vector<16x8xf32>
    %321 = arith.subf %317, %320 : vector<16x8xf32>
    %322 = math.exp %321 : vector<16x8xf32>
    %cst_130 = arith.constant dense<0.000000e+00> : vector<16xf32>
    %323 = vector.multi_reduction <add>, %322, %cst_130 [1] : vector<16x8xf32> to vector<16xf32>
    %324 = vector.shape_cast %323 : vector<16xf32> to vector<16x1xf32>
    %325 = vector.broadcast %324 : vector<16x1xf32> to vector<16x8xf32>
    %326 = arith.divf %322, %325 : vector<16x8xf32>
    %cst_131 = arith.constant dense<0.000000e+00> : vector<16x8xf32>
    %327 = tpu.matmul %326, %314, %cst_131 {dimension_numbers = #tpu.dot_dimension_numbers<[1], [0], [0], [1], [0, 0, 1, 1], [], []>} : vector<16x8xf32>, vector<8x8xf32>, vector<16x8xf32> -> vector<16x8xf32>
    %c0_132 = arith.constant 0 : index
    %c24_133 = arith.constant 24 : index
    %328 = vector.load %arg11[%c0_132, %c24_133] : memref<16x64xf32, #tpu.memory_space<vmem>>, vector<16x8xf32>
    tpu.vector_store %arg11[%c0_132, %c24_133], %327 {strides = array<i32>} : memref<16x64xf32, #tpu.memory_space<vmem>>, vector<16x8xf32>,
    %329 = vector.extract_strided_slice %258 {offsets = [0, 32], sizes = [16, 8], strides = [1, 1]} : vector<16x64xf32> to vector<16x8xf32>
    %330 = vector.extract_strided_slice %252 {offsets = [0, 32], sizes = [8, 8], strides = [1, 1]} : vector<8x64xf32> to vector<8x8xf32>
    %331 = vector.extract_strided_slice %253 {offsets = [0, 32], sizes = [8, 8], strides = [1, 1]} : vector<8x64xf32> to vector<8x8xf32>
    %cst_134 = arith.constant dense<0.000000e+00> : vector<16x8xf32>
    %332 = tpu.matmul %329, %330, %cst_134 {dimension_numbers = #tpu.dot_dimension_numbers<[1], [1], [0], [0], [0, 0, 1, 0], [], []>} : vector<16x8xf32>, vector<8x8xf32>, vector<16x8xf32> -> vector<16x8xf32>
    %cst_135 = arith.constant 0.353553385 : f32
    %333 = vector.broadcast %cst_135 : f32 to vector<16x8xf32>
    %334 = arith.mulf %332, %333 : vector<16x8xf32>
    %cst_136 = arith.constant dense<0xFF800000> : vector<16xf32>
    %335 = vector.multi_reduction <maximumf>, %334, %cst_136 [1] : vector<16x8xf32> to vector<16xf32>
    %336 = vector.shape_cast %335 : vector<16xf32> to vector<16x1xf32>
    %337 = vector.broadcast %336 : vector<16x1xf32> to vector<16x8xf32>
    %338 = arith.subf %334, %337 : vector<16x8xf32>
    %339 = math.exp %338 : vector<16x8xf32>
    %cst_137 = arith.constant dense<0.000000e+00> : vector<16xf32>
    %340 = vector.multi_reduction <add>, %339, %cst_137 [1] : vector<16x8xf32> to vector<16xf32>
    %341 = vector.shape_cast %340 : vector<16xf32> to vector<16x1xf32>
    %342 = vector.broadcast %341 : vector<16x1xf32> to vector<16x8xf32>
    %343 = arith.divf %339, %342 : vector<16x8xf32>
    %cst_138 = arith.constant dense<0.000000e+00> : vector<16x8xf32>
    %344 = tpu.matmul %343, %331, %cst_138 {dimension_numbers = #tpu.dot_dimension_numbers<[1], [0], [0], [1], [0, 0, 1, 1], [], []>} : vector<16x8xf32>, vector<8x8xf32>, vector<16x8xf32> -> vector<16x8xf32>
    %c0_139 = arith.constant 0 : index
    %c32_140 = arith.constant 32 : index
    %345 = vector.load %arg11[%c0_139, %c32_140] : memref<16x64xf32, #tpu.memory_space<vmem>>, vector<16x8xf32>
    tpu.vector_store %arg11[%c0_139, %c32_140], %344 {strides = array<i32>} : memref<16x64xf32, #tpu.memory_space<vmem>>, vector<16x8xf32>,
    %346 = vector.extract_strided_slice %258 {offsets = [0, 40], sizes = [16, 8], strides = [1, 1]} : vector<16x64xf32> to vector<16x8xf32>
    %347 = vector.extract_strided_slice %252 {offsets = [0, 40], sizes = [8, 8], strides = [1, 1]} : vector<8x64xf32> to vector<8x8xf32>
    %348 = vector.extract_strided_slice %253 {offsets = [0, 40], sizes = [8, 8], strides = [1, 1]} : vector<8x64xf32> to vector<8x8xf32>
    %cst_141 = arith.constant dense<0.000000e+00> : vector<16x8xf32>
    %349 = tpu.matmul %346, %347, %cst_141 {dimension_numbers = #tpu.dot_dimension_numbers<[1], [1], [0], [0], [0, 0, 1, 0], [], []>} : vector<16x8xf32>, vector<8x8xf32>, vector<16x8xf32> -> vector<16x8xf32>
    %cst_142 = arith.constant 0.353553385 : f32
    %350 = vector.broadcast %cst_142 : f32 to vector<16x8xf32>
    %351 = arith.mulf %349, %350 : vector<16x8xf32>
    %cst_143 = arith.constant dense<0xFF800000> : vector<16xf32>
    %352 = vector.multi_reduction <maximumf>, %351, %cst_143 [1] : vector<16x8xf32> to vector<16xf32>
    %353 = vector.shape_cast %352 : vector<16xf32> to vector<16x1xf32>
    %354 = vector.broadcast %353 : vector<16x1xf32> to vector<16x8xf32>
    %355 = arith.subf %351, %354 : vector<16x8xf32>
    %356 = math.exp %355 : vector<16x8xf32>
    %cst_144 = arith.constant dense<0.000000e+00> : vector<16xf32>
    %357 = vector.multi_reduction <add>, %356, %cst_144 [1] : vector<16x8xf32> to vector<16xf32>
    %358 = vector.shape_cast %357 : vector<16xf32> to vector<16x1xf32>
    %359 = vector.broadcast %358 : vector<16x1xf32> to vector<16x8xf32>
    %360 = arith.divf %356, %359 : vector<16x8xf32>
    %cst_145 = arith.constant dense<0.000000e+00> : vector<16x8xf32>
    %361 = tpu.matmul %360, %348, %cst_145 {dimension_numbers = #tpu.dot_dimension_numbers<[1], [0], [0], [1], [0, 0, 1, 1], [], []>} : vector<16x8xf32>, vector<8x8xf32>, vector<16x8xf32> -> vector<16x8xf32>
    %c0_146 = arith.constant 0 : index
    %c40_147 = arith.constant 40 : index
    %362 = vector.load %arg11[%c0_146, %c40_147] : memref<16x64xf32, #tpu.memory_space<vmem>>, vector<16x8xf32>
    tpu.vector_store %arg11[%c0_146, %c40_147], %361 {strides = array<i32>} : memref<16x64xf32, #tpu.memory_space<vmem>>, vector<16x8xf32>,
    %363 = vector.extract_strided_slice %258 {offsets = [0, 48], sizes = [16, 8], strides = [1, 1]} : vector<16x64xf32> to vector<16x8xf32>
    %364 = vector.extract_strided_slice %252 {offsets = [0, 48], sizes = [8, 8], strides = [1, 1]} : vector<8x64xf32> to vector<8x8xf32>
    %365 = vector.extract_strided_slice %253 {offsets = [0, 48], sizes = [8, 8], strides = [1, 1]} : vector<8x64xf32> to vector<8x8xf32>
    %cst_148 = arith.constant dense<0.000000e+00> : vector<16x8xf32>
    %366 = tpu.matmul %363, %364, %cst_148 {dimension_numbers = #tpu.dot_dimension_numbers<[1], [1], [0], [0], [0, 0, 1, 0], [], []>} : vector<16x8xf32>, vector<8x8xf32>, vector<16x8xf32> -> vector<16x8xf32>
    %cst_149 = arith.constant 0.353553385 : f32
    %367 = vector.broadcast %cst_149 : f32 to vector<16x8xf32>
    %368 = arith.mulf %366, %367 : vector<16x8xf32>
    %cst_150 = arith.constant dense<0xFF800000> : vector<16xf32>
    %369 = vector.multi_reduction <maximumf>, %368, %cst_150 [1] : vector<16x8xf32> to vector<16xf32>
    %370 = vector.shape_cast %369 : vector<16xf32> to vector<16x1xf32>
    %371 = vector.broadcast %370 : vector<16x1xf32> to vector<16x8xf32>
    %372 = arith.subf %368, %371 : vector<16x8xf32>
    %373 = math.exp %372 : vector<16x8xf32>
    %cst_151 = arith.constant dense<0.000000e+00> : vector<16xf32>
    %374 = vector.multi_reduction <add>, %373, %cst_151 [1] : vector<16x8xf32> to vector<16xf32>
    %375 = vector.shape_cast %374 : vector<16xf32> to vector<16x1xf32>
    %376 = vector.broadcast %375 : vector<16x1xf32> to vector<16x8xf32>
    %377 = arith.divf %373, %376 : vector<16x8xf32>
    %cst_152 = arith.constant dense<0.000000e+00> : vector<16x8xf32>
    %378 = tpu.matmul %377, %365, %cst_152 {dimension_numbers = #tpu.dot_dimension_numbers<[1], [0], [0], [1], [0, 0, 1, 1], [], []>} : vector<16x8xf32>, vector<8x8xf32>, vector<16x8xf32> -> vector<16x8xf32>
    %c0_153 = arith.constant 0 : index
    %c48_154 = arith.constant 48 : index
    %379 = vector.load %arg11[%c0_153, %c48_154] : memref<16x64xf32, #tpu.memory_space<vmem>>, vector<16x8xf32>
    tpu.vector_store %arg11[%c0_153, %c48_154], %378 {strides = array<i32>} : memref<16x64xf32, #tpu.memory_space<vmem>>, vector<16x8xf32>,
    %380 = vector.extract_strided_slice %258 {offsets = [0, 56], sizes = [16, 8], strides = [1, 1]} : vector<16x64xf32> to vector<16x8xf32>
    %381 = vector.extract_strided_slice %252 {offsets = [0, 56], sizes = [8, 8], strides = [1, 1]} : vector<8x64xf32> to vector<8x8xf32>
    %382 = vector.extract_strided_slice %253 {offsets = [0, 56], sizes = [8, 8], strides = [1, 1]} : vector<8x64xf32> to vector<8x8xf32>
    %cst_155 = arith.constant dense<0.000000e+00> : vector<16x8xf32>
    %383 = tpu.matmul %380, %381, %cst_155 {dimension_numbers = #tpu.dot_dimension_numbers<[1], [1], [0], [0], [0, 0, 1, 0], [], []>} : vector<16x8xf32>, vector<8x8xf32>, vector<16x8xf32> -> vector<16x8xf32>
    %cst_156 = arith.constant 0.353553385 : f32
    %384 = vector.broadcast %cst_156 : f32 to vector<16x8xf32>
    %385 = arith.mulf %383, %384 : vector<16x8xf32>
    %cst_157 = arith.constant dense<0xFF800000> : vector<16xf32>
    %386 = vector.multi_reduction <maximumf>, %385, %cst_157 [1] : vector<16x8xf32> to vector<16xf32>
    %387 = vector.shape_cast %386 : vector<16xf32> to vector<16x1xf32>
    %388 = vector.broadcast %387 : vector<16x1xf32> to vector<16x8xf32>
    %389 = arith.subf %385, %388 : vector<16x8xf32>
    %390 = math.exp %389 : vector<16x8xf32>
    %cst_158 = arith.constant dense<0.000000e+00> : vector<16xf32>
    %391 = vector.multi_reduction <add>, %390, %cst_158 [1] : vector<16x8xf32> to vector<16xf32>
    %392 = vector.shape_cast %391 : vector<16xf32> to vector<16x1xf32>
    %393 = vector.broadcast %392 : vector<16x1xf32> to vector<16x8xf32>
    %394 = arith.divf %390, %393 : vector<16x8xf32>
    %cst_159 = arith.constant dense<0.000000e+00> : vector<16x8xf32>
    %395 = tpu.matmul %394, %382, %cst_159 {dimension_numbers = #tpu.dot_dimension_numbers<[1], [0], [0], [1], [0, 0, 1, 1], [], []>} : vector<16x8xf32>, vector<8x8xf32>, vector<16x8xf32> -> vector<16x8xf32>
    %c0_160 = arith.constant 0 : index
    %c56_161 = arith.constant 56 : index
    %396 = vector.load %arg11[%c0_160, %c56_161] : memref<16x64xf32, #tpu.memory_space<vmem>>, vector<16x8xf32>
    tpu.vector_store %arg11[%c0_160, %c56_161], %395 {strides = array<i32>} : memref<16x64xf32, #tpu.memory_space<vmem>>, vector<16x8xf32>,
    %c0_162 = arith.constant 0 : index
    %c0_163 = arith.constant 0 : index
    %397 = vector.load %arg11[%c0_162, %c0_163] : memref<16x64xf32, #tpu.memory_space<vmem>>, vector<16x64xf32>
    %cst_164 = arith.constant dense<0.000000e+00> : vector<16x64xf32>
    %398 = tpu.matmul %397, %259, %cst_164 {dimension_numbers = #tpu.dot_dimension_numbers<[1], [0], [0], [1], [0, 0, 1, 1], [], []>} : vector<16x64xf32>, vector<64x64xf32>, vector<16x64xf32> -> vector<16x64xf32>
    %399 = vector.broadcast %260 : vector<1x64xf32> to vector<16x64xf32>
    %400 = arith.addf %398, %399 : vector<16x64xf32>
    %401 = arith.addf %38, %400 : vector<16x64xf32>
    %c34 = arith.constant 34 : index
    %c0_165 = arith.constant 0 : index
    %402 = vector.load %arg6[%c34, %c0_165] : memref<58x256xf32, #tpu.memory_space<vmem>>, vector<1x64xf32>
    %c35 = arith.constant 35 : index
    %c0_166 = arith.constant 0 : index
    %403 = vector.load %arg6[%c35, %c0_166] : memref<58x256xf32, #tpu.memory_space<vmem>>, vector<1x64xf32>
    %cst_167 = arith.constant dense<0.000000e+00> : vector<16xf32>
    %404 = vector.multi_reduction <add>, %401, %cst_167 [1] : vector<16x64xf32> to vector<16xf32>
    %405 = vector.shape_cast %404 : vector<16xf32> to vector<16x1xf32>
    %cst_168 = arith.constant 6.400000e+01 : f32
    %406 = vector.broadcast %cst_168 : f32 to vector<16x1xf32>
    %407 = arith.divf %405, %406 : vector<16x1xf32>
    %408 = vector.broadcast %407 : vector<16x1xf32> to vector<16x64xf32>
    %409 = arith.subf %401, %408 : vector<16x64xf32>
    %410 = arith.mulf %409, %409 : vector<16x64xf32>
    %cst_169 = arith.constant dense<0.000000e+00> : vector<16xf32>
    %411 = vector.multi_reduction <add>, %410, %cst_169 [1] : vector<16x64xf32> to vector<16xf32>
    %412 = vector.shape_cast %411 : vector<16xf32> to vector<16x1xf32>
    %cst_170 = arith.constant 6.400000e+01 : f32
    %413 = vector.broadcast %cst_170 : f32 to vector<16x1xf32>
    %414 = arith.divf %412, %413 : vector<16x1xf32>
    %415 = vector.broadcast %407 : vector<16x1xf32> to vector<16x64xf32>
    %416 = arith.subf %401, %415 : vector<16x64xf32>
    %cst_171 = arith.constant 9.99999997E-7 : f32
    %417 = vector.broadcast %cst_171 : f32 to vector<16x1xf32>
    %418 = arith.addf %414, %417 : vector<16x1xf32>
    %419 = math.rsqrt %418 : vector<16x1xf32>
    %420 = vector.broadcast %419 : vector<16x1xf32> to vector<16x64xf32>
    %421 = arith.mulf %416, %420 : vector<16x64xf32>
    %422 = vector.broadcast %402 : vector<1x64xf32> to vector<16x64xf32>
    %423 = arith.mulf %421, %422 : vector<16x64xf32>
    %424 = vector.broadcast %403 : vector<1x64xf32> to vector<16x64xf32>
    %425 = arith.addf %423, %424 : vector<16x64xf32>
    %cst_172 = arith.constant 0.000000e+00 : f32
    %426 = vector.broadcast %cst_172 : f32 to vector<16x64xf32>
    %427 = arith.maximumf %425, %426 : vector<16x64xf32>
    %428 = arith.addf %425, %427 : vector<16x64xf32>
    %c32_173 = arith.constant 32 : index
    %c0_174 = arith.constant 0 : index
    %429 = vector.load %arg6[%c32_173, %c0_174] : memref<58x256xf32, #tpu.memory_space<vmem>>, vector<1x64xf32>
    %c33 = arith.constant 33 : index
    %c0_175 = arith.constant 0 : index
    %430 = vector.load %arg6[%c33, %c0_175] : memref<58x256xf32, #tpu.memory_space<vmem>>, vector<1x64xf32>
    %cst_176 = arith.constant dense<0.000000e+00> : vector<16xf32>
    %431 = vector.multi_reduction <add>, %428, %cst_176 [1] : vector<16x64xf32> to vector<16xf32>
    %432 = vector.shape_cast %431 : vector<16xf32> to vector<16x1xf32>
    %cst_177 = arith.constant 6.400000e+01 : f32
    %433 = vector.broadcast %cst_177 : f32 to vector<16x1xf32>
    %434 = arith.divf %432, %433 : vector<16x1xf32>
    %435 = vector.broadcast %434 : vector<16x1xf32> to vector<16x64xf32>
    %436 = arith.subf %428, %435 : vector<16x64xf32>
    %437 = arith.mulf %436, %436 : vector<16x64xf32>
    %cst_178 = arith.constant dense<0.000000e+00> : vector<16xf32>
    %438 = vector.multi_reduction <add>, %437, %cst_178 [1] : vector<16x64xf32> to vector<16xf32>
    %439 = vector.shape_cast %438 : vector<16xf32> to vector<16x1xf32>
    %cst_179 = arith.constant 6.400000e+01 : f32
    %440 = vector.broadcast %cst_179 : f32 to vector<16x1xf32>
    %441 = arith.divf %439, %440 : vector<16x1xf32>
    %442 = vector.broadcast %434 : vector<16x1xf32> to vector<16x64xf32>
    %443 = arith.subf %428, %442 : vector<16x64xf32>
    %cst_180 = arith.constant 9.99999997E-7 : f32
    %444 = vector.broadcast %cst_180 : f32 to vector<16x1xf32>
    %445 = arith.addf %441, %444 : vector<16x1xf32>
    %446 = math.rsqrt %445 : vector<16x1xf32>
    %447 = vector.broadcast %446 : vector<16x1xf32> to vector<16x64xf32>
    %448 = arith.mulf %443, %447 : vector<16x64xf32>
    %449 = vector.broadcast %429 : vector<1x64xf32> to vector<16x64xf32>
    %450 = arith.mulf %448, %449 : vector<16x64xf32>
    %451 = vector.broadcast %430 : vector<1x64xf32> to vector<16x64xf32>
    %452 = arith.addf %450, %451 : vector<16x64xf32>
    %c0_181 = arith.constant 0 : index
    %c128 = arith.constant 128 : index
    %453 = vector.load %arg4[%c0_181, %c128] : memref<64x2688xf32, #tpu.memory_space<vmem>>, vector<64x64xf32>
    %c2 = arith.constant 2 : index
    %c0_182 = arith.constant 0 : index
    %454 = vector.load %arg6[%c2, %c0_182] : memref<58x256xf32, #tpu.memory_space<vmem>>, vector<1x64xf32>
    %cst_183 = arith.constant dense<0.000000e+00> : vector<16x64xf32>
    %455 = tpu.matmul %0, %452, %cst_183 {dimension_numbers = #tpu.dot_dimension_numbers<[1], [0], [0], [1], [0, 0, 1, 1], [], []>} : vector<16x16xf32>, vector<16x64xf32>, vector<16x64xf32> -> vector<16x64xf32>
    %456 = arith.addf %455, %452 : vector<16x64xf32>
    %cst_184 = arith.constant dense<0.000000e+00> : vector<16x64xf32>
    %457 = tpu.matmul %456, %453, %cst_184 {dimension_numbers = #tpu.dot_dimension_numbers<[1], [0], [0], [1], [0, 0, 1, 1], [], []>} : vector<16x64xf32>, vector<64x64xf32>, vector<16x64xf32> -> vector<16x64xf32>
    %458 = vector.broadcast %454 : vector<1x64xf32> to vector<16x64xf32>
    %459 = arith.addf %457, %458 : vector<16x64xf32>
    %460 = arith.mulf %459, %459 : vector<16x64xf32>
    %cst_185 = arith.constant dense<0.000000e+00> : vector<16xf32>
    %461 = vector.multi_reduction <add>, %460, %cst_185 [1] : vector<16x64xf32> to vector<16xf32>
    %462 = vector.shape_cast %461 : vector<16xf32> to vector<16x1xf32>
    %463 = math.sqrt %462 : vector<16x1xf32>
    %cst_186 = arith.constant 9.99999996E-13 : f32
    %464 = vector.broadcast %cst_186 : f32 to vector<16x1xf32>
    %465 = arith.maximumf %463, %464 : vector<16x1xf32>
    %466 = vector.broadcast %465 : vector<16x1xf32> to vector<16x64xf32>
    %467 = arith.divf %459, %466 : vector<16x64xf32>
    %468 = vector.broadcast %1 : vector<16x1xf32> to vector<16x64xf32>
    %469 = arith.mulf %467, %468 : vector<16x64xf32>
    %c0_187 = arith.constant 0 : index
    %c256 = arith.constant 256 : index
    %470 = vector.load %arg4[%c0_187, %c256] : memref<64x2688xf32, #tpu.memory_space<vmem>>, vector<64x4xf32>
    %cst_188 = arith.constant dense<0.000000e+00> : vector<16x4xf32>
    %471 = tpu.matmul %469, %470, %cst_188 {dimension_numbers = #tpu.dot_dimension_numbers<[1], [0], [0], [1], [0, 0, 1, 1], [], []>} : vector<16x64xf32>, vector<64x4xf32>, vector<16x4xf32> -> vector<16x4xf32>
    %c3 = arith.constant 3 : index
    %c0_189 = arith.constant 0 : index
    %472 = vector.load %arg6[%c3, %c0_189] : memref<58x256xf32, #tpu.memory_space<vmem>>, vector<1x4xf32>
    %473 = vector.broadcast %472 : vector<1x4xf32> to vector<16x4xf32>
    %474 = arith.addf %471, %473 : vector<16x4xf32>
    %cst_190 = arith.constant dense<0xFF800000> : vector<16xf32>
    %475 = vector.multi_reduction <maximumf>, %474, %cst_190 [1] : vector<16x4xf32> to vector<16xf32>
    %476 = vector.shape_cast %475 : vector<16xf32> to vector<16x1xf32>
    %477 = vector.broadcast %476 : vector<16x1xf32> to vector<16x4xf32>
    %478 = arith.subf %474, %477 : vector<16x4xf32>
    %479 = math.exp %478 : vector<16x4xf32>
    %cst_191 = arith.constant dense<0.000000e+00> : vector<16xf32>
    %480 = vector.multi_reduction <add>, %479, %cst_191 [1] : vector<16x4xf32> to vector<16xf32>
    %481 = vector.shape_cast %480 : vector<16xf32> to vector<16x1xf32>
    %482 = vector.broadcast %481 : vector<16x1xf32> to vector<16x4xf32>
    %483 = arith.divf %479, %482 : vector<16x4xf32>
    %484 = vector.broadcast %1 : vector<16x1xf32> to vector<16x64xf32>
    %485 = arith.mulf %452, %484 : vector<16x64xf32>
    %486 = vector.broadcast %1 : vector<16x1xf32> to vector<16x4xf32>
    %487 = arith.mulf %483, %486 : vector<16x4xf32>
    %488 = tpu.transpose %487, [1, 0] : vector<16x4xf32> -> vector<4x16xf32>
    %cst_192 = arith.constant dense<0.000000e+00> : vector<4x64xf32>
    %489 = tpu.matmul %488, %485, %cst_192 {dimension_numbers = #tpu.dot_dimension_numbers<[1], [0], [0], [1], [0, 0, 1, 1], [], []>} : vector<4x16xf32>, vector<16x64xf32>, vector<4x64xf32> -> vector<4x64xf32>
    %cst_193 = arith.constant dense<0.000000e+00> : vector<4x16xf32>
    %490 = tpu.matmul %488, %0, %cst_193 {dimension_numbers = #tpu.dot_dimension_numbers<[1], [0], [0], [1], [0, 0, 1, 1], [], []>} : vector<4x16xf32>, vector<16x16xf32>, vector<4x16xf32> -> vector<4x16xf32>
    %cst_194 = arith.constant dense<0.000000e+00> : vector<4x4xf32>
    %491 = tpu.matmul %490, %487, %cst_194 {dimension_numbers = #tpu.dot_dimension_numbers<[1], [0], [0], [1], [0, 0, 1, 1], [], []>} : vector<4x16xf32>, vector<16x4xf32>, vector<4x4xf32> -> vector<4x4xf32>
    %492 = tpu.iota {dimensions = array<i32: 0>} : vector<4x4xi32>
    %493 = tpu.iota {dimensions = array<i32: 1>} : vector<4x4xi32>
    %494 = arith.cmpi eq, %492, %493 : vector<4x4xi32>
    %495 = arith.extui %494 : vector<4x4xi1> to vector<4x4xi32>
    %496 = arith.sitofp %495 : vector<4x4xi32> to vector<4x4xf32>
    %497 = arith.mulf %491, %496 : vector<4x4xf32>
    %cst_195 = arith.constant dense<0.000000e+00> : vector<4xf32>
    %498 = vector.multi_reduction <add>, %497, %cst_195 [1] : vector<4x4xf32> to vector<4xf32>
    %499 = vector.shape_cast %498 : vector<4xf32> to vector<4x1xf32>
    %cst_196 = arith.constant dense<0.000000e+00> : vector<1xf32>
    %500 = vector.multi_reduction <add>, %499, %cst_196 [0] : vector<4x1xf32> to vector<1xf32>
    %501 = vector.shape_cast %500 : vector<1xf32> to vector<1x1xf32>
    %cst_197 = arith.constant dense<0.000000e+00> : vector<16xf32>
    %502 = vector.multi_reduction <add>, %0, %cst_197 [1] : vector<16x16xf32> to vector<16xf32>
    %503 = vector.shape_cast %502 : vector<16xf32> to vector<16x1xf32>
    %504 = vector.broadcast %503 : vector<16x1xf32> to vector<16x4xf32>
    %505 = arith.mulf %504, %487 : vector<16x4xf32>
    %506 = arith.mulf %505, %487 : vector<16x4xf32>
    %cst_198 = arith.constant dense<0.000000e+00> : vector<16xf32>
    %507 = vector.multi_reduction <add>, %506, %cst_198 [1] : vector<16x4xf32> to vector<16xf32>
    %508 = vector.shape_cast %507 : vector<16xf32> to vector<16x1xf32>
    %cst_199 = arith.constant dense<0.000000e+00> : vector<1xf32>
    %509 = vector.multi_reduction <add>, %508, %cst_199 [0] : vector<16x1xf32> to vector<1xf32>
    %510 = vector.shape_cast %509 : vector<1xf32> to vector<1x1xf32>
    %511 = arith.divf %501, %510 : vector<1x1xf32>
    %cst_200 = arith.constant 0.000000e+00 : f32
    %512 = vector.broadcast %cst_200 : f32 to vector<1x1xf32>
    %513 = arith.subf %512, %511 : vector<1x1xf32>
    %cst_201 = arith.constant dense<0.000000e+00> : vector<4x4xf32>
    %514 = tpu.matmul %488, %487, %cst_201 {dimension_numbers = #tpu.dot_dimension_numbers<[1], [0], [0], [1], [0, 0, 1, 1], [], []>} : vector<4x16xf32>, vector<16x4xf32>, vector<4x4xf32> -> vector<4x4xf32>
    %515 = arith.mulf %514, %514 : vector<4x4xf32>
    %cst_202 = arith.constant dense<0.000000e+00> : vector<4xf32>
    %516 = vector.multi_reduction <add>, %515, %cst_202 [1] : vector<4x4xf32> to vector<4xf32>
    %517 = vector.shape_cast %516 : vector<4xf32> to vector<4x1xf32>
    %cst_203 = arith.constant dense<0.000000e+00> : vector<1xf32>
    %518 = vector.multi_reduction <add>, %517, %cst_203 [0] : vector<4x1xf32> to vector<1xf32>
    %519 = vector.shape_cast %518 : vector<1xf32> to vector<1x1xf32>
    %520 = math.sqrt %519 : vector<1x1xf32>
    %521 = vector.broadcast %520 : vector<1x1xf32> to vector<4x4xf32>
    %522 = arith.divf %514, %521 : vector<4x4xf32>
    %cst_204 = arith.constant 5.000000e-01 : f32
    %523 = vector.broadcast %cst_204 : f32 to vector<4x4xf32>
    %524 = arith.mulf %496, %523 : vector<4x4xf32>
    %525 = arith.subf %522, %524 : vector<4x4xf32>
    %526 = arith.mulf %525, %525 : vector<4x4xf32>
    %cst_205 = arith.constant dense<0.000000e+00> : vector<4xf32>
    %527 = vector.multi_reduction <add>, %526, %cst_205 [1] : vector<4x4xf32> to vector<4xf32>
    %528 = vector.shape_cast %527 : vector<4xf32> to vector<4x1xf32>
    %cst_206 = arith.constant dense<0.000000e+00> : vector<1xf32>
    %529 = vector.multi_reduction <add>, %528, %cst_206 [0] : vector<4x1xf32> to vector<1xf32>
    %530 = vector.shape_cast %529 : vector<1xf32> to vector<1x1xf32>
    %531 = math.sqrt %530 : vector<1x1xf32>
    %c0_207 = arith.constant 0 : index
    %c0_208 = arith.constant 0 : index
    %532 = vector.load %arg9[%c0_207, %c0_208] : memref<1x1xf32, #tpu.memory_space<vmem>>, vector<1x1xf32>
    tpu.vector_store %arg9[%c0_207, %c0_208], %513 {strides = array<i32>} : memref<1x1xf32, #tpu.memory_space<vmem>>, vector<1x1xf32>,
    %c0_209 = arith.constant 0 : index
    %c0_210 = arith.constant 0 : index
    %533 = vector.load %arg10[%c0_209, %c0_210] : memref<1x1xf32, #tpu.memory_space<vmem>>, vector<1x1xf32>
    tpu.vector_store %arg10[%c0_209, %c0_210], %531 {strides = array<i32>} : memref<1x1xf32, #tpu.memory_space<vmem>>, vector<1x1xf32>,
    %c15 = arith.constant 15 : index
    %c0_211 = arith.constant 0 : index
    %534 = vector.load %arg6[%c15, %c0_211] : memref<58x256xf32, #tpu.memory_space<vmem>>, vector<1x64xf32>
    %c0_212 = arith.constant 0 : index
    %c0_213 = arith.constant 0 : index
    %535 = vector.load %arg11[%c0_212, %c0_213] : memref<16x64xf32, #tpu.memory_space<vmem>>, vector<1x64xf32>
    tpu.vector_store %arg11[%c0_212, %c0_213], %534 {strides = array<i32>} : memref<16x64xf32, #tpu.memory_space<vmem>>, vector<1x64xf32>,
    %536 = vector.extract_strided_slice %245 {offsets = [13, 0], sizes = [1, 64], strides = [1, 1]} : vector<16x64xf32> to vector<1x64xf32>
    %c1_214 = arith.constant 1 : index
    %c0_215 = arith.constant 0 : index
    %537 = vector.load %arg11[%c1_214, %c0_215] : memref<16x64xf32, #tpu.memory_space<vmem>>, vector<1x64xf32>
    tpu.vector_store %arg11[%c1_214, %c0_215], %536 {strides = array<i32>} : memref<16x64xf32, #tpu.memory_space<vmem>>, vector<1x64xf32>,
    %538 = vector.extract_strided_slice %245 {offsets = [6, 0], sizes = [1, 64], strides = [1, 1]} : vector<16x64xf32> to vector<1x64xf32>
    %c2_216 = arith.constant 2 : index
    %c0_217 = arith.constant 0 : index
    %539 = vector.load %arg11[%c2_216, %c0_217] : memref<16x64xf32, #tpu.memory_space<vmem>>, vector<1x64xf32>
    tpu.vector_store %arg11[%c2_216, %c0_217], %538 {strides = array<i32>} : memref<16x64xf32, #tpu.memory_space<vmem>>, vector<1x64xf32>,
    %540 = vector.extract_strided_slice %245 {offsets = [12, 0], sizes = [1, 64], strides = [1, 1]} : vector<16x64xf32> to vector<1x64xf32>
    %c3_218 = arith.constant 3 : index
    %c0_219 = arith.constant 0 : index
    %541 = vector.load %arg11[%c3_218, %c0_219] : memref<16x64xf32, #tpu.memory_space<vmem>>, vector<1x64xf32>
    tpu.vector_store %arg11[%c3_218, %c0_219], %540 {strides = array<i32>} : memref<16x64xf32, #tpu.memory_space<vmem>>, vector<1x64xf32>,
    %542 = vector.extract_strided_slice %245 {offsets = [14, 0], sizes = [1, 64], strides = [1, 1]} : vector<16x64xf32> to vector<1x64xf32>
    %c4_220 = arith.constant 4 : index
    %c0_221 = arith.constant 0 : index
    %543 = vector.load %arg11[%c4_220, %c0_221] : memref<16x64xf32, #tpu.memory_space<vmem>>, vector<1x64xf32>
    tpu.vector_store %arg11[%c4_220, %c0_221], %542 {strides = array<i32>} : memref<16x64xf32, #tpu.memory_space<vmem>>, vector<1x64xf32>,
    %c0_222 = arith.constant 0 : index
    %c0_223 = arith.constant 0 : index
    %544 = vector.load %arg11[%c0_222, %c0_223] : memref<16x64xf32, #tpu.memory_space<vmem>>, vector<5x64xf32>
    %c36 = arith.constant 36 : index
    %c0_224 = arith.constant 0 : index
    %545 = vector.load %arg6[%c36, %c0_224] : memref<58x256xf32, #tpu.memory_space<vmem>>, vector<1x64xf32>
    %c37 = arith.constant 37 : index
    %c0_225 = arith.constant 0 : index
    %546 = vector.load %arg6[%c37, %c0_225] : memref<58x256xf32, #tpu.memory_space<vmem>>, vector<1x64xf32>
    %cst_226 = arith.constant dense<0.000000e+00> : vector<5xf32>
    %547 = vector.multi_reduction <add>, %544, %cst_226 [1] : vector<5x64xf32> to vector<5xf32>
    %548 = vector.shape_cast %547 : vector<5xf32> to vector<5x1xf32>
    %cst_227 = arith.constant 6.400000e+01 : f32
    %549 = vector.broadcast %cst_227 : f32 to vector<5x1xf32>
    %550 = arith.divf %548, %549 : vector<5x1xf32>
    %551 = vector.broadcast %550 : vector<5x1xf32> to vector<5x64xf32>
    %552 = arith.subf %544, %551 : vector<5x64xf32>
    %553 = arith.mulf %552, %552 : vector<5x64xf32>
    %cst_228 = arith.constant dense<0.000000e+00> : vector<5xf32>
    %554 = vector.multi_reduction <add>, %553, %cst_228 [1] : vector<5x64xf32> to vector<5xf32>
    %555 = vector.shape_cast %554 : vector<5xf32> to vector<5x1xf32>
    %cst_229 = arith.constant 6.400000e+01 : f32
    %556 = vector.broadcast %cst_229 : f32 to vector<5x1xf32>
    %557 = arith.divf %555, %556 : vector<5x1xf32>
    %558 = vector.broadcast %550 : vector<5x1xf32> to vector<5x64xf32>
    %559 = arith.subf %544, %558 : vector<5x64xf32>
    %cst_230 = arith.constant 9.99999997E-7 : f32
    %560 = vector.broadcast %cst_230 : f32 to vector<5x1xf32>
    %561 = arith.addf %557, %560 : vector<5x1xf32>
    %562 = math.rsqrt %561 : vector<5x1xf32>
    %563 = vector.broadcast %562 : vector<5x1xf32> to vector<5x64xf32>
    %564 = arith.mulf %559, %563 : vector<5x64xf32>
    %565 = vector.broadcast %545 : vector<1x64xf32> to vector<5x64xf32>
    %566 = arith.mulf %564, %565 : vector<5x64xf32>
    %567 = vector.broadcast %546 : vector<1x64xf32> to vector<5x64xf32>
    %568 = arith.addf %566, %567 : vector<5x64xf32>
    %c0_231 = arith.constant 0 : index
    %c1152 = arith.constant 1152 : index
    %569 = vector.load %arg4[%c0_231, %c1152] : memref<64x2688xf32, #tpu.memory_space<vmem>>, vector<64x192xf32>
    %cst_232 = arith.constant dense<0.000000e+00> : vector<5x192xf32>
    %570 = tpu.matmul %568, %569, %cst_232 {dimension_numbers = #tpu.dot_dimension_numbers<[1], [0], [0], [1], [0, 0, 1, 1], [], []>} : vector<5x64xf32>, vector<64x192xf32>, vector<5x192xf32> -> vector<5x192xf32>
    %c38 = arith.constant 38 : index
    %c0_233 = arith.constant 0 : index
    %571 = vector.load %arg6[%c38, %c0_233] : memref<58x256xf32, #tpu.memory_space<vmem>>, vector<1x192xf32>
    %572 = vector.broadcast %571 : vector<1x192xf32> to vector<5x192xf32>
    %573 = arith.addf %570, %572 : vector<5x192xf32>
    %574 = vector.extract_strided_slice %573 {offsets = [0, 0], sizes = [5, 64], strides = [1, 1]} : vector<5x192xf32> to vector<5x64xf32>
    %575 = vector.extract_strided_slice %573 {offsets = [0, 64], sizes = [5, 64], strides = [1, 1]} : vector<5x192xf32> to vector<5x64xf32>
    %576 = vector.extract_strided_slice %573 {offsets = [0, 128], sizes = [5, 64], strides = [1, 1]} : vector<5x192xf32> to vector<5x64xf32>
    %c0_234 = arith.constant 0 : index
    %c1408 = arith.constant 1408 : index
    %577 = vector.load %arg4[%c0_234, %c1408] : memref<64x2688xf32, #tpu.memory_space<vmem>>, vector<64x64xf32>
    %c39 = arith.constant 39 : index
    %c0_235 = arith.constant 0 : index
    %578 = vector.load %arg6[%c39, %c0_235] : memref<58x256xf32, #tpu.memory_space<vmem>>, vector<1x64xf32>
    %579 = vector.extract_strided_slice %574 {offsets = [0, 0], sizes = [5, 8], strides = [1, 1]} : vector<5x64xf32> to vector<5x8xf32>
    %580 = vector.extract_strided_slice %575 {offsets = [0, 0], sizes = [5, 8], strides = [1, 1]} : vector<5x64xf32> to vector<5x8xf32>
    %581 = vector.extract_strided_slice %576 {offsets = [0, 0], sizes = [5, 8], strides = [1, 1]} : vector<5x64xf32> to vector<5x8xf32>
    %cst_236 = arith.constant dense<0.000000e+00> : vector<5x5xf32>
    %582 = tpu.matmul %579, %580, %cst_236 {dimension_numbers = #tpu.dot_dimension_numbers<[1], [1], [0], [0], [0, 0, 1, 0], [], []>} : vector<5x8xf32>, vector<5x8xf32>, vector<5x5xf32> -> vector<5x5xf32>
    %cst_237 = arith.constant 0.353553385 : f32
    %583 = vector.broadcast %cst_237 : f32 to vector<5x5xf32>
    %584 = arith.mulf %582, %583 : vector<5x5xf32>
    %cst_238 = arith.constant dense<0xFF800000> : vector<5xf32>
    %585 = vector.multi_reduction <maximumf>, %584, %cst_238 [1] : vector<5x5xf32> to vector<5xf32>
    %586 = vector.shape_cast %585 : vector<5xf32> to vector<5x1xf32>
    %587 = vector.broadcast %586 : vector<5x1xf32> to vector<5x5xf32>
    %588 = arith.subf %584, %587 : vector<5x5xf32>
    %589 = math.exp %588 : vector<5x5xf32>
    %cst_239 = arith.constant dense<0.000000e+00> : vector<5xf32>
    %590 = vector.multi_reduction <add>, %589, %cst_239 [1] : vector<5x5xf32> to vector<5xf32>
    %591 = vector.shape_cast %590 : vector<5xf32> to vector<5x1xf32>
    %592 = vector.broadcast %591 : vector<5x1xf32> to vector<5x5xf32>
    %593 = arith.divf %589, %592 : vector<5x5xf32>
    %cst_240 = arith.constant dense<0.000000e+00> : vector<5x8xf32>
    %594 = tpu.matmul %593, %581, %cst_240 {dimension_numbers = #tpu.dot_dimension_numbers<[1], [0], [0], [1], [0, 0, 1, 1], [], []>} : vector<5x5xf32>, vector<5x8xf32>, vector<5x8xf32> -> vector<5x8xf32>
    %c0_241 = arith.constant 0 : index
    %c0_242 = arith.constant 0 : index
    %595 = vector.load %arg11[%c0_241, %c0_242] : memref<16x64xf32, #tpu.memory_space<vmem>>, vector<5x8xf32>
    tpu.vector_store %arg11[%c0_241, %c0_242], %594 {strides = array<i32>} : memref<16x64xf32, #tpu.memory_space<vmem>>, vector<5x8xf32>,
    %596 = vector.extract_strided_slice %574 {offsets = [0, 8], sizes = [5, 8], strides = [1, 1]} : vector<5x64xf32> to vector<5x8xf32>
    %597 = vector.extract_strided_slice %575 {offsets = [0, 8], sizes = [5, 8], strides = [1, 1]} : vector<5x64xf32> to vector<5x8xf32>
    %598 = vector.extract_strided_slice %576 {offsets = [0, 8], sizes = [5, 8], strides = [1, 1]} : vector<5x64xf32> to vector<5x8xf32>
    %cst_243 = arith.constant dense<0.000000e+00> : vector<5x5xf32>
    %599 = tpu.matmul %596, %597, %cst_243 {dimension_numbers = #tpu.dot_dimension_numbers<[1], [1], [0], [0], [0, 0, 1, 0], [], []>} : vector<5x8xf32>, vector<5x8xf32>, vector<5x5xf32> -> vector<5x5xf32>
    %cst_244 = arith.constant 0.353553385 : f32
    %600 = vector.broadcast %cst_244 : f32 to vector<5x5xf32>
    %601 = arith.mulf %599, %600 : vector<5x5xf32>
    %cst_245 = arith.constant dense<0xFF800000> : vector<5xf32>
    %602 = vector.multi_reduction <maximumf>, %601, %cst_245 [1] : vector<5x5xf32> to vector<5xf32>
    %603 = vector.shape_cast %602 : vector<5xf32> to vector<5x1xf32>
    %604 = vector.broadcast %603 : vector<5x1xf32> to vector<5x5xf32>
    %605 = arith.subf %601, %604 : vector<5x5xf32>
    %606 = math.exp %605 : vector<5x5xf32>
    %cst_246 = arith.constant dense<0.000000e+00> : vector<5xf32>
    %607 = vector.multi_reduction <add>, %606, %cst_246 [1] : vector<5x5xf32> to vector<5xf32>
    %608 = vector.shape_cast %607 : vector<5xf32> to vector<5x1xf32>
    %609 = vector.broadcast %608 : vector<5x1xf32> to vector<5x5xf32>
    %610 = arith.divf %606, %609 : vector<5x5xf32>
    %cst_247 = arith.constant dense<0.000000e+00> : vector<5x8xf32>
    %611 = tpu.matmul %610, %598, %cst_247 {dimension_numbers = #tpu.dot_dimension_numbers<[1], [0], [0], [1], [0, 0, 1, 1], [], []>} : vector<5x5xf32>, vector<5x8xf32>, vector<5x8xf32> -> vector<5x8xf32>
    %c0_248 = arith.constant 0 : index
    %c8_249 = arith.constant 8 : index
    %612 = vector.load %arg11[%c0_248, %c8_249] : memref<16x64xf32, #tpu.memory_space<vmem>>, vector<5x8xf32>
    tpu.vector_store %arg11[%c0_248, %c8_249], %611 {strides = array<i32>} : memref<16x64xf32, #tpu.memory_space<vmem>>, vector<5x8xf32>,
    %613 = vector.extract_strided_slice %574 {offsets = [0, 16], sizes = [5, 8], strides = [1, 1]} : vector<5x64xf32> to vector<5x8xf32>
    %614 = vector.extract_strided_slice %575 {offsets = [0, 16], sizes = [5, 8], strides = [1, 1]} : vector<5x64xf32> to vector<5x8xf32>
    %615 = vector.extract_strided_slice %576 {offsets = [0, 16], sizes = [5, 8], strides = [1, 1]} : vector<5x64xf32> to vector<5x8xf32>
    %cst_250 = arith.constant dense<0.000000e+00> : vector<5x5xf32>
    %616 = tpu.matmul %613, %614, %cst_250 {dimension_numbers = #tpu.dot_dimension_numbers<[1], [1], [0], [0], [0, 0, 1, 0], [], []>} : vector<5x8xf32>, vector<5x8xf32>, vector<5x5xf32> -> vector<5x5xf32>
    %cst_251 = arith.constant 0.353553385 : f32
    %617 = vector.broadcast %cst_251 : f32 to vector<5x5xf32>
    %618 = arith.mulf %616, %617 : vector<5x5xf32>
    %cst_252 = arith.constant dense<0xFF800000> : vector<5xf32>
    %619 = vector.multi_reduction <maximumf>, %618, %cst_252 [1] : vector<5x5xf32> to vector<5xf32>
    %620 = vector.shape_cast %619 : vector<5xf32> to vector<5x1xf32>
    %621 = vector.broadcast %620 : vector<5x1xf32> to vector<5x5xf32>
    %622 = arith.subf %618, %621 : vector<5x5xf32>
    %623 = math.exp %622 : vector<5x5xf32>
    %cst_253 = arith.constant dense<0.000000e+00> : vector<5xf32>
    %624 = vector.multi_reduction <add>, %623, %cst_253 [1] : vector<5x5xf32> to vector<5xf32>
    %625 = vector.shape_cast %624 : vector<5xf32> to vector<5x1xf32>
    %626 = vector.broadcast %625 : vector<5x1xf32> to vector<5x5xf32>
    %627 = arith.divf %623, %626 : vector<5x5xf32>
    %cst_254 = arith.constant dense<0.000000e+00> : vector<5x8xf32>
    %628 = tpu.matmul %627, %615, %cst_254 {dimension_numbers = #tpu.dot_dimension_numbers<[1], [0], [0], [1], [0, 0, 1, 1], [], []>} : vector<5x5xf32>, vector<5x8xf32>, vector<5x8xf32> -> vector<5x8xf32>
    %c0_255 = arith.constant 0 : index
    %c16_256 = arith.constant 16 : index
    %629 = vector.load %arg11[%c0_255, %c16_256] : memref<16x64xf32, #tpu.memory_space<vmem>>, vector<5x8xf32>
    tpu.vector_store %arg11[%c0_255, %c16_256], %628 {strides = array<i32>} : memref<16x64xf32, #tpu.memory_space<vmem>>, vector<5x8xf32>,
    %630 = vector.extract_strided_slice %574 {offsets = [0, 24], sizes = [5, 8], strides = [1, 1]} : vector<5x64xf32> to vector<5x8xf32>
    %631 = vector.extract_strided_slice %575 {offsets = [0, 24], sizes = [5, 8], strides = [1, 1]} : vector<5x64xf32> to vector<5x8xf32>
    %632 = vector.extract_strided_slice %576 {offsets = [0, 24], sizes = [5, 8], strides = [1, 1]} : vector<5x64xf32> to vector<5x8xf32>
    %cst_257 = arith.constant dense<0.000000e+00> : vector<5x5xf32>
    %633 = tpu.matmul %630, %631, %cst_257 {dimension_numbers = #tpu.dot_dimension_numbers<[1], [1], [0], [0], [0, 0, 1, 0], [], []>} : vector<5x8xf32>, vector<5x8xf32>, vector<5x5xf32> -> vector<5x5xf32>
    %cst_258 = arith.constant 0.353553385 : f32
    %634 = vector.broadcast %cst_258 : f32 to vector<5x5xf32>
    %635 = arith.mulf %633, %634 : vector<5x5xf32>
    %cst_259 = arith.constant dense<0xFF800000> : vector<5xf32>
    %636 = vector.multi_reduction <maximumf>, %635, %cst_259 [1] : vector<5x5xf32> to vector<5xf32>
    %637 = vector.shape_cast %636 : vector<5xf32> to vector<5x1xf32>
    %638 = vector.broadcast %637 : vector<5x1xf32> to vector<5x5xf32>
    %639 = arith.subf %635, %638 : vector<5x5xf32>
    %640 = math.exp %639 : vector<5x5xf32>
    %cst_260 = arith.constant dense<0.000000e+00> : vector<5xf32>
    %641 = vector.multi_reduction <add>, %640, %cst_260 [1] : vector<5x5xf32> to vector<5xf32>
    %642 = vector.shape_cast %641 : vector<5xf32> to vector<5x1xf32>
    %643 = vector.broadcast %642 : vector<5x1xf32> to vector<5x5xf32>
    %644 = arith.divf %640, %643 : vector<5x5xf32>
    %cst_261 = arith.constant dense<0.000000e+00> : vector<5x8xf32>
    %645 = tpu.matmul %644, %632, %cst_261 {dimension_numbers = #tpu.dot_dimension_numbers<[1], [0], [0], [1], [0, 0, 1, 1], [], []>} : vector<5x5xf32>, vector<5x8xf32>, vector<5x8xf32> -> vector<5x8xf32>
    %c0_262 = arith.constant 0 : index
    %c24_263 = arith.constant 24 : index
    %646 = vector.load %arg11[%c0_262, %c24_263] : memref<16x64xf32, #tpu.memory_space<vmem>>, vector<5x8xf32>
    tpu.vector_store %arg11[%c0_262, %c24_263], %645 {strides = array<i32>} : memref<16x64xf32, #tpu.memory_space<vmem>>, vector<5x8xf32>,
    %647 = vector.extract_strided_slice %574 {offsets = [0, 32], sizes = [5, 8], strides = [1, 1]} : vector<5x64xf32> to vector<5x8xf32>
    %648 = vector.extract_strided_slice %575 {offsets = [0, 32], sizes = [5, 8], strides = [1, 1]} : vector<5x64xf32> to vector<5x8xf32>
    %649 = vector.extract_strided_slice %576 {offsets = [0, 32], sizes = [5, 8], strides = [1, 1]} : vector<5x64xf32> to vector<5x8xf32>
    %cst_264 = arith.constant dense<0.000000e+00> : vector<5x5xf32>
    %650 = tpu.matmul %647, %648, %cst_264 {dimension_numbers = #tpu.dot_dimension_numbers<[1], [1], [0], [0], [0, 0, 1, 0], [], []>} : vector<5x8xf32>, vector<5x8xf32>, vector<5x5xf32> -> vector<5x5xf32>
    %cst_265 = arith.constant 0.353553385 : f32
    %651 = vector.broadcast %cst_265 : f32 to vector<5x5xf32>
    %652 = arith.mulf %650, %651 : vector<5x5xf32>
    %cst_266 = arith.constant dense<0xFF800000> : vector<5xf32>
    %653 = vector.multi_reduction <maximumf>, %652, %cst_266 [1] : vector<5x5xf32> to vector<5xf32>
    %654 = vector.shape_cast %653 : vector<5xf32> to vector<5x1xf32>
    %655 = vector.broadcast %654 : vector<5x1xf32> to vector<5x5xf32>
    %656 = arith.subf %652, %655 : vector<5x5xf32>
    %657 = math.exp %656 : vector<5x5xf32>
    %cst_267 = arith.constant dense<0.000000e+00> : vector<5xf32>
    %658 = vector.multi_reduction <add>, %657, %cst_267 [1] : vector<5x5xf32> to vector<5xf32>
    %659 = vector.shape_cast %658 : vector<5xf32> to vector<5x1xf32>
    %660 = vector.broadcast %659 : vector<5x1xf32> to vector<5x5xf32>
    %661 = arith.divf %657, %660 : vector<5x5xf32>
    %cst_268 = arith.constant dense<0.000000e+00> : vector<5x8xf32>
    %662 = tpu.matmul %661, %649, %cst_268 {dimension_numbers = #tpu.dot_dimension_numbers<[1], [0], [0], [1], [0, 0, 1, 1], [], []>} : vector<5x5xf32>, vector<5x8xf32>, vector<5x8xf32> -> vector<5x8xf32>
    %c0_269 = arith.constant 0 : index
    %c32_270 = arith.constant 32 : index
    %663 = vector.load %arg11[%c0_269, %c32_270] : memref<16x64xf32, #tpu.memory_space<vmem>>, vector<5x8xf32>
    tpu.vector_store %arg11[%c0_269, %c32_270], %662 {strides = array<i32>} : memref<16x64xf32, #tpu.memory_space<vmem>>, vector<5x8xf32>,
    %664 = vector.extract_strided_slice %574 {offsets = [0, 40], sizes = [5, 8], strides = [1, 1]} : vector<5x64xf32> to vector<5x8xf32>
    %665 = vector.extract_strided_slice %575 {offsets = [0, 40], sizes = [5, 8], strides = [1, 1]} : vector<5x64xf32> to vector<5x8xf32>
    %666 = vector.extract_strided_slice %576 {offsets = [0, 40], sizes = [5, 8], strides = [1, 1]} : vector<5x64xf32> to vector<5x8xf32>
    %cst_271 = arith.constant dense<0.000000e+00> : vector<5x5xf32>
    %667 = tpu.matmul %664, %665, %cst_271 {dimension_numbers = #tpu.dot_dimension_numbers<[1], [1], [0], [0], [0, 0, 1, 0], [], []>} : vector<5x8xf32>, vector<5x8xf32>, vector<5x5xf32> -> vector<5x5xf32>
    %cst_272 = arith.constant 0.353553385 : f32
    %668 = vector.broadcast %cst_272 : f32 to vector<5x5xf32>
    %669 = arith.mulf %667, %668 : vector<5x5xf32>
    %cst_273 = arith.constant dense<0xFF800000> : vector<5xf32>
    %670 = vector.multi_reduction <maximumf>, %669, %cst_273 [1] : vector<5x5xf32> to vector<5xf32>
    %671 = vector.shape_cast %670 : vector<5xf32> to vector<5x1xf32>
    %672 = vector.broadcast %671 : vector<5x1xf32> to vector<5x5xf32>
    %673 = arith.subf %669, %672 : vector<5x5xf32>
    %674 = math.exp %673 : vector<5x5xf32>
    %cst_274 = arith.constant dense<0.000000e+00> : vector<5xf32>
    %675 = vector.multi_reduction <add>, %674, %cst_274 [1] : vector<5x5xf32> to vector<5xf32>
    %676 = vector.shape_cast %675 : vector<5xf32> to vector<5x1xf32>
    %677 = vector.broadcast %676 : vector<5x1xf32> to vector<5x5xf32>
    %678 = arith.divf %674, %677 : vector<5x5xf32>
    %cst_275 = arith.constant dense<0.000000e+00> : vector<5x8xf32>
    %679 = tpu.matmul %678, %666, %cst_275 {dimension_numbers = #tpu.dot_dimension_numbers<[1], [0], [0], [1], [0, 0, 1, 1], [], []>} : vector<5x5xf32>, vector<5x8xf32>, vector<5x8xf32> -> vector<5x8xf32>
    %c0_276 = arith.constant 0 : index
    %c40_277 = arith.constant 40 : index
    %680 = vector.load %arg11[%c0_276, %c40_277] : memref<16x64xf32, #tpu.memory_space<vmem>>, vector<5x8xf32>
    tpu.vector_store %arg11[%c0_276, %c40_277], %679 {strides = array<i32>} : memref<16x64xf32, #tpu.memory_space<vmem>>, vector<5x8xf32>,
    %681 = vector.extract_strided_slice %574 {offsets = [0, 48], sizes = [5, 8], strides = [1, 1]} : vector<5x64xf32> to vector<5x8xf32>
    %682 = vector.extract_strided_slice %575 {offsets = [0, 48], sizes = [5, 8], strides = [1, 1]} : vector<5x64xf32> to vector<5x8xf32>
    %683 = vector.extract_strided_slice %576 {offsets = [0, 48], sizes = [5, 8], strides = [1, 1]} : vector<5x64xf32> to vector<5x8xf32>
    %cst_278 = arith.constant dense<0.000000e+00> : vector<5x5xf32>
    %684 = tpu.matmul %681, %682, %cst_278 {dimension_numbers = #tpu.dot_dimension_numbers<[1], [1], [0], [0], [0, 0, 1, 0], [], []>} : vector<5x8xf32>, vector<5x8xf32>, vector<5x5xf32> -> vector<5x5xf32>
    %cst_279 = arith.constant 0.353553385 : f32
    %685 = vector.broadcast %cst_279 : f32 to vector<5x5xf32>
    %686 = arith.mulf %684, %685 : vector<5x5xf32>
    %cst_280 = arith.constant dense<0xFF800000> : vector<5xf32>
    %687 = vector.multi_reduction <maximumf>, %686, %cst_280 [1] : vector<5x5xf32> to vector<5xf32>
    %688 = vector.shape_cast %687 : vector<5xf32> to vector<5x1xf32>
    %689 = vector.broadcast %688 : vector<5x1xf32> to vector<5x5xf32>
    %690 = arith.subf %686, %689 : vector<5x5xf32>
    %691 = math.exp %690 : vector<5x5xf32>
    %cst_281 = arith.constant dense<0.000000e+00> : vector<5xf32>
    %692 = vector.multi_reduction <add>, %691, %cst_281 [1] : vector<5x5xf32> to vector<5xf32>
    %693 = vector.shape_cast %692 : vector<5xf32> to vector<5x1xf32>
    %694 = vector.broadcast %693 : vector<5x1xf32> to vector<5x5xf32>
    %695 = arith.divf %691, %694 : vector<5x5xf32>
    %cst_282 = arith.constant dense<0.000000e+00> : vector<5x8xf32>
    %696 = tpu.matmul %695, %683, %cst_282 {dimension_numbers = #tpu.dot_dimension_numbers<[1], [0], [0], [1], [0, 0, 1, 1], [], []>} : vector<5x5xf32>, vector<5x8xf32>, vector<5x8xf32> -> vector<5x8xf32>
    %c0_283 = arith.constant 0 : index
    %c48_284 = arith.constant 48 : index
    %697 = vector.load %arg11[%c0_283, %c48_284] : memref<16x64xf32, #tpu.memory_space<vmem>>, vector<5x8xf32>
    tpu.vector_store %arg11[%c0_283, %c48_284], %696 {strides = array<i32>} : memref<16x64xf32, #tpu.memory_space<vmem>>, vector<5x8xf32>,
    %698 = vector.extract_strided_slice %574 {offsets = [0, 56], sizes = [5, 8], strides = [1, 1]} : vector<5x64xf32> to vector<5x8xf32>
    %699 = vector.extract_strided_slice %575 {offsets = [0, 56], sizes = [5, 8], strides = [1, 1]} : vector<5x64xf32> to vector<5x8xf32>
    %700 = vector.extract_strided_slice %576 {offsets = [0, 56], sizes = [5, 8], strides = [1, 1]} : vector<5x64xf32> to vector<5x8xf32>
    %cst_285 = arith.constant dense<0.000000e+00> : vector<5x5xf32>
    %701 = tpu.matmul %698, %699, %cst_285 {dimension_numbers = #tpu.dot_dimension_numbers<[1], [1], [0], [0], [0, 0, 1, 0], [], []>} : vector<5x8xf32>, vector<5x8xf32>, vector<5x5xf32> -> vector<5x5xf32>
    %cst_286 = arith.constant 0.353553385 : f32
    %702 = vector.broadcast %cst_286 : f32 to vector<5x5xf32>
    %703 = arith.mulf %701, %702 : vector<5x5xf32>
    %cst_287 = arith.constant dense<0xFF800000> : vector<5xf32>
    %704 = vector.multi_reduction <maximumf>, %703, %cst_287 [1] : vector<5x5xf32> to vector<5xf32>
    %705 = vector.shape_cast %704 : vector<5xf32> to vector<5x1xf32>
    %706 = vector.broadcast %705 : vector<5x1xf32> to vector<5x5xf32>
    %707 = arith.subf %703, %706 : vector<5x5xf32>
    %708 = math.exp %707 : vector<5x5xf32>
    %cst_288 = arith.constant dense<0.000000e+00> : vector<5xf32>
    %709 = vector.multi_reduction <add>, %708, %cst_288 [1] : vector<5x5xf32> to vector<5xf32>
    %710 = vector.shape_cast %709 : vector<5xf32> to vector<5x1xf32>
    %711 = vector.broadcast %710 : vector<5x1xf32> to vector<5x5xf32>
    %712 = arith.divf %708, %711 : vector<5x5xf32>
    %cst_289 = arith.constant dense<0.000000e+00> : vector<5x8xf32>
    %713 = tpu.matmul %712, %700, %cst_289 {dimension_numbers = #tpu.dot_dimension_numbers<[1], [0], [0], [1], [0, 0, 1, 1], [], []>} : vector<5x5xf32>, vector<5x8xf32>, vector<5x8xf32> -> vector<5x8xf32>
    %c0_290 = arith.constant 0 : index
    %c56_291 = arith.constant 56 : index
    %714 = vector.load %arg11[%c0_290, %c56_291] : memref<16x64xf32, #tpu.memory_space<vmem>>, vector<5x8xf32>
    tpu.vector_store %arg11[%c0_290, %c56_291], %713 {strides = array<i32>} : memref<16x64xf32, #tpu.memory_space<vmem>>, vector<5x8xf32>,
    %c0_292 = arith.constant 0 : index
    %c0_293 = arith.constant 0 : index
    %715 = vector.load %arg11[%c0_292, %c0_293] : memref<16x64xf32, #tpu.memory_space<vmem>>, vector<5x64xf32>
    %cst_294 = arith.constant dense<0.000000e+00> : vector<5x64xf32>
    %716 = tpu.matmul %715, %577, %cst_294 {dimension_numbers = #tpu.dot_dimension_numbers<[1], [0], [0], [1], [0, 0, 1, 1], [], []>} : vector<5x64xf32>, vector<64x64xf32>, vector<5x64xf32> -> vector<5x64xf32>
    %717 = vector.broadcast %578 : vector<1x64xf32> to vector<5x64xf32>
    %718 = arith.addf %716, %717 : vector<5x64xf32>
    %719 = arith.addf %544, %718 : vector<5x64xf32>
    %c40_295 = arith.constant 40 : index
    %c0_296 = arith.constant 0 : index
    %720 = vector.load %arg6[%c40_295, %c0_296] : memref<58x256xf32, #tpu.memory_space<vmem>>, vector<1x64xf32>
    %c41 = arith.constant 41 : index
    %c0_297 = arith.constant 0 : index
    %721 = vector.load %arg6[%c41, %c0_297] : memref<58x256xf32, #tpu.memory_space<vmem>>, vector<1x64xf32>
    %cst_298 = arith.constant dense<0.000000e+00> : vector<5xf32>
    %722 = vector.multi_reduction <add>, %719, %cst_298 [1] : vector<5x64xf32> to vector<5xf32>
    %723 = vector.shape_cast %722 : vector<5xf32> to vector<5x1xf32>
    %cst_299 = arith.constant 6.400000e+01 : f32
    %724 = vector.broadcast %cst_299 : f32 to vector<5x1xf32>
    %725 = arith.divf %723, %724 : vector<5x1xf32>
    %726 = vector.broadcast %725 : vector<5x1xf32> to vector<5x64xf32>
    %727 = arith.subf %719, %726 : vector<5x64xf32>
    %728 = arith.mulf %727, %727 : vector<5x64xf32>
    %cst_300 = arith.constant dense<0.000000e+00> : vector<5xf32>
    %729 = vector.multi_reduction <add>, %728, %cst_300 [1] : vector<5x64xf32> to vector<5xf32>
    %730 = vector.shape_cast %729 : vector<5xf32> to vector<5x1xf32>
    %cst_301 = arith.constant 6.400000e+01 : f32
    %731 = vector.broadcast %cst_301 : f32 to vector<5x1xf32>
    %732 = arith.divf %730, %731 : vector<5x1xf32>
    %733 = vector.broadcast %725 : vector<5x1xf32> to vector<5x64xf32>
    %734 = arith.subf %719, %733 : vector<5x64xf32>
    %cst_302 = arith.constant 9.99999997E-7 : f32
    %735 = vector.broadcast %cst_302 : f32 to vector<5x1xf32>
    %736 = arith.addf %732, %735 : vector<5x1xf32>
    %737 = math.rsqrt %736 : vector<5x1xf32>
    %738 = vector.broadcast %737 : vector<5x1xf32> to vector<5x64xf32>
    %739 = arith.mulf %734, %738 : vector<5x64xf32>
    %740 = vector.broadcast %720 : vector<1x64xf32> to vector<5x64xf32>
    %741 = arith.mulf %739, %740 : vector<5x64xf32>
    %742 = vector.broadcast %721 : vector<1x64xf32> to vector<5x64xf32>
    %743 = arith.addf %741, %742 : vector<5x64xf32>
    %c0_303 = arith.constant 0 : index
    %c1536 = arith.constant 1536 : index
    %744 = vector.load %arg4[%c0_303, %c1536] : memref<64x2688xf32, #tpu.memory_space<vmem>>, vector<64x256xf32>
    %cst_304 = arith.constant dense<0.000000e+00> : vector<5x256xf32>
    %745 = tpu.matmul %743, %744, %cst_304 {dimension_numbers = #tpu.dot_dimension_numbers<[1], [0], [0], [1], [0, 0, 1, 1], [], []>} : vector<5x64xf32>, vector<64x256xf32>, vector<5x256xf32> -> vector<5x256xf32>
    %c42 = arith.constant 42 : index
    %c0_305 = arith.constant 0 : index
    %746 = vector.load %arg6[%c42, %c0_305] : memref<58x256xf32, #tpu.memory_space<vmem>>, vector<1x256xf32>
    %747 = vector.broadcast %746 : vector<1x256xf32> to vector<5x256xf32>
    %748 = arith.addf %745, %747 : vector<5x256xf32>
    %749 = arith.mulf %748, %748 : vector<5x256xf32>
    %750 = arith.mulf %748, %749 : vector<5x256xf32>
    %cst_306 = arith.constant 4.471500e-02 : f32
    %751 = vector.broadcast %cst_306 : f32 to vector<5x256xf32>
    %752 = arith.mulf %751, %750 : vector<5x256xf32>
    %753 = arith.addf %748, %752 : vector<5x256xf32>
    %cst_307 = arith.constant 0.797884583 : f32
    %754 = vector.broadcast %cst_307 : f32 to vector<5x256xf32>
    %755 = arith.mulf %754, %753 : vector<5x256xf32>
    %756 = math.tanh %755 : vector<5x256xf32>
    %cst_308 = arith.constant 1.000000e+00 : f32
    %757 = vector.broadcast %cst_308 : f32 to vector<5x256xf32>
    %758 = arith.addf %757, %756 : vector<5x256xf32>
    %cst_309 = arith.constant 5.000000e-01 : f32
    %759 = vector.broadcast %cst_309 : f32 to vector<5x256xf32>
    %760 = arith.mulf %759, %758 : vector<5x256xf32>
    %761 = arith.mulf %748, %760 : vector<5x256xf32>
    %c0_310 = arith.constant 0 : index
    %c0_311 = arith.constant 0 : index
    %762 = vector.load %arg5[%c0_310, %c0_311] : memref<256x256xf32, #tpu.memory_space<vmem>>, vector<256x64xf32>
    %cst_312 = arith.constant dense<0.000000e+00> : vector<5x64xf32>
    %763 = tpu.matmul %761, %762, %cst_312 {dimension_numbers = #tpu.dot_dimension_numbers<[1], [0], [0], [1], [0, 0, 1, 1], [], []>} : vector<5x256xf32>, vector<256x64xf32>, vector<5x64xf32> -> vector<5x64xf32>
    %764 = arith.addf %719, %763 : vector<5x64xf32>
    %c43 = arith.constant 43 : index
    %c0_313 = arith.constant 0 : index
    %765 = vector.load %arg6[%c43, %c0_313] : memref<58x256xf32, #tpu.memory_space<vmem>>, vector<1x64xf32>
    %766 = vector.broadcast %765 : vector<1x64xf32> to vector<5x64xf32>
    %767 = arith.addf %764, %766 : vector<5x64xf32>
    %c44 = arith.constant 44 : index
    %c0_314 = arith.constant 0 : index
    %768 = vector.load %arg6[%c44, %c0_314] : memref<58x256xf32, #tpu.memory_space<vmem>>, vector<1x64xf32>
    %c45 = arith.constant 45 : index
    %c0_315 = arith.constant 0 : index
    %769 = vector.load %arg6[%c45, %c0_315] : memref<58x256xf32, #tpu.memory_space<vmem>>, vector<1x64xf32>
    %cst_316 = arith.constant dense<0.000000e+00> : vector<5xf32>
    %770 = vector.multi_reduction <add>, %767, %cst_316 [1] : vector<5x64xf32> to vector<5xf32>
    %771 = vector.shape_cast %770 : vector<5xf32> to vector<5x1xf32>
    %cst_317 = arith.constant 6.400000e+01 : f32
    %772 = vector.broadcast %cst_317 : f32 to vector<5x1xf32>
    %773 = arith.divf %771, %772 : vector<5x1xf32>
    %774 = vector.broadcast %773 : vector<5x1xf32> to vector<5x64xf32>
    %775 = arith.subf %767, %774 : vector<5x64xf32>
    %776 = arith.mulf %775, %775 : vector<5x64xf32>
    %cst_318 = arith.constant dense<0.000000e+00> : vector<5xf32>
    %777 = vector.multi_reduction <add>, %776, %cst_318 [1] : vector<5x64xf32> to vector<5xf32>
    %778 = vector.shape_cast %777 : vector<5xf32> to vector<5x1xf32>
    %cst_319 = arith.constant 6.400000e+01 : f32
    %779 = vector.broadcast %cst_319 : f32 to vector<5x1xf32>
    %780 = arith.divf %778, %779 : vector<5x1xf32>
    %781 = vector.broadcast %773 : vector<5x1xf32> to vector<5x64xf32>
    %782 = arith.subf %767, %781 : vector<5x64xf32>
    %cst_320 = arith.constant 9.99999997E-7 : f32
    %783 = vector.broadcast %cst_320 : f32 to vector<5x1xf32>
    %784 = arith.addf %780, %783 : vector<5x1xf32>
    %785 = math.rsqrt %784 : vector<5x1xf32>
    %786 = vector.broadcast %785 : vector<5x1xf32> to vector<5x64xf32>
    %787 = arith.mulf %782, %786 : vector<5x64xf32>
    %788 = vector.broadcast %768 : vector<1x64xf32> to vector<5x64xf32>
    %789 = arith.mulf %787, %788 : vector<5x64xf32>
    %790 = vector.broadcast %769 : vector<1x64xf32> to vector<5x64xf32>
    %791 = arith.addf %789, %790 : vector<5x64xf32>
    %792 = vector.extract_strided_slice %791 {offsets = [0, 0], sizes = [1, 64], strides = [1, 1]} : vector<5x64xf32> to vector<1x64xf32>
    %c0_321 = arith.constant 0 : index
    %c1792 = arith.constant 1792 : index
    %793 = vector.load %arg4[%c0_321, %c1792] : memref<64x2688xf32, #tpu.memory_space<vmem>>, vector<64x3xf32>
    %cst_322 = arith.constant dense<0.000000e+00> : vector<1x3xf32>
    %794 = tpu.matmul %792, %793, %cst_322 {dimension_numbers = #tpu.dot_dimension_numbers<[1], [0], [0], [1], [0, 0, 1, 1], [], []>} : vector<1x64xf32>, vector<64x3xf32>, vector<1x3xf32> -> vector<1x3xf32>
    %c46 = arith.constant 46 : index
    %c0_323 = arith.constant 0 : index
    %795 = vector.load %arg6[%c46, %c0_323] : memref<58x256xf32, #tpu.memory_space<vmem>>, vector<1x3xf32>
    %796 = arith.addf %794, %795 : vector<1x3xf32>
    %c0_324 = arith.constant 0 : index
    %c0_325 = arith.constant 0 : index
    %797 = vector.load %arg7[%c0_324, %c0_325] : memref<1x3xf32, #tpu.memory_space<vmem>>, vector<1x3xf32>
    tpu.vector_store %arg7[%c0_324, %c0_325], %796 {strides = array<i32>} : memref<1x3xf32, #tpu.memory_space<vmem>>, vector<1x3xf32>,
    %c27 = arith.constant 27 : index
    %c0_326 = arith.constant 0 : index
    %798 = vector.load %arg6[%c27, %c0_326] : memref<58x256xf32, #tpu.memory_space<vmem>>, vector<1x64xf32>
    %c0_327 = arith.constant 0 : index
    %c0_328 = arith.constant 0 : index
    %799 = vector.load %arg11[%c0_327, %c0_328] : memref<16x64xf32, #tpu.memory_space<vmem>>, vector<1x64xf32>
    tpu.vector_store %arg11[%c0_327, %c0_328], %798 {strides = array<i32>} : memref<16x64xf32, #tpu.memory_space<vmem>>, vector<1x64xf32>,
    %c1_329 = arith.constant 1 : index
    %c0_330 = arith.constant 0 : index
    %800 = vector.load %arg11[%c1_329, %c0_330] : memref<16x64xf32, #tpu.memory_space<vmem>>, vector<4x64xf32>
    tpu.vector_store %arg11[%c1_329, %c0_330], %489 {strides = array<i32>} : memref<16x64xf32, #tpu.memory_space<vmem>>, vector<4x64xf32>,
    %c0_331 = arith.constant 0 : index
    %c0_332 = arith.constant 0 : index
    %801 = vector.load %arg11[%c0_331, %c0_332] : memref<16x64xf32, #tpu.memory_space<vmem>>, vector<5x64xf32>
    %c47 = arith.constant 47 : index
    %c0_333 = arith.constant 0 : index
    %802 = vector.load %arg6[%c47, %c0_333] : memref<58x256xf32, #tpu.memory_space<vmem>>, vector<1x64xf32>
    %c48_334 = arith.constant 48 : index
    %c0_335 = arith.constant 0 : index
    %803 = vector.load %arg6[%c48_334, %c0_335] : memref<58x256xf32, #tpu.memory_space<vmem>>, vector<1x64xf32>
    %cst_336 = arith.constant dense<0.000000e+00> : vector<5xf32>
    %804 = vector.multi_reduction <add>, %801, %cst_336 [1] : vector<5x64xf32> to vector<5xf32>
    %805 = vector.shape_cast %804 : vector<5xf32> to vector<5x1xf32>
    %cst_337 = arith.constant 6.400000e+01 : f32
    %806 = vector.broadcast %cst_337 : f32 to vector<5x1xf32>
    %807 = arith.divf %805, %806 : vector<5x1xf32>
    %808 = vector.broadcast %807 : vector<5x1xf32> to vector<5x64xf32>
    %809 = arith.subf %801, %808 : vector<5x64xf32>
    %810 = arith.mulf %809, %809 : vector<5x64xf32>
    %cst_338 = arith.constant dense<0.000000e+00> : vector<5xf32>
    %811 = vector.multi_reduction <add>, %810, %cst_338 [1] : vector<5x64xf32> to vector<5xf32>
    %812 = vector.shape_cast %811 : vector<5xf32> to vector<5x1xf32>
    %cst_339 = arith.constant 6.400000e+01 : f32
    %813 = vector.broadcast %cst_339 : f32 to vector<5x1xf32>
    %814 = arith.divf %812, %813 : vector<5x1xf32>
    %815 = vector.broadcast %807 : vector<5x1xf32> to vector<5x64xf32>
    %816 = arith.subf %801, %815 : vector<5x64xf32>
    %cst_340 = arith.constant 9.99999997E-7 : f32
    %817 = vector.broadcast %cst_340 : f32 to vector<5x1xf32>
    %818 = arith.addf %814, %817 : vector<5x1xf32>
    %819 = math.rsqrt %818 : vector<5x1xf32>
    %820 = vector.broadcast %819 : vector<5x1xf32> to vector<5x64xf32>
    %821 = arith.mulf %816, %820 : vector<5x64xf32>
    %822 = vector.broadcast %802 : vector<1x64xf32> to vector<5x64xf32>
    %823 = arith.mulf %821, %822 : vector<5x64xf32>
    %824 = vector.broadcast %803 : vector<1x64xf32> to vector<5x64xf32>
    %825 = arith.addf %823, %824 : vector<5x64xf32>
    %c0_341 = arith.constant 0 : index
    %c1920 = arith.constant 1920 : index
    %826 = vector.load %arg4[%c0_341, %c1920] : memref<64x2688xf32, #tpu.memory_space<vmem>>, vector<64x192xf32>
    %cst_342 = arith.constant dense<0.000000e+00> : vector<5x192xf32>
    %827 = tpu.matmul %825, %826, %cst_342 {dimension_numbers = #tpu.dot_dimension_numbers<[1], [0], [0], [1], [0, 0, 1, 1], [], []>} : vector<5x64xf32>, vector<64x192xf32>, vector<5x192xf32> -> vector<5x192xf32>
    %c49 = arith.constant 49 : index
    %c0_343 = arith.constant 0 : index
    %828 = vector.load %arg6[%c49, %c0_343] : memref<58x256xf32, #tpu.memory_space<vmem>>, vector<1x192xf32>
    %829 = vector.broadcast %828 : vector<1x192xf32> to vector<5x192xf32>
    %830 = arith.addf %827, %829 : vector<5x192xf32>
    %831 = vector.extract_strided_slice %830 {offsets = [0, 0], sizes = [5, 64], strides = [1, 1]} : vector<5x192xf32> to vector<5x64xf32>
    %832 = vector.extract_strided_slice %830 {offsets = [0, 64], sizes = [5, 64], strides = [1, 1]} : vector<5x192xf32> to vector<5x64xf32>
    %833 = vector.extract_strided_slice %830 {offsets = [0, 128], sizes = [5, 64], strides = [1, 1]} : vector<5x192xf32> to vector<5x64xf32>
    %c0_344 = arith.constant 0 : index
    %c2176 = arith.constant 2176 : index
    %834 = vector.load %arg4[%c0_344, %c2176] : memref<64x2688xf32, #tpu.memory_space<vmem>>, vector<64x64xf32>
    %c50 = arith.constant 50 : index
    %c0_345 = arith.constant 0 : index
    %835 = vector.load %arg6[%c50, %c0_345] : memref<58x256xf32, #tpu.memory_space<vmem>>, vector<1x64xf32>
    %836 = vector.extract_strided_slice %831 {offsets = [0, 0], sizes = [5, 8], strides = [1, 1]} : vector<5x64xf32> to vector<5x8xf32>
    %837 = vector.extract_strided_slice %832 {offsets = [0, 0], sizes = [5, 8], strides = [1, 1]} : vector<5x64xf32> to vector<5x8xf32>
    %838 = vector.extract_strided_slice %833 {offsets = [0, 0], sizes = [5, 8], strides = [1, 1]} : vector<5x64xf32> to vector<5x8xf32>
    %cst_346 = arith.constant dense<0.000000e+00> : vector<5x5xf32>
    %839 = tpu.matmul %836, %837, %cst_346 {dimension_numbers = #tpu.dot_dimension_numbers<[1], [1], [0], [0], [0, 0, 1, 0], [], []>} : vector<5x8xf32>, vector<5x8xf32>, vector<5x5xf32> -> vector<5x5xf32>
    %cst_347 = arith.constant 0.353553385 : f32
    %840 = vector.broadcast %cst_347 : f32 to vector<5x5xf32>
    %841 = arith.mulf %839, %840 : vector<5x5xf32>
    %cst_348 = arith.constant dense<0xFF800000> : vector<5xf32>
    %842 = vector.multi_reduction <maximumf>, %841, %cst_348 [1] : vector<5x5xf32> to vector<5xf32>
    %843 = vector.shape_cast %842 : vector<5xf32> to vector<5x1xf32>
    %844 = vector.broadcast %843 : vector<5x1xf32> to vector<5x5xf32>
    %845 = arith.subf %841, %844 : vector<5x5xf32>
    %846 = math.exp %845 : vector<5x5xf32>
    %cst_349 = arith.constant dense<0.000000e+00> : vector<5xf32>
    %847 = vector.multi_reduction <add>, %846, %cst_349 [1] : vector<5x5xf32> to vector<5xf32>
    %848 = vector.shape_cast %847 : vector<5xf32> to vector<5x1xf32>
    %849 = vector.broadcast %848 : vector<5x1xf32> to vector<5x5xf32>
    %850 = arith.divf %846, %849 : vector<5x5xf32>
    %cst_350 = arith.constant dense<0.000000e+00> : vector<5x8xf32>
    %851 = tpu.matmul %850, %838, %cst_350 {dimension_numbers = #tpu.dot_dimension_numbers<[1], [0], [0], [1], [0, 0, 1, 1], [], []>} : vector<5x5xf32>, vector<5x8xf32>, vector<5x8xf32> -> vector<5x8xf32>
    %c0_351 = arith.constant 0 : index
    %c0_352 = arith.constant 0 : index
    %852 = vector.load %arg11[%c0_351, %c0_352] : memref<16x64xf32, #tpu.memory_space<vmem>>, vector<5x8xf32>
    tpu.vector_store %arg11[%c0_351, %c0_352], %851 {strides = array<i32>} : memref<16x64xf32, #tpu.memory_space<vmem>>, vector<5x8xf32>,
    %853 = vector.extract_strided_slice %831 {offsets = [0, 8], sizes = [5, 8], strides = [1, 1]} : vector<5x64xf32> to vector<5x8xf32>
    %854 = vector.extract_strided_slice %832 {offsets = [0, 8], sizes = [5, 8], strides = [1, 1]} : vector<5x64xf32> to vector<5x8xf32>
    %855 = vector.extract_strided_slice %833 {offsets = [0, 8], sizes = [5, 8], strides = [1, 1]} : vector<5x64xf32> to vector<5x8xf32>
    %cst_353 = arith.constant dense<0.000000e+00> : vector<5x5xf32>
    %856 = tpu.matmul %853, %854, %cst_353 {dimension_numbers = #tpu.dot_dimension_numbers<[1], [1], [0], [0], [0, 0, 1, 0], [], []>} : vector<5x8xf32>, vector<5x8xf32>, vector<5x5xf32> -> vector<5x5xf32>
    %cst_354 = arith.constant 0.353553385 : f32
    %857 = vector.broadcast %cst_354 : f32 to vector<5x5xf32>
    %858 = arith.mulf %856, %857 : vector<5x5xf32>
    %cst_355 = arith.constant dense<0xFF800000> : vector<5xf32>
    %859 = vector.multi_reduction <maximumf>, %858, %cst_355 [1] : vector<5x5xf32> to vector<5xf32>
    %860 = vector.shape_cast %859 : vector<5xf32> to vector<5x1xf32>
    %861 = vector.broadcast %860 : vector<5x1xf32> to vector<5x5xf32>
    %862 = arith.subf %858, %861 : vector<5x5xf32>
    %863 = math.exp %862 : vector<5x5xf32>
    %cst_356 = arith.constant dense<0.000000e+00> : vector<5xf32>
    %864 = vector.multi_reduction <add>, %863, %cst_356 [1] : vector<5x5xf32> to vector<5xf32>
    %865 = vector.shape_cast %864 : vector<5xf32> to vector<5x1xf32>
    %866 = vector.broadcast %865 : vector<5x1xf32> to vector<5x5xf32>
    %867 = arith.divf %863, %866 : vector<5x5xf32>
    %cst_357 = arith.constant dense<0.000000e+00> : vector<5x8xf32>
    %868 = tpu.matmul %867, %855, %cst_357 {dimension_numbers = #tpu.dot_dimension_numbers<[1], [0], [0], [1], [0, 0, 1, 1], [], []>} : vector<5x5xf32>, vector<5x8xf32>, vector<5x8xf32> -> vector<5x8xf32>
    %c0_358 = arith.constant 0 : index
    %c8_359 = arith.constant 8 : index
    %869 = vector.load %arg11[%c0_358, %c8_359] : memref<16x64xf32, #tpu.memory_space<vmem>>, vector<5x8xf32>
    tpu.vector_store %arg11[%c0_358, %c8_359], %868 {strides = array<i32>} : memref<16x64xf32, #tpu.memory_space<vmem>>, vector<5x8xf32>,
    %870 = vector.extract_strided_slice %831 {offsets = [0, 16], sizes = [5, 8], strides = [1, 1]} : vector<5x64xf32> to vector<5x8xf32>
    %871 = vector.extract_strided_slice %832 {offsets = [0, 16], sizes = [5, 8], strides = [1, 1]} : vector<5x64xf32> to vector<5x8xf32>
    %872 = vector.extract_strided_slice %833 {offsets = [0, 16], sizes = [5, 8], strides = [1, 1]} : vector<5x64xf32> to vector<5x8xf32>
    %cst_360 = arith.constant dense<0.000000e+00> : vector<5x5xf32>
    %873 = tpu.matmul %870, %871, %cst_360 {dimension_numbers = #tpu.dot_dimension_numbers<[1], [1], [0], [0], [0, 0, 1, 0], [], []>} : vector<5x8xf32>, vector<5x8xf32>, vector<5x5xf32> -> vector<5x5xf32>
    %cst_361 = arith.constant 0.353553385 : f32
    %874 = vector.broadcast %cst_361 : f32 to vector<5x5xf32>
    %875 = arith.mulf %873, %874 : vector<5x5xf32>
    %cst_362 = arith.constant dense<0xFF800000> : vector<5xf32>
    %876 = vector.multi_reduction <maximumf>, %875, %cst_362 [1] : vector<5x5xf32> to vector<5xf32>
    %877 = vector.shape_cast %876 : vector<5xf32> to vector<5x1xf32>
    %878 = vector.broadcast %877 : vector<5x1xf32> to vector<5x5xf32>
    %879 = arith.subf %875, %878 : vector<5x5xf32>
    %880 = math.exp %879 : vector<5x5xf32>
    %cst_363 = arith.constant dense<0.000000e+00> : vector<5xf32>
    %881 = vector.multi_reduction <add>, %880, %cst_363 [1] : vector<5x5xf32> to vector<5xf32>
    %882 = vector.shape_cast %881 : vector<5xf32> to vector<5x1xf32>
    %883 = vector.broadcast %882 : vector<5x1xf32> to vector<5x5xf32>
    %884 = arith.divf %880, %883 : vector<5x5xf32>
    %cst_364 = arith.constant dense<0.000000e+00> : vector<5x8xf32>
    %885 = tpu.matmul %884, %872, %cst_364 {dimension_numbers = #tpu.dot_dimension_numbers<[1], [0], [0], [1], [0, 0, 1, 1], [], []>} : vector<5x5xf32>, vector<5x8xf32>, vector<5x8xf32> -> vector<5x8xf32>
    %c0_365 = arith.constant 0 : index
    %c16_366 = arith.constant 16 : index
    %886 = vector.load %arg11[%c0_365, %c16_366] : memref<16x64xf32, #tpu.memory_space<vmem>>, vector<5x8xf32>
    tpu.vector_store %arg11[%c0_365, %c16_366], %885 {strides = array<i32>} : memref<16x64xf32, #tpu.memory_space<vmem>>, vector<5x8xf32>,
    %887 = vector.extract_strided_slice %831 {offsets = [0, 24], sizes = [5, 8], strides = [1, 1]} : vector<5x64xf32> to vector<5x8xf32>
    %888 = vector.extract_strided_slice %832 {offsets = [0, 24], sizes = [5, 8], strides = [1, 1]} : vector<5x64xf32> to vector<5x8xf32>
    %889 = vector.extract_strided_slice %833 {offsets = [0, 24], sizes = [5, 8], strides = [1, 1]} : vector<5x64xf32> to vector<5x8xf32>
    %cst_367 = arith.constant dense<0.000000e+00> : vector<5x5xf32>
    %890 = tpu.matmul %887, %888, %cst_367 {dimension_numbers = #tpu.dot_dimension_numbers<[1], [1], [0], [0], [0, 0, 1, 0], [], []>} : vector<5x8xf32>, vector<5x8xf32>, vector<5x5xf32> -> vector<5x5xf32>
    %cst_368 = arith.constant 0.353553385 : f32
    %891 = vector.broadcast %cst_368 : f32 to vector<5x5xf32>
    %892 = arith.mulf %890, %891 : vector<5x5xf32>
    %cst_369 = arith.constant dense<0xFF800000> : vector<5xf32>
    %893 = vector.multi_reduction <maximumf>, %892, %cst_369 [1] : vector<5x5xf32> to vector<5xf32>
    %894 = vector.shape_cast %893 : vector<5xf32> to vector<5x1xf32>
    %895 = vector.broadcast %894 : vector<5x1xf32> to vector<5x5xf32>
    %896 = arith.subf %892, %895 : vector<5x5xf32>
    %897 = math.exp %896 : vector<5x5xf32>
    %cst_370 = arith.constant dense<0.000000e+00> : vector<5xf32>
    %898 = vector.multi_reduction <add>, %897, %cst_370 [1] : vector<5x5xf32> to vector<5xf32>
    %899 = vector.shape_cast %898 : vector<5xf32> to vector<5x1xf32>
    %900 = vector.broadcast %899 : vector<5x1xf32> to vector<5x5xf32>
    %901 = arith.divf %897, %900 : vector<5x5xf32>
    %cst_371 = arith.constant dense<0.000000e+00> : vector<5x8xf32>
    %902 = tpu.matmul %901, %889, %cst_371 {dimension_numbers = #tpu.dot_dimension_numbers<[1], [0], [0], [1], [0, 0, 1, 1], [], []>} : vector<5x5xf32>, vector<5x8xf32>, vector<5x8xf32> -> vector<5x8xf32>
    %c0_372 = arith.constant 0 : index
    %c24_373 = arith.constant 24 : index
    %903 = vector.load %arg11[%c0_372, %c24_373] : memref<16x64xf32, #tpu.memory_space<vmem>>, vector<5x8xf32>
    tpu.vector_store %arg11[%c0_372, %c24_373], %902 {strides = array<i32>} : memref<16x64xf32, #tpu.memory_space<vmem>>, vector<5x8xf32>,
    %904 = vector.extract_strided_slice %831 {offsets = [0, 32], sizes = [5, 8], strides = [1, 1]} : vector<5x64xf32> to vector<5x8xf32>
    %905 = vector.extract_strided_slice %832 {offsets = [0, 32], sizes = [5, 8], strides = [1, 1]} : vector<5x64xf32> to vector<5x8xf32>
    %906 = vector.extract_strided_slice %833 {offsets = [0, 32], sizes = [5, 8], strides = [1, 1]} : vector<5x64xf32> to vector<5x8xf32>
    %cst_374 = arith.constant dense<0.000000e+00> : vector<5x5xf32>
    %907 = tpu.matmul %904, %905, %cst_374 {dimension_numbers = #tpu.dot_dimension_numbers<[1], [1], [0], [0], [0, 0, 1, 0], [], []>} : vector<5x8xf32>, vector<5x8xf32>, vector<5x5xf32> -> vector<5x5xf32>
    %cst_375 = arith.constant 0.353553385 : f32
    %908 = vector.broadcast %cst_375 : f32 to vector<5x5xf32>
    %909 = arith.mulf %907, %908 : vector<5x5xf32>
    %cst_376 = arith.constant dense<0xFF800000> : vector<5xf32>
    %910 = vector.multi_reduction <maximumf>, %909, %cst_376 [1] : vector<5x5xf32> to vector<5xf32>
    %911 = vector.shape_cast %910 : vector<5xf32> to vector<5x1xf32>
    %912 = vector.broadcast %911 : vector<5x1xf32> to vector<5x5xf32>
    %913 = arith.subf %909, %912 : vector<5x5xf32>
    %914 = math.exp %913 : vector<5x5xf32>
    %cst_377 = arith.constant dense<0.000000e+00> : vector<5xf32>
    %915 = vector.multi_reduction <add>, %914, %cst_377 [1] : vector<5x5xf32> to vector<5xf32>
    %916 = vector.shape_cast %915 : vector<5xf32> to vector<5x1xf32>
    %917 = vector.broadcast %916 : vector<5x1xf32> to vector<5x5xf32>
    %918 = arith.divf %914, %917 : vector<5x5xf32>
    %cst_378 = arith.constant dense<0.000000e+00> : vector<5x8xf32>
    %919 = tpu.matmul %918, %906, %cst_378 {dimension_numbers = #tpu.dot_dimension_numbers<[1], [0], [0], [1], [0, 0, 1, 1], [], []>} : vector<5x5xf32>, vector<5x8xf32>, vector<5x8xf32> -> vector<5x8xf32>
    %c0_379 = arith.constant 0 : index
    %c32_380 = arith.constant 32 : index
    %920 = vector.load %arg11[%c0_379, %c32_380] : memref<16x64xf32, #tpu.memory_space<vmem>>, vector<5x8xf32>
    tpu.vector_store %arg11[%c0_379, %c32_380], %919 {strides = array<i32>} : memref<16x64xf32, #tpu.memory_space<vmem>>, vector<5x8xf32>,
    %921 = vector.extract_strided_slice %831 {offsets = [0, 40], sizes = [5, 8], strides = [1, 1]} : vector<5x64xf32> to vector<5x8xf32>
    %922 = vector.extract_strided_slice %832 {offsets = [0, 40], sizes = [5, 8], strides = [1, 1]} : vector<5x64xf32> to vector<5x8xf32>
    %923 = vector.extract_strided_slice %833 {offsets = [0, 40], sizes = [5, 8], strides = [1, 1]} : vector<5x64xf32> to vector<5x8xf32>
    %cst_381 = arith.constant dense<0.000000e+00> : vector<5x5xf32>
    %924 = tpu.matmul %921, %922, %cst_381 {dimension_numbers = #tpu.dot_dimension_numbers<[1], [1], [0], [0], [0, 0, 1, 0], [], []>} : vector<5x8xf32>, vector<5x8xf32>, vector<5x5xf32> -> vector<5x5xf32>
    %cst_382 = arith.constant 0.353553385 : f32
    %925 = vector.broadcast %cst_382 : f32 to vector<5x5xf32>
    %926 = arith.mulf %924, %925 : vector<5x5xf32>
    %cst_383 = arith.constant dense<0xFF800000> : vector<5xf32>
    %927 = vector.multi_reduction <maximumf>, %926, %cst_383 [1] : vector<5x5xf32> to vector<5xf32>
    %928 = vector.shape_cast %927 : vector<5xf32> to vector<5x1xf32>
    %929 = vector.broadcast %928 : vector<5x1xf32> to vector<5x5xf32>
    %930 = arith.subf %926, %929 : vector<5x5xf32>
    %931 = math.exp %930 : vector<5x5xf32>
    %cst_384 = arith.constant dense<0.000000e+00> : vector<5xf32>
    %932 = vector.multi_reduction <add>, %931, %cst_384 [1] : vector<5x5xf32> to vector<5xf32>
    %933 = vector.shape_cast %932 : vector<5xf32> to vector<5x1xf32>
    %934 = vector.broadcast %933 : vector<5x1xf32> to vector<5x5xf32>
    %935 = arith.divf %931, %934 : vector<5x5xf32>
    %cst_385 = arith.constant dense<0.000000e+00> : vector<5x8xf32>
    %936 = tpu.matmul %935, %923, %cst_385 {dimension_numbers = #tpu.dot_dimension_numbers<[1], [0], [0], [1], [0, 0, 1, 1], [], []>} : vector<5x5xf32>, vector<5x8xf32>, vector<5x8xf32> -> vector<5x8xf32>
    %c0_386 = arith.constant 0 : index
    %c40_387 = arith.constant 40 : index
    %937 = vector.load %arg11[%c0_386, %c40_387] : memref<16x64xf32, #tpu.memory_space<vmem>>, vector<5x8xf32>
    tpu.vector_store %arg11[%c0_386, %c40_387], %936 {strides = array<i32>} : memref<16x64xf32, #tpu.memory_space<vmem>>, vector<5x8xf32>,
    %938 = vector.extract_strided_slice %831 {offsets = [0, 48], sizes = [5, 8], strides = [1, 1]} : vector<5x64xf32> to vector<5x8xf32>
    %939 = vector.extract_strided_slice %832 {offsets = [0, 48], sizes = [5, 8], strides = [1, 1]} : vector<5x64xf32> to vector<5x8xf32>
    %940 = vector.extract_strided_slice %833 {offsets = [0, 48], sizes = [5, 8], strides = [1, 1]} : vector<5x64xf32> to vector<5x8xf32>
    %cst_388 = arith.constant dense<0.000000e+00> : vector<5x5xf32>
    %941 = tpu.matmul %938, %939, %cst_388 {dimension_numbers = #tpu.dot_dimension_numbers<[1], [1], [0], [0], [0, 0, 1, 0], [], []>} : vector<5x8xf32>, vector<5x8xf32>, vector<5x5xf32> -> vector<5x5xf32>
    %cst_389 = arith.constant 0.353553385 : f32
    %942 = vector.broadcast %cst_389 : f32 to vector<5x5xf32>
    %943 = arith.mulf %941, %942 : vector<5x5xf32>
    %cst_390 = arith.constant dense<0xFF800000> : vector<5xf32>
    %944 = vector.multi_reduction <maximumf>, %943, %cst_390 [1] : vector<5x5xf32> to vector<5xf32>
    %945 = vector.shape_cast %944 : vector<5xf32> to vector<5x1xf32>
    %946 = vector.broadcast %945 : vector<5x1xf32> to vector<5x5xf32>
    %947 = arith.subf %943, %946 : vector<5x5xf32>
    %948 = math.exp %947 : vector<5x5xf32>
    %cst_391 = arith.constant dense<0.000000e+00> : vector<5xf32>
    %949 = vector.multi_reduction <add>, %948, %cst_391 [1] : vector<5x5xf32> to vector<5xf32>
    %950 = vector.shape_cast %949 : vector<5xf32> to vector<5x1xf32>
    %951 = vector.broadcast %950 : vector<5x1xf32> to vector<5x5xf32>
    %952 = arith.divf %948, %951 : vector<5x5xf32>
    %cst_392 = arith.constant dense<0.000000e+00> : vector<5x8xf32>
    %953 = tpu.matmul %952, %940, %cst_392 {dimension_numbers = #tpu.dot_dimension_numbers<[1], [0], [0], [1], [0, 0, 1, 1], [], []>} : vector<5x5xf32>, vector<5x8xf32>, vector<5x8xf32> -> vector<5x8xf32>
    %c0_393 = arith.constant 0 : index
    %c48_394 = arith.constant 48 : index
    %954 = vector.load %arg11[%c0_393, %c48_394] : memref<16x64xf32, #tpu.memory_space<vmem>>, vector<5x8xf32>
    tpu.vector_store %arg11[%c0_393, %c48_394], %953 {strides = array<i32>} : memref<16x64xf32, #tpu.memory_space<vmem>>, vector<5x8xf32>,
    %955 = vector.extract_strided_slice %831 {offsets = [0, 56], sizes = [5, 8], strides = [1, 1]} : vector<5x64xf32> to vector<5x8xf32>
    %956 = vector.extract_strided_slice %832 {offsets = [0, 56], sizes = [5, 8], strides = [1, 1]} : vector<5x64xf32> to vector<5x8xf32>
    %957 = vector.extract_strided_slice %833 {offsets = [0, 56], sizes = [5, 8], strides = [1, 1]} : vector<5x64xf32> to vector<5x8xf32>
    %cst_395 = arith.constant dense<0.000000e+00> : vector<5x5xf32>
    %958 = tpu.matmul %955, %956, %cst_395 {dimension_numbers = #tpu.dot_dimension_numbers<[1], [1], [0], [0], [0, 0, 1, 0], [], []>} : vector<5x8xf32>, vector<5x8xf32>, vector<5x5xf32> -> vector<5x5xf32>
    %cst_396 = arith.constant 0.353553385 : f32
    %959 = vector.broadcast %cst_396 : f32 to vector<5x5xf32>
    %960 = arith.mulf %958, %959 : vector<5x5xf32>
    %cst_397 = arith.constant dense<0xFF800000> : vector<5xf32>
    %961 = vector.multi_reduction <maximumf>, %960, %cst_397 [1] : vector<5x5xf32> to vector<5xf32>
    %962 = vector.shape_cast %961 : vector<5xf32> to vector<5x1xf32>
    %963 = vector.broadcast %962 : vector<5x1xf32> to vector<5x5xf32>
    %964 = arith.subf %960, %963 : vector<5x5xf32>
    %965 = math.exp %964 : vector<5x5xf32>
    %cst_398 = arith.constant dense<0.000000e+00> : vector<5xf32>
    %966 = vector.multi_reduction <add>, %965, %cst_398 [1] : vector<5x5xf32> to vector<5xf32>
    %967 = vector.shape_cast %966 : vector<5xf32> to vector<5x1xf32>
    %968 = vector.broadcast %967 : vector<5x1xf32> to vector<5x5xf32>
    %969 = arith.divf %965, %968 : vector<5x5xf32>
    %cst_399 = arith.constant dense<0.000000e+00> : vector<5x8xf32>
    %970 = tpu.matmul %969, %957, %cst_399 {dimension_numbers = #tpu.dot_dimension_numbers<[1], [0], [0], [1], [0, 0, 1, 1], [], []>} : vector<5x5xf32>, vector<5x8xf32>, vector<5x8xf32> -> vector<5x8xf32>
    %c0_400 = arith.constant 0 : index
    %c56_401 = arith.constant 56 : index
    %971 = vector.load %arg11[%c0_400, %c56_401] : memref<16x64xf32, #tpu.memory_space<vmem>>, vector<5x8xf32>
    tpu.vector_store %arg11[%c0_400, %c56_401], %970 {strides = array<i32>} : memref<16x64xf32, #tpu.memory_space<vmem>>, vector<5x8xf32>,
    %c0_402 = arith.constant 0 : index
    %c0_403 = arith.constant 0 : index
    %972 = vector.load %arg11[%c0_402, %c0_403] : memref<16x64xf32, #tpu.memory_space<vmem>>, vector<5x64xf32>
    %cst_404 = arith.constant dense<0.000000e+00> : vector<5x64xf32>
    %973 = tpu.matmul %972, %834, %cst_404 {dimension_numbers = #tpu.dot_dimension_numbers<[1], [0], [0], [1], [0, 0, 1, 1], [], []>} : vector<5x64xf32>, vector<64x64xf32>, vector<5x64xf32> -> vector<5x64xf32>
    %974 = vector.broadcast %835 : vector<1x64xf32> to vector<5x64xf32>
    %975 = arith.addf %973, %974 : vector<5x64xf32>
    %976 = arith.addf %801, %975 : vector<5x64xf32>
    %c51 = arith.constant 51 : index
    %c0_405 = arith.constant 0 : index
    %977 = vector.load %arg6[%c51, %c0_405] : memref<58x256xf32, #tpu.memory_space<vmem>>, vector<1x64xf32>
    %c52 = arith.constant 52 : index
    %c0_406 = arith.constant 0 : index
    %978 = vector.load %arg6[%c52, %c0_406] : memref<58x256xf32, #tpu.memory_space<vmem>>, vector<1x64xf32>
    %cst_407 = arith.constant dense<0.000000e+00> : vector<5xf32>
    %979 = vector.multi_reduction <add>, %976, %cst_407 [1] : vector<5x64xf32> to vector<5xf32>
    %980 = vector.shape_cast %979 : vector<5xf32> to vector<5x1xf32>
    %cst_408 = arith.constant 6.400000e+01 : f32
    %981 = vector.broadcast %cst_408 : f32 to vector<5x1xf32>
    %982 = arith.divf %980, %981 : vector<5x1xf32>
    %983 = vector.broadcast %982 : vector<5x1xf32> to vector<5x64xf32>
    %984 = arith.subf %976, %983 : vector<5x64xf32>
    %985 = arith.mulf %984, %984 : vector<5x64xf32>
    %cst_409 = arith.constant dense<0.000000e+00> : vector<5xf32>
    %986 = vector.multi_reduction <add>, %985, %cst_409 [1] : vector<5x64xf32> to vector<5xf32>
    %987 = vector.shape_cast %986 : vector<5xf32> to vector<5x1xf32>
    %cst_410 = arith.constant 6.400000e+01 : f32
    %988 = vector.broadcast %cst_410 : f32 to vector<5x1xf32>
    %989 = arith.divf %987, %988 : vector<5x1xf32>
    %990 = vector.broadcast %982 : vector<5x1xf32> to vector<5x64xf32>
    %991 = arith.subf %976, %990 : vector<5x64xf32>
    %cst_411 = arith.constant 9.99999997E-7 : f32
    %992 = vector.broadcast %cst_411 : f32 to vector<5x1xf32>
    %993 = arith.addf %989, %992 : vector<5x1xf32>
    %994 = math.rsqrt %993 : vector<5x1xf32>
    %995 = vector.broadcast %994 : vector<5x1xf32> to vector<5x64xf32>
    %996 = arith.mulf %991, %995 : vector<5x64xf32>
    %997 = vector.broadcast %977 : vector<1x64xf32> to vector<5x64xf32>
    %998 = arith.mulf %996, %997 : vector<5x64xf32>
    %999 = vector.broadcast %978 : vector<1x64xf32> to vector<5x64xf32>
    %1000 = arith.addf %998, %999 : vector<5x64xf32>
    %c0_412 = arith.constant 0 : index
    %c2304 = arith.constant 2304 : index
    %1001 = vector.load %arg4[%c0_412, %c2304] : memref<64x2688xf32, #tpu.memory_space<vmem>>, vector<64x256xf32>
    %cst_413 = arith.constant dense<0.000000e+00> : vector<5x256xf32>
    %1002 = tpu.matmul %1000, %1001, %cst_413 {dimension_numbers = #tpu.dot_dimension_numbers<[1], [0], [0], [1], [0, 0, 1, 1], [], []>} : vector<5x64xf32>, vector<64x256xf32>, vector<5x256xf32> -> vector<5x256xf32>
    %c53 = arith.constant 53 : index
    %c0_414 = arith.constant 0 : index
    %1003 = vector.load %arg6[%c53, %c0_414] : memref<58x256xf32, #tpu.memory_space<vmem>>, vector<1x256xf32>
    %1004 = vector.broadcast %1003 : vector<1x256xf32> to vector<5x256xf32>
    %1005 = arith.addf %1002, %1004 : vector<5x256xf32>
    %1006 = arith.mulf %1005, %1005 : vector<5x256xf32>
    %1007 = arith.mulf %1005, %1006 : vector<5x256xf32>
    %cst_415 = arith.constant 4.471500e-02 : f32
    %1008 = vector.broadcast %cst_415 : f32 to vector<5x256xf32>
    %1009 = arith.mulf %1008, %1007 : vector<5x256xf32>
    %1010 = arith.addf %1005, %1009 : vector<5x256xf32>
    %cst_416 = arith.constant 0.797884583 : f32
    %1011 = vector.broadcast %cst_416 : f32 to vector<5x256xf32>
    %1012 = arith.mulf %1011, %1010 : vector<5x256xf32>
    %1013 = math.tanh %1012 : vector<5x256xf32>
    %cst_417 = arith.constant 1.000000e+00 : f32
    %1014 = vector.broadcast %cst_417 : f32 to vector<5x256xf32>
    %1015 = arith.addf %1014, %1013 : vector<5x256xf32>
    %cst_418 = arith.constant 5.000000e-01 : f32
    %1016 = vector.broadcast %cst_418 : f32 to vector<5x256xf32>
    %1017 = arith.mulf %1016, %1015 : vector<5x256xf32>
    %1018 = arith.mulf %1005, %1017 : vector<5x256xf32>
    %c0_419 = arith.constant 0 : index
    %c128_420 = arith.constant 128 : index
    %1019 = vector.load %arg5[%c0_419, %c128_420] : memref<256x256xf32, #tpu.memory_space<vmem>>, vector<256x64xf32>
    %cst_421 = arith.constant dense<0.000000e+00> : vector<5x64xf32>
    %1020 = tpu.matmul %1018, %1019, %cst_421 {dimension_numbers = #tpu.dot_dimension_numbers<[1], [0], [0], [1], [0, 0, 1, 1], [], []>} : vector<5x256xf32>, vector<256x64xf32>, vector<5x64xf32> -> vector<5x64xf32>
    %1021 = arith.addf %976, %1020 : vector<5x64xf32>
    %c54 = arith.constant 54 : index
    %c0_422 = arith.constant 0 : index
    %1022 = vector.load %arg6[%c54, %c0_422] : memref<58x256xf32, #tpu.memory_space<vmem>>, vector<1x64xf32>
    %1023 = vector.broadcast %1022 : vector<1x64xf32> to vector<5x64xf32>
    %1024 = arith.addf %1021, %1023 : vector<5x64xf32>
    %c55 = arith.constant 55 : index
    %c0_423 = arith.constant 0 : index
    %1025 = vector.load %arg6[%c55, %c0_423] : memref<58x256xf32, #tpu.memory_space<vmem>>, vector<1x64xf32>
    %c56_424 = arith.constant 56 : index
    %c0_425 = arith.constant 0 : index
    %1026 = vector.load %arg6[%c56_424, %c0_425] : memref<58x256xf32, #tpu.memory_space<vmem>>, vector<1x64xf32>
    %cst_426 = arith.constant dense<0.000000e+00> : vector<5xf32>
    %1027 = vector.multi_reduction <add>, %1024, %cst_426 [1] : vector<5x64xf32> to vector<5xf32>
    %1028 = vector.shape_cast %1027 : vector<5xf32> to vector<5x1xf32>
    %cst_427 = arith.constant 6.400000e+01 : f32
    %1029 = vector.broadcast %cst_427 : f32 to vector<5x1xf32>
    %1030 = arith.divf %1028, %1029 : vector<5x1xf32>
    %1031 = vector.broadcast %1030 : vector<5x1xf32> to vector<5x64xf32>
    %1032 = arith.subf %1024, %1031 : vector<5x64xf32>
    %1033 = arith.mulf %1032, %1032 : vector<5x64xf32>
    %cst_428 = arith.constant dense<0.000000e+00> : vector<5xf32>
    %1034 = vector.multi_reduction <add>, %1033, %cst_428 [1] : vector<5x64xf32> to vector<5xf32>
    %1035 = vector.shape_cast %1034 : vector<5xf32> to vector<5x1xf32>
    %cst_429 = arith.constant 6.400000e+01 : f32
    %1036 = vector.broadcast %cst_429 : f32 to vector<5x1xf32>
    %1037 = arith.divf %1035, %1036 : vector<5x1xf32>
    %1038 = vector.broadcast %1030 : vector<5x1xf32> to vector<5x64xf32>
    %1039 = arith.subf %1024, %1038 : vector<5x64xf32>
    %cst_430 = arith.constant 9.99999997E-7 : f32
    %1040 = vector.broadcast %cst_430 : f32 to vector<5x1xf32>
    %1041 = arith.addf %1037, %1040 : vector<5x1xf32>
    %1042 = math.rsqrt %1041 : vector<5x1xf32>
    %1043 = vector.broadcast %1042 : vector<5x1xf32> to vector<5x64xf32>
    %1044 = arith.mulf %1039, %1043 : vector<5x64xf32>
    %1045 = vector.broadcast %1025 : vector<1x64xf32> to vector<5x64xf32>
    %1046 = arith.mulf %1044, %1045 : vector<5x64xf32>
    %1047 = vector.broadcast %1026 : vector<1x64xf32> to vector<5x64xf32>
    %1048 = arith.addf %1046, %1047 : vector<5x64xf32>
    %1049 = vector.extract_strided_slice %1048 {offsets = [0, 0], sizes = [1, 64], strides = [1, 1]} : vector<5x64xf32> to vector<1x64xf32>
    %c0_431 = arith.constant 0 : index
    %c2560 = arith.constant 2560 : index
    %1050 = vector.load %arg4[%c0_431, %c2560] : memref<64x2688xf32, #tpu.memory_space<vmem>>, vector<64x2xf32>
    %cst_432 = arith.constant dense<0.000000e+00> : vector<1x2xf32>
    %1051 = tpu.matmul %1049, %1050, %cst_432 {dimension_numbers = #tpu.dot_dimension_numbers<[1], [0], [0], [1], [0, 0, 1, 1], [], []>} : vector<1x64xf32>, vector<64x2xf32>, vector<1x2xf32> -> vector<1x2xf32>
    %c57 = arith.constant 57 : index
    %c0_433 = arith.constant 0 : index
    %1052 = vector.load %arg6[%c57, %c0_433] : memref<58x256xf32, #tpu.memory_space<vmem>>, vector<1x2xf32>
    %1053 = arith.addf %1051, %1052 : vector<1x2xf32>
    %c0_434 = arith.constant 0 : index
    %c0_435 = arith.constant 0 : index
    %1054 = vector.load %arg8[%c0_434, %c0_435] : memref<1x2xf32, #tpu.memory_space<vmem>>, vector<1x2xf32>
    tpu.vector_store %arg8[%c0_434, %c0_435], %1053 {strides = array<i32>} : memref<1x2xf32, #tpu.memory_space<vmem>>, vector<1x2xf32>,
    return
  }
}

</mosaic_0001>

<llo_original>
// kernel: mulgt_forward.1
$region0: #{mulgt_forward.1}
  #allocation0 [shape = 'u32[]', space=smem, size = 0x4, offset = 0x4, fixed_abs, tag = 'smem constant byte address 0x4 - core index']
  #allocation1 [shape = 'u32[144,128]{1,0:T(1,128)}', space=vmem, size = 0x12000, scoped, tag = 'internal scratch']
  #allocation2 [shape = 'f32[16,64]{1,0:T(8,128)}', space=vmem, size = 0x2000, scoped, tag = 'scratch operand']
  %s0 = inlined_call_operand.vmem [shape: f32[16,128], index: 0, kind: input, shape index: {}]
  %s1 = inlined_call_operand.vmem [shape: f32[16,16], index: 1, kind: input, shape index: {}]
  %s2 = inlined_call_operand.vmem [shape: f32[16,1], index: 2, kind: input, shape index: {}]
  %s3 = inlined_call_operand.vmem [shape: f32[128,64], index: 3, kind: input, shape index: {}]
  %s4 = inlined_call_operand.hbm [shape: f32[64,2688], index: 4, kind: input, shape index: {}]
  %s5 = inlined_call_operand.hbm [shape: f32[256,256], index: 5, kind: input, shape index: {}]
  %s6 = inlined_call_operand.vmem [shape: f32[58,256], index: 6, kind: input, shape index: {}]
  %s7 = inlined_call_operand.vmem [shape: f32[1,3], index: 7, kind: output, shape index: {0}]
  %s8 = inlined_call_operand.vmem [shape: f32[1,2], index: 8, kind: output, shape index: {1}]
  %s9 = inlined_call_operand.hbm [shape: f32[1,1], index: 9, kind: output, shape index: {2}]
  %s10 = inlined_call_operand.hbm [shape: f32[1,1], index: 10, kind: output, shape index: {3}]
  %11 = xla_tuple %s7, %s8, %s9, %s10
  %s12 = sld [smem:[#allocation0]]
  $region70: #{mulgt_forward.1} parent=0
    _
  %s14 = ssub.s32 1, %s12
  %s15 = scalar_select 0, %s14, %s12
  $region1: #{mulgt_forward.1} parent=0
    #allocation3 [shape = 'u8[688128]{0}', space=vmem, size = 0xa8000, scoped, tag = 'input window, operand 4, single buffered']
    #allocation4 [shape = 's32[1]{0}', space=sflag, size = 0x4, scoped, tag = 'scoped memory for mulgt_forward.1']
    #allocation5 [shape = 's32[1]{0}', space=sflag, size = 0x4, scoped, tag = 'scoped memory for mulgt_forward.1']
    #allocation6 [shape = 'u8[262144]{0}', space=vmem, size = 0x40000, scoped, tag = 'input window, operand 5, single buffered']
    #allocation7 [shape = 's32[1]{0}', space=sflag, size = 0x4, scoped, tag = 'scoped memory for mulgt_forward.1']
    #allocation8 [shape = 'u8[512]{0}', space=vmem, size = 0x400, scoped, tag = 'output window, operand 2, single buffered']
    #allocation9 [shape = 'u8[512]{0}', space=vmem, size = 0x400, scoped, tag = 'output window, operand 3, single buffered']
    #allocation10 [shape = 's32[1]{0}', space=sflag, size = 0x4, scoped, tag = 'scoped memory for mulgt_forward.1']
    %16 = vsyncpa [#allocation4], 0
    %17 = vsyncpa [#allocation7], 0
    %18 = vsyncpa [#allocation5], 0
    %19 = vsyncpa [#allocation10], 0
    // Predicated region
    $region2: #{mulgt_forward.1} parent=1 // pred_check
      _
    $region3: #{mulgt_forward.1} parent=1 // pred_check_branch
      %21 = sbr.rel (0) target = $region5
    $region4: #{mulgt_forward.1} parent=1 // pred_region
      _
    $region5: #{mulgt_forward.1} parent=1 // pred_fallthru
      _
    // Predicated region
    $region6: #{mulgt_forward.1} parent=1 // pred_check
      _
    $region7: #{mulgt_forward.1} parent=1 // pred_check_branch
      %23 = sbr.rel (0) target = $region9
    $region8: #{mulgt_forward.1} parent=1 // pred_region
      _
    $region9: #{mulgt_forward.1} parent=1 // pred_fallthru
      _
    // Predicated region
    $region10: #{mulgt_forward.1} parent=1 // pred_check
      _
    $region11: #{mulgt_forward.1} parent=1 // pred_check_branch
      %25 = sbr.rel (0) target = $region13
    $region12: #{mulgt_forward.1} parent=1 // pred_region
      _
    $region13: #{mulgt_forward.1} parent=1 // pred_fallthru
      _
    // Predicated region
    $region14: #{mulgt_forward.1} parent=1 // pred_check
      _
    $region15: #{mulgt_forward.1} parent=1 // pred_check_branch
      %27 = sbr.rel (0) target = $region17
    $region16: #{mulgt_forward.1} parent=1 // pred_region
      _
    $region17: #{mulgt_forward.1} parent=1 // pred_fallthru
      _
    // Predicated region
    $region18: #{mulgt_forward.1} parent=1 // pred_check
      _
    $region19: #{mulgt_forward.1} parent=1 // pred_check_branch
      %29 = sbr.rel (0) target = $region21
    $region20: #{mulgt_forward.1} parent=1 // pred_region
      %s31 = ssub.s32 21504, 21504
      %32 = vsyncadd [#allocation4], %s31
      %s33 = sshll.u32 [#allocation3], 4
      %s34 = int_to_ptr.vmem [resolvable:$true] %s33
      %39 = dma.hbm_to_vmem [thread:$0]  %s4, 21504, %s34, [#allocation4], 2688, 2688, 168
    $region21: #{mulgt_forward.1} parent=1 // pred_fallthru
      _
    // Predicated region
    $region22: #{mulgt_forward.1} parent=1 // pred_check
      _
    $region23: #{mulgt_forward.1} parent=1 // pred_check_branch
      %41 = sbr.rel (0) target = $region25
    $region24: #{mulgt_forward.1} parent=1 // pred_region
      %s43 = ssub.s32 8192, 8192
      %44 = vsyncadd [#allocation7], %s43
      %s45 = sshll.u32 [#allocation6], 4
      %s46 = int_to_ptr.vmem [resolvable:$true] %s45
      %51 = dma.hbm_to_vmem [thread:$0]  %s5, 8192, %s46, [#allocation7], 256, 256, 16
    $region25: #{mulgt_forward.1} parent=1 // pred_fallthru
      _
    // Predicated region
    $region26: #{mulgt_forward.1} parent=1 // pred_check
      _
    $region27: #{mulgt_forward.1} parent=1 // pred_check_branch
      %53 = sbr.rel (0) target = $region29
    $region28: #{mulgt_forward.1} parent=1 // pred_region
      _
    $region29: #{mulgt_forward.1} parent=1 // pred_fallthru
      _
    // Predicated region
    $region30: #{mulgt_forward.1} parent=1 // pred_check
      _
    $region31: #{mulgt_forward.1} parent=1 // pred_check_branch
      %55 = sbr.rel (0) target = $region33
    $region32: #{mulgt_forward.1} parent=1 // pred_region
      %56 = dma.done [#allocation4], 21504
    $region33: #{mulgt_forward.1} parent=1 // pred_fallthru
      _
    // Predicated region
    $region34: #{mulgt_forward.1} parent=1 // pred_check
      _
    $region35: #{mulgt_forward.1} parent=1 // pred_check_branch
      %58 = sbr.rel (0) target = $region37
    $region36: #{mulgt_forward.1} parent=1 // pred_region
      %59 = dma.done [#allocation7], 8192
    $region37: #{mulgt_forward.1} parent=1 // pred_fallthru
      _
    %v60 = vld [vmem:[%s1] sm:$0xff]
    %v61 = vld [vmem:[%s1 + $0x8] sm:$0xff]
    %v62 = vld [vmem:[%s2] sm:$0xff]
    %v63 = vld [vmem:[%s2 + $0x8] sm:$0xff]
    %v64 = vld [vmem:[%s0] sm:$0xff]
    %v65 = vld [vmem:[%s0 + $0x8] sm:$0xff]
    %67 = vset.pattern.permute.xlu0 0
    %68 = vperm.xlu0 %67, %v62
    %v69 = vpop.permute.xlu0 %68
    %72 = vset.pattern.permute.xlu0 0
    %73 = vperm.xlu0 %72, %v63
    %v74 = vpop.permute.xlu0 %73
    %v76 = vmul.f32 %v64, %v69
    %v77 = vmul.f32 %v65, %v74
    %v78 = vld [vmem:[%s3] sm:$0xff]
    %v79 = vld [vmem:[%s3 + $0x8] sm:$0xff]
    %v80 = vld [vmem:[%s3 + $0x10] sm:$0xff]
    %v81 = vld [vmem:[%s3 + $0x18] sm:$0xff]
    %v82 = vld [vmem:[%s3 + $0x20] sm:$0xff]
    %v83 = vld [vmem:[%s3 + $0x28] sm:$0xff]
    %v84 = vld [vmem:[%s3 + $0x30] sm:$0xff]
    %v85 = vld [vmem:[%s3 + $0x38] sm:$0xff]
    %v86 = vld [vmem:[%s3 + $0x40] sm:$0xff]
    %v87 = vld [vmem:[%s3 + $0x48] sm:$0xff]
    %v88 = vld [vmem:[%s3 + $0x50] sm:$0xff]
    %v89 = vld [vmem:[%s3 + $0x58] sm:$0xff]
    %v90 = vld [vmem:[%s3 + $0x60] sm:$0xff]
    %v91 = vld [vmem:[%s3 + $0x68] sm:$0xff]
    %v92 = vld [vmem:[%s3 + $0x70] sm:$0xff]
    %v93 = vld [vmem:[%s3 + $0x78] sm:$0xff]
    %v94 = vld [vmem:[%s6] ss:$0 sm:$0xff]
    %vm95 = vcmask 130048
    %v97 = vsel %vm95, %v60, 0
    %v100 = vsel %vm95, %v61, 0
    %102 = vmatprep.subr.mxu0 0.0
    %103 = vmatpush1.msra.mxu0 0.0
    %104 = vmatprep.subr.mxu0 0.0
    %105 = vmatpush1.msra.mxu0 0.0
    %106 = vmatprep.subr.mxu0 0.0
    %107 = vmatpush1.msra.mxu0 0.0
    %108 = vmatprep.subr.mxu0 0.0
    %109 = vmatpush1.msra.mxu0 0.0
    %110 = vmatprep.subr.mxu0 0.0
    %111 = vmatpush1.msra.mxu0 0.0
    %112 = vmatprep.subr.mxu0 0.0
    %113 = vmatpush1.msra.mxu0 0.0
    %114 = vmatprep.subr.mxu0 0.0
    %115 = vmatpush1.msra.mxu0 0.0
    %116 = vmatprep.subr.mxu0 0.0
    %117 = vmatpush1.msra.mxu0 0.0
    %118 = vmatprep.subr.mxu0 0.0
    %119 = vmatpush1.msra.mxu0 0.0
    %120 = vmatprep.subr.mxu0 0.0
    %121 = vmatpush1.msra.mxu0 0.0
    %122 = vmatprep.subr.mxu0 0.0
    %123 = vmatpush1.msra.mxu0 0.0
    %124 = vmatprep.subr.mxu0 0.0
    %125 = vmatpush1.msra.mxu0 0.0
    %126 = vmatprep.subr.mxu0 0.0
    %127 = vmatpush1.msra.mxu0 0.0
    %128 = vmatprep.subr.mxu0 0.0
    %129 = vmatpush1.msra.mxu0 0.0
    %130 = vmatprep.subr.mxu0 0.0
    %131 = vmatpush1.msra.mxu0 %v77
    %132 = vmatprep.subr.mxu0 0.0
    %133 = vmatpush1.msra.mxu0 %v76
    %134 = vmatprep.subr.mxu0 0.0
    %135 = vmatpush2.msra.mxu0 0.0
    %136 = vmatprep.subr.mxu0 0.0
    %137 = vmatpush2.msra.mxu0 0.0
    %138 = vmatprep.subr.mxu0 0.0
    %139 = vmatpush2.msra.mxu0 0.0
    %140 = vmatprep.subr.mxu0 0.0
    %141 = vmatpush2.msra.mxu0 0.0
    %142 = vmatprep.subr.mxu0 0.0
    %143 = vmatpush2.msra.mxu0 0.0
    %144 = vmatprep.subr.mxu0 0.0
    %145 = vmatpush2.msra.mxu0 0.0
    %146 = vmatprep.subr.mxu0 0.0
    %147 = vmatpush2.msra.mxu0 0.0
    %148 = vmatprep.subr.mxu0 0.0
    %149 = vmatpush2.msra.mxu0 0.0
    %150 = vmatprep.subr.mxu0 0.0
    %151 = vmatpush2.msra.mxu0 0.0
    %152 = vmatprep.subr.mxu0 0.0
    %153 = vmatpush2.msra.mxu0 0.0
    %154 = vmatprep.subr.mxu0 0.0
    %155 = vmatpush2.msra.mxu0 0.0
    %156 = vmatprep.subr.mxu0 0.0
    %157 = vmatpush2.msra.mxu0 0.0
    %158 = vmatprep.subr.mxu0 0.0
    %159 = vmatpush2.msra.mxu0 0.0
    %160 = vmatprep.subr.mxu0 0.0
    %161 = vmatpush2.msra.mxu0 0.0
    %162 = vmatprep.subr.mxu0 0.0
    %163 = vmatpush2.msra.mxu0 0.0
    %164 = vmatprep.subr.mxu0 0.0
    %165 = vmatpush2.msra.mxu0 0.0
    %166 = vmatprep.mubr.f32.mxu0 0.0
    %167 = vmatmul.mubr.f32.gmra.mxu0 %v97
    %v168 = vpop.f32.mrf.mxu0
    %v169 = vadd.f32 %v76, %v168
    %v170 = vpop.f32.mrf.mxu0
    %171 = vmatprep.mubr.f32.mxu0 0.0
    %172 = vmatmul.mubr.f32.gmra.mxu0 %v100
    %v173 = vpop.f32.mrf.mxu0
    %v174 = vadd.f32 %v77, %v173
    %v175 = vpop.f32.mrf.mxu0
    %176 = vdwg.mxu0
    %177 = vmatprep.subr.mxu0 0.0
    %178 = vmatpush1.msra.mxu0 %v93
    %179 = vmatprep.subr.mxu0 0.0
    %180 = vmatpush1.msra.mxu0 %v92
    %181 = vmatprep.subr.mxu0 0.0
    %182 = vmatpush1.msra.mxu0 %v91
    %183 = vmatprep.subr.mxu0 0.0
    %184 = vmatpush1.msra.mxu0 %v90
    %185 = vmatprep.subr.mxu0 0.0
    %186 = vmatpush1.msra.mxu0 %v89
    %187 = vmatprep.subr.mxu0 0.0
    %188 = vmatpush1.msra.mxu0 %v88
    %189 = vmatprep.subr.mxu0 0.0
    %190 = vmatpush1.msra.mxu0 %v87
    %191 = vmatprep.subr.mxu0 0.0
    %192 = vmatpush1.msra.mxu0 %v86
    %193 = vmatprep.subr.mxu0 0.0
    %194 = vmatpush1.msra.mxu0 %v85
    %195 = vmatprep.subr.mxu0 0.0
    %196 = vmatpush1.msra.mxu0 %v84
    %197 = vmatprep.subr.mxu0 0.0
    %198 = vmatpush1.msra.mxu0 %v83
    %199 = vmatprep.subr.mxu0 0.0
    %200 = vmatpush1.msra.mxu0 %v82
    %201 = vmatprep.subr.mxu0 0.0
    %202 = vmatpush1.msra.mxu0 %v81
    %203 = vmatprep.subr.mxu0 0.0
    %204 = vmatpush1.msra.mxu0 %v80
    %205 = vmatprep.subr.mxu0 0.0
    %206 = vmatpush1.msra.mxu0 %v79
    %207 = vmatprep.subr.mxu0 0.0
    %208 = vmatpush1.msra.mxu0 %v78
    %209 = vmatprep.subr.mxu0 0.0
    %210 = vmatpush2.msra.mxu0 0.0
    %211 = vmatprep.subr.mxu0 0.0
    %212 = vmatpush2.msra.mxu0 0.0
    %213 = vmatprep.subr.mxu0 0.0
    %214 = vmatpush2.msra.mxu0 0.0
    %215 = vmatprep.subr.mxu0 0.0
    %216 = vmatpush2.msra.mxu0 0.0
    %217 = vmatprep.subr.mxu0 0.0
    %218 = vmatpush2.msra.mxu0 0.0
    %219 = vmatprep.subr.mxu0 0.0
    %220 = vmatpush2.msra.mxu0 0.0
    %221 = vmatprep.subr.mxu0 0.0
    %222 = vmatpush2.msra.mxu0 0.0
    %223 = vmatprep.subr.mxu0 0.0
    %224 = vmatpush2.msra.mxu0 0.0
    %225 = vmatprep.subr.mxu0 0.0
    %226 = vmatpush2.msra.mxu0 0.0
    %227 = vmatprep.subr.mxu0 0.0
    %228 = vmatpush2.msra.mxu0 0.0
    %229 = vmatprep.subr.mxu0 0.0
    %230 = vmatpush2.msra.mxu0 0.0
    %231 = vmatprep.subr.mxu0 0.0
    %232 = vmatpush2.msra.mxu0 0.0
    %233 = vmatprep.subr.mxu0 0.0
    %234 = vmatpush2.msra.mxu0 0.0
    %235 = vmatprep.subr.mxu0 0.0
    %236 = vmatpush2.msra.mxu0 0.0
    %237 = vmatprep.subr.mxu0 0.0
    %238 = vmatpush2.msra.mxu0 0.0
    %239 = vmatprep.subr.mxu0 0.0
    %240 = vmatpush2.msra.mxu0 0.0
    %241 = vmatprep.mubr.f32.mxu0 0.0
    %242 = vmatmul.mubr.f32.gmra.mxu0 %v169
    %v243 = vpop.f32.mrf.mxu0
    %v244 = vadd.f32 %v94, %v243
    %v245 = vpop.f32.mrf.mxu0
    %246 = vmatprep.mubr.f32.mxu0 0.0
    %247 = vmatmul.mubr.f32.gmra.mxu0 %v174
    %v248 = vpop.f32.mrf.mxu0
    %v249 = vadd.f32 %v94, %v248
    %v250 = vpop.f32.mrf.mxu0
    %251 = vdwg.mxu0
    %v252 = vmul.f32 %v244, %v244
    %v253 = vmul.f32 %v249, %v249
    %vm254 = vcmask 523264
    %v255 = vsel %vm254, %v252, 0.0
    %256 = vadd.xlane.f32.xlu0 %v255
    %v257 = vpop.xlane.xlu0 %256
    %v258 = vsel %vm254, %v253, 0.0
    %259 = vadd.xlane.f32.xlu0 %v258
    %v260 = vpop.xlane.xlu0 %259
    %v261 = vrsqrt.pop %v257
    %v262 = vmul.f32 %v257, %v261
    %vm263 = vcmp.eq.f32.partialorder %v257, inf
    %v264 = vsel %vm263, %v257, %v262
    %vm265 = vcmp.eq.f32.partialorder %v257, 0.0
    %v266 = vand.u32 %v257, 2147483648
    %v267 = vsel %vm265, %v266, %v264
    %v268 = vrsqrt.pop %v260
    %v269 = vmul.f32 %v260, %v268
    %vm270 = vcmp.eq.f32.partialorder %v260, inf
    %v271 = vsel %vm270, %v260, %v269
    %vm272 = vcmp.eq.f32.partialorder %v260, 0.0
    %v273 = vand.u32 %v260, 2147483648
    %v274 = vsel %vm272, %v273, %v271
    %v275 = vmax.f32 %v267, 1e-12
    %v276 = vmax.f32 %v274, 1e-12
    %v277 = vrcp.pop %v275
    %v278 = vmul.f32 %v244, %v277
    %v279 = vrcp.pop %v276
    %v280 = vmul.f32 %v249, %v279
    %v281 = vmul.f32 %v278, %v69
    %v282 = vmul.f32 %v280, %v74
    %v283 = vld [vmem:[#allocation3] sm:$0xff]
    %v284 = vld [vmem:[#allocation3 + $0xa8] sm:$0xff]
    %v285 = vld [vmem:[#allocation3 + $0x150] sm:$0xff]
    %v286 = vld [vmem:[#allocation3 + $0x1f8] sm:$0xff]
    %v287 = vld [vmem:[#allocation3 + $0x2a0] sm:$0xff]
    %v288 = vld [vmem:[#allocation3 + $0x348] sm:$0xff]
    %v289 = vld [vmem:[#allocation3 + $0x3f0] sm:$0xff]
    %v290 = vld [vmem:[#allocation3 + $0x498] sm:$0xff]
    %v291 = vld [vmem:[%s6 + $0x1] ss:$0 sm:$0xff]
    %292 = vmatprep.subr.mxu0 0.0
    %293 = vmatpush1.msra.mxu0 0.0
    %294 = vmatprep.subr.mxu0 0.0
    %295 = vmatpush1.msra.mxu0 0.0
    %296 = vmatprep.subr.mxu0 0.0
    %297 = vmatpush1.msra.mxu0 0.0
    %298 = vmatprep.subr.mxu0 0.0
    %299 = vmatpush1.msra.mxu0 0.0
    %300 = vmatprep.subr.mxu0 0.0
    %301 = vmatpush1.msra.mxu0 0.0
    %302 = vmatprep.subr.mxu0 0.0
    %303 = vmatpush1.msra.mxu0 0.0
    %304 = vmatprep.subr.mxu0 0.0
    %305 = vmatpush1.msra.mxu0 0.0
    %306 = vmatprep.subr.mxu0 0.0
    %307 = vmatpush1.msra.mxu0 0.0
    %308 = vmatprep.subr.mxu0 0.0
    %309 = vmatpush1.msra.mxu0 0.0
    %310 = vmatprep.subr.mxu0 0.0
    %311 = vmatpush1.msra.mxu0 0.0
    %312 = vmatprep.subr.mxu0 0.0
    %313 = vmatpush1.msra.mxu0 0.0
    %314 = vmatprep.subr.mxu0 0.0
    %315 = vmatpush1.msra.mxu0 0.0
    %316 = vmatprep.subr.mxu0 0.0
    %317 = vmatpush1.msra.mxu0 0.0
    %318 = vmatprep.subr.mxu0 0.0
    %319 = vmatpush1.msra.mxu0 0.0
    %320 = vmatprep.subr.mxu0 0.0
    %321 = vmatpush1.msra.mxu0 %v282
    %322 = vmatprep.subr.mxu0 0.0
    %323 = vmatpush1.msra.mxu0 %v281
    %324 = vmatprep.subr.mxu0 0.0
    %325 = vmatpush2.msra.mxu0 0.0
    %326 = vmatprep.subr.mxu0 0.0
    %327 = vmatpush2.msra.mxu0 0.0
    %328 = vmatprep.subr.mxu0 0.0
    %329 = vmatpush2.msra.mxu0 0.0
    %330 = vmatprep.subr.mxu0 0.0
    %331 = vmatpush2.msra.mxu0 0.0
    %332 = vmatprep.subr.mxu0 0.0
    %333 = vmatpush2.msra.mxu0 0.0
    %334 = vmatprep.subr.mxu0 0.0
    %335 = vmatpush2.msra.mxu0 0.0
    %336 = vmatprep.subr.mxu0 0.0
    %337 = vmatpush2.msra.mxu0 0.0
    %338 = vmatprep.subr.mxu0 0.0
    %339 = vmatpush2.msra.mxu0 0.0
    %340 = vmatprep.subr.mxu0 0.0
    %341 = vmatpush2.msra.mxu0 0.0
    %342 = vmatprep.subr.mxu0 0.0
    %343 = vmatpush2.msra.mxu0 0.0
    %344 = vmatprep.subr.mxu0 0.0
    %345 = vmatpush2.msra.mxu0 0.0
    %346 = vmatprep.subr.mxu0 0.0
    %347 = vmatpush2.msra.mxu0 0.0
    %348 = vmatprep.subr.mxu0 0.0
    %349 = vmatpush2.msra.mxu0 0.0
    %350 = vmatprep.subr.mxu0 0.0
    %351 = vmatpush2.msra.mxu0 0.0
    %352 = vmatprep.subr.mxu0 0.0
    %353 = vmatpush2.msra.mxu0 0.0
    %354 = vmatprep.subr.mxu0 0.0
    %355 = vmatpush2.msra.mxu0 0.0
    %356 = vmatprep.mubr.f32.mxu0 0.0
    %357 = vmatmul.mubr.f32.gmra.mxu0 %v97
    %v358 = vpop.f32.mrf.mxu0
    %v359 = vadd.f32 %v281, %v358
    %v360 = vpop.f32.mrf.mxu0
    %361 = vmatprep.mubr.f32.mxu0 0.0
    %362 = vmatmul.mubr.f32.gmra.mxu0 %v100
    %v363 = vpop.f32.mrf.mxu0
    %v364 = vadd.f32 %v282, %v363
    %v365 = vpop.f32.mrf.mxu0
    %366 = vdwg.mxu0
    %v368 = vsel %vm254, %v359, 0
    %v371 = vsel %vm254, %v364, 0
    %373 = vmatprep.subr.mxu0 0.0
    %374 = vmatpush1.msra.mxu0 0.0
    %375 = vmatprep.subr.mxu0 0.0
    %376 = vmatpush1.msra.mxu0 0.0
    %377 = vmatprep.subr.mxu0 0.0
    %378 = vmatpush1.msra.mxu0 0.0
    %379 = vmatprep.subr.mxu0 0.0
    %380 = vmatpush1.msra.mxu0 0.0
    %381 = vmatprep.subr.mxu0 0.0
    %382 = vmatpush1.msra.mxu0 0.0
    %383 = vmatprep.subr.mxu0 0.0
    %384 = vmatpush1.msra.mxu0 0.0
    %385 = vmatprep.subr.mxu0 0.0
    %386 = vmatpush1.msra.mxu0 0.0
    %387 = vmatprep.subr.mxu0 0.0
    %388 = vmatpush1.msra.mxu0 0.0
    %389 = vmatprep.subr.mxu0 0.0
    %390 = vmatpush1.msra.mxu0 %v290
    %391 = vmatprep.subr.mxu0 0.0
    %392 = vmatpush1.msra.mxu0 %v289
    %393 = vmatprep.subr.mxu0 0.0
    %394 = vmatpush1.msra.mxu0 %v288
    %395 = vmatprep.subr.mxu0 0.0
    %396 = vmatpush1.msra.mxu0 %v287
    %397 = vmatprep.subr.mxu0 0.0
    %398 = vmatpush1.msra.mxu0 %v286
    %399 = vmatprep.subr.mxu0 0.0
    %400 = vmatpush1.msra.mxu0 %v285
    %401 = vmatprep.subr.mxu0 0.0
    %402 = vmatpush1.msra.mxu0 %v284
    %403 = vmatprep.subr.mxu0 0.0
    %404 = vmatpush1.msra.mxu0 %v283
    %405 = vmatprep.subr.mxu0 0.0
    %406 = vmatpush2.msra.mxu0 0.0
    %407 = vmatprep.subr.mxu0 0.0
    %408 = vmatpush2.msra.mxu0 0.0
    %409 = vmatprep.subr.mxu0 0.0
    %410 = vmatpush2.msra.mxu0 0.0
    %411 = vmatprep.subr.mxu0 0.0
    %412 = vmatpush2.msra.mxu0 0.0
    %413 = vmatprep.subr.mxu0 0.0
    %414 = vmatpush2.msra.mxu0 0.0
    %415 = vmatprep.subr.mxu0 0.0
    %416 = vmatpush2.msra.mxu0 0.0
    %417 = vmatprep.subr.mxu0 0.0
    %418 = vmatpush2.msra.mxu0 0.0
    %419 = vmatprep.subr.mxu0 0.0
    %420 = vmatpush2.msra.mxu0 0.0
    %421 = vmatprep.subr.mxu0 0.0
    %422 = vmatpush2.msra.mxu0 0.0
    %423 = vmatprep.subr.mxu0 0.0
    %424 = vmatpush2.msra.mxu0 0.0
    %425 = vmatprep.subr.mxu0 0.0
    %426 = vmatpush2.msra.mxu0 0.0
    %427 = vmatprep.subr.mxu0 0.0
    %428 = vmatpush2.msra.mxu0 0.0
    %429 = vmatprep.subr.mxu0 0.0
    %430 = vmatpush2.msra.mxu0 0.0
    %431 = vmatprep.subr.mxu0 0.0
    %432 = vmatpush2.msra.mxu0 0.0
    %433 = vmatprep.subr.mxu0 0.0
    %434 = vmatpush2.msra.mxu0 0.0
    %435 = vmatprep.subr.mxu0 0.0
    %436 = vmatpush2.msra.mxu0 0.0
    %437 = vmatprep.mubr.f32.mxu0 0.0
    %438 = vmatmul.mubr.f32.gmra.mxu0 %v368
    %v439 = vpop.f32.mrf.mxu0
    %v440 = vadd.f32 %v291, %v439
    %v441 = vpop.f32.mrf.mxu0
    %442 = vmatprep.mubr.f32.mxu0 0.0
    %443 = vmatmul.mubr.f32.gmra.mxu0 %v371
    %v444 = vpop.f32.mrf.mxu0
    %v445 = vadd.f32 %v291, %v444
    %v446 = vpop.f32.mrf.mxu0
    %447 = vdwg.mxu0
    %v448 = vmul.f32 %v440, %v440
    %v449 = vmul.f32 %v445, %v445
    %v450 = vsel %vm254, %v448, 0.0
    %451 = vadd.xlane.f32.xlu0 %v450
    %v452 = vpop.xlane.xlu0 %451
    %v453 = vsel %vm254, %v449, 0.0
    %454 = vadd.xlane.f32.xlu0 %v453
    %v455 = vpop.xlane.xlu0 %454
    %v456 = vrsqrt.pop %v452
    %v457 = vmul.f32 %v452, %v456
    %vm458 = vcmp.eq.f32.partialorder %v452, inf
    %v459 = vsel %vm458, %v452, %v457
    %vm460 = vcmp.eq.f32.partialorder %v452, 0.0
    %v461 = vand.u32 %v452, 2147483648
    %v462 = vsel %vm460, %v461, %v459
    %v463 = vrsqrt.pop %v455
    %v464 = vmul.f32 %v455, %v463
    %vm465 = vcmp.eq.f32.partialorder %v455, inf
    %v466 = vsel %vm465, %v455, %v464
    %vm467 = vcmp.eq.f32.partialorder %v455, 0.0
    %v468 = vand.u32 %v455, 2147483648
    %v469 = vsel %vm467, %v468, %v466
    %v470 = vmax.f32 %v462, 1e-12
    %v471 = vmax.f32 %v469, 1e-12
    %v472 = vrcp.pop %v470
    %v473 = vmul.f32 %v440, %v472
    %v474 = vrcp.pop %v471
    %v475 = vmul.f32 %v445, %v474
    %v476 = vmul.f32 %v473, %v69
    %v477 = vmul.f32 %v475, %v74
    %v478 = vld [vmem:[%s6] sm:$0xf0]
    %v479 = vld [vmem:[%s6 + $0x10] sm:$0xf]
    %v480 = vld [vmem:[#allocation3 + $0x18] sm:$0xff]
    %v481 = vld [vmem:[#allocation3 + $0xc0] sm:$0xff]
    %v482 = vld [vmem:[#allocation3 + $0x168] sm:$0xff]
    %v483 = vld [vmem:[#allocation3 + $0x210] sm:$0xff]
    %v484 = vld [vmem:[#allocation3 + $0x2b8] sm:$0xff]
    %v485 = vld [vmem:[#allocation3 + $0x360] sm:$0xff]
    %v486 = vld [vmem:[#allocation3 + $0x408] sm:$0xff]
    %v487 = vld [vmem:[#allocation3 + $0x4b0] sm:$0xff]
    %v488 = vld [vmem:[%s6 + $0x14] ss:$0 sm:$0xff]
    %vm491 = vcmask 1043456
    %v492 = vrot.slane %v478, 4
    %v493 = vrot.slane %v479, 4
    %v494 = vsel %vm491, %v492, %v493
    %v495 = vsel %vm254, %v494, 0
    %497 = vmatprep.subr.mxu0 0.0
    %498 = vmatpush1.msra.mxu0 0.0
    %499 = vmatprep.subr.mxu0 0.0
    %500 = vmatpush1.msra.mxu0 0.0
    %501 = vmatprep.subr.mxu0 0.0
    %502 = vmatpush1.msra.mxu0 0.0
    %503 = vmatprep.subr.mxu0 0.0
    %504 = vmatpush1.msra.mxu0 0.0
    %505 = vmatprep.subr.mxu0 0.0
    %506 = vmatpush1.msra.mxu0 0.0
    %507 = vmatprep.subr.mxu0 0.0
    %508 = vmatpush1.msra.mxu0 0.0
    %509 = vmatprep.subr.mxu0 0.0
    %510 = vmatpush1.msra.mxu0 0.0
    %511 = vmatprep.subr.mxu0 0.0
    %512 = vmatpush1.msra.mxu0 0.0
    %513 = vmatprep.subr.mxu0 0.0
    %514 = vmatpush1.msra.mxu0 %v487
    %515 = vmatprep.subr.mxu0 0.0
    %516 = vmatpush1.msra.mxu0 %v486
    %517 = vmatprep.subr.mxu0 0.0
    %518 = vmatpush1.msra.mxu0 %v485
    %519 = vmatprep.subr.mxu0 0.0
    %520 = vmatpush1.msra.mxu0 %v484
    %521 = vmatprep.subr.mxu0 0.0
    %522 = vmatpush1.msra.mxu0 %v483
    %523 = vmatprep.subr.mxu0 0.0
    %524 = vmatpush1.msra.mxu0 %v482
    %525 = vmatprep.subr.mxu0 0.0
    %526 = vmatpush1.msra.mxu0 %v481
    %527 = vmatprep.subr.mxu0 0.0
    %528 = vmatpush1.msra.mxu0 %v480
    %529 = vmatprep.subr.mxu0 0.0
    %530 = vmatpush2.msra.mxu0 0.0
    %531 = vmatprep.subr.mxu0 0.0
    %532 = vmatpush2.msra.mxu0 0.0
    %533 = vmatprep.subr.mxu0 0.0
    %534 = vmatpush2.msra.mxu0 0.0
    %535 = vmatprep.subr.mxu0 0.0
    %536 = vmatpush2.msra.mxu0 0.0
    %537 = vmatprep.subr.mxu0 0.0
    %538 = vmatpush2.msra.mxu0 0.0
    %539 = vmatprep.subr.mxu0 0.0
    %540 = vmatpush2.msra.mxu0 0.0
    %541 = vmatprep.subr.mxu0 0.0
    %542 = vmatpush2.msra.mxu0 0.0
    %543 = vmatprep.subr.mxu0 0.0
    %544 = vmatpush2.msra.mxu0 0.0
    %545 = vmatprep.subr.mxu0 0.0
    %546 = vmatpush2.msra.mxu0 0.0
    %547 = vmatprep.subr.mxu0 0.0
    %548 = vmatpush2.msra.mxu0 0.0
    %549 = vmatprep.subr.mxu0 0.0
    %550 = vmatpush2.msra.mxu0 0.0
    %551 = vmatprep.subr.mxu0 0.0
    %552 = vmatpush2.msra.mxu0 0.0
    %553 = vmatprep.subr.mxu0 0.0
    %554 = vmatpush2.msra.mxu0 0.0
    %555 = vmatprep.subr.mxu0 0.0
    %556 = vmatpush2.msra.mxu0 0.0
    %557 = vmatprep.subr.mxu0 0.0
    %558 = vmatpush2.msra.mxu0 0.0
    %559 = vmatprep.subr.mxu0 0.0
    %560 = vmatpush2.msra.mxu0 0.0
    %561 = vmatprep.mubr.f32.mxu0 0.0
    %562 = vmatmul.mubr.f32.gmra.mxu0 %v495
    %v563 = vpop.f32.mrf.mxu0
    %v564 = vadd.f32 %v488, %v563
    %v565 = vpop.f32.mrf.mxu0
    %566 = vdwg.mxu0
    %v567 = vld [vmem:[#allocation3 + $0x20] sm:$0xff]
    %v568 = vld [vmem:[#allocation3 + $0xc8] sm:$0xff]
    %v569 = vld [vmem:[#allocation3 + $0x170] sm:$0xff]
    %v570 = vld [vmem:[#allocation3 + $0x218] sm:$0xff]
    %v571 = vld [vmem:[#allocation3 + $0x2c0] sm:$0xff]
    %v572 = vld [vmem:[#allocation3 + $0x368] sm:$0xff]
    %v573 = vld [vmem:[#allocation3 + $0x410] sm:$0xff]
    %v574 = vld [vmem:[#allocation3 + $0x4b8] sm:$0xff]
    %v575 = vld [vmem:[%s6 + $0x15] ss:$0 sm:$0xff]
    %v577 = vsel %vm254, %v476, 0
    %v580 = vsel %vm254, %v477, 0
    %582 = vmatprep.subr.mxu0 0.0
    %583 = vmatpush1.msra.mxu0 0.0
    %584 = vmatprep.subr.mxu0 0.0
    %585 = vmatpush1.msra.mxu0 0.0
    %586 = vmatprep.subr.mxu0 0.0
    %587 = vmatpush1.msra.mxu0 0.0
    %588 = vmatprep.subr.mxu0 0.0
    %589 = vmatpush1.msra.mxu0 0.0
    %590 = vmatprep.subr.mxu0 0.0
    %591 = vmatpush1.msra.mxu0 0.0
    %592 = vmatprep.subr.mxu0 0.0
    %593 = vmatpush1.msra.mxu0 0.0
    %594 = vmatprep.subr.mxu0 0.0
    %595 = vmatpush1.msra.mxu0 0.0
    %596 = vmatprep.subr.mxu0 0.0
    %597 = vmatpush1.msra.mxu0 0.0
    %598 = vmatprep.subr.mxu0 0.0
    %599 = vmatpush1.msra.mxu0 %v574
    %600 = vmatprep.subr.mxu0 0.0
    %601 = vmatpush1.msra.mxu0 %v573
    %602 = vmatprep.subr.mxu0 0.0
    %603 = vmatpush1.msra.mxu0 %v572
    %604 = vmatprep.subr.mxu0 0.0
    %605 = vmatpush1.msra.mxu0 %v571
    %606 = vmatprep.subr.mxu0 0.0
    %607 = vmatpush1.msra.mxu0 %v570
    %608 = vmatprep.subr.mxu0 0.0
    %609 = vmatpush1.msra.mxu0 %v569
    %610 = vmatprep.subr.mxu0 0.0
    %611 = vmatpush1.msra.mxu0 %v568
    %612 = vmatprep.subr.mxu0 0.0
    %613 = vmatpush1.msra.mxu0 %v567
    %614 = vmatprep.subr.mxu0 0.0
    %615 = vmatpush2.msra.mxu0 0.0
    %616 = vmatprep.subr.mxu0 0.0
    %617 = vmatpush2.msra.mxu0 0.0
    %618 = vmatprep.subr.mxu0 0.0
    %619 = vmatpush2.msra.mxu0 0.0
    %620 = vmatprep.subr.mxu0 0.0
    %621 = vmatpush2.msra.mxu0 0.0
    %622 = vmatprep.subr.mxu0 0.0
    %623 = vmatpush2.msra.mxu0 0.0
    %624 = vmatprep.subr.mxu0 0.0
    %625 = vmatpush2.msra.mxu0 0.0
    %626 = vmatprep.subr.mxu0 0.0
    %627 = vmatpush2.msra.mxu0 0.0
    %628 = vmatprep.subr.mxu0 0.0
    %629 = vmatpush2.msra.mxu0 0.0
    %630 = vmatprep.subr.mxu0 0.0
    %631 = vmatpush2.msra.mxu0 0.0
    %632 = vmatprep.subr.mxu0 0.0
    %633 = vmatpush2.msra.mxu0 0.0
    %634 = vmatprep.subr.mxu0 0.0
    %635 = vmatpush2.msra.mxu0 0.0
    %636 = vmatprep.subr.mxu0 0.0
    %637 = vmatpush2.msra.mxu0 0.0
    %638 = vmatprep.subr.mxu0 0.0
    %639 = vmatpush2.msra.mxu0 0.0
    %640 = vmatprep.subr.mxu0 0.0
    %641 = vmatpush2.msra.mxu0 0.0
    %642 = vmatprep.subr.mxu0 0.0
    %643 = vmatpush2.msra.mxu0 0.0
    %644 = vmatprep.subr.mxu0 0.0
    %645 = vmatpush2.msra.mxu0 0.0
    %646 = vmatprep.mubr.f32.mxu0 0.0
    %647 = vmatmul.mubr.f32.gmra.mxu0 %v577
    %v648 = vpop.f32.mrf.mxu0
    %v649 = vadd.f32 %v575, %v648
    %v650 = vpop.f32.mrf.mxu0
    %651 = vmatprep.mubr.f32.mxu0 0.0
    %652 = vmatmul.mubr.f32.gmra.mxu0 %v580
    %v653 = vpop.f32.mrf.mxu0
    %v654 = vadd.f32 %v575, %v653
    %v655 = vpop.f32.mrf.mxu0
    %656 = vdwg.mxu0
    %v657 = vld [vmem:[#allocation3 + $0x28] sm:$0xff]
    %v658 = vld [vmem:[#allocation3 + $0xd0] sm:$0xff]
    %v659 = vld [vmem:[#allocation3 + $0x178] sm:$0xff]
    %v660 = vld [vmem:[#allocation3 + $0x220] sm:$0xff]
    %v661 = vld [vmem:[#allocation3 + $0x2c8] sm:$0xff]
    %v662 = vld [vmem:[#allocation3 + $0x370] sm:$0xff]
    %v663 = vld [vmem:[#allocation3 + $0x418] sm:$0xff]
    %v664 = vld [vmem:[#allocation3 + $0x4c0] sm:$0xff]
    %v665 = vld [vmem:[%s6 + $0x16] ss:$0 sm:$0xff]
    %vm666 = vcmask 64512
    %v668 = vsel %vm666, %v649, 0
    %v671 = vsel %vm666, %v654, 0
    %v674 = vsel %vm666, %v564, 0
    %676 = vmatprep.subr.mxu0 0.0
    %677 = vmatpush1.xpose.msra.mxu0 0.0
    %678 = vmatprep.subr.mxu0 0.0
    %679 = vmatpush1.xpose.msra.mxu0 0.0
    %680 = vmatprep.subr.mxu0 0.0
    %681 = vmatpush1.xpose.msra.mxu0 0.0
    %682 = vmatprep.subr.mxu0 0.0
    %683 = vmatpush1.xpose.msra.mxu0 0.0
    %684 = vmatprep.subr.mxu0 0.0
    %685 = vmatpush1.xpose.msra.mxu0 0.0
    %686 = vmatprep.subr.mxu0 0.0
    %687 = vmatpush1.xpose.msra.mxu0 0.0
    %688 = vmatprep.subr.mxu0 0.0
    %689 = vmatpush1.xpose.msra.mxu0 0.0
    %690 = vmatprep.subr.mxu0 0.0
    %691 = vmatpush1.xpose.msra.mxu0 0.0
    %692 = vmatprep.subr.mxu0 0.0
    %693 = vmatpush1.xpose.msra.mxu0 0.0
    %694 = vmatprep.subr.mxu0 0.0
    %695 = vmatpush1.xpose.msra.mxu0 0.0
    %696 = vmatprep.subr.mxu0 0.0
    %697 = vmatpush1.xpose.msra.mxu0 0.0
    %698 = vmatprep.subr.mxu0 0.0
    %699 = vmatpush1.xpose.msra.mxu0 0.0
    %700 = vmatprep.subr.mxu0 0.0
    %701 = vmatpush1.xpose.msra.mxu0 0.0
    %702 = vmatprep.subr.mxu0 0.0
    %703 = vmatpush1.xpose.msra.mxu0 0.0
    %704 = vmatprep.subr.mxu0 0.0
    %705 = vmatpush1.xpose.msra.mxu0 0.0
    %706 = vmatprep.subr.mxu0 0.0
    %707 = vmatpush1.xpose.msra.mxu0 %v674
    %708 = vmatprep.subr.mxu0 0.0
    %709 = vmatpush2.xpose.msra.mxu0 0.0
    %710 = vmatprep.subr.mxu0 0.0
    %711 = vmatpush2.xpose.msra.mxu0 0.0
    %712 = vmatprep.subr.mxu0 0.0
    %713 = vmatpush2.xpose.msra.mxu0 0.0
    %714 = vmatprep.subr.mxu0 0.0
    %715 = vmatpush2.xpose.msra.mxu0 0.0
    %716 = vmatprep.subr.mxu0 0.0
    %717 = vmatpush2.xpose.msra.mxu0 0.0
    %718 = vmatprep.subr.mxu0 0.0
    %719 = vmatpush2.xpose.msra.mxu0 0.0
    %720 = vmatprep.subr.mxu0 0.0
    %721 = vmatpush2.xpose.msra.mxu0 0.0
    %722 = vmatprep.subr.mxu0 0.0
    %723 = vmatpush2.xpose.msra.mxu0 0.0
    %724 = vmatprep.subr.mxu0 0.0
    %725 = vmatpush2.xpose.msra.mxu0 0.0
    %726 = vmatprep.subr.mxu0 0.0
    %727 = vmatpush2.xpose.msra.mxu0 0.0
    %728 = vmatprep.subr.mxu0 0.0
    %729 = vmatpush2.xpose.msra.mxu0 0.0
    %730 = vmatprep.subr.mxu0 0.0
    %731 = vmatpush2.xpose.msra.mxu0 0.0
    %732 = vmatprep.subr.mxu0 0.0
    %733 = vmatpush2.xpose.msra.mxu0 0.0
    %734 = vmatprep.subr.mxu0 0.0
    %735 = vmatpush2.xpose.msra.mxu0 0.0
    %736 = vmatprep.subr.mxu0 0.0
    %737 = vmatpush2.xpose.msra.mxu0 0.0
    %738 = vmatprep.subr.mxu0 0.0
    %739 = vmatpush2.xpose.msra.mxu0 0.0
    %740 = vmatprep.mubr.f32.mxu0 0.0
    %741 = vmatmul.mubr.f32.gmra.mxu0 %v668
    %v742 = vpop.f32.mrf.mxu0
    %v743 = vadd.f32 0.0, %v742
    %v744 = vpop.f32.mrf.mxu0
    %745 = vmatprep.mubr.f32.mxu0 0.0
    %746 = vmatmul.mubr.f32.gmra.mxu0 %v671
    %v747 = vpop.f32.mrf.mxu0
    %v748 = vadd.f32 0.0, %v747
    %v749 = vpop.f32.mrf.mxu0
    %750 = vdwg.mxu0
    %v751 = vmul.f32 %v743, 0.35355338
    %v752 = vmul.f32 %v748, 0.35355338
    %v753 = vsel %vm666, %v751, -inf
    %754 = vmax.xlane.f32.xlu0 %v753
    %v755 = vpop.xlane.xlu0 %754
    %v756 = vsel %vm666, %v752, -inf
    %757 = vmax.xlane.f32.xlu0 %v756
    %v758 = vpop.xlane.xlu0 %757
    %v759 = vsub.f32 %v751, %v755
    %v760 = vsub.f32 %v752, %v758
    %v761 = vmul.f32 %v759, 1.442695
    %v762 = vpow.pop %v761
    %v763 = vmul.f32 %v760, 1.442695
    %v764 = vpow.pop %v763
    %v765 = vsel %vm666, %v762, 0.0
    %766 = vadd.xlane.f32.xlu0 %v765
    %v767 = vpop.xlane.xlu0 %766
    %v768 = vsel %vm666, %v764, 0.0
    %769 = vadd.xlane.f32.xlu0 %v768
    %v770 = vpop.xlane.xlu0 %769
    %v771 = vrcp.pop %v767
    %v772 = vmul.f32 %v762, %v771
    %v773 = vrcp.pop %v770
    %v774 = vmul.f32 %v764, %v773
    %775 = vrot.lane.b32.xlu0 %v564, 64
    %v776 = vpop.permute.xlu0 %775
    %v779 = vsel %vm666, %v772, 0
    %v782 = vsel %vm666, %v774, 0
    %784 = vmatprep.subr.mxu0 0.0
    %785 = vmatpush1.msra.mxu0 0.0
    %786 = vmatprep.subr.mxu0 0.0
    %787 = vmatpush1.msra.mxu0 0.0
    %788 = vmatprep.subr.mxu0 0.0
    %789 = vmatpush1.msra.mxu0 0.0
    %790 = vmatprep.subr.mxu0 0.0
    %791 = vmatpush1.msra.mxu0 0.0
    %792 = vmatprep.subr.mxu0 0.0
    %793 = vmatpush1.msra.mxu0 0.0
    %794 = vmatprep.subr.mxu0 0.0
    %795 = vmatpush1.msra.mxu0 0.0
    %796 = vmatprep.subr.mxu0 0.0
    %797 = vmatpush1.msra.mxu0 0.0
    %798 = vmatprep.subr.mxu0 0.0
    %799 = vmatpush1.msra.mxu0 0.0
    %800 = vmatprep.subr.mxu0 0.0
    %801 = vmatpush1.msra.mxu0 0.0
    %802 = vmatprep.subr.mxu0 0.0
    %803 = vmatpush1.msra.mxu0 0.0
    %804 = vmatprep.subr.mxu0 0.0
    %805 = vmatpush1.msra.mxu0 0.0
    %806 = vmatprep.subr.mxu0 0.0
    %807 = vmatpush1.msra.mxu0 0.0
    %808 = vmatprep.subr.mxu0 0.0
    %809 = vmatpush1.msra.mxu0 0.0
    %810 = vmatprep.subr.mxu0 0.0
    %811 = vmatpush1.msra.mxu0 0.0
    %812 = vmatprep.subr.mxu0 0.0
    %813 = vmatpush1.msra.mxu0 0.0
    %814 = vmatprep.subr.mxu0 0.0
    %815 = vmatpush1.msra.mxu0 %v776
    %816 = vmatprep.subr.mxu0 0.0
    %817 = vmatpush2.msra.mxu0 0.0
    %818 = vmatprep.subr.mxu0 0.0
    %819 = vmatpush2.msra.mxu0 0.0
    %820 = vmatprep.subr.mxu0 0.0
    %821 = vmatpush2.msra.mxu0 0.0
    %822 = vmatprep.subr.mxu0 0.0
    %823 = vmatpush2.msra.mxu0 0.0
    %824 = vmatprep.subr.mxu0 0.0
    %825 = vmatpush2.msra.mxu0 0.0
    %826 = vmatprep.subr.mxu0 0.0
    %827 = vmatpush2.msra.mxu0 0.0
    %828 = vmatprep.subr.mxu0 0.0
    %829 = vmatpush2.msra.mxu0 0.0
    %830 = vmatprep.subr.mxu0 0.0
    %831 = vmatpush2.msra.mxu0 0.0
    %832 = vmatprep.subr.mxu0 0.0
    %833 = vmatpush2.msra.mxu0 0.0
    %834 = vmatprep.subr.mxu0 0.0
    %835 = vmatpush2.msra.mxu0 0.0
    %836 = vmatprep.subr.mxu0 0.0
    %837 = vmatpush2.msra.mxu0 0.0
    %838 = vmatprep.subr.mxu0 0.0
    %839 = vmatpush2.msra.mxu0 0.0
    %840 = vmatprep.subr.mxu0 0.0
    %841 = vmatpush2.msra.mxu0 0.0
    %842 = vmatprep.subr.mxu0 0.0
    %843 = vmatpush2.msra.mxu0 0.0
    %844 = vmatprep.subr.mxu0 0.0
    %845 = vmatpush2.msra.mxu0 0.0
    %846 = vmatprep.subr.mxu0 0.0
    %847 = vmatpush2.msra.mxu0 0.0
    %848 = vmatprep.mubr.f32.mxu0 0.0
    %849 = vmatmul.mubr.f32.gmra.mxu0 %v779
    %v850 = vpop.f32.mrf.mxu0
    %v851 = vadd.f32 0.0, %v850
    %v852 = vpop.f32.mrf.mxu0
    %853 = vmatprep.mubr.f32.mxu0 0.0
    %854 = vmatmul.mubr.f32.gmra.mxu0 %v782
    %v855 = vpop.f32.mrf.mxu0
    %v856 = vadd.f32 0.0, %v855
    %v857 = vpop.f32.mrf.mxu0
    %858 = vdwg.mxu0
    %859 = vst.msk [vmem:[#allocation2] sm:$0xff] %vm666, %v851
    %860 = vst.msk [vmem:[#allocation2 + $0x8] sm:$0xff] %vm666, %v856
    %861 = vrot.lane.b32.xlu0 %v649, 120
    %v862 = vpop.permute.xlu0 %861
    %863 = vrot.lane.b32.xlu0 %v654, 120
    %v864 = vpop.permute.xlu0 %863
    %865 = vrot.lane.b32.xlu0 %v564, 120
    %v866 = vpop.permute.xlu0 %865
    %v867 = vsel %vm666, %v862, 0
    %v869 = vsel %vm666, %v864, 0
    %v871 = vsel %vm666, %v866, 0
    %873 = vmatprep.subr.mxu0 0.0
    %874 = vmatpush1.xpose.msra.mxu0 0.0
    %875 = vmatprep.subr.mxu0 0.0
    %876 = vmatpush1.xpose.msra.mxu0 0.0
    %877 = vmatprep.subr.mxu0 0.0
    %878 = vmatpush1.xpose.msra.mxu0 0.0
    %879 = vmatprep.subr.mxu0 0.0
    %880 = vmatpush1.xpose.msra.mxu0 0.0
    %881 = vmatprep.subr.mxu0 0.0
    %882 = vmatpush1.xpose.msra.mxu0 0.0
    %883 = vmatprep.subr.mxu0 0.0
    %884 = vmatpush1.xpose.msra.mxu0 0.0
    %885 = vmatprep.subr.mxu0 0.0
    %886 = vmatpush1.xpose.msra.mxu0 0.0
    %887 = vmatprep.subr.mxu0 0.0
    %888 = vmatpush1.xpose.msra.mxu0 0.0
    %889 = vmatprep.subr.mxu0 0.0
    %890 = vmatpush1.xpose.msra.mxu0 0.0
    %891 = vmatprep.subr.mxu0 0.0
    %892 = vmatpush1.xpose.msra.mxu0 0.0
    %893 = vmatprep.subr.mxu0 0.0
    %894 = vmatpush1.xpose.msra.mxu0 0.0
    %895 = vmatprep.subr.mxu0 0.0
    %896 = vmatpush1.xpose.msra.mxu0 0.0
    %897 = vmatprep.subr.mxu0 0.0
    %898 = vmatpush1.xpose.msra.mxu0 0.0
    %899 = vmatprep.subr.mxu0 0.0
    %900 = vmatpush1.xpose.msra.mxu0 0.0
    %901 = vmatprep.subr.mxu0 0.0
    %902 = vmatpush1.xpose.msra.mxu0 0.0
    %903 = vmatprep.subr.mxu0 0.0
    %904 = vmatpush1.xpose.msra.mxu0 %v871
    %905 = vmatprep.subr.mxu0 0.0
    %906 = vmatpush2.xpose.msra.mxu0 0.0
    %907 = vmatprep.subr.mxu0 0.0
    %908 = vmatpush2.xpose.msra.mxu0 0.0
    %909 = vmatprep.subr.mxu0 0.0
    %910 = vmatpush2.xpose.msra.mxu0 0.0
    %911 = vmatprep.subr.mxu0 0.0
    %912 = vmatpush2.xpose.msra.mxu0 0.0
    %913 = vmatprep.subr.mxu0 0.0
    %914 = vmatpush2.xpose.msra.mxu0 0.0
    %915 = vmatprep.subr.mxu0 0.0
    %916 = vmatpush2.xpose.msra.mxu0 0.0
    %917 = vmatprep.subr.mxu0 0.0
    %918 = vmatpush2.xpose.msra.mxu0 0.0
    %919 = vmatprep.subr.mxu0 0.0
    %920 = vmatpush2.xpose.msra.mxu0 0.0
    %921 = vmatprep.subr.mxu0 0.0
    %922 = vmatpush2.xpose.msra.mxu0 0.0
    %923 = vmatprep.subr.mxu0 0.0
    %924 = vmatpush2.xpose.msra.mxu0 0.0
    %925 = vmatprep.subr.mxu0 0.0
    %926 = vmatpush2.xpose.msra.mxu0 0.0
    %927 = vmatprep.subr.mxu0 0.0
    %928 = vmatpush2.xpose.msra.mxu0 0.0
    %929 = vmatprep.subr.mxu0 0.0
    %930 = vmatpush2.xpose.msra.mxu0 0.0
    %931 = vmatprep.subr.mxu0 0.0
    %932 = vmatpush2.xpose.msra.mxu0 0.0
    %933 = vmatprep.subr.mxu0 0.0
    %934 = vmatpush2.xpose.msra.mxu0 0.0
    %935 = vmatprep.subr.mxu0 0.0
    %936 = vmatpush2.xpose.msra.mxu0 0.0
    %937 = vmatprep.mubr.f32.mxu0 0.0
    %938 = vmatmul.mubr.f32.gmra.mxu0 %v867
    %v939 = vpop.f32.mrf.mxu0
    %v940 = vadd.f32 0.0, %v939
    %v941 = vpop.f32.mrf.mxu0
    %942 = vmatprep.mubr.f32.mxu0 0.0
    %943 = vmatmul.mubr.f32.gmra.mxu0 %v869
    %v944 = vpop.f32.mrf.mxu0
    %v945 = vadd.f32 0.0, %v944
    %v946 = vpop.f32.mrf.mxu0
    %947 = vdwg.mxu0
    %v948 = vmul.f32 %v940, 0.35355338
    %v949 = vmul.f32 %v945, 0.35355338
    %v950 = vsel %vm666, %v948, -inf
    %951 = vmax.xlane.f32.xlu0 %v950
    %v952 = vpop.xlane.xlu0 %951
    %v953 = vsel %vm666, %v949, -inf
    %954 = vmax.xlane.f32.xlu0 %v953
    %v955 = vpop.xlane.xlu0 %954
    %v956 = vsub.f32 %v948, %v952
    %v957 = vsub.f32 %v949, %v955
    %v958 = vmul.f32 %v956, 1.442695
    %v959 = vpow.pop %v958
    %v960 = vmul.f32 %v957, 1.442695
    %v961 = vpow.pop %v960
    %v962 = vsel %vm666, %v959, 0.0
    %963 = vadd.xlane.f32.xlu0 %v962
    %v964 = vpop.xlane.xlu0 %963
    %v965 = vsel %vm666, %v961, 0.0
    %966 = vadd.xlane.f32.xlu0 %v965
    %v967 = vpop.xlane.xlu0 %966
    %v968 = vrcp.pop %v964
    %v969 = vmul.f32 %v959, %v968
    %v970 = vrcp.pop %v967
    %v971 = vmul.f32 %v961, %v970
    %972 = vrot.lane.b32.xlu0 %v564, 56
    %v973 = vpop.permute.xlu0 %972
    %v976 = vsel %vm666, %v969, 0
    %v979 = vsel %vm666, %v971, 0
    %981 = vmatprep.subr.mxu0 0.0
    %982 = vmatpush1.msra.mxu0 0.0
    %983 = vmatprep.subr.mxu0 0.0
    %984 = vmatpush1.msra.mxu0 0.0
    %985 = vmatprep.subr.mxu0 0.0
    %986 = vmatpush1.msra.mxu0 0.0
    %987 = vmatprep.subr.mxu0 0.0
    %988 = vmatpush1.msra.mxu0 0.0
    %989 = vmatprep.subr.mxu0 0.0
    %990 = vmatpush1.msra.mxu0 0.0
    %991 = vmatprep.subr.mxu0 0.0
    %992 = vmatpush1.msra.mxu0 0.0
    %993 = vmatprep.subr.mxu0 0.0
    %994 = vmatpush1.msra.mxu0 0.0
    %995 = vmatprep.subr.mxu0 0.0
    %996 = vmatpush1.msra.mxu0 0.0
    %997 = vmatprep.subr.mxu0 0.0
    %998 = vmatpush1.msra.mxu0 0.0
    %999 = vmatprep.subr.mxu0 0.0
    %1000 = vmatpush1.msra.mxu0 0.0
    %1001 = vmatprep.subr.mxu0 0.0
    %1002 = vmatpush1.msra.mxu0 0.0
    %1003 = vmatprep.subr.mxu0 0.0
    %1004 = vmatpush1.msra.mxu0 0.0
    %1005 = vmatprep.subr.mxu0 0.0
    %1006 = vmatpush1.msra.mxu0 0.0
    %1007 = vmatprep.subr.mxu0 0.0
    %1008 = vmatpush1.msra.mxu0 0.0
    %1009 = vmatprep.subr.mxu0 0.0
    %1010 = vmatpush1.msra.mxu0 0.0
    %1011 = vmatprep.subr.mxu0 0.0
    %1012 = vmatpush1.msra.mxu0 %v973
    %1013 = vmatprep.subr.mxu0 0.0
    %1014 = vmatpush2.msra.mxu0 0.0
    %1015 = vmatprep.subr.mxu0 0.0
    %1016 = vmatpush2.msra.mxu0 0.0
    %1017 = vmatprep.subr.mxu0 0.0
    %1018 = vmatpush2.msra.mxu0 0.0
    %1019 = vmatprep.subr.mxu0 0.0
    %1020 = vmatpush2.msra.mxu0 0.0
    %1021 = vmatprep.subr.mxu0 0.0
    %1022 = vmatpush2.msra.mxu0 0.0
    %1023 = vmatprep.subr.mxu0 0.0
    %1024 = vmatpush2.msra.mxu0 0.0
    %1025 = vmatprep.subr.mxu0 0.0
    %1026 = vmatpush2.msra.mxu0 0.0
    %1027 = vmatprep.subr.mxu0 0.0
    %1028 = vmatpush2.msra.mxu0 0.0
    %1029 = vmatprep.subr.mxu0 0.0
    %1030 = vmatpush2.msra.mxu0 0.0
    %1031 = vmatprep.subr.mxu0 0.0
    %1032 = vmatpush2.msra.mxu0 0.0
    %1033 = vmatprep.subr.mxu0 0.0
    %1034 = vmatpush2.msra.mxu0 0.0
    %1035 = vmatprep.subr.mxu0 0.0
    %1036 = vmatpush2.msra.mxu0 0.0
    %1037 = vmatprep.subr.mxu0 0.0
    %1038 = vmatpush2.msra.mxu0 0.0
    %1039 = vmatprep.subr.mxu0 0.0
    %1040 = vmatpush2.msra.mxu0 0.0
    %1041 = vmatprep.subr.mxu0 0.0
    %1042 = vmatpush2.msra.mxu0 0.0
    %1043 = vmatprep.subr.mxu0 0.0
    %1044 = vmatpush2.msra.mxu0 0.0
    %1045 = vmatprep.mubr.f32.mxu0 0.0
    %1046 = vmatmul.mubr.f32.gmra.mxu0 %v976
    %v1047 = vpop.f32.mrf.mxu0
    %v1048 = vadd.f32 0.0, %v1047
    %v1049 = vpop.f32.mrf.mxu0
    %1050 = vmatprep.mubr.f32.mxu0 0.0
    %1051 = vmatmul.mubr.f32.gmra.mxu0 %v979
    %v1052 = vpop.f32.mrf.mxu0
    %v1053 = vadd.f32 0.0, %v1052
    %v1054 = vpop.f32.mrf.mxu0
    %1055 = vdwg.mxu0
    %1058 = vrot.lane.b32.xlu0 %v1048, 8
    %v1059 = vpop.permute.xlu0 %1058
    %1060 = vrot.lane.b32.xlu0 %v1053, 8
    %v1061 = vpop.permute.xlu0 %1060
    %vm1064 = vcmask 130112
    %1065 = vst.msk [vmem:[#allocation2] sm:$0xff] %vm1064, %v1059
    %1066 = vst.msk [vmem:[#allocation2 + $0x8] sm:$0xff] %vm1064, %v1061
    %1067 = vrot.lane.b32.xlu0 %v649, 112
    %v1068 = vpop.permute.xlu0 %1067
    %1069 = vrot.lane.b32.xlu0 %v654, 112
    %v1070 = vpop.permute.xlu0 %1069
    %1071 = vrot.lane.b32.xlu0 %v564, 112
    %v1072 = vpop.permute.xlu0 %1071
    %v1073 = vsel %vm666, %v1068, 0
    %v1075 = vsel %vm666, %v1070, 0
    %v1077 = vsel %vm666, %v1072, 0
    %1079 = vmatprep.subr.mxu0 0.0
    %1080 = vmatpush1.xpose.msra.mxu0 0.0
    %1081 = vmatprep.subr.mxu0 0.0
    %1082 = vmatpush1.xpose.msra.mxu0 0.0
    %1083 = vmatprep.subr.mxu0 0.0
    %1084 = vmatpush1.xpose.msra.mxu0 0.0
    %1085 = vmatprep.subr.mxu0 0.0
    %1086 = vmatpush1.xpose.msra.mxu0 0.0
    %1087 = vmatprep.subr.mxu0 0.0
    %1088 = vmatpush1.xpose.msra.mxu0 0.0
    %1089 = vmatprep.subr.mxu0 0.0
    %1090 = vmatpush1.xpose.msra.mxu0 0.0
    %1091 = vmatprep.subr.mxu0 0.0
    %1092 = vmatpush1.xpose.msra.mxu0 0.0
    %1093 = vmatprep.subr.mxu0 0.0
    %1094 = vmatpush1.xpose.msra.mxu0 0.0
    %1095 = vmatprep.subr.mxu0 0.0
    %1096 = vmatpush1.xpose.msra.mxu0 0.0
    %1097 = vmatprep.subr.mxu0 0.0
    %1098 = vmatpush1.xpose.msra.mxu0 0.0
    %1099 = vmatprep.subr.mxu0 0.0
    %1100 = vmatpush1.xpose.msra.mxu0 0.0
    %1101 = vmatprep.subr.mxu0 0.0
    %1102 = vmatpush1.xpose.msra.mxu0 0.0
    %1103 = vmatprep.subr.mxu0 0.0
    %1104 = vmatpush1.xpose.msra.mxu0 0.0
    %1105 = vmatprep.subr.mxu0 0.0
    %1106 = vmatpush1.xpose.msra.mxu0 0.0
    %1107 = vmatprep.subr.mxu0 0.0
    %1108 = vmatpush1.xpose.msra.mxu0 0.0
    %1109 = vmatprep.subr.mxu0 0.0
    %1110 = vmatpush1.xpose.msra.mxu0 %v1077
    %1111 = vmatprep.subr.mxu0 0.0
    %1112 = vmatpush2.xpose.msra.mxu0 0.0
    %1113 = vmatprep.subr.mxu0 0.0
    %1114 = vmatpush2.xpose.msra.mxu0 0.0
    %1115 = vmatprep.subr.mxu0 0.0
    %1116 = vmatpush2.xpose.msra.mxu0 0.0
    %1117 = vmatprep.subr.mxu0 0.0
    %1118 = vmatpush2.xpose.msra.mxu0 0.0
    %1119 = vmatprep.subr.mxu0 0.0
    %1120 = vmatpush2.xpose.msra.mxu0 0.0
    %1121 = vmatprep.subr.mxu0 0.0
    %1122 = vmatpush2.xpose.msra.mxu0 0.0
    %1123 = vmatprep.subr.mxu0 0.0
    %1124 = vmatpush2.xpose.msra.mxu0 0.0
    %1125 = vmatprep.subr.mxu0 0.0
    %1126 = vmatpush2.xpose.msra.mxu0 0.0
    %1127 = vmatprep.subr.mxu0 0.0
    %1128 = vmatpush2.xpose.msra.mxu0 0.0
    %1129 = vmatprep.subr.mxu0 0.0
    %1130 = vmatpush2.xpose.msra.mxu0 0.0
    %1131 = vmatprep.subr.mxu0 0.0
    %1132 = vmatpush2.xpose.msra.mxu0 0.0
    %1133 = vmatprep.subr.mxu0 0.0
    %1134 = vmatpush2.xpose.msra.mxu0 0.0
    %1135 = vmatprep.subr.mxu0 0.0
    %1136 = vmatpush2.xpose.msra.mxu0 0.0
    %1137 = vmatprep.subr.mxu0 0.0
    %1138 = vmatpush2.xpose.msra.mxu0 0.0
    %1139 = vmatprep.subr.mxu0 0.0
    %1140 = vmatpush2.xpose.msra.mxu0 0.0
    %1141 = vmatprep.subr.mxu0 0.0
    %1142 = vmatpush2.xpose.msra.mxu0 0.0
    %1143 = vmatprep.mubr.f32.mxu0 0.0
    %1144 = vmatmul.mubr.f32.gmra.mxu0 %v1073
    %v1145 = vpop.f32.mrf.mxu0
    %v1146 = vadd.f32 0.0, %v1145
    %v1147 = vpop.f32.mrf.mxu0
    %1148 = vmatprep.mubr.f32.mxu0 0.0
    %1149 = vmatmul.mubr.f32.gmra.mxu0 %v1075
    %v1150 = vpop.f32.mrf.mxu0
    %v1151 = vadd.f32 0.0, %v1150
    %v1152 = vpop.f32.mrf.mxu0
    %1153 = vdwg.mxu0
    %v1154 = vmul.f32 %v1146, 0.35355338
    %v1155 = vmul.f32 %v1151, 0.35355338
    %v1156 = vsel %vm666, %v1154, -inf
    %1157 = vmax.xlane.f32.xlu0 %v1156
    %v1158 = vpop.xlane.xlu0 %1157
    %v1159 = vsel %vm666, %v1155, -inf
    %1160 = vmax.xlane.f32.xlu0 %v1159
    %v1161 = vpop.xlane.xlu0 %1160
    %v1162 = vsub.f32 %v1154, %v1158
    %v1163 = vsub.f32 %v1155, %v1161
    %v1164 = vmul.f32 %v1162, 1.442695
    %v1165 = vpow.pop %v1164
    %v1166 = vmul.f32 %v1163, 1.442695
    %v1167 = vpow.pop %v1166
    %v1168 = vsel %vm666, %v1165, 0.0
    %1169 = vadd.xlane.f32.xlu0 %v1168
    %v1170 = vpop.xlane.xlu0 %1169
    %v1171 = vsel %vm666, %v1167, 0.0
    %1172 = vadd.xlane.f32.xlu0 %v1171
    %v1173 = vpop.xlane.xlu0 %1172
    %v1174 = vrcp.pop %v1170
    %v1175 = vmul.f32 %v1165, %v1174
    %v1176 = vrcp.pop %v1173
    %v1177 = vmul.f32 %v1167, %v1176
    %1178 = vrot.lane.b32.xlu0 %v564, 48
    %v1179 = vpop.permute.xlu0 %1178
    %v1182 = vsel %vm666, %v1175, 0
    %v1185 = vsel %vm666, %v1177, 0
    %1187 = vmatprep.subr.mxu0 0.0
    %1188 = vmatpush1.msra.mxu0 0.0
    %1189 = vmatprep.subr.mxu0 0.0
    %1190 = vmatpush1.msra.mxu0 0.0
    %1191 = vmatprep.subr.mxu0 0.0
    %1192 = vmatpush1.msra.mxu0 0.0
    %1193 = vmatprep.subr.mxu0 0.0
    %1194 = vmatpush1.msra.mxu0 0.0
    %1195 = vmatprep.subr.mxu0 0.0
    %1196 = vmatpush1.msra.mxu0 0.0
    %1197 = vmatprep.subr.mxu0 0.0
    %1198 = vmatpush1.msra.mxu0 0.0
    %1199 = vmatprep.subr.mxu0 0.0
    %1200 = vmatpush1.msra.mxu0 0.0
    %1201 = vmatprep.subr.mxu0 0.0
    %1202 = vmatpush1.msra.mxu0 0.0
    %1203 = vmatprep.subr.mxu0 0.0
    %1204 = vmatpush1.msra.mxu0 0.0
    %1205 = vmatprep.subr.mxu0 0.0
    %1206 = vmatpush1.msra.mxu0 0.0
    %1207 = vmatprep.subr.mxu0 0.0
    %1208 = vmatpush1.msra.mxu0 0.0
    %1209 = vmatprep.subr.mxu0 0.0
    %1210 = vmatpush1.msra.mxu0 0.0
    %1211 = vmatprep.subr.mxu0 0.0
    %1212 = vmatpush1.msra.mxu0 0.0
    %1213 = vmatprep.subr.mxu0 0.0
    %1214 = vmatpush1.msra.mxu0 0.0
    %1215 = vmatprep.subr.mxu0 0.0
    %1216 = vmatpush1.msra.mxu0 0.0
    %1217 = vmatprep.subr.mxu0 0.0
    %1218 = vmatpush1.msra.mxu0 %v1179
    %1219 = vmatprep.subr.mxu0 0.0
    %1220 = vmatpush2.msra.mxu0 0.0
    %1221 = vmatprep.subr.mxu0 0.0
    %1222 = vmatpush2.msra.mxu0 0.0
    %1223 = vmatprep.subr.mxu0 0.0
    %1224 = vmatpush2.msra.mxu0 0.0
    %1225 = vmatprep.subr.mxu0 0.0
    %1226 = vmatpush2.msra.mxu0 0.0
    %1227 = vmatprep.subr.mxu0 0.0
    %1228 = vmatpush2.msra.mxu0 0.0
    %1229 = vmatprep.subr.mxu0 0.0
    %1230 = vmatpush2.msra.mxu0 0.0
    %1231 = vmatprep.subr.mxu0 0.0
    %1232 = vmatpush2.msra.mxu0 0.0
    %1233 = vmatprep.subr.mxu0 0.0
    %1234 = vmatpush2.msra.mxu0 0.0
    %1235 = vmatprep.subr.mxu0 0.0
    %1236 = vmatpush2.msra.mxu0 0.0
    %1237 = vmatprep.subr.mxu0 0.0
    %1238 = vmatpush2.msra.mxu0 0.0
    %1239 = vmatprep.subr.mxu0 0.0
    %1240 = vmatpush2.msra.mxu0 0.0
    %1241 = vmatprep.subr.mxu0 0.0
    %1242 = vmatpush2.msra.mxu0 0.0
    %1243 = vmatprep.subr.mxu0 0.0
    %1244 = vmatpush2.msra.mxu0 0.0
    %1245 = vmatprep.subr.mxu0 0.0
    %1246 = vmatpush2.msra.mxu0 0.0
    %1247 = vmatprep.subr.mxu0 0.0
    %1248 = vmatpush2.msra.mxu0 0.0
    %1249 = vmatprep.subr.mxu0 0.0
    %1250 = vmatpush2.msra.mxu0 0.0
    %1251 = vmatprep.mubr.f32.mxu0 0.0
    %1252 = vmatmul.mubr.f32.gmra.mxu0 %v1182
    %v1253 = vpop.f32.mrf.mxu0
    %v1254 = vadd.f32 0.0, %v1253
    %v1255 = vpop.f32.mrf.mxu0
    %1256 = vmatprep.mubr.f32.mxu0 0.0
    %1257 = vmatmul.mubr.f32.gmra.mxu0 %v1185
    %v1258 = vpop.f32.mrf.mxu0
    %v1259 = vadd.f32 0.0, %v1258
    %v1260 = vpop.f32.mrf.mxu0
    %1261 = vdwg.mxu0
    %1264 = vrot.lane.b32.xlu0 %v1254, 16
    %v1265 = vpop.permute.xlu0 %1264
    %1266 = vrot.lane.b32.xlu0 %v1259, 16
    %v1267 = vpop.permute.xlu0 %1266
    %vm1270 = vcmask 195712
    %1271 = vst.msk [vmem:[#allocation2] sm:$0xff] %vm1270, %v1265
    %1272 = vst.msk [vmem:[#allocation2 + $0x8] sm:$0xff] %vm1270, %v1267
    %1273 = vrot.lane.b32.xlu0 %v649, 104
    %v1274 = vpop.permute.xlu0 %1273
    %1275 = vrot.lane.b32.xlu0 %v654, 104
    %v1276 = vpop.permute.xlu0 %1275
    %1277 = vrot.lane.b32.xlu0 %v564, 104
    %v1278 = vpop.permute.xlu0 %1277
    %v1279 = vsel %vm666, %v1274, 0
    %v1281 = vsel %vm666, %v1276, 0
    %v1283 = vsel %vm666, %v1278, 0
    %1285 = vmatprep.subr.mxu0 0.0
    %1286 = vmatpush1.xpose.msra.mxu0 0.0
    %1287 = vmatprep.subr.mxu0 0.0
    %1288 = vmatpush1.xpose.msra.mxu0 0.0
    %1289 = vmatprep.subr.mxu0 0.0
    %1290 = vmatpush1.xpose.msra.mxu0 0.0
    %1291 = vmatprep.subr.mxu0 0.0
    %1292 = vmatpush1.xpose.msra.mxu0 0.0
    %1293 = vmatprep.subr.mxu0 0.0
    %1294 = vmatpush1.xpose.msra.mxu0 0.0
    %1295 = vmatprep.subr.mxu0 0.0
    %1296 = vmatpush1.xpose.msra.mxu0 0.0
    %1297 = vmatprep.subr.mxu0 0.0
    %1298 = vmatpush1.xpose.msra.mxu0 0.0
    %1299 = vmatprep.subr.mxu0 0.0
    %1300 = vmatpush1.xpose.msra.mxu0 0.0
    %1301 = vmatprep.subr.mxu0 0.0
    %1302 = vmatpush1.xpose.msra.mxu0 0.0
    %1303 = vmatprep.subr.mxu0 0.0
    %1304 = vmatpush1.xpose.msra.mxu0 0.0
    %1305 = vmatprep.subr.mxu0 0.0
    %1306 = vmatpush1.xpose.msra.mxu0 0.0
    %1307 = vmatprep.subr.mxu0 0.0
    %1308 = vmatpush1.xpose.msra.mxu0 0.0
    %1309 = vmatprep.subr.mxu0 0.0
    %1310 = vmatpush1.xpose.msra.mxu0 0.0
    %1311 = vmatprep.subr.mxu0 0.0
    %1312 = vmatpush1.xpose.msra.mxu0 0.0
    %1313 = vmatprep.subr.mxu0 0.0
    %1314 = vmatpush1.xpose.msra.mxu0 0.0
    %1315 = vmatprep.subr.mxu0 0.0
    %1316 = vmatpush1.xpose.msra.mxu0 %v1283
    %1317 = vmatprep.subr.mxu0 0.0
    %1318 = vmatpush2.xpose.msra.mxu0 0.0
    %1319 = vmatprep.subr.mxu0 0.0
    %1320 = vmatpush2.xpose.msra.mxu0 0.0
    %1321 = vmatprep.subr.mxu0 0.0
    %1322 = vmatpush2.xpose.msra.mxu0 0.0
    %1323 = vmatprep.subr.mxu0 0.0
    %1324 = vmatpush2.xpose.msra.mxu0 0.0
    %1325 = vmatprep.subr.mxu0 0.0
    %1326 = vmatpush2.xpose.msra.mxu0 0.0
    %1327 = vmatprep.subr.mxu0 0.0
    %1328 = vmatpush2.xpose.msra.mxu0 0.0
    %1329 = vmatprep.subr.mxu0 0.0
    %1330 = vmatpush2.xpose.msra.mxu0 0.0
    %1331 = vmatprep.subr.mxu0 0.0
    %1332 = vmatpush2.xpose.msra.mxu0 0.0
    %1333 = vmatprep.subr.mxu0 0.0
    %1334 = vmatpush2.xpose.msra.mxu0 0.0
    %1335 = vmatprep.subr.mxu0 0.0
    %1336 = vmatpush2.xpose.msra.mxu0 0.0
    %1337 = vmatprep.subr.mxu0 0.0
    %1338 = vmatpush2.xpose.msra.mxu0 0.0
    %1339 = vmatprep.subr.mxu0 0.0
    %1340 = vmatpush2.xpose.msra.mxu0 0.0
    %1341 = vmatprep.subr.mxu0 0.0
    %1342 = vmatpush2.xpose.msra.mxu0 0.0
    %1343 = vmatprep.subr.mxu0 0.0
    %1344 = vmatpush2.xpose.msra.mxu0 0.0
    %1345 = vmatprep.subr.mxu0 0.0
    %1346 = vmatpush2.xpose.msra.mxu0 0.0
    %1347 = vmatprep.subr.mxu0 0.0
    %1348 = vmatpush2.xpose.msra.mxu0 0.0
    %1349 = vmatprep.mubr.f32.mxu0 0.0
    %1350 = vmatmul.mubr.f32.gmra.mxu0 %v1279
    %v1351 = vpop.f32.mrf.mxu0
    %v1352 = vadd.f32 0.0, %v1351
    %v1353 = vpop.f32.mrf.mxu0
    %1354 = vmatprep.mubr.f32.mxu0 0.0
    %1355 = vmatmul.mubr.f32.gmra.mxu0 %v1281
    %v1356 = vpop.f32.mrf.mxu0
    %v1357 = vadd.f32 0.0, %v1356
    %v1358 = vpop.f32.mrf.mxu0
    %1359 = vdwg.mxu0
    %v1360 = vmul.f32 %v1352, 0.35355338
    %v1361 = vmul.f32 %v1357, 0.35355338
    %v1362 = vsel %vm666, %v1360, -inf
    %1363 = vmax.xlane.f32.xlu0 %v1362
    %v1364 = vpop.xlane.xlu0 %1363
    %v1365 = vsel %vm666, %v1361, -inf
    %1366 = vmax.xlane.f32.xlu0 %v1365
    %v1367 = vpop.xlane.xlu0 %1366
    %v1368 = vsub.f32 %v1360, %v1364
    %v1369 = vsub.f32 %v1361, %v1367
    %v1370 = vmul.f32 %v1368, 1.442695
    %v1371 = vpow.pop %v1370
    %v1372 = vmul.f32 %v1369, 1.442695
    %v1373 = vpow.pop %v1372
    %v1374 = vsel %vm666, %v1371, 0.0
    %1375 = vadd.xlane.f32.xlu0 %v1374
    %v1376 = vpop.xlane.xlu0 %1375
    %v1377 = vsel %vm666, %v1373, 0.0
    %1378 = vadd.xlane.f32.xlu0 %v1377
    %v1379 = vpop.xlane.xlu0 %1378
    %v1380 = vrcp.pop %v1376
    %v1381 = vmul.f32 %v1371, %v1380
    %v1382 = vrcp.pop %v1379
    %v1383 = vmul.f32 %v1373, %v1382
    %1384 = vrot.lane.b32.xlu0 %v564, 40
    %v1385 = vpop.permute.xlu0 %1384
    %v1388 = vsel %vm666, %v1381, 0
    %v1391 = vsel %vm666, %v1383, 0
    %1393 = vmatprep.subr.mxu0 0.0
    %1394 = vmatpush1.msra.mxu0 0.0
    %1395 = vmatprep.subr.mxu0 0.0
    %1396 = vmatpush1.msra.mxu0 0.0
    %1397 = vmatprep.subr.mxu0 0.0
    %1398 = vmatpush1.msra.mxu0 0.0
    %1399 = vmatprep.subr.mxu0 0.0
    %1400 = vmatpush1.msra.mxu0 0.0
    %1401 = vmatprep.subr.mxu0 0.0
    %1402 = vmatpush1.msra.mxu0 0.0
    %1403 = vmatprep.subr.mxu0 0.0
    %1404 = vmatpush1.msra.mxu0 0.0
    %1405 = vmatprep.subr.mxu0 0.0
    %1406 = vmatpush1.msra.mxu0 0.0
    %1407 = vmatprep.subr.mxu0 0.0
    %1408 = vmatpush1.msra.mxu0 0.0
    %1409 = vmatprep.subr.mxu0 0.0
    %1410 = vmatpush1.msra.mxu0 0.0
    %1411 = vmatprep.subr.mxu0 0.0
    %1412 = vmatpush1.msra.mxu0 0.0
    %1413 = vmatprep.subr.mxu0 0.0
    %1414 = vmatpush1.msra.mxu0 0.0
    %1415 = vmatprep.subr.mxu0 0.0
    %1416 = vmatpush1.msra.mxu0 0.0
    %1417 = vmatprep.subr.mxu0 0.0
    %1418 = vmatpush1.msra.mxu0 0.0
    %1419 = vmatprep.subr.mxu0 0.0
    %1420 = vmatpush1.msra.mxu0 0.0
    %1421 = vmatprep.subr.mxu0 0.0
    %1422 = vmatpush1.msra.mxu0 0.0
    %1423 = vmatprep.subr.mxu0 0.0
    %1424 = vmatpush1.msra.mxu0 %v1385
    %1425 = vmatprep.subr.mxu0 0.0
    %1426 = vmatpush2.msra.mxu0 0.0
    %1427 = vmatprep.subr.mxu0 0.0
    %1428 = vmatpush2.msra.mxu0 0.0
    %1429 = vmatprep.subr.mxu0 0.0
    %1430 = vmatpush2.msra.mxu0 0.0
    %1431 = vmatprep.subr.mxu0 0.0
    %1432 = vmatpush2.msra.mxu0 0.0
    %1433 = vmatprep.subr.mxu0 0.0
    %1434 = vmatpush2.msra.mxu0 0.0
    %1435 = vmatprep.subr.mxu0 0.0
    %1436 = vmatpush2.msra.mxu0 0.0
    %1437 = vmatprep.subr.mxu0 0.0
    %1438 = vmatpush2.msra.mxu0 0.0
    %1439 = vmatprep.subr.mxu0 0.0
    %1440 = vmatpush2.msra.mxu0 0.0
    %1441 = vmatprep.subr.mxu0 0.0
    %1442 = vmatpush2.msra.mxu0 0.0
    %1443 = vmatprep.subr.mxu0 0.0
    %1444 = vmatpush2.msra.mxu0 0.0
    %1445 = vmatprep.subr.mxu0 0.0
    %1446 = vmatpush2.msra.mxu0 0.0
    %1447 = vmatprep.subr.mxu0 0.0
    %1448 = vmatpush2.msra.mxu0 0.0
    %1449 = vmatprep.subr.mxu0 0.0
    %1450 = vmatpush2.msra.mxu0 0.0
    %1451 = vmatprep.subr.mxu0 0.0
    %1452 = vmatpush2.msra.mxu0 0.0
    %1453 = vmatprep.subr.mxu0 0.0
    %1454 = vmatpush2.msra.mxu0 0.0
    %1455 = vmatprep.subr.mxu0 0.0
    %1456 = vmatpush2.msra.mxu0 0.0
    %1457 = vmatprep.mubr.f32.mxu0 0.0
    %1458 = vmatmul.mubr.f32.gmra.mxu0 %v1388
    %v1459 = vpop.f32.mrf.mxu0
    %v1460 = vadd.f32 0.0, %v1459
    %v1461 = vpop.f32.mrf.mxu0
    %1462 = vmatprep.mubr.f32.mxu0 0.0
    %1463 = vmatmul.mubr.f32.gmra.mxu0 %v1391
    %v1464 = vpop.f32.mrf.mxu0
    %v1465 = vadd.f32 0.0, %v1464
    %v1466 = vpop.f32.mrf.mxu0
    %1467 = vdwg.mxu0
    %1470 = vrot.lane.b32.xlu0 %v1460, 24
    %v1471 = vpop.permute.xlu0 %1470
    %1472 = vrot.lane.b32.xlu0 %v1465, 24
    %v1473 = vpop.permute.xlu0 %1472
    %vm1476 = vcmask 261312
    %1477 = vst.msk [vmem:[#allocation2] sm:$0xff] %vm1476, %v1471
    %1478 = vst.msk [vmem:[#allocation2 + $0x8] sm:$0xff] %vm1476, %v1473
    %1479 = vrot.lane.b32.xlu0 %v649, 96
    %v1480 = vpop.permute.xlu0 %1479
    %1481 = vrot.lane.b32.xlu0 %v654, 96
    %v1482 = vpop.permute.xlu0 %1481
    %1483 = vrot.lane.b32.xlu0 %v564, 96
    %v1484 = vpop.permute.xlu0 %1483
    %v1485 = vsel %vm666, %v1480, 0
    %v1487 = vsel %vm666, %v1482, 0
    %v1489 = vsel %vm666, %v1484, 0
    %1491 = vmatprep.subr.mxu0 0.0
    %1492 = vmatpush1.xpose.msra.mxu0 0.0
    %1493 = vmatprep.subr.mxu0 0.0
    %1494 = vmatpush1.xpose.msra.mxu0 0.0
    %1495 = vmatprep.subr.mxu0 0.0
    %1496 = vmatpush1.xpose.msra.mxu0 0.0
    %1497 = vmatprep.subr.mxu0 0.0
    %1498 = vmatpush1.xpose.msra.mxu0 0.0
    %1499 = vmatprep.subr.mxu0 0.0
    %1500 = vmatpush1.xpose.msra.mxu0 0.0
    %1501 = vmatprep.subr.mxu0 0.0
    %1502 = vmatpush1.xpose.msra.mxu0 0.0
    %1503 = vmatprep.subr.mxu0 0.0
    %1504 = vmatpush1.xpose.msra.mxu0 0.0
    %1505 = vmatprep.subr.mxu0 0.0
    %1506 = vmatpush1.xpose.msra.mxu0 0.0
    %1507 = vmatprep.subr.mxu0 0.0
    %1508 = vmatpush1.xpose.msra.mxu0 0.0
    %1509 = vmatprep.subr.mxu0 0.0
    %1510 = vmatpush1.xpose.msra.mxu0 0.0
    %1511 = vmatprep.subr.mxu0 0.0
    %1512 = vmatpush1.xpose.msra.mxu0 0.0
    %1513 = vmatprep.subr.mxu0 0.0
    %1514 = vmatpush1.xpose.msra.mxu0 0.0
    %1515 = vmatprep.subr.mxu0 0.0
    %1516 = vmatpush1.xpose.msra.mxu0 0.0
    %1517 = vmatprep.subr.mxu0 0.0
    %1518 = vmatpush1.xpose.msra.mxu0 0.0
    %1519 = vmatprep.subr.mxu0 0.0
    %1520 = vmatpush1.xpose.msra.mxu0 0.0
    %1521 = vmatprep.subr.mxu0 0.0
    %1522 = vmatpush1.xpose.msra.mxu0 %v1489
    %1523 = vmatprep.subr.mxu0 0.0
    %1524 = vmatpush2.xpose.msra.mxu0 0.0
    %1525 = vmatprep.subr.mxu0 0.0
    %1526 = vmatpush2.xpose.msra.mxu0 0.0
    %1527 = vmatprep.subr.mxu0 0.0
    %1528 = vmatpush2.xpose.msra.mxu0 0.0
    %1529 = vmatprep.subr.mxu0 0.0
    %1530 = vmatpush2.xpose.msra.mxu0 0.0
    %1531 = vmatprep.subr.mxu0 0.0
    %1532 = vmatpush2.xpose.msra.mxu0 0.0
    %1533 = vmatprep.subr.mxu0 0.0
    %1534 = vmatpush2.xpose.msra.mxu0 0.0
    %1535 = vmatprep.subr.mxu0 0.0
    %1536 = vmatpush2.xpose.msra.mxu0 0.0
    %1537 = vmatprep.subr.mxu0 0.0
    %1538 = vmatpush2.xpose.msra.mxu0 0.0
    %1539 = vmatprep.subr.mxu0 0.0
    %1540 = vmatpush2.xpose.msra.mxu0 0.0
    %1541 = vmatprep.subr.mxu0 0.0
    %1542 = vmatpush2.xpose.msra.mxu0 0.0
    %1543 = vmatprep.subr.mxu0 0.0
    %1544 = vmatpush2.xpose.msra.mxu0 0.0
    %1545 = vmatprep.subr.mxu0 0.0
    %1546 = vmatpush2.xpose.msra.mxu0 0.0
    %1547 = vmatprep.subr.mxu0 0.0
    %1548 = vmatpush2.xpose.msra.mxu0 0.0
    %1549 = vmatprep.subr.mxu0 0.0
    %1550 = vmatpush2.xpose.msra.mxu0 0.0
    %1551 = vmatprep.subr.mxu0 0.0
    %1552 = vmatpush2.xpose.msra.mxu0 0.0
    %1553 = vmatprep.subr.mxu0 0.0
    %1554 = vmatpush2.xpose.msra.mxu0 0.0
    %1555 = vmatprep.mubr.f32.mxu0 0.0
    %1556 = vmatmul.mubr.f32.gmra.mxu0 %v1485
    %v1557 = vpop.f32.mrf.mxu0
    %v1558 = vadd.f32 0.0, %v1557
    %v1559 = vpop.f32.mrf.mxu0
    %1560 = vmatprep.mubr.f32.mxu0 0.0
    %1561 = vmatmul.mubr.f32.gmra.mxu0 %v1487
    %v1562 = vpop.f32.mrf.mxu0
    %v1563 = vadd.f32 0.0, %v1562
    %v1564 = vpop.f32.mrf.mxu0
    %1565 = vdwg.mxu0
    %v1566 = vmul.f32 %v1558, 0.35355338
    %v1567 = vmul.f32 %v1563, 0.35355338
    %v1568 = vsel %vm666, %v1566, -inf
    %1569 = vmax.xlane.f32.xlu0 %v1568
    %v1570 = vpop.xlane.xlu0 %1569
    %v1571 = vsel %vm666, %v1567, -inf
    %1572 = vmax.xlane.f32.xlu0 %v1571
    %v1573 = vpop.xlane.xlu0 %1572
    %v1574 = vsub.f32 %v1566, %v1570
    %v1575 = vsub.f32 %v1567, %v1573
    %v1576 = vmul.f32 %v1574, 1.442695
    %v1577 = vpow.pop %v1576
    %v1578 = vmul.f32 %v1575, 1.442695
    %v1579 = vpow.pop %v1578
    %v1580 = vsel %vm666, %v1577, 0.0
    %1581 = vadd.xlane.f32.xlu0 %v1580
    %v1582 = vpop.xlane.xlu0 %1581
    %v1583 = vsel %vm666, %v1579, 0.0
    %1584 = vadd.xlane.f32.xlu0 %v1583
    %v1585 = vpop.xlane.xlu0 %1584
    %v1586 = vrcp.pop %v1582
    %v1587 = vmul.f32 %v1577, %v1586
    %v1588 = vrcp.pop %v1585
    %v1589 = vmul.f32 %v1579, %v1588
    %1590 = vrot.lane.b32.xlu0 %v564, 32
    %v1591 = vpop.permute.xlu0 %1590
    %v1594 = vsel %vm666, %v1587, 0
    %v1597 = vsel %vm666, %v1589, 0
    %1599 = vmatprep.subr.mxu0 0.0
    %1600 = vmatpush1.msra.mxu0 0.0
    %1601 = vmatprep.subr.mxu0 0.0
    %1602 = vmatpush1.msra.mxu0 0.0
    %1603 = vmatprep.subr.mxu0 0.0
    %1604 = vmatpush1.msra.mxu0 0.0
    %1605 = vmatprep.subr.mxu0 0.0
    %1606 = vmatpush1.msra.mxu0 0.0
    %1607 = vmatprep.subr.mxu0 0.0
    %1608 = vmatpush1.msra.mxu0 0.0
    %1609 = vmatprep.subr.mxu0 0.0
    %1610 = vmatpush1.msra.mxu0 0.0
    %1611 = vmatprep.subr.mxu0 0.0
    %1612 = vmatpush1.msra.mxu0 0.0
    %1613 = vmatprep.subr.mxu0 0.0
    %1614 = vmatpush1.msra.mxu0 0.0
    %1615 = vmatprep.subr.mxu0 0.0
    %1616 = vmatpush1.msra.mxu0 0.0
    %1617 = vmatprep.subr.mxu0 0.0
    %1618 = vmatpush1.msra.mxu0 0.0
    %1619 = vmatprep.subr.mxu0 0.0
    %1620 = vmatpush1.msra.mxu0 0.0
    %1621 = vmatprep.subr.mxu0 0.0
    %1622 = vmatpush1.msra.mxu0 0.0
    %1623 = vmatprep.subr.mxu0 0.0
    %1624 = vmatpush1.msra.mxu0 0.0
    %1625 = vmatprep.subr.mxu0 0.0
    %1626 = vmatpush1.msra.mxu0 0.0
    %1627 = vmatprep.subr.mxu0 0.0
    %1628 = vmatpush1.msra.mxu0 0.0
    %1629 = vmatprep.subr.mxu0 0.0
    %1630 = vmatpush1.msra.mxu0 %v1591
    %1631 = vmatprep.subr.mxu0 0.0
    %1632 = vmatpush2.msra.mxu0 0.0
    %1633 = vmatprep.subr.mxu0 0.0
    %1634 = vmatpush2.msra.mxu0 0.0
    %1635 = vmatprep.subr.mxu0 0.0
    %1636 = vmatpush2.msra.mxu0 0.0
    %1637 = vmatprep.subr.mxu0 0.0
    %1638 = vmatpush2.msra.mxu0 0.0
    %1639 = vmatprep.subr.mxu0 0.0
    %1640 = vmatpush2.msra.mxu0 0.0
    %1641 = vmatprep.subr.mxu0 0.0
    %1642 = vmatpush2.msra.mxu0 0.0
    %1643 = vmatprep.subr.mxu0 0.0
    %1644 = vmatpush2.msra.mxu0 0.0
    %1645 = vmatprep.subr.mxu0 0.0
    %1646 = vmatpush2.msra.mxu0 0.0
    %1647 = vmatprep.subr.mxu0 0.0
    %1648 = vmatpush2.msra.mxu0 0.0
    %1649 = vmatprep.subr.mxu0 0.0
    %1650 = vmatpush2.msra.mxu0 0.0
    %1651 = vmatprep.subr.mxu0 0.0
    %1652 = vmatpush2.msra.mxu0 0.0
    %1653 = vmatprep.subr.mxu0 0.0
    %1654 = vmatpush2.msra.mxu0 0.0
    %1655 = vmatprep.subr.mxu0 0.0
    %1656 = vmatpush2.msra.mxu0 0.0
    %1657 = vmatprep.subr.mxu0 0.0
    %1658 = vmatpush2.msra.mxu0 0.0
    %1659 = vmatprep.subr.mxu0 0.0
    %1660 = vmatpush2.msra.mxu0 0.0
    %1661 = vmatprep.subr.mxu0 0.0
    %1662 = vmatpush2.msra.mxu0 0.0
    %1663 = vmatprep.mubr.f32.mxu0 0.0
    %1664 = vmatmul.mubr.f32.gmra.mxu0 %v1594
    %v1665 = vpop.f32.mrf.mxu0
    %v1666 = vadd.f32 0.0, %v1665
    %v1667 = vpop.f32.mrf.mxu0
    %1668 = vmatprep.mubr.f32.mxu0 0.0
    %1669 = vmatmul.mubr.f32.gmra.mxu0 %v1597
    %v1670 = vpop.f32.mrf.mxu0
    %v1671 = vadd.f32 0.0, %v1670
    %v1672 = vpop.f32.mrf.mxu0
    %1673 = vdwg.mxu0
    %1676 = vrot.lane.b32.xlu0 %v1666, 32
    %v1677 = vpop.permute.xlu0 %1676
    %1678 = vrot.lane.b32.xlu0 %v1671, 32
    %v1679 = vpop.permute.xlu0 %1678
    %vm1682 = vcmask 326912
    %1683 = vst.msk [vmem:[#allocation2] sm:$0xff] %vm1682, %v1677
    %1684 = vst.msk [vmem:[#allocation2 + $0x8] sm:$0xff] %vm1682, %v1679
    %1685 = vrot.lane.b32.xlu0 %v649, 88
    %v1686 = vpop.permute.xlu0 %1685
    %1687 = vrot.lane.b32.xlu0 %v654, 88
    %v1688 = vpop.permute.xlu0 %1687
    %1689 = vrot.lane.b32.xlu0 %v564, 88
    %v1690 = vpop.permute.xlu0 %1689
    %v1691 = vsel %vm666, %v1686, 0
    %v1693 = vsel %vm666, %v1688, 0
    %v1695 = vsel %vm666, %v1690, 0
    %1697 = vmatprep.subr.mxu0 0.0
    %1698 = vmatpush1.xpose.msra.mxu0 0.0
    %1699 = vmatprep.subr.mxu0 0.0
    %1700 = vmatpush1.xpose.msra.mxu0 0.0
    %1701 = vmatprep.subr.mxu0 0.0
    %1702 = vmatpush1.xpose.msra.mxu0 0.0
    %1703 = vmatprep.subr.mxu0 0.0
    %1704 = vmatpush1.xpose.msra.mxu0 0.0
    %1705 = vmatprep.subr.mxu0 0.0
    %1706 = vmatpush1.xpose.msra.mxu0 0.0
    %1707 = vmatprep.subr.mxu0 0.0
    %1708 = vmatpush1.xpose.msra.mxu0 0.0
    %1709 = vmatprep.subr.mxu0 0.0
    %1710 = vmatpush1.xpose.msra.mxu0 0.0
    %1711 = vmatprep.subr.mxu0 0.0
    %1712 = vmatpush1.xpose.msra.mxu0 0.0
    %1713 = vmatprep.subr.mxu0 0.0
    %1714 = vmatpush1.xpose.msra.mxu0 0.0
    %1715 = vmatprep.subr.mxu0 0.0
    %1716 = vmatpush1.xpose.msra.mxu0 0.0
    %1717 = vmatprep.subr.mxu0 0.0
    %1718 = vmatpush1.xpose.msra.mxu0 0.0
    %1719 = vmatprep.subr.mxu0 0.0
    %1720 = vmatpush1.xpose.msra.mxu0 0.0
    %1721 = vmatprep.subr.mxu0 0.0
    %1722 = vmatpush1.xpose.msra.mxu0 0.0
    %1723 = vmatprep.subr.mxu0 0.0
    %1724 = vmatpush1.xpose.msra.mxu0 0.0
    %1725 = vmatprep.subr.mxu0 0.0
    %1726 = vmatpush1.xpose.msra.mxu0 0.0
    %1727 = vmatprep.subr.mxu0 0.0
    %1728 = vmatpush1.xpose.msra.mxu0 %v1695
    %1729 = vmatprep.subr.mxu0 0.0
    %1730 = vmatpush2.xpose.msra.mxu0 0.0
    %1731 = vmatprep.subr.mxu0 0.0
    %1732 = vmatpush2.xpose.msra.mxu0 0.0
    %1733 = vmatprep.subr.mxu0 0.0
    %1734 = vmatpush2.xpose.msra.mxu0 0.0
    %1735 = vmatprep.subr.mxu0 0.0
    %1736 = vmatpush2.xpose.msra.mxu0 0.0
    %1737 = vmatprep.subr.mxu0 0.0
    %1738 = vmatpush2.xpose.msra.mxu0 0.0
    %1739 = vmatprep.subr.mxu0 0.0
    %1740 = vmatpush2.xpose.msra.mxu0 0.0
    %1741 = vmatprep.subr.mxu0 0.0
    %1742 = vmatpush2.xpose.msra.mxu0 0.0
    %1743 = vmatprep.subr.mxu0 0.0
    %1744 = vmatpush2.xpose.msra.mxu0 0.0
    %1745 = vmatprep.subr.mxu0 0.0
    %1746 = vmatpush2.xpose.msra.mxu0 0.0
    %1747 = vmatprep.subr.mxu0 0.0
    %1748 = vmatpush2.xpose.msra.mxu0 0.0
    %1749 = vmatprep.subr.mxu0 0.0
    %1750 = vmatpush2.xpose.msra.mxu0 0.0
    %1751 = vmatprep.subr.mxu0 0.0
    %1752 = vmatpush2.xpose.msra.mxu0 0.0
    %1753 = vmatprep.subr.mxu0 0.0
    %1754 = vmatpush2.xpose.msra.mxu0 0.0
    %1755 = vmatprep.subr.mxu0 0.0
    %1756 = vmatpush2.xpose.msra.mxu0 0.0
    %1757 = vmatprep.subr.mxu0 0.0
    %1758 = vmatpush2.xpose.msra.mxu0 0.0
    %1759 = vmatprep.subr.mxu0 0.0
    %1760 = vmatpush2.xpose.msra.mxu0 0.0
    %1761 = vmatprep.mubr.f32.mxu0 0.0
    %1762 = vmatmul.mubr.f32.gmra.mxu0 %v1691
    %v1763 = vpop.f32.mrf.mxu0
    %v1764 = vadd.f32 0.0, %v1763
    %v1765 = vpop.f32.mrf.mxu0
    %1766 = vmatprep.mubr.f32.mxu0 0.0
    %1767 = vmatmul.mubr.f32.gmra.mxu0 %v1693
    %v1768 = vpop.f32.mrf.mxu0
    %v1769 = vadd.f32 0.0, %v1768
    %v1770 = vpop.f32.mrf.mxu0
    %1771 = vdwg.mxu0
    %v1772 = vmul.f32 %v1764, 0.35355338
    %v1773 = vmul.f32 %v1769, 0.35355338
    %v1774 = vsel %vm666, %v1772, -inf
    %1775 = vmax.xlane.f32.xlu0 %v1774
    %v1776 = vpop.xlane.xlu0 %1775
    %v1777 = vsel %vm666, %v1773, -inf
    %1778 = vmax.xlane.f32.xlu0 %v1777
    %v1779 = vpop.xlane.xlu0 %1778
    %v1780 = vsub.f32 %v1772, %v1776
    %v1781 = vsub.f32 %v1773, %v1779
    %v1782 = vmul.f32 %v1780, 1.442695
    %v1783 = vpow.pop %v1782
    %v1784 = vmul.f32 %v1781, 1.442695
    %v1785 = vpow.pop %v1784
    %v1786 = vsel %vm666, %v1783, 0.0
    %1787 = vadd.xlane.f32.xlu0 %v1786
    %v1788 = vpop.xlane.xlu0 %1787
    %v1789 = vsel %vm666, %v1785, 0.0
    %1790 = vadd.xlane.f32.xlu0 %v1789
    %v1791 = vpop.xlane.xlu0 %1790
    %v1792 = vrcp.pop %v1788
    %v1793 = vmul.f32 %v1783, %v1792
    %v1794 = vrcp.pop %v1791
    %v1795 = vmul.f32 %v1785, %v1794
    %1796 = vrot.lane.b32.xlu0 %v564, 24
    %v1797 = vpop.permute.xlu0 %1796
    %v1800 = vsel %vm666, %v1793, 0
    %v1803 = vsel %vm666, %v1795, 0
    %1805 = vmatprep.subr.mxu0 0.0
    %1806 = vmatpush1.msra.mxu0 0.0
    %1807 = vmatprep.subr.mxu0 0.0
    %1808 = vmatpush1.msra.mxu0 0.0
    %1809 = vmatprep.subr.mxu0 0.0
    %1810 = vmatpush1.msra.mxu0 0.0
    %1811 = vmatprep.subr.mxu0 0.0
    %1812 = vmatpush1.msra.mxu0 0.0
    %1813 = vmatprep.subr.mxu0 0.0
    %1814 = vmatpush1.msra.mxu0 0.0
    %1815 = vmatprep.subr.mxu0 0.0
    %1816 = vmatpush1.msra.mxu0 0.0
    %1817 = vmatprep.subr.mxu0 0.0
    %1818 = vmatpush1.msra.mxu0 0.0
    %1819 = vmatprep.subr.mxu0 0.0
    %1820 = vmatpush1.msra.mxu0 0.0
    %1821 = vmatprep.subr.mxu0 0.0
    %1822 = vmatpush1.msra.mxu0 0.0
    %1823 = vmatprep.subr.mxu0 0.0
    %1824 = vmatpush1.msra.mxu0 0.0
    %1825 = vmatprep.subr.mxu0 0.0
    %1826 = vmatpush1.msra.mxu0 0.0
    %1827 = vmatprep.subr.mxu0 0.0
    %1828 = vmatpush1.msra.mxu0 0.0
    %1829 = vmatprep.subr.mxu0 0.0
    %1830 = vmatpush1.msra.mxu0 0.0
    %1831 = vmatprep.subr.mxu0 0.0
    %1832 = vmatpush1.msra.mxu0 0.0
    %1833 = vmatprep.subr.mxu0 0.0
    %1834 = vmatpush1.msra.mxu0 0.0
    %1835 = vmatprep.subr.mxu0 0.0
    %1836 = vmatpush1.msra.mxu0 %v1797
    %1837 = vmatprep.subr.mxu0 0.0
    %1838 = vmatpush2.msra.mxu0 0.0
    %1839 = vmatprep.subr.mxu0 0.0
    %1840 = vmatpush2.msra.mxu0 0.0
    %1841 = vmatprep.subr.mxu0 0.0
    %1842 = vmatpush2.msra.mxu0 0.0
    %1843 = vmatprep.subr.mxu0 0.0
    %1844 = vmatpush2.msra.mxu0 0.0
    %1845 = vmatprep.subr.mxu0 0.0
    %1846 = vmatpush2.msra.mxu0 0.0
    %1847 = vmatprep.subr.mxu0 0.0
    %1848 = vmatpush2.msra.mxu0 0.0
    %1849 = vmatprep.subr.mxu0 0.0
    %1850 = vmatpush2.msra.mxu0 0.0
    %1851 = vmatprep.subr.mxu0 0.0
    %1852 = vmatpush2.msra.mxu0 0.0
    %1853 = vmatprep.subr.mxu0 0.0
    %1854 = vmatpush2.msra.mxu0 0.0
    %1855 = vmatprep.subr.mxu0 0.0
    %1856 = vmatpush2.msra.mxu0 0.0
    %1857 = vmatprep.subr.mxu0 0.0
    %1858 = vmatpush2.msra.mxu0 0.0
    %1859 = vmatprep.subr.mxu0 0.0
    %1860 = vmatpush2.msra.mxu0 0.0
    %1861 = vmatprep.subr.mxu0 0.0
    %1862 = vmatpush2.msra.mxu0 0.0
    %1863 = vmatprep.subr.mxu0 0.0
    %1864 = vmatpush2.msra.mxu0 0.0
    %1865 = vmatprep.subr.mxu0 0.0
    %1866 = vmatpush2.msra.mxu0 0.0
    %1867 = vmatprep.subr.mxu0 0.0
    %1868 = vmatpush2.msra.mxu0 0.0
    %1869 = vmatprep.mubr.f32.mxu0 0.0
    %1870 = vmatmul.mubr.f32.gmra.mxu0 %v1800
    %v1871 = vpop.f32.mrf.mxu0
    %v1872 = vadd.f32 0.0, %v1871
    %v1873 = vpop.f32.mrf.mxu0
    %1874 = vmatprep.mubr.f32.mxu0 0.0
    %1875 = vmatmul.mubr.f32.gmra.mxu0 %v1803
    %v1876 = vpop.f32.mrf.mxu0
    %v1877 = vadd.f32 0.0, %v1876
    %v1878 = vpop.f32.mrf.mxu0
    %1879 = vdwg.mxu0
    %1882 = vrot.lane.b32.xlu0 %v1872, 40
    %v1883 = vpop.permute.xlu0 %1882
    %1884 = vrot.lane.b32.xlu0 %v1877, 40
    %v1885 = vpop.permute.xlu0 %1884
    %vm1888 = vcmask 392512
    %1889 = vst.msk [vmem:[#allocation2] sm:$0xff] %vm1888, %v1883
    %1890 = vst.msk [vmem:[#allocation2 + $0x8] sm:$0xff] %vm1888, %v1885
    %1891 = vrot.lane.b32.xlu0 %v649, 80
    %v1892 = vpop.permute.xlu0 %1891
    %1893 = vrot.lane.b32.xlu0 %v654, 80
    %v1894 = vpop.permute.xlu0 %1893
    %1895 = vrot.lane.b32.xlu0 %v564, 80
    %v1896 = vpop.permute.xlu0 %1895
    %v1897 = vsel %vm666, %v1892, 0
    %v1899 = vsel %vm666, %v1894, 0
    %v1901 = vsel %vm666, %v1896, 0
    %1903 = vmatprep.subr.mxu0 0.0
    %1904 = vmatpush1.xpose.msra.mxu0 0.0
    %1905 = vmatprep.subr.mxu0 0.0
    %1906 = vmatpush1.xpose.msra.mxu0 0.0
    %1907 = vmatprep.subr.mxu0 0.0
    %1908 = vmatpush1.xpose.msra.mxu0 0.0
    %1909 = vmatprep.subr.mxu0 0.0
    %1910 = vmatpush1.xpose.msra.mxu0 0.0
    %1911 = vmatprep.subr.mxu0 0.0
    %1912 = vmatpush1.xpose.msra.mxu0 0.0
    %1913 = vmatprep.subr.mxu0 0.0
    %1914 = vmatpush1.xpose.msra.mxu0 0.0
    %1915 = vmatprep.subr.mxu0 0.0
    %1916 = vmatpush1.xpose.msra.mxu0 0.0
    %1917 = vmatprep.subr.mxu0 0.0
    %1918 = vmatpush1.xpose.msra.mxu0 0.0
    %1919 = vmatprep.subr.mxu0 0.0
    %1920 = vmatpush1.xpose.msra.mxu0 0.0
    %1921 = vmatprep.subr.mxu0 0.0
    %1922 = vmatpush1.xpose.msra.mxu0 0.0
    %1923 = vmatprep.subr.mxu0 0.0
    %1924 = vmatpush1.xpose.msra.mxu0 0.0
    %1925 = vmatprep.subr.mxu0 0.0
    %1926 = vmatpush1.xpose.msra.mxu0 0.0
    %1927 = vmatprep.subr.mxu0 0.0
    %1928 = vmatpush1.xpose.msra.mxu0 0.0
    %1929 = vmatprep.subr.mxu0 0.0
    %1930 = vmatpush1.xpose.msra.mxu0 0.0
    %1931 = vmatprep.subr.mxu0 0.0
    %1932 = vmatpush1.xpose.msra.mxu0 0.0
    %1933 = vmatprep.subr.mxu0 0.0
    %1934 = vmatpush1.xpose.msra.mxu0 %v1901
    %1935 = vmatprep.subr.mxu0 0.0
    %1936 = vmatpush2.xpose.msra.mxu0 0.0
    %1937 = vmatprep.subr.mxu0 0.0
    %1938 = vmatpush2.xpose.msra.mxu0 0.0
    %1939 = vmatprep.subr.mxu0 0.0
    %1940 = vmatpush2.xpose.msra.mxu0 0.0
    %1941 = vmatprep.subr.mxu0 0.0
    %1942 = vmatpush2.xpose.msra.mxu0 0.0
    %1943 = vmatprep.subr.mxu0 0.0
    %1944 = vmatpush2.xpose.msra.mxu0 0.0
    %1945 = vmatprep.subr.mxu0 0.0
    %1946 = vmatpush2.xpose.msra.mxu0 0.0
    %1947 = vmatprep.subr.mxu0 0.0
    %1948 = vmatpush2.xpose.msra.mxu0 0.0
    %1949 = vmatprep.subr.mxu0 0.0
    %1950 = vmatpush2.xpose.msra.mxu0 0.0
    %1951 = vmatprep.subr.mxu0 0.0
    %1952 = vmatpush2.xpose.msra.mxu0 0.0
    %1953 = vmatprep.subr.mxu0 0.0
    %1954 = vmatpush2.xpose.msra.mxu0 0.0
    %1955 = vmatprep.subr.mxu0 0.0
    %1956 = vmatpush2.xpose.msra.mxu0 0.0
    %1957 = vmatprep.subr.mxu0 0.0
    %1958 = vmatpush2.xpose.msra.mxu0 0.0
    %1959 = vmatprep.subr.mxu0 0.0
    %1960 = vmatpush2.xpose.msra.mxu0 0.0
    %1961 = vmatprep.subr.mxu0 0.0
    %1962 = vmatpush2.xpose.msra.mxu0 0.0
    %1963 = vmatprep.subr.mxu0 0.0
    %1964 = vmatpush2.xpose.msra.mxu0 0.0
    %1965 = vmatprep.subr.mxu0 0.0
    %1966 = vmatpush2.xpose.msra.mxu0 0.0
    %1967 = vmatprep.mubr.f32.mxu0 0.0
    %1968 = vmatmul.mubr.f32.gmra.mxu0 %v1897
    %v1969 = vpop.f32.mrf.mxu0
    %v1970 = vadd.f32 0.0, %v1969
    %v1971 = vpop.f32.mrf.mxu0
    %1972 = vmatprep.mubr.f32.mxu0 0.0
    %1973 = vmatmul.mubr.f32.gmra.mxu0 %v1899
    %v1974 = vpop.f32.mrf.mxu0
    %v1975 = vadd.f32 0.0, %v1974
    %v1976 = vpop.f32.mrf.mxu0
    %1977 = vdwg.mxu0
    %v1978 = vmul.f32 %v1970, 0.35355338
    %v1979 = vmul.f32 %v1975, 0.35355338
    %v1980 = vsel %vm666, %v1978, -inf
    %1981 = vmax.xlane.f32.xlu0 %v1980
    %v1982 = vpop.xlane.xlu0 %1981
    %v1983 = vsel %vm666, %v1979, -inf
    %1984 = vmax.xlane.f32.xlu0 %v1983
    %v1985 = vpop.xlane.xlu0 %1984
    %v1986 = vsub.f32 %v1978, %v1982
    %v1987 = vsub.f32 %v1979, %v1985
    %v1988 = vmul.f32 %v1986, 1.442695
    %v1989 = vpow.pop %v1988
    %v1990 = vmul.f32 %v1987, 1.442695
    %v1991 = vpow.pop %v1990
    %v1992 = vsel %vm666, %v1989, 0.0
    %1993 = vadd.xlane.f32.xlu0 %v1992
    %v1994 = vpop.xlane.xlu0 %1993
    %v1995 = vsel %vm666, %v1991, 0.0
    %1996 = vadd.xlane.f32.xlu0 %v1995
    %v1997 = vpop.xlane.xlu0 %1996
    %v1998 = vrcp.pop %v1994
    %v1999 = vmul.f32 %v1989, %v1998
    %v2000 = vrcp.pop %v1997
    %v2001 = vmul.f32 %v1991, %v2000
    %2002 = vrot.lane.b32.xlu0 %v564, 16
    %v2003 = vpop.permute.xlu0 %2002
    %v2006 = vsel %vm666, %v1999, 0
    %v2009 = vsel %vm666, %v2001, 0
    %2011 = vmatprep.subr.mxu0 0.0
    %2012 = vmatpush1.msra.mxu0 0.0
    %2013 = vmatprep.subr.mxu0 0.0
    %2014 = vmatpush1.msra.mxu0 0.0
    %2015 = vmatprep.subr.mxu0 0.0
    %2016 = vmatpush1.msra.mxu0 0.0
    %2017 = vmatprep.subr.mxu0 0.0
    %2018 = vmatpush1.msra.mxu0 0.0
    %2019 = vmatprep.subr.mxu0 0.0
    %2020 = vmatpush1.msra.mxu0 0.0
    %2021 = vmatprep.subr.mxu0 0.0
    %2022 = vmatpush1.msra.mxu0 0.0
    %2023 = vmatprep.subr.mxu0 0.0
    %2024 = vmatpush1.msra.mxu0 0.0
    %2025 = vmatprep.subr.mxu0 0.0
    %2026 = vmatpush1.msra.mxu0 0.0
    %2027 = vmatprep.subr.mxu0 0.0
    %2028 = vmatpush1.msra.mxu0 0.0
    %2029 = vmatprep.subr.mxu0 0.0
    %2030 = vmatpush1.msra.mxu0 0.0
    %2031 = vmatprep.subr.mxu0 0.0
    %2032 = vmatpush1.msra.mxu0 0.0
    %2033 = vmatprep.subr.mxu0 0.0
    %2034 = vmatpush1.msra.mxu0 0.0
    %2035 = vmatprep.subr.mxu0 0.0
    %2036 = vmatpush1.msra.mxu0 0.0
    %2037 = vmatprep.subr.mxu0 0.0
    %2038 = vmatpush1.msra.mxu0 0.0
    %2039 = vmatprep.subr.mxu0 0.0
    %2040 = vmatpush1.msra.mxu0 0.0
    %2041 = vmatprep.subr.mxu0 0.0
    %2042 = vmatpush1.msra.mxu0 %v2003
    %2043 = vmatprep.subr.mxu0 0.0
    %2044 = vmatpush2.msra.mxu0 0.0
    %2045 = vmatprep.subr.mxu0 0.0
    %2046 = vmatpush2.msra.mxu0 0.0
    %2047 = vmatprep.subr.mxu0 0.0
    %2048 = vmatpush2.msra.mxu0 0.0
    %2049 = vmatprep.subr.mxu0 0.0
    %2050 = vmatpush2.msra.mxu0 0.0
    %2051 = vmatprep.subr.mxu0 0.0
    %2052 = vmatpush2.msra.mxu0 0.0
    %2053 = vmatprep.subr.mxu0 0.0
    %2054 = vmatpush2.msra.mxu0 0.0
    %2055 = vmatprep.subr.mxu0 0.0
    %2056 = vmatpush2.msra.mxu0 0.0
    %2057 = vmatprep.subr.mxu0 0.0
    %2058 = vmatpush2.msra.mxu0 0.0
    %2059 = vmatprep.subr.mxu0 0.0
    %2060 = vmatpush2.msra.mxu0 0.0
    %2061 = vmatprep.subr.mxu0 0.0
    %2062 = vmatpush2.msra.mxu0 0.0
    %2063 = vmatprep.subr.mxu0 0.0
    %2064 = vmatpush2.msra.mxu0 0.0
    %2065 = vmatprep.subr.mxu0 0.0
    %2066 = vmatpush2.msra.mxu0 0.0
    %2067 = vmatprep.subr.mxu0 0.0
    %2068 = vmatpush2.msra.mxu0 0.0
    %2069 = vmatprep.subr.mxu0 0.0
    %2070 = vmatpush2.msra.mxu0 0.0
    %2071 = vmatprep.subr.mxu0 0.0
    %2072 = vmatpush2.msra.mxu0 0.0
    %2073 = vmatprep.subr.mxu0 0.0
    %2074 = vmatpush2.msra.mxu0 0.0
    %2075 = vmatprep.mubr.f32.mxu0 0.0
    %2076 = vmatmul.mubr.f32.gmra.mxu0 %v2006
    %v2077 = vpop.f32.mrf.mxu0
    %v2078 = vadd.f32 0.0, %v2077
    %v2079 = vpop.f32.mrf.mxu0
    %2080 = vmatprep.mubr.f32.mxu0 0.0
    %2081 = vmatmul.mubr.f32.gmra.mxu0 %v2009
    %v2082 = vpop.f32.mrf.mxu0
    %v2083 = vadd.f32 0.0, %v2082
    %v2084 = vpop.f32.mrf.mxu0
    %2085 = vdwg.mxu0
    %2088 = vrot.lane.b32.xlu0 %v2078, 48
    %v2089 = vpop.permute.xlu0 %2088
    %2090 = vrot.lane.b32.xlu0 %v2083, 48
    %v2091 = vpop.permute.xlu0 %2090
    %vm2094 = vcmask 458112
    %2095 = vst.msk [vmem:[#allocation2] sm:$0xff] %vm2094, %v2089
    %2096 = vst.msk [vmem:[#allocation2 + $0x8] sm:$0xff] %vm2094, %v2091
    %2097 = vrot.lane.b32.xlu0 %v649, 72
    %v2098 = vpop.permute.xlu0 %2097
    %2099 = vrot.lane.b32.xlu0 %v654, 72
    %v2100 = vpop.permute.xlu0 %2099
    %2101 = vrot.lane.b32.xlu0 %v564, 72
    %v2102 = vpop.permute.xlu0 %2101
    %v2103 = vsel %vm666, %v2098, 0
    %v2105 = vsel %vm666, %v2100, 0
    %v2107 = vsel %vm666, %v2102, 0
    %2109 = vmatprep.subr.mxu0 0.0
    %2110 = vmatpush1.xpose.msra.mxu0 0.0
    %2111 = vmatprep.subr.mxu0 0.0
    %2112 = vmatpush1.xpose.msra.mxu0 0.0
    %2113 = vmatprep.subr.mxu0 0.0
    %2114 = vmatpush1.xpose.msra.mxu0 0.0
    %2115 = vmatprep.subr.mxu0 0.0
    %2116 = vmatpush1.xpose.msra.mxu0 0.0
    %2117 = vmatprep.subr.mxu0 0.0
    %2118 = vmatpush1.xpose.msra.mxu0 0.0
    %2119 = vmatprep.subr.mxu0 0.0
    %2120 = vmatpush1.xpose.msra.mxu0 0.0
    %2121 = vmatprep.subr.mxu0 0.0
    %2122 = vmatpush1.xpose.msra.mxu0 0.0
    %2123 = vmatprep.subr.mxu0 0.0
    %2124 = vmatpush1.xpose.msra.mxu0 0.0
    %2125 = vmatprep.subr.mxu0 0.0
    %2126 = vmatpush1.xpose.msra.mxu0 0.0
    %2127 = vmatprep.subr.mxu0 0.0
    %2128 = vmatpush1.xpose.msra.mxu0 0.0
    %2129 = vmatprep.subr.mxu0 0.0
    %2130 = vmatpush1.xpose.msra.mxu0 0.0
    %2131 = vmatprep.subr.mxu0 0.0
    %2132 = vmatpush1.xpose.msra.mxu0 0.0
    %2133 = vmatprep.subr.mxu0 0.0
    %2134 = vmatpush1.xpose.msra.mxu0 0.0
    %2135 = vmatprep.subr.mxu0 0.0
    %2136 = vmatpush1.xpose.msra.mxu0 0.0
    %2137 = vmatprep.subr.mxu0 0.0
    %2138 = vmatpush1.xpose.msra.mxu0 0.0
    %2139 = vmatprep.subr.mxu0 0.0
    %2140 = vmatpush1.xpose.msra.mxu0 %v2107
    %2141 = vmatprep.subr.mxu0 0.0
    %2142 = vmatpush2.xpose.msra.mxu0 0.0
    %2143 = vmatprep.subr.mxu0 0.0
    %2144 = vmatpush2.xpose.msra.mxu0 0.0
    %2145 = vmatprep.subr.mxu0 0.0
    %2146 = vmatpush2.xpose.msra.mxu0 0.0
    %2147 = vmatprep.subr.mxu0 0.0
    %2148 = vmatpush2.xpose.msra.mxu0 0.0
    %2149 = vmatprep.subr.mxu0 0.0
    %2150 = vmatpush2.xpose.msra.mxu0 0.0
    %2151 = vmatprep.subr.mxu0 0.0
    %2152 = vmatpush2.xpose.msra.mxu0 0.0
    %2153 = vmatprep.subr.mxu0 0.0
    %2154 = vmatpush2.xpose.msra.mxu0 0.0
    %2155 = vmatprep.subr.mxu0 0.0
    %2156 = vmatpush2.xpose.msra.mxu0 0.0
    %2157 = vmatprep.subr.mxu0 0.0
    %2158 = vmatpush2.xpose.msra.mxu0 0.0
    %2159 = vmatprep.subr.mxu0 0.0
    %2160 = vmatpush2.xpose.msra.mxu0 0.0
    %2161 = vmatprep.subr.mxu0 0.0
    %2162 = vmatpush2.xpose.msra.mxu0 0.0
    %2163 = vmatprep.subr.mxu0 0.0
    %2164 = vmatpush2.xpose.msra.mxu0 0.0
    %2165 = vmatprep.subr.mxu0 0.0
    %2166 = vmatpush2.xpose.msra.mxu0 0.0
    %2167 = vmatprep.subr.mxu0 0.0
    %2168 = vmatpush2.xpose.msra.mxu0 0.0
    %2169 = vmatprep.subr.mxu0 0.0
    %2170 = vmatpush2.xpose.msra.mxu0 0.0
    %2171 = vmatprep.subr.mxu0 0.0
    %2172 = vmatpush2.xpose.msra.mxu0 0.0
    %2173 = vmatprep.mubr.f32.mxu0 0.0
    %2174 = vmatmul.mubr.f32.gmra.mxu0 %v2103
    %v2175 = vpop.f32.mrf.mxu0
    %v2176 = vadd.f32 0.0, %v2175
    %v2177 = vpop.f32.mrf.mxu0
    %2178 = vmatprep.mubr.f32.mxu0 0.0
    %2179 = vmatmul.mubr.f32.gmra.mxu0 %v2105
    %v2180 = vpop.f32.mrf.mxu0
    %v2181 = vadd.f32 0.0, %v2180
    %v2182 = vpop.f32.mrf.mxu0
    %2183 = vdwg.mxu0
    %v2184 = vmul.f32 %v2176, 0.35355338
    %v2185 = vmul.f32 %v2181, 0.35355338
    %v2186 = vsel %vm666, %v2184, -inf
    %2187 = vmax.xlane.f32.xlu0 %v2186
    %v2188 = vpop.xlane.xlu0 %2187
    %v2189 = vsel %vm666, %v2185, -inf
    %2190 = vmax.xlane.f32.xlu0 %v2189
    %v2191 = vpop.xlane.xlu0 %2190
    %v2192 = vsub.f32 %v2184, %v2188
    %v2193 = vsub.f32 %v2185, %v2191
    %v2194 = vmul.f32 %v2192, 1.442695
    %v2195 = vpow.pop %v2194
    %v2196 = vmul.f32 %v2193, 1.442695
    %v2197 = vpow.pop %v2196
    %v2198 = vsel %vm666, %v2195, 0.0
    %2199 = vadd.xlane.f32.xlu0 %v2198
    %v2200 = vpop.xlane.xlu0 %2199
    %v2201 = vsel %vm666, %v2197, 0.0
    %2202 = vadd.xlane.f32.xlu0 %v2201
    %v2203 = vpop.xlane.xlu0 %2202
    %v2204 = vrcp.pop %v2200
    %v2205 = vmul.f32 %v2195, %v2204
    %v2206 = vrcp.pop %v2203
    %v2207 = vmul.f32 %v2197, %v2206
    %2208 = vrot.lane.b32.xlu0 %v564, 8
    %v2209 = vpop.permute.xlu0 %2208
    %v2212 = vsel %vm666, %v2205, 0
    %v2215 = vsel %vm666, %v2207, 0
    %2217 = vmatprep.subr.mxu0 0.0
    %2218 = vmatpush1.msra.mxu0 0.0
    %2219 = vmatprep.subr.mxu0 0.0
    %2220 = vmatpush1.msra.mxu0 0.0
    %2221 = vmatprep.subr.mxu0 0.0
    %2222 = vmatpush1.msra.mxu0 0.0
    %2223 = vmatprep.subr.mxu0 0.0
    %2224 = vmatpush1.msra.mxu0 0.0
    %2225 = vmatprep.subr.mxu0 0.0
    %2226 = vmatpush1.msra.mxu0 0.0
    %2227 = vmatprep.subr.mxu0 0.0
    %2228 = vmatpush1.msra.mxu0 0.0
    %2229 = vmatprep.subr.mxu0 0.0
    %2230 = vmatpush1.msra.mxu0 0.0
    %2231 = vmatprep.subr.mxu0 0.0
    %2232 = vmatpush1.msra.mxu0 0.0
    %2233 = vmatprep.subr.mxu0 0.0
    %2234 = vmatpush1.msra.mxu0 0.0
    %2235 = vmatprep.subr.mxu0 0.0
    %2236 = vmatpush1.msra.mxu0 0.0
    %2237 = vmatprep.subr.mxu0 0.0
    %2238 = vmatpush1.msra.mxu0 0.0
    %2239 = vmatprep.subr.mxu0 0.0
    %2240 = vmatpush1.msra.mxu0 0.0
    %2241 = vmatprep.subr.mxu0 0.0
    %2242 = vmatpush1.msra.mxu0 0.0
    %2243 = vmatprep.subr.mxu0 0.0
    %2244 = vmatpush1.msra.mxu0 0.0
    %2245 = vmatprep.subr.mxu0 0.0
    %2246 = vmatpush1.msra.mxu0 0.0
    %2247 = vmatprep.subr.mxu0 0.0
    %2248 = vmatpush1.msra.mxu0 %v2209
    %2249 = vmatprep.subr.mxu0 0.0
    %2250 = vmatpush2.msra.mxu0 0.0
    %2251 = vmatprep.subr.mxu0 0.0
    %2252 = vmatpush2.msra.mxu0 0.0
    %2253 = vmatprep.subr.mxu0 0.0
    %2254 = vmatpush2.msra.mxu0 0.0
    %2255 = vmatprep.subr.mxu0 0.0
    %2256 = vmatpush2.msra.mxu0 0.0
    %2257 = vmatprep.subr.mxu0 0.0
    %2258 = vmatpush2.msra.mxu0 0.0
    %2259 = vmatprep.subr.mxu0 0.0
    %2260 = vmatpush2.msra.mxu0 0.0
    %2261 = vmatprep.subr.mxu0 0.0
    %2262 = vmatpush2.msra.mxu0 0.0
    %2263 = vmatprep.subr.mxu0 0.0
    %2264 = vmatpush2.msra.mxu0 0.0
    %2265 = vmatprep.subr.mxu0 0.0
    %2266 = vmatpush2.msra.mxu0 0.0
    %2267 = vmatprep.subr.mxu0 0.0
    %2268 = vmatpush2.msra.mxu0 0.0
    %2269 = vmatprep.subr.mxu0 0.0
    %2270 = vmatpush2.msra.mxu0 0.0
    %2271 = vmatprep.subr.mxu0 0.0
    %2272 = vmatpush2.msra.mxu0 0.0
    %2273 = vmatprep.subr.mxu0 0.0
    %2274 = vmatpush2.msra.mxu0 0.0
    %2275 = vmatprep.subr.mxu0 0.0
    %2276 = vmatpush2.msra.mxu0 0.0
    %2277 = vmatprep.subr.mxu0 0.0
    %2278 = vmatpush2.msra.mxu0 0.0
    %2279 = vmatprep.subr.mxu0 0.0
    %2280 = vmatpush2.msra.mxu0 0.0
    %2281 = vmatprep.mubr.f32.mxu0 0.0
    %2282 = vmatmul.mubr.f32.gmra.mxu0 %v2212
    %v2283 = vpop.f32.mrf.mxu0
    %v2284 = vadd.f32 0.0, %v2283
    %v2285 = vpop.f32.mrf.mxu0
    %2286 = vmatprep.mubr.f32.mxu0 0.0
    %2287 = vmatmul.mubr.f32.gmra.mxu0 %v2215
    %v2288 = vpop.f32.mrf.mxu0
    %v2289 = vadd.f32 0.0, %v2288
    %v2290 = vpop.f32.mrf.mxu0
    %2291 = vdwg.mxu0
    %2294 = vrot.lane.b32.xlu0 %v2284, 56
    %v2295 = vpop.permute.xlu0 %2294
    %2296 = vrot.lane.b32.xlu0 %v2289, 56
    %v2297 = vpop.permute.xlu0 %2296
    %vm2300 = vcmask 523712
    %2301 = vst.msk [vmem:[#allocation2] sm:$0xff] %vm2300, %v2295
    %2302 = vst.msk [vmem:[#allocation2 + $0x8] sm:$0xff] %vm2300, %v2297
    %v2303 = vld [vmem:[#allocation2] sm:$0xff]
    %v2304 = vld [vmem:[#allocation2 + $0x8] sm:$0xff]
    %v2306 = vsel %vm254, %v2303, 0
    %v2309 = vsel %vm254, %v2304, 0
    %2311 = vmatprep.subr.mxu0 0.0
    %2312 = vmatpush1.msra.mxu0 0.0
    %2313 = vmatprep.subr.mxu0 0.0
    %2314 = vmatpush1.msra.mxu0 0.0
    %2315 = vmatprep.subr.mxu0 0.0
    %2316 = vmatpush1.msra.mxu0 0.0
    %2317 = vmatprep.subr.mxu0 0.0
    %2318 = vmatpush1.msra.mxu0 0.0
    %2319 = vmatprep.subr.mxu0 0.0
    %2320 = vmatpush1.msra.mxu0 0.0
    %2321 = vmatprep.subr.mxu0 0.0
    %2322 = vmatpush1.msra.mxu0 0.0
    %2323 = vmatprep.subr.mxu0 0.0
    %2324 = vmatpush1.msra.mxu0 0.0
    %2325 = vmatprep.subr.mxu0 0.0
    %2326 = vmatpush1.msra.mxu0 0.0
    %2327 = vmatprep.subr.mxu0 0.0
    %2328 = vmatpush1.msra.mxu0 %v664
    %2329 = vmatprep.subr.mxu0 0.0
    %2330 = vmatpush1.msra.mxu0 %v663
    %2331 = vmatprep.subr.mxu0 0.0
    %2332 = vmatpush1.msra.mxu0 %v662
    %2333 = vmatprep.subr.mxu0 0.0
    %2334 = vmatpush1.msra.mxu0 %v661
    %2335 = vmatprep.subr.mxu0 0.0
    %2336 = vmatpush1.msra.mxu0 %v660
    %2337 = vmatprep.subr.mxu0 0.0
    %2338 = vmatpush1.msra.mxu0 %v659
    %2339 = vmatprep.subr.mxu0 0.0
    %2340 = vmatpush1.msra.mxu0 %v658
    %2341 = vmatprep.subr.mxu0 0.0
    %2342 = vmatpush1.msra.mxu0 %v657
    %2343 = vmatprep.subr.mxu0 0.0
    %2344 = vmatpush2.msra.mxu0 0.0
    %2345 = vmatprep.subr.mxu0 0.0
    %2346 = vmatpush2.msra.mxu0 0.0
    %2347 = vmatprep.subr.mxu0 0.0
    %2348 = vmatpush2.msra.mxu0 0.0
    %2349 = vmatprep.subr.mxu0 0.0
    %2350 = vmatpush2.msra.mxu0 0.0
    %2351 = vmatprep.subr.mxu0 0.0
    %2352 = vmatpush2.msra.mxu0 0.0
    %2353 = vmatprep.subr.mxu0 0.0
    %2354 = vmatpush2.msra.mxu0 0.0
    %2355 = vmatprep.subr.mxu0 0.0
    %2356 = vmatpush2.msra.mxu0 0.0
    %2357 = vmatprep.subr.mxu0 0.0
    %2358 = vmatpush2.msra.mxu0 0.0
    %2359 = vmatprep.subr.mxu0 0.0
    %2360 = vmatpush2.msra.mxu0 0.0
    %2361 = vmatprep.subr.mxu0 0.0
    %2362 = vmatpush2.msra.mxu0 0.0
    %2363 = vmatprep.subr.mxu0 0.0
    %2364 = vmatpush2.msra.mxu0 0.0
    %2365 = vmatprep.subr.mxu0 0.0
    %2366 = vmatpush2.msra.mxu0 0.0
    %2367 = vmatprep.subr.mxu0 0.0
    %2368 = vmatpush2.msra.mxu0 0.0
    %2369 = vmatprep.subr.mxu0 0.0
    %2370 = vmatpush2.msra.mxu0 0.0
    %2371 = vmatprep.subr.mxu0 0.0
    %2372 = vmatpush2.msra.mxu0 0.0
    %2373 = vmatprep.subr.mxu0 0.0
    %2374 = vmatpush2.msra.mxu0 0.0
    %2375 = vmatprep.mubr.f32.mxu0 0.0
    %2376 = vmatmul.mubr.f32.gmra.mxu0 %v2306
    %v2377 = vpop.f32.mrf.mxu0
    %v2378 = vadd.f32 %v665, %v2377
    %v2379 = vpop.f32.mrf.mxu0
    %2380 = vmatprep.mubr.f32.mxu0 0.0
    %2381 = vmatmul.mubr.f32.gmra.mxu0 %v2309
    %v2382 = vpop.f32.mrf.mxu0
    %v2383 = vadd.f32 %v665, %v2382
    %v2384 = vpop.f32.mrf.mxu0
    %2385 = vdwg.mxu0
    %v2386 = vadd.f32 %v476, %v2378
    %v2387 = vadd.f32 %v477, %v2383
    %v2388 = vld [vmem:[%s6 + $0x36] ss:$0 sm:$0xff]
    %v2389 = vld [vmem:[%s6 + $0x37] ss:$0 sm:$0xff]
    %v2390 = vsel %vm254, %v2386, 0.0
    %2391 = vadd.xlane.f32.xlu0 %v2390
    %v2392 = vpop.xlane.xlu0 %2391
    %v2393 = vsel %vm254, %v2387, 0.0
    %2394 = vadd.xlane.f32.xlu0 %v2393
    %v2395 = vpop.xlane.xlu0 %2394
    %v2396 = vrcp.pop 64.0
    %v2397 = vmul.f32 %v2392, %v2396
    %v2398 = vmul.f32 %v2395, %v2396
    %v2399 = vsub.f32 %v2386, %v2397
    %v2400 = vsub.f32 %v2387, %v2398
    %v2401 = vmul.f32 %v2399, %v2399
    %v2402 = vmul.f32 %v2400, %v2400
    %v2403 = vsel %vm254, %v2401, 0.0
    %2404 = vadd.xlane.f32.xlu0 %v2403
    %v2405 = vpop.xlane.xlu0 %2404
    %v2406 = vsel %vm254, %v2402, 0.0
    %2407 = vadd.xlane.f32.xlu0 %v2406
    %v2408 = vpop.xlane.xlu0 %2407
    %v2409 = vmul.f32 %v2405, %v2396
    %v2410 = vmul.f32 %v2408, %v2396
    %v2411 = vadd.f32 %v2409, 1e-06
    %v2412 = vadd.f32 %v2410, 1e-06
    %v2413 = vrsqrt.pop %v2411
    %v2414 = vrsqrt.pop %v2412
    %v2415 = vmul.f32 %v2399, %v2413
    %v2416 = vmul.f32 %v2400, %v2414
    %v2417 = vmul.f32 %v2415, %v2388
    %v2418 = vmul.f32 %v2416, %v2388
    %v2419 = vadd.f32 %v2417, %v2389
    %v2420 = vadd.f32 %v2418, %v2389
    %v2421 = vmax.f32 %v2419, 0.0
    %v2422 = vmax.f32 %v2420, 0.0
    %v2423 = vadd.f32 %v2419, %v2421
    %v2424 = vadd.f32 %v2420, %v2422
    %v2425 = vld [vmem:[%s6 + $0x34] ss:$0 sm:$0xff]
    %v2426 = vld [vmem:[%s6 + $0x35] ss:$0 sm:$0xff]
    %v2427 = vsel %vm254, %v2423, 0.0
    %2428 = vadd.xlane.f32.xlu0 %v2427
    %v2429 = vpop.xlane.xlu0 %2428
    %v2430 = vsel %vm254, %v2424, 0.0
    %2431 = vadd.xlane.f32.xlu0 %v2430
    %v2432 = vpop.xlane.xlu0 %2431
    %v2433 = vmul.f32 %v2429, %v2396
    %v2434 = vmul.f32 %v2432, %v2396
    %v2435 = vsub.f32 %v2423, %v2433
    %v2436 = vsub.f32 %v2424, %v2434
    %v2437 = vmul.f32 %v2435, %v2435
    %v2438 = vmul.f32 %v2436, %v2436
    %v2439 = vsel %vm254, %v2437, 0.0
    %2440 = vadd.xlane.f32.xlu0 %v2439
    %v2441 = vpop.xlane.xlu0 %2440
    %v2442 = vsel %vm254, %v2438, 0.0
    %2443 = vadd.xlane.f32.xlu0 %v2442
    %v2444 = vpop.xlane.xlu0 %2443
    %v2445 = vmul.f32 %v2441, %v2396
    %v2446 = vmul.f32 %v2444, %v2396
    %v2447 = vadd.f32 %v2445, 1e-06
    %v2448 = vadd.f32 %v2446, 1e-06
    %v2449 = vrsqrt.pop %v2447
    %v2450 = vrsqrt.pop %v2448
    %v2451 = vmul.f32 %v2435, %v2449
    %v2452 = vmul.f32 %v2436, %v2450
    %v2453 = vmul.f32 %v2451, %v2425
    %v2454 = vmul.f32 %v2452, %v2425
    %v2455 = vadd.f32 %v2453, %v2426
    %v2456 = vadd.f32 %v2454, %v2426
    %v2457 = vld [vmem:[%s6 + $0x20] sm:$0xff]
    %v2458 = vld [vmem:[#allocation3 + $0x30] sm:$0xff]
    %v2459 = vld [vmem:[#allocation3 + $0xd8] sm:$0xff]
    %v2460 = vld [vmem:[#allocation3 + $0x180] sm:$0xff]
    %v2461 = vld [vmem:[#allocation3 + $0x228] sm:$0xff]
    %v2462 = vld [vmem:[#allocation3 + $0x2d0] sm:$0xff]
    %v2463 = vld [vmem:[#allocation3 + $0x378] sm:$0xff]
    %v2464 = vld [vmem:[#allocation3 + $0x420] sm:$0xff]
    %v2465 = vld [vmem:[#allocation3 + $0x4c8] sm:$0xff]
    %v2466 = vld [vmem:[%s6 + $0x30] ss:$0 sm:$0xff]
    %v2468 = vsel %vm254, %v2457, 0
    %2470 = vmatprep.subr.mxu0 0.0
    %2471 = vmatpush1.msra.mxu0 0.0
    %2472 = vmatprep.subr.mxu0 0.0
    %2473 = vmatpush1.msra.mxu0 0.0
    %2474 = vmatprep.subr.mxu0 0.0
    %2475 = vmatpush1.msra.mxu0 0.0
    %2476 = vmatprep.subr.mxu0 0.0
    %2477 = vmatpush1.msra.mxu0 0.0
    %2478 = vmatprep.subr.mxu0 0.0
    %2479 = vmatpush1.msra.mxu0 0.0
    %2480 = vmatprep.subr.mxu0 0.0
    %2481 = vmatpush1.msra.mxu0 0.0
    %2482 = vmatprep.subr.mxu0 0.0
    %2483 = vmatpush1.msra.mxu0 0.0
    %2484 = vmatprep.subr.mxu0 0.0
    %2485 = vmatpush1.msra.mxu0 0.0
    %2486 = vmatprep.subr.mxu0 0.0
    %2487 = vmatpush1.msra.mxu0 %v2465
    %2488 = vmatprep.subr.mxu0 0.0
    %2489 = vmatpush1.msra.mxu0 %v2464
    %2490 = vmatprep.subr.mxu0 0.0
    %2491 = vmatpush1.msra.mxu0 %v2463
    %2492 = vmatprep.subr.mxu0 0.0
    %2493 = vmatpush1.msra.mxu0 %v2462
    %2494 = vmatprep.subr.mxu0 0.0
    %2495 = vmatpush1.msra.mxu0 %v2461
    %2496 = vmatprep.subr.mxu0 0.0
    %2497 = vmatpush1.msra.mxu0 %v2460
    %2498 = vmatprep.subr.mxu0 0.0
    %2499 = vmatpush1.msra.mxu0 %v2459
    %2500 = vmatprep.subr.mxu0 0.0
    %2501 = vmatpush1.msra.mxu0 %v2458
    %2502 = vmatprep.subr.mxu0 0.0
    %2503 = vmatpush2.msra.mxu0 0.0
    %2504 = vmatprep.subr.mxu0 0.0
    %2505 = vmatpush2.msra.mxu0 0.0
    %2506 = vmatprep.subr.mxu0 0.0
    %2507 = vmatpush2.msra.mxu0 0.0
    %2508 = vmatprep.subr.mxu0 0.0
    %2509 = vmatpush2.msra.mxu0 0.0
    %2510 = vmatprep.subr.mxu0 0.0
    %2511 = vmatpush2.msra.mxu0 0.0
    %2512 = vmatprep.subr.mxu0 0.0
    %2513 = vmatpush2.msra.mxu0 0.0
    %2514 = vmatprep.subr.mxu0 0.0
    %2515 = vmatpush2.msra.mxu0 0.0
    %2516 = vmatprep.subr.mxu0 0.0
    %2517 = vmatpush2.msra.mxu0 0.0
    %2518 = vmatprep.subr.mxu0 0.0
    %2519 = vmatpush2.msra.mxu0 0.0
    %2520 = vmatprep.subr.mxu0 0.0
    %2521 = vmatpush2.msra.mxu0 0.0
    %2522 = vmatprep.subr.mxu0 0.0
    %2523 = vmatpush2.msra.mxu0 0.0
    %2524 = vmatprep.subr.mxu0 0.0
    %2525 = vmatpush2.msra.mxu0 0.0
    %2526 = vmatprep.subr.mxu0 0.0
    %2527 = vmatpush2.msra.mxu0 0.0
    %2528 = vmatprep.subr.mxu0 0.0
    %2529 = vmatpush2.msra.mxu0 0.0
    %2530 = vmatprep.subr.mxu0 0.0
    %2531 = vmatpush2.msra.mxu0 0.0
    %2532 = vmatprep.subr.mxu0 0.0
    %2533 = vmatpush2.msra.mxu0 0.0
    %2534 = vmatprep.mubr.f32.mxu0 0.0
    %2535 = vmatmul.mubr.f32.gmra.mxu0 %v2468
    %v2536 = vpop.f32.mrf.mxu0
    %v2537 = vadd.f32 %v2466, %v2536
    %v2538 = vpop.f32.mrf.mxu0
    %2539 = vdwg.mxu0
    %v2540 = vld [vmem:[#allocation3 + $0x38] sm:$0xff]
    %v2541 = vld [vmem:[#allocation3 + $0xe0] sm:$0xff]
    %v2542 = vld [vmem:[#allocation3 + $0x188] sm:$0xff]
    %v2543 = vld [vmem:[#allocation3 + $0x230] sm:$0xff]
    %v2544 = vld [vmem:[#allocation3 + $0x2d8] sm:$0xff]
    %v2545 = vld [vmem:[#allocation3 + $0x380] sm:$0xff]
    %v2546 = vld [vmem:[#allocation3 + $0x428] sm:$0xff]
    %v2547 = vld [vmem:[#allocation3 + $0x4d0] sm:$0xff]
    %v2548 = vld [vmem:[%s6 + $0x31] ss:$0 sm:$0xff]
    %2549 = vmatprep.subr.mxu0 0.0
    %2550 = vmatpush1.msra.mxu0 0.0
    %2551 = vmatprep.subr.mxu0 0.0
    %2552 = vmatpush1.msra.mxu0 0.0
    %2553 = vmatprep.subr.mxu0 0.0
    %2554 = vmatpush1.msra.mxu0 0.0
    %2555 = vmatprep.subr.mxu0 0.0
    %2556 = vmatpush1.msra.mxu0 0.0
    %2557 = vmatprep.subr.mxu0 0.0
    %2558 = vmatpush1.msra.mxu0 0.0
    %2559 = vmatprep.subr.mxu0 0.0
    %2560 = vmatpush1.msra.mxu0 0.0
    %2561 = vmatprep.subr.mxu0 0.0
    %2562 = vmatpush1.msra.mxu0 0.0
    %2563 = vmatprep.subr.mxu0 0.0
    %2564 = vmatpush1.msra.mxu0 0.0
    %2565 = vmatprep.subr.mxu0 0.0
    %2566 = vmatpush1.msra.mxu0 %v2547
    %2567 = vmatprep.subr.mxu0 0.0
    %2568 = vmatpush1.msra.mxu0 %v2546
    %2569 = vmatprep.subr.mxu0 0.0
    %2570 = vmatpush1.msra.mxu0 %v2545
    %2571 = vmatprep.subr.mxu0 0.0
    %2572 = vmatpush1.msra.mxu0 %v2544
    %2573 = vmatprep.subr.mxu0 0.0
    %2574 = vmatpush1.msra.mxu0 %v2543
    %2575 = vmatprep.subr.mxu0 0.0
    %2576 = vmatpush1.msra.mxu0 %v2542
    %2577 = vmatprep.subr.mxu0 0.0
    %2578 = vmatpush1.msra.mxu0 %v2541
    %2579 = vmatprep.subr.mxu0 0.0
    %2580 = vmatpush1.msra.mxu0 %v2540
    %2581 = vmatprep.subr.mxu0 0.0
    %2582 = vmatpush2.msra.mxu0 0.0
    %2583 = vmatprep.subr.mxu0 0.0
    %2584 = vmatpush2.msra.mxu0 0.0
    %2585 = vmatprep.subr.mxu0 0.0
    %2586 = vmatpush2.msra.mxu0 0.0
    %2587 = vmatprep.subr.mxu0 0.0
    %2588 = vmatpush2.msra.mxu0 0.0
    %2589 = vmatprep.subr.mxu0 0.0
    %2590 = vmatpush2.msra.mxu0 0.0
    %2591 = vmatprep.subr.mxu0 0.0
    %2592 = vmatpush2.msra.mxu0 0.0
    %2593 = vmatprep.subr.mxu0 0.0
    %2594 = vmatpush2.msra.mxu0 0.0
    %2595 = vmatprep.subr.mxu0 0.0
    %2596 = vmatpush2.msra.mxu0 0.0
    %2597 = vmatprep.subr.mxu0 0.0
    %2598 = vmatpush2.msra.mxu0 0.0
    %2599 = vmatprep.subr.mxu0 0.0
    %2600 = vmatpush2.msra.mxu0 0.0
    %2601 = vmatprep.subr.mxu0 0.0
    %2602 = vmatpush2.msra.mxu0 0.0
    %2603 = vmatprep.subr.mxu0 0.0
    %2604 = vmatpush2.msra.mxu0 0.0
    %2605 = vmatprep.subr.mxu0 0.0
    %2606 = vmatpush2.msra.mxu0 0.0
    %2607 = vmatprep.subr.mxu0 0.0
    %2608 = vmatpush2.msra.mxu0 0.0
    %2609 = vmatprep.subr.mxu0 0.0
    %2610 = vmatpush2.msra.mxu0 0.0
    %2611 = vmatprep.subr.mxu0 0.0
    %2612 = vmatpush2.msra.mxu0 0.0
    %2613 = vmatprep.mubr.f32.mxu0 0.0
    %2614 = vmatmul.mubr.f32.gmra.mxu0 %v577
    %v2615 = vpop.f32.mrf.mxu0
    %v2616 = vadd.f32 %v2548, %v2615
    %v2617 = vpop.f32.mrf.mxu0
    %2618 = vmatprep.mubr.f32.mxu0 0.0
    %2619 = vmatmul.mubr.f32.gmra.mxu0 %v580
    %v2620 = vpop.f32.mrf.mxu0
    %v2621 = vadd.f32 %v2548, %v2620
    %v2622 = vpop.f32.mrf.mxu0
    %2623 = vdwg.mxu0
    %v2624 = vld [vmem:[#allocation3 + $0x40] sm:$0xff]
    %v2625 = vld [vmem:[#allocation3 + $0xe8] sm:$0xff]
    %v2626 = vld [vmem:[#allocation3 + $0x190] sm:$0xff]
    %v2627 = vld [vmem:[#allocation3 + $0x238] sm:$0xff]
    %v2628 = vld [vmem:[#allocation3 + $0x2e0] sm:$0xff]
    %v2629 = vld [vmem:[#allocation3 + $0x388] sm:$0xff]
    %v2630 = vld [vmem:[#allocation3 + $0x430] sm:$0xff]
    %v2631 = vld [vmem:[#allocation3 + $0x4d8] sm:$0xff]
    %v2632 = vld [vmem:[%s6 + $0x32] ss:$0 sm:$0xff]
    %v2634 = vsel %vm666, %v2616, 0
    %v2637 = vsel %vm666, %v2621, 0
    %v2640 = vsel %vm666, %v2537, 0
    %2642 = vmatprep.subr.mxu0 0.0
    %2643 = vmatpush1.xpose.msra.mxu0 0.0
    %2644 = vmatprep.subr.mxu0 0.0
    %2645 = vmatpush1.xpose.msra.mxu0 0.0
    %2646 = vmatprep.subr.mxu0 0.0
    %2647 = vmatpush1.xpose.msra.mxu0 0.0
    %2648 = vmatprep.subr.mxu0 0.0
    %2649 = vmatpush1.xpose.msra.mxu0 0.0
    %2650 = vmatprep.subr.mxu0 0.0
    %2651 = vmatpush1.xpose.msra.mxu0 0.0
    %2652 = vmatprep.subr.mxu0 0.0
    %2653 = vmatpush1.xpose.msra.mxu0 0.0
    %2654 = vmatprep.subr.mxu0 0.0
    %2655 = vmatpush1.xpose.msra.mxu0 0.0
    %2656 = vmatprep.subr.mxu0 0.0
    %2657 = vmatpush1.xpose.msra.mxu0 0.0
    %2658 = vmatprep.subr.mxu0 0.0
    %2659 = vmatpush1.xpose.msra.mxu0 0.0
    %2660 = vmatprep.subr.mxu0 0.0
    %2661 = vmatpush1.xpose.msra.mxu0 0.0
    %2662 = vmatprep.subr.mxu0 0.0
    %2663 = vmatpush1.xpose.msra.mxu0 0.0
    %2664 = vmatprep.subr.mxu0 0.0
    %2665 = vmatpush1.xpose.msra.mxu0 0.0
    %2666 = vmatprep.subr.mxu0 0.0
    %2667 = vmatpush1.xpose.msra.mxu0 0.0
    %2668 = vmatprep.subr.mxu0 0.0
    %2669 = vmatpush1.xpose.msra.mxu0 0.0
    %2670 = vmatprep.subr.mxu0 0.0
    %2671 = vmatpush1.xpose.msra.mxu0 0.0
    %2672 = vmatprep.subr.mxu0 0.0
    %2673 = vmatpush1.xpose.msra.mxu0 %v2640
    %2674 = vmatprep.subr.mxu0 0.0
    %2675 = vmatpush2.xpose.msra.mxu0 0.0
    %2676 = vmatprep.subr.mxu0 0.0
    %2677 = vmatpush2.xpose.msra.mxu0 0.0
    %2678 = vmatprep.subr.mxu0 0.0
    %2679 = vmatpush2.xpose.msra.mxu0 0.0
    %2680 = vmatprep.subr.mxu0 0.0
    %2681 = vmatpush2.xpose.msra.mxu0 0.0
    %2682 = vmatprep.subr.mxu0 0.0
    %2683 = vmatpush2.xpose.msra.mxu0 0.0
    %2684 = vmatprep.subr.mxu0 0.0
    %2685 = vmatpush2.xpose.msra.mxu0 0.0
    %2686 = vmatprep.subr.mxu0 0.0
    %2687 = vmatpush2.xpose.msra.mxu0 0.0
    %2688 = vmatprep.subr.mxu0 0.0
    %2689 = vmatpush2.xpose.msra.mxu0 0.0
    %2690 = vmatprep.subr.mxu0 0.0
    %2691 = vmatpush2.xpose.msra.mxu0 0.0
    %2692 = vmatprep.subr.mxu0 0.0
    %2693 = vmatpush2.xpose.msra.mxu0 0.0
    %2694 = vmatprep.subr.mxu0 0.0
    %2695 = vmatpush2.xpose.msra.mxu0 0.0
    %2696 = vmatprep.subr.mxu0 0.0
    %2697 = vmatpush2.xpose.msra.mxu0 0.0
    %2698 = vmatprep.subr.mxu0 0.0
    %2699 = vmatpush2.xpose.msra.mxu0 0.0
    %2700 = vmatprep.subr.mxu0 0.0
    %2701 = vmatpush2.xpose.msra.mxu0 0.0
    %2702 = vmatprep.subr.mxu0 0.0
    %2703 = vmatpush2.xpose.msra.mxu0 0.0
    %2704 = vmatprep.subr.mxu0 0.0
    %2705 = vmatpush2.xpose.msra.mxu0 0.0
    %2706 = vmatprep.mubr.f32.mxu0 0.0
    %2707 = vmatmul.mubr.f32.gmra.mxu0 %v2634
    %v2708 = vpop.f32.mrf.mxu0
    %v2709 = vadd.f32 0.0, %v2708
    %v2710 = vpop.f32.mrf.mxu0
    %2711 = vmatprep.mubr.f32.mxu0 0.0
    %2712 = vmatmul.mubr.f32.gmra.mxu0 %v2637
    %v2713 = vpop.f32.mrf.mxu0
    %v2714 = vadd.f32 0.0, %v2713
    %v2715 = vpop.f32.mrf.mxu0
    %2716 = vdwg.mxu0
    %v2717 = vmul.f32 %v2709, 0.35355338
    %v2718 = vmul.f32 %v2714, 0.35355338
    %v2719 = vsel %vm666, %v2717, -inf
    %2720 = vmax.xlane.f32.xlu0 %v2719
    %v2721 = vpop.xlane.xlu0 %2720
    %v2722 = vsel %vm666, %v2718, -inf
    %2723 = vmax.xlane.f32.xlu0 %v2722
    %v2724 = vpop.xlane.xlu0 %2723
    %v2725 = vsub.f32 %v2717, %v2721
    %v2726 = vsub.f32 %v2718, %v2724
    %v2727 = vmul.f32 %v2725, 1.442695
    %v2728 = vpow.pop %v2727
    %v2729 = vmul.f32 %v2726, 1.442695
    %v2730 = vpow.pop %v2729
    %v2731 = vsel %vm666, %v2728, 0.0
    %2732 = vadd.xlane.f32.xlu0 %v2731
    %v2733 = vpop.xlane.xlu0 %2732
    %v2734 = vsel %vm666, %v2730, 0.0
    %2735 = vadd.xlane.f32.xlu0 %v2734
    %v2736 = vpop.xlane.xlu0 %2735
    %v2737 = vrcp.pop %v2733
    %v2738 = vmul.f32 %v2728, %v2737
    %v2739 = vrcp.pop %v2736
    %v2740 = vmul.f32 %v2730, %v2739
    %2741 = vrot.lane.b32.xlu0 %v2537, 64
    %v2742 = vpop.permute.xlu0 %2741
    %v2745 = vsel %vm666, %v2738, 0
    %v2748 = vsel %vm666, %v2740, 0
    %2750 = vmatprep.subr.mxu0 0.0
    %2751 = vmatpush1.msra.mxu0 0.0
    %2752 = vmatprep.subr.mxu0 0.0
    %2753 = vmatpush1.msra.mxu0 0.0
    %2754 = vmatprep.subr.mxu0 0.0
    %2755 = vmatpush1.msra.mxu0 0.0
    %2756 = vmatprep.subr.mxu0 0.0
    %2757 = vmatpush1.msra.mxu0 0.0
    %2758 = vmatprep.subr.mxu0 0.0
    %2759 = vmatpush1.msra.mxu0 0.0
    %2760 = vmatprep.subr.mxu0 0.0
    %2761 = vmatpush1.msra.mxu0 0.0
    %2762 = vmatprep.subr.mxu0 0.0
    %2763 = vmatpush1.msra.mxu0 0.0
    %2764 = vmatprep.subr.mxu0 0.0
    %2765 = vmatpush1.msra.mxu0 0.0
    %2766 = vmatprep.subr.mxu0 0.0
    %2767 = vmatpush1.msra.mxu0 0.0
    %2768 = vmatprep.subr.mxu0 0.0
    %2769 = vmatpush1.msra.mxu0 0.0
    %2770 = vmatprep.subr.mxu0 0.0
    %2771 = vmatpush1.msra.mxu0 0.0
    %2772 = vmatprep.subr.mxu0 0.0
    %2773 = vmatpush1.msra.mxu0 0.0
    %2774 = vmatprep.subr.mxu0 0.0
    %2775 = vmatpush1.msra.mxu0 0.0
    %2776 = vmatprep.subr.mxu0 0.0
    %2777 = vmatpush1.msra.mxu0 0.0
    %2778 = vmatprep.subr.mxu0 0.0
    %2779 = vmatpush1.msra.mxu0 0.0
    %2780 = vmatprep.subr.mxu0 0.0
    %2781 = vmatpush1.msra.mxu0 %v2742
    %2782 = vmatprep.subr.mxu0 0.0
    %2783 = vmatpush2.msra.mxu0 0.0
    %2784 = vmatprep.subr.mxu0 0.0
    %2785 = vmatpush2.msra.mxu0 0.0
    %2786 = vmatprep.subr.mxu0 0.0
    %2787 = vmatpush2.msra.mxu0 0.0
    %2788 = vmatprep.subr.mxu0 0.0
    %2789 = vmatpush2.msra.mxu0 0.0
    %2790 = vmatprep.subr.mxu0 0.0
    %2791 = vmatpush2.msra.mxu0 0.0
    %2792 = vmatprep.subr.mxu0 0.0
    %2793 = vmatpush2.msra.mxu0 0.0
    %2794 = vmatprep.subr.mxu0 0.0
    %2795 = vmatpush2.msra.mxu0 0.0
    %2796 = vmatprep.subr.mxu0 0.0
    %2797 = vmatpush2.msra.mxu0 0.0
    %2798 = vmatprep.subr.mxu0 0.0
    %2799 = vmatpush2.msra.mxu0 0.0
    %2800 = vmatprep.subr.mxu0 0.0
    %2801 = vmatpush2.msra.mxu0 0.0
    %2802 = vmatprep.subr.mxu0 0.0
    %2803 = vmatpush2.msra.mxu0 0.0
    %2804 = vmatprep.subr.mxu0 0.0
    %2805 = vmatpush2.msra.mxu0 0.0
    %2806 = vmatprep.subr.mxu0 0.0
    %2807 = vmatpush2.msra.mxu0 0.0
    %2808 = vmatprep.subr.mxu0 0.0
    %2809 = vmatpush2.msra.mxu0 0.0
    %2810 = vmatprep.subr.mxu0 0.0
    %2811 = vmatpush2.msra.mxu0 0.0
    %2812 = vmatprep.subr.mxu0 0.0
    %2813 = vmatpush2.msra.mxu0 0.0
    %2814 = vmatprep.mubr.f32.mxu0 0.0
    %2815 = vmatmul.mubr.f32.gmra.mxu0 %v2745
    %v2816 = vpop.f32.mrf.mxu0
    %v2817 = vadd.f32 0.0, %v2816
    %v2818 = vpop.f32.mrf.mxu0
    %2819 = vmatprep.mubr.f32.mxu0 0.0
    %2820 = vmatmul.mubr.f32.gmra.mxu0 %v2748
    %v2821 = vpop.f32.mrf.mxu0
    %v2822 = vadd.f32 0.0, %v2821
    %v2823 = vpop.f32.mrf.mxu0
    %2824 = vdwg.mxu0
    %2825 = vst.msk [vmem:[#allocation2] sm:$0xff] %vm666, %v2817
    %2826 = vst.msk [vmem:[#allocation2 + $0x8] sm:$0xff] %vm666, %v2822
    %2827 = vrot.lane.b32.xlu0 %v2616, 120
    %v2828 = vpop.permute.xlu0 %2827
    %2829 = vrot.lane.b32.xlu0 %v2621, 120
    %v2830 = vpop.permute.xlu0 %2829
    %2831 = vrot.lane.b32.xlu0 %v2537, 120
    %v2832 = vpop.permute.xlu0 %2831
    %v2833 = vsel %vm666, %v2828, 0
    %v2835 = vsel %vm666, %v2830, 0
    %v2837 = vsel %vm666, %v2832, 0
    %2839 = vmatprep.subr.mxu0 0.0
    %2840 = vmatpush1.xpose.msra.mxu0 0.0
    %2841 = vmatprep.subr.mxu0 0.0
    %2842 = vmatpush1.xpose.msra.mxu0 0.0
    %2843 = vmatprep.subr.mxu0 0.0
    %2844 = vmatpush1.xpose.msra.mxu0 0.0
    %2845 = vmatprep.subr.mxu0 0.0
    %2846 = vmatpush1.xpose.msra.mxu0 0.0
    %2847 = vmatprep.subr.mxu0 0.0
    %2848 = vmatpush1.xpose.msra.mxu0 0.0
    %2849 = vmatprep.subr.mxu0 0.0
    %2850 = vmatpush1.xpose.msra.mxu0 0.0
    %2851 = vmatprep.subr.mxu0 0.0
    %2852 = vmatpush1.xpose.msra.mxu0 0.0
    %2853 = vmatprep.subr.mxu0 0.0
    %2854 = vmatpush1.xpose.msra.mxu0 0.0
    %2855 = vmatprep.subr.mxu0 0.0
    %2856 = vmatpush1.xpose.msra.mxu0 0.0
    %2857 = vmatprep.subr.mxu0 0.0
    %2858 = vmatpush1.xpose.msra.mxu0 0.0
    %2859 = vmatprep.subr.mxu0 0.0
    %2860 = vmatpush1.xpose.msra.mxu0 0.0
    %2861 = vmatprep.subr.mxu0 0.0
    %2862 = vmatpush1.xpose.msra.mxu0 0.0
    %2863 = vmatprep.subr.mxu0 0.0
    %2864 = vmatpush1.xpose.msra.mxu0 0.0
    %2865 = vmatprep.subr.mxu0 0.0
    %2866 = vmatpush1.xpose.msra.mxu0 0.0
    %2867 = vmatprep.subr.mxu0 0.0
    %2868 = vmatpush1.xpose.msra.mxu0 0.0
    %2869 = vmatprep.subr.mxu0 0.0
    %2870 = vmatpush1.xpose.msra.mxu0 %v2837
    %2871 = vmatprep.subr.mxu0 0.0
    %2872 = vmatpush2.xpose.msra.mxu0 0.0
    %2873 = vmatprep.subr.mxu0 0.0
    %2874 = vmatpush2.xpose.msra.mxu0 0.0
    %2875 = vmatprep.subr.mxu0 0.0
    %2876 = vmatpush2.xpose.msra.mxu0 0.0
    %2877 = vmatprep.subr.mxu0 0.0
    %2878 = vmatpush2.xpose.msra.mxu0 0.0
    %2879 = vmatprep.subr.mxu0 0.0
    %2880 = vmatpush2.xpose.msra.mxu0 0.0
    %2881 = vmatprep.subr.mxu0 0.0
    %2882 = vmatpush2.xpose.msra.mxu0 0.0
    %2883 = vmatprep.subr.mxu0 0.0
    %2884 = vmatpush2.xpose.msra.mxu0 0.0
    %2885 = vmatprep.subr.mxu0 0.0
    %2886 = vmatpush2.xpose.msra.mxu0 0.0
    %2887 = vmatprep.subr.mxu0 0.0
    %2888 = vmatpush2.xpose.msra.mxu0 0.0
    %2889 = vmatprep.subr.mxu0 0.0
    %2890 = vmatpush2.xpose.msra.mxu0 0.0
    %2891 = vmatprep.subr.mxu0 0.0
    %2892 = vmatpush2.xpose.msra.mxu0 0.0
    %2893 = vmatprep.subr.mxu0 0.0
    %2894 = vmatpush2.xpose.msra.mxu0 0.0
    %2895 = vmatprep.subr.mxu0 0.0
    %2896 = vmatpush2.xpose.msra.mxu0 0.0
    %2897 = vmatprep.subr.mxu0 0.0
    %2898 = vmatpush2.xpose.msra.mxu0 0.0
    %2899 = vmatprep.subr.mxu0 0.0
    %2900 = vmatpush2.xpose.msra.mxu0 0.0
    %2901 = vmatprep.subr.mxu0 0.0
    %2902 = vmatpush2.xpose.msra.mxu0 0.0
    %2903 = vmatprep.mubr.f32.mxu0 0.0
    %2904 = vmatmul.mubr.f32.gmra.mxu0 %v2833
    %v2905 = vpop.f32.mrf.mxu0
    %v2906 = vadd.f32 0.0, %v2905
    %v2907 = vpop.f32.mrf.mxu0
    %2908 = vmatprep.mubr.f32.mxu0 0.0
    %2909 = vmatmul.mubr.f32.gmra.mxu0 %v2835
    %v2910 = vpop.f32.mrf.mxu0
    %v2911 = vadd.f32 0.0, %v2910
    %v2912 = vpop.f32.mrf.mxu0
    %2913 = vdwg.mxu0
    %v2914 = vmul.f32 %v2906, 0.35355338
    %v2915 = vmul.f32 %v2911, 0.35355338
    %v2916 = vsel %vm666, %v2914, -inf
    %2917 = vmax.xlane.f32.xlu0 %v2916
    %v2918 = vpop.xlane.xlu0 %2917
    %v2919 = vsel %vm666, %v2915, -inf
    %2920 = vmax.xlane.f32.xlu0 %v2919
    %v2921 = vpop.xlane.xlu0 %2920
    %v2922 = vsub.f32 %v2914, %v2918
    %v2923 = vsub.f32 %v2915, %v2921
    %v2924 = vmul.f32 %v2922, 1.442695
    %v2925 = vpow.pop %v2924
    %v2926 = vmul.f32 %v2923, 1.442695
    %v2927 = vpow.pop %v2926
    %v2928 = vsel %vm666, %v2925, 0.0
    %2929 = vadd.xlane.f32.xlu0 %v2928
    %v2930 = vpop.xlane.xlu0 %2929
    %v2931 = vsel %vm666, %v2927, 0.0
    %2932 = vadd.xlane.f32.xlu0 %v2931
    %v2933 = vpop.xlane.xlu0 %2932
    %v2934 = vrcp.pop %v2930
    %v2935 = vmul.f32 %v2925, %v2934
    %v2936 = vrcp.pop %v2933
    %v2937 = vmul.f32 %v2927, %v2936
    %2938 = vrot.lane.b32.xlu0 %v2537, 56
    %v2939 = vpop.permute.xlu0 %2938
    %v2942 = vsel %vm666, %v2935, 0
    %v2945 = vsel %vm666, %v2937, 0
    %2947 = vmatprep.subr.mxu0 0.0
    %2948 = vmatpush1.msra.mxu0 0.0
    %2949 = vmatprep.subr.mxu0 0.0
    %2950 = vmatpush1.msra.mxu0 0.0
    %2951 = vmatprep.subr.mxu0 0.0
    %2952 = vmatpush1.msra.mxu0 0.0
    %2953 = vmatprep.subr.mxu0 0.0
    %2954 = vmatpush1.msra.mxu0 0.0
    %2955 = vmatprep.subr.mxu0 0.0
    %2956 = vmatpush1.msra.mxu0 0.0
    %2957 = vmatprep.subr.mxu0 0.0
    %2958 = vmatpush1.msra.mxu0 0.0
    %2959 = vmatprep.subr.mxu0 0.0
    %2960 = vmatpush1.msra.mxu0 0.0
    %2961 = vmatprep.subr.mxu0 0.0
    %2962 = vmatpush1.msra.mxu0 0.0
    %2963 = vmatprep.subr.mxu0 0.0
    %2964 = vmatpush1.msra.mxu0 0.0
    %2965 = vmatprep.subr.mxu0 0.0
    %2966 = vmatpush1.msra.mxu0 0.0
    %2967 = vmatprep.subr.mxu0 0.0
    %2968 = vmatpush1.msra.mxu0 0.0
    %2969 = vmatprep.subr.mxu0 0.0
    %2970 = vmatpush1.msra.mxu0 0.0
    %2971 = vmatprep.subr.mxu0 0.0
    %2972 = vmatpush1.msra.mxu0 0.0
    %2973 = vmatprep.subr.mxu0 0.0
    %2974 = vmatpush1.msra.mxu0 0.0
    %2975 = vmatprep.subr.mxu0 0.0
    %2976 = vmatpush1.msra.mxu0 0.0
    %2977 = vmatprep.subr.mxu0 0.0
    %2978 = vmatpush1.msra.mxu0 %v2939
    %2979 = vmatprep.subr.mxu0 0.0
    %2980 = vmatpush2.msra.mxu0 0.0
    %2981 = vmatprep.subr.mxu0 0.0
    %2982 = vmatpush2.msra.mxu0 0.0
    %2983 = vmatprep.subr.mxu0 0.0
    %2984 = vmatpush2.msra.mxu0 0.0
    %2985 = vmatprep.subr.mxu0 0.0
    %2986 = vmatpush2.msra.mxu0 0.0
    %2987 = vmatprep.subr.mxu0 0.0
    %2988 = vmatpush2.msra.mxu0 0.0
    %2989 = vmatprep.subr.mxu0 0.0
    %2990 = vmatpush2.msra.mxu0 0.0
    %2991 = vmatprep.subr.mxu0 0.0
    %2992 = vmatpush2.msra.mxu0 0.0
    %2993 = vmatprep.subr.mxu0 0.0
    %2994 = vmatpush2.msra.mxu0 0.0
    %2995 = vmatprep.subr.mxu0 0.0
    %2996 = vmatpush2.msra.mxu0 0.0
    %2997 = vmatprep.subr.mxu0 0.0
    %2998 = vmatpush2.msra.mxu0 0.0
    %2999 = vmatprep.subr.mxu0 0.0
    %3000 = vmatpush2.msra.mxu0 0.0
    %3001 = vmatprep.subr.mxu0 0.0
    %3002 = vmatpush2.msra.mxu0 0.0
    %3003 = vmatprep.subr.mxu0 0.0
    %3004 = vmatpush2.msra.mxu0 0.0
    %3005 = vmatprep.subr.mxu0 0.0
    %3006 = vmatpush2.msra.mxu0 0.0
    %3007 = vmatprep.subr.mxu0 0.0
    %3008 = vmatpush2.msra.mxu0 0.0
    %3009 = vmatprep.subr.mxu0 0.0
    %3010 = vmatpush2.msra.mxu0 0.0
    %3011 = vmatprep.mubr.f32.mxu0 0.0
    %3012 = vmatmul.mubr.f32.gmra.mxu0 %v2942
    %v3013 = vpop.f32.mrf.mxu0
    %v3014 = vadd.f32 0.0, %v3013
    %v3015 = vpop.f32.mrf.mxu0
    %3016 = vmatprep.mubr.f32.mxu0 0.0
    %3017 = vmatmul.mubr.f32.gmra.mxu0 %v2945
    %v3018 = vpop.f32.mrf.mxu0
    %v3019 = vadd.f32 0.0, %v3018
    %v3020 = vpop.f32.mrf.mxu0
    %3021 = vdwg.mxu0
    %3024 = vrot.lane.b32.xlu0 %v3014, 8
    %v3025 = vpop.permute.xlu0 %3024
    %3026 = vrot.lane.b32.xlu0 %v3019, 8
    %v3027 = vpop.permute.xlu0 %3026
    %3030 = vst.msk [vmem:[#allocation2] sm:$0xff] %vm1064, %v3025
    %3031 = vst.msk [vmem:[#allocation2 + $0x8] sm:$0xff] %vm1064, %v3027
    %3032 = vrot.lane.b32.xlu0 %v2616, 112
    %v3033 = vpop.permute.xlu0 %3032
    %3034 = vrot.lane.b32.xlu0 %v2621, 112
    %v3035 = vpop.permute.xlu0 %3034
    %3036 = vrot.lane.b32.xlu0 %v2537, 112
    %v3037 = vpop.permute.xlu0 %3036
    %v3038 = vsel %vm666, %v3033, 0
    %v3040 = vsel %vm666, %v3035, 0
    %v3042 = vsel %vm666, %v3037, 0
    %3044 = vmatprep.subr.mxu0 0.0
    %3045 = vmatpush1.xpose.msra.mxu0 0.0
    %3046 = vmatprep.subr.mxu0 0.0
    %3047 = vmatpush1.xpose.msra.mxu0 0.0
    %3048 = vmatprep.subr.mxu0 0.0
    %3049 = vmatpush1.xpose.msra.mxu0 0.0
    %3050 = vmatprep.subr.mxu0 0.0
    %3051 = vmatpush1.xpose.msra.mxu0 0.0
    %3052 = vmatprep.subr.mxu0 0.0
    %3053 = vmatpush1.xpose.msra.mxu0 0.0
    %3054 = vmatprep.subr.mxu0 0.0
    %3055 = vmatpush1.xpose.msra.mxu0 0.0
    %3056 = vmatprep.subr.mxu0 0.0
    %3057 = vmatpush1.xpose.msra.mxu0 0.0
    %3058 = vmatprep.subr.mxu0 0.0
    %3059 = vmatpush1.xpose.msra.mxu0 0.0
    %3060 = vmatprep.subr.mxu0 0.0
    %3061 = vmatpush1.xpose.msra.mxu0 0.0
    %3062 = vmatprep.subr.mxu0 0.0
    %3063 = vmatpush1.xpose.msra.mxu0 0.0
    %3064 = vmatprep.subr.mxu0 0.0
    %3065 = vmatpush1.xpose.msra.mxu0 0.0
    %3066 = vmatprep.subr.mxu0 0.0
    %3067 = vmatpush1.xpose.msra.mxu0 0.0
    %3068 = vmatprep.subr.mxu0 0.0
    %3069 = vmatpush1.xpose.msra.mxu0 0.0
    %3070 = vmatprep.subr.mxu0 0.0
    %3071 = vmatpush1.xpose.msra.mxu0 0.0
    %3072 = vmatprep.subr.mxu0 0.0
    %3073 = vmatpush1.xpose.msra.mxu0 0.0
    %3074 = vmatprep.subr.mxu0 0.0
    %3075 = vmatpush1.xpose.msra.mxu0 %v3042
    %3076 = vmatprep.subr.mxu0 0.0
    %3077 = vmatpush2.xpose.msra.mxu0 0.0
    %3078 = vmatprep.subr.mxu0 0.0
    %3079 = vmatpush2.xpose.msra.mxu0 0.0
    %3080 = vmatprep.subr.mxu0 0.0
    %3081 = vmatpush2.xpose.msra.mxu0 0.0
    %3082 = vmatprep.subr.mxu0 0.0
    %3083 = vmatpush2.xpose.msra.mxu0 0.0
    %3084 = vmatprep.subr.mxu0 0.0
    %3085 = vmatpush2.xpose.msra.mxu0 0.0
    %3086 = vmatprep.subr.mxu0 0.0
    %3087 = vmatpush2.xpose.msra.mxu0 0.0
    %3088 = vmatprep.subr.mxu0 0.0
    %3089 = vmatpush2.xpose.msra.mxu0 0.0
    %3090 = vmatprep.subr.mxu0 0.0
    %3091 = vmatpush2.xpose.msra.mxu0 0.0
    %3092 = vmatprep.subr.mxu0 0.0
    %3093 = vmatpush2.xpose.msra.mxu0 0.0
    %3094 = vmatprep.subr.mxu0 0.0
    %3095 = vmatpush2.xpose.msra.mxu0 0.0
    %3096 = vmatprep.subr.mxu0 0.0
    %3097 = vmatpush2.xpose.msra.mxu0 0.0
    %3098 = vmatprep.subr.mxu0 0.0
    %3099 = vmatpush2.xpose.msra.mxu0 0.0
    %3100 = vmatprep.subr.mxu0 0.0
    %3101 = vmatpush2.xpose.msra.mxu0 0.0
    %3102 = vmatprep.subr.mxu0 0.0
    %3103 = vmatpush2.xpose.msra.mxu0 0.0
    %3104 = vmatprep.subr.mxu0 0.0
    %3105 = vmatpush2.xpose.msra.mxu0 0.0
    %3106 = vmatprep.subr.mxu0 0.0
    %3107 = vmatpush2.xpose.msra.mxu0 0.0
    %3108 = vmatprep.mubr.f32.mxu0 0.0
    %3109 = vmatmul.mubr.f32.gmra.mxu0 %v3038
    %v3110 = vpop.f32.mrf.mxu0
    %v3111 = vadd.f32 0.0, %v3110
    %v3112 = vpop.f32.mrf.mxu0
    %3113 = vmatprep.mubr.f32.mxu0 0.0
    %3114 = vmatmul.mubr.f32.gmra.mxu0 %v3040
    %v3115 = vpop.f32.mrf.mxu0
    %v3116 = vadd.f32 0.0, %v3115
    %v3117 = vpop.f32.mrf.mxu0
    %3118 = vdwg.mxu0
    %v3119 = vmul.f32 %v3111, 0.35355338
    %v3120 = vmul.f32 %v3116, 0.35355338
    %v3121 = vsel %vm666, %v3119, -inf
    %3122 = vmax.xlane.f32.xlu0 %v3121
    %v3123 = vpop.xlane.xlu0 %3122
    %v3124 = vsel %vm666, %v3120, -inf
    %3125 = vmax.xlane.f32.xlu0 %v3124
    %v3126 = vpop.xlane.xlu0 %3125
    %v3127 = vsub.f32 %v3119, %v3123
    %v3128 = vsub.f32 %v3120, %v3126
    %v3129 = vmul.f32 %v3127, 1.442695
    %v3130 = vpow.pop %v3129
    %v3131 = vmul.f32 %v3128, 1.442695
    %v3132 = vpow.pop %v3131
    %v3133 = vsel %vm666, %v3130, 0.0
    %3134 = vadd.xlane.f32.xlu0 %v3133
    %v3135 = vpop.xlane.xlu0 %3134
    %v3136 = vsel %vm666, %v3132, 0.0
    %3137 = vadd.xlane.f32.xlu0 %v3136
    %v3138 = vpop.xlane.xlu0 %3137
    %v3139 = vrcp.pop %v3135
    %v3140 = vmul.f32 %v3130, %v3139
    %v3141 = vrcp.pop %v3138
    %v3142 = vmul.f32 %v3132, %v3141
    %3143 = vrot.lane.b32.xlu0 %v2537, 48
    %v3144 = vpop.permute.xlu0 %3143
    %v3147 = vsel %vm666, %v3140, 0
    %v3150 = vsel %vm666, %v3142, 0
    %3152 = vmatprep.subr.mxu0 0.0
    %3153 = vmatpush1.msra.mxu0 0.0
    %3154 = vmatprep.subr.mxu0 0.0
    %3155 = vmatpush1.msra.mxu0 0.0
    %3156 = vmatprep.subr.mxu0 0.0
    %3157 = vmatpush1.msra.mxu0 0.0
    %3158 = vmatprep.subr.mxu0 0.0
    %3159 = vmatpush1.msra.mxu0 0.0
    %3160 = vmatprep.subr.mxu0 0.0
    %3161 = vmatpush1.msra.mxu0 0.0
    %3162 = vmatprep.subr.mxu0 0.0
    %3163 = vmatpush1.msra.mxu0 0.0
    %3164 = vmatprep.subr.mxu0 0.0
    %3165 = vmatpush1.msra.mxu0 0.0
    %3166 = vmatprep.subr.mxu0 0.0
    %3167 = vmatpush1.msra.mxu0 0.0
    %3168 = vmatprep.subr.mxu0 0.0
    %3169 = vmatpush1.msra.mxu0 0.0
    %3170 = vmatprep.subr.mxu0 0.0
    %3171 = vmatpush1.msra.mxu0 0.0
    %3172 = vmatprep.subr.mxu0 0.0
    %3173 = vmatpush1.msra.mxu0 0.0
    %3174 = vmatprep.subr.mxu0 0.0
    %3175 = vmatpush1.msra.mxu0 0.0
    %3176 = vmatprep.subr.mxu0 0.0
    %3177 = vmatpush1.msra.mxu0 0.0
    %3178 = vmatprep.subr.mxu0 0.0
    %3179 = vmatpush1.msra.mxu0 0.0
    %3180 = vmatprep.subr.mxu0 0.0
    %3181 = vmatpush1.msra.mxu0 0.0
    %3182 = vmatprep.subr.mxu0 0.0
    %3183 = vmatpush1.msra.mxu0 %v3144
    %3184 = vmatprep.subr.mxu0 0.0
    %3185 = vmatpush2.msra.mxu0 0.0
    %3186 = vmatprep.subr.mxu0 0.0
    %3187 = vmatpush2.msra.mxu0 0.0
    %3188 = vmatprep.subr.mxu0 0.0
    %3189 = vmatpush2.msra.mxu0 0.0
    %3190 = vmatprep.subr.mxu0 0.0
    %3191 = vmatpush2.msra.mxu0 0.0
    %3192 = vmatprep.subr.mxu0 0.0
    %3193 = vmatpush2.msra.mxu0 0.0
    %3194 = vmatprep.subr.mxu0 0.0
    %3195 = vmatpush2.msra.mxu0 0.0
    %3196 = vmatprep.subr.mxu0 0.0
    %3197 = vmatpush2.msra.mxu0 0.0
    %3198 = vmatprep.subr.mxu0 0.0
    %3199 = vmatpush2.msra.mxu0 0.0
    %3200 = vmatprep.subr.mxu0 0.0
    %3201 = vmatpush2.msra.mxu0 0.0
    %3202 = vmatprep.subr.mxu0 0.0
    %3203 = vmatpush2.msra.mxu0 0.0
    %3204 = vmatprep.subr.mxu0 0.0
    %3205 = vmatpush2.msra.mxu0 0.0
    %3206 = vmatprep.subr.mxu0 0.0
    %3207 = vmatpush2.msra.mxu0 0.0
    %3208 = vmatprep.subr.mxu0 0.0
    %3209 = vmatpush2.msra.mxu0 0.0
    %3210 = vmatprep.subr.mxu0 0.0
    %3211 = vmatpush2.msra.mxu0 0.0
    %3212 = vmatprep.subr.mxu0 0.0
    %3213 = vmatpush2.msra.mxu0 0.0
    %3214 = vmatprep.subr.mxu0 0.0
    %3215 = vmatpush2.msra.mxu0 0.0
    %3216 = vmatprep.mubr.f32.mxu0 0.0
    %3217 = vmatmul.mubr.f32.gmra.mxu0 %v3147
    %v3218 = vpop.f32.mrf.mxu0
    %v3219 = vadd.f32 0.0, %v3218
    %v3220 = vpop.f32.mrf.mxu0
    %3221 = vmatprep.mubr.f32.mxu0 0.0
    %3222 = vmatmul.mubr.f32.gmra.mxu0 %v3150
    %v3223 = vpop.f32.mrf.mxu0
    %v3224 = vadd.f32 0.0, %v3223
    %v3225 = vpop.f32.mrf.mxu0
    %3226 = vdwg.mxu0
    %3229 = vrot.lane.b32.xlu0 %v3219, 16
    %v3230 = vpop.permute.xlu0 %3229
    %3231 = vrot.lane.b32.xlu0 %v3224, 16
    %v3232 = vpop.permute.xlu0 %3231
    %3235 = vst.msk [vmem:[#allocation2] sm:$0xff] %vm1270, %v3230
    %3236 = vst.msk [vmem:[#allocation2 + $0x8] sm:$0xff] %vm1270, %v3232
    %3237 = vrot.lane.b32.xlu0 %v2616, 104
    %v3238 = vpop.permute.xlu0 %3237
    %3239 = vrot.lane.b32.xlu0 %v2621, 104
    %v3240 = vpop.permute.xlu0 %3239
    %3241 = vrot.lane.b32.xlu0 %v2537, 104
    %v3242 = vpop.permute.xlu0 %3241
    %v3243 = vsel %vm666, %v3238, 0
    %v3245 = vsel %vm666, %v3240, 0
    %v3247 = vsel %vm666, %v3242, 0
    %3249 = vmatprep.subr.mxu0 0.0
    %3250 = vmatpush1.xpose.msra.mxu0 0.0
    %3251 = vmatprep.subr.mxu0 0.0
    %3252 = vmatpush1.xpose.msra.mxu0 0.0
    %3253 = vmatprep.subr.mxu0 0.0
    %3254 = vmatpush1.xpose.msra.mxu0 0.0
    %3255 = vmatprep.subr.mxu0 0.0
    %3256 = vmatpush1.xpose.msra.mxu0 0.0
    %3257 = vmatprep.subr.mxu0 0.0
    %3258 = vmatpush1.xpose.msra.mxu0 0.0
    %3259 = vmatprep.subr.mxu0 0.0
    %3260 = vmatpush1.xpose.msra.mxu0 0.0
    %3261 = vmatprep.subr.mxu0 0.0
    %3262 = vmatpush1.xpose.msra.mxu0 0.0
    %3263 = vmatprep.subr.mxu0 0.0
    %3264 = vmatpush1.xpose.msra.mxu0 0.0
    %3265 = vmatprep.subr.mxu0 0.0
    %3266 = vmatpush1.xpose.msra.mxu0 0.0
    %3267 = vmatprep.subr.mxu0 0.0
    %3268 = vmatpush1.xpose.msra.mxu0 0.0
    %3269 = vmatprep.subr.mxu0 0.0
    %3270 = vmatpush1.xpose.msra.mxu0 0.0
    %3271 = vmatprep.subr.mxu0 0.0
    %3272 = vmatpush1.xpose.msra.mxu0 0.0
    %3273 = vmatprep.subr.mxu0 0.0
    %3274 = vmatpush1.xpose.msra.mxu0 0.0
    %3275 = vmatprep.subr.mxu0 0.0
    %3276 = vmatpush1.xpose.msra.mxu0 0.0
    %3277 = vmatprep.subr.mxu0 0.0
    %3278 = vmatpush1.xpose.msra.mxu0 0.0
    %3279 = vmatprep.subr.mxu0 0.0
    %3280 = vmatpush1.xpose.msra.mxu0 %v3247
    %3281 = vmatprep.subr.mxu0 0.0
    %3282 = vmatpush2.xpose.msra.mxu0 0.0
    %3283 = vmatprep.subr.mxu0 0.0
    %3284 = vmatpush2.xpose.msra.mxu0 0.0
    %3285 = vmatprep.subr.mxu0 0.0
    %3286 = vmatpush2.xpose.msra.mxu0 0.0
    %3287 = vmatprep.subr.mxu0 0.0
    %3288 = vmatpush2.xpose.msra.mxu0 0.0
    %3289 = vmatprep.subr.mxu0 0.0
    %3290 = vmatpush2.xpose.msra.mxu0 0.0
    %3291 = vmatprep.subr.mxu0 0.0
    %3292 = vmatpush2.xpose.msra.mxu0 0.0
    %3293 = vmatprep.subr.mxu0 0.0
    %3294 = vmatpush2.xpose.msra.mxu0 0.0
    %3295 = vmatprep.subr.mxu0 0.0
    %3296 = vmatpush2.xpose.msra.mxu0 0.0
    %3297 = vmatprep.subr.mxu0 0.0
    %3298 = vmatpush2.xpose.msra.mxu0 0.0
    %3299 = vmatprep.subr.mxu0 0.0
    %3300 = vmatpush2.xpose.msra.mxu0 0.0
    %3301 = vmatprep.subr.mxu0 0.0
    %3302 = vmatpush2.xpose.msra.mxu0 0.0
    %3303 = vmatprep.subr.mxu0 0.0
    %3304 = vmatpush2.xpose.msra.mxu0 0.0
    %3305 = vmatprep.subr.mxu0 0.0
    %3306 = vmatpush2.xpose.msra.mxu0 0.0
    %3307 = vmatprep.subr.mxu0 0.0
    %3308 = vmatpush2.xpose.msra.mxu0 0.0
    %3309 = vmatprep.subr.mxu0 0.0
    %3310 = vmatpush2.xpose.msra.mxu0 0.0
    %3311 = vmatprep.subr.mxu0 0.0
    %3312 = vmatpush2.xpose.msra.mxu0 0.0
    %3313 = vmatprep.mubr.f32.mxu0 0.0
    %3314 = vmatmul.mubr.f32.gmra.mxu0 %v3243
    %v3315 = vpop.f32.mrf.mxu0
    %v3316 = vadd.f32 0.0, %v3315
    %v3317 = vpop.f32.mrf.mxu0
    %3318 = vmatprep.mubr.f32.mxu0 0.0
    %3319 = vmatmul.mubr.f32.gmra.mxu0 %v3245
    %v3320 = vpop.f32.mrf.mxu0
    %v3321 = vadd.f32 0.0, %v3320
    %v3322 = vpop.f32.mrf.mxu0
    %3323 = vdwg.mxu0
    %v3324 = vmul.f32 %v3316, 0.35355338
    %v3325 = vmul.f32 %v3321, 0.35355338
    %v3326 = vsel %vm666, %v3324, -inf
    %3327 = vmax.xlane.f32.xlu0 %v3326
    %v3328 = vpop.xlane.xlu0 %3327
    %v3329 = vsel %vm666, %v3325, -inf
    %3330 = vmax.xlane.f32.xlu0 %v3329
    %v3331 = vpop.xlane.xlu0 %3330
    %v3332 = vsub.f32 %v3324, %v3328
    %v3333 = vsub.f32 %v3325, %v3331
    %v3334 = vmul.f32 %v3332, 1.442695
    %v3335 = vpow.pop %v3334
    %v3336 = vmul.f32 %v3333, 1.442695
    %v3337 = vpow.pop %v3336
    %v3338 = vsel %vm666, %v3335, 0.0
    %3339 = vadd.xlane.f32.xlu0 %v3338
    %v3340 = vpop.xlane.xlu0 %3339
    %v3341 = vsel %vm666, %v3337, 0.0
    %3342 = vadd.xlane.f32.xlu0 %v3341
    %v3343 = vpop.xlane.xlu0 %3342
    %v3344 = vrcp.pop %v3340
    %v3345 = vmul.f32 %v3335, %v3344
    %v3346 = vrcp.pop %v3343
    %v3347 = vmul.f32 %v3337, %v3346
    %3348 = vrot.lane.b32.xlu0 %v2537, 40
    %v3349 = vpop.permute.xlu0 %3348
    %v3352 = vsel %vm666, %v3345, 0
    %v3355 = vsel %vm666, %v3347, 0
    %3357 = vmatprep.subr.mxu0 0.0
    %3358 = vmatpush1.msra.mxu0 0.0
    %3359 = vmatprep.subr.mxu0 0.0
    %3360 = vmatpush1.msra.mxu0 0.0
    %3361 = vmatprep.subr.mxu0 0.0
    %3362 = vmatpush1.msra.mxu0 0.0
    %3363 = vmatprep.subr.mxu0 0.0
    %3364 = vmatpush1.msra.mxu0 0.0
    %3365 = vmatprep.subr.mxu0 0.0
    %3366 = vmatpush1.msra.mxu0 0.0
    %3367 = vmatprep.subr.mxu0 0.0
    %3368 = vmatpush1.msra.mxu0 0.0
    %3369 = vmatprep.subr.mxu0 0.0
    %3370 = vmatpush1.msra.mxu0 0.0
    %3371 = vmatprep.subr.mxu0 0.0
    %3372 = vmatpush1.msra.mxu0 0.0
    %3373 = vmatprep.subr.mxu0 0.0
    %3374 = vmatpush1.msra.mxu0 0.0
    %3375 = vmatprep.subr.mxu0 0.0
    %3376 = vmatpush1.msra.mxu0 0.0
    %3377 = vmatprep.subr.mxu0 0.0
    %3378 = vmatpush1.msra.mxu0 0.0
    %3379 = vmatprep.subr.mxu0 0.0
    %3380 = vmatpush1.msra.mxu0 0.0
    %3381 = vmatprep.subr.mxu0 0.0
    %3382 = vmatpush1.msra.mxu0 0.0
    %3383 = vmatprep.subr.mxu0 0.0
    %3384 = vmatpush1.msra.mxu0 0.0
    %3385 = vmatprep.subr.mxu0 0.0
    %3386 = vmatpush1.msra.mxu0 0.0
    %3387 = vmatprep.subr.mxu0 0.0
    %3388 = vmatpush1.msra.mxu0 %v3349
    %3389 = vmatprep.subr.mxu0 0.0
    %3390 = vmatpush2.msra.mxu0 0.0
    %3391 = vmatprep.subr.mxu0 0.0
    %3392 = vmatpush2.msra.mxu0 0.0
    %3393 = vmatprep.subr.mxu0 0.0
    %3394 = vmatpush2.msra.mxu0 0.0
    %3395 = vmatprep.subr.mxu0 0.0
    %3396 = vmatpush2.msra.mxu0 0.0
    %3397 = vmatprep.subr.mxu0 0.0
    %3398 = vmatpush2.msra.mxu0 0.0
    %3399 = vmatprep.subr.mxu0 0.0
    %3400 = vmatpush2.msra.mxu0 0.0
    %3401 = vmatprep.subr.mxu0 0.0
    %3402 = vmatpush2.msra.mxu0 0.0
    %3403 = vmatprep.subr.mxu0 0.0
    %3404 = vmatpush2.msra.mxu0 0.0
    %3405 = vmatprep.subr.mxu0 0.0
    %3406 = vmatpush2.msra.mxu0 0.0
    %3407 = vmatprep.subr.mxu0 0.0
    %3408 = vmatpush2.msra.mxu0 0.0
    %3409 = vmatprep.subr.mxu0 0.0
    %3410 = vmatpush2.msra.mxu0 0.0
    %3411 = vmatprep.subr.mxu0 0.0
    %3412 = vmatpush2.msra.mxu0 0.0
    %3413 = vmatprep.subr.mxu0 0.0
    %3414 = vmatpush2.msra.mxu0 0.0
    %3415 = vmatprep.subr.mxu0 0.0
    %3416 = vmatpush2.msra.mxu0 0.0
    %3417 = vmatprep.subr.mxu0 0.0
    %3418 = vmatpush2.msra.mxu0 0.0
    %3419 = vmatprep.subr.mxu0 0.0
    %3420 = vmatpush2.msra.mxu0 0.0
    %3421 = vmatprep.mubr.f32.mxu0 0.0
    %3422 = vmatmul.mubr.f32.gmra.mxu0 %v3352
    %v3423 = vpop.f32.mrf.mxu0
    %v3424 = vadd.f32 0.0, %v3423
    %v3425 = vpop.f32.mrf.mxu0
    %3426 = vmatprep.mubr.f32.mxu0 0.0
    %3427 = vmatmul.mubr.f32.gmra.mxu0 %v3355
    %v3428 = vpop.f32.mrf.mxu0
    %v3429 = vadd.f32 0.0, %v3428
    %v3430 = vpop.f32.mrf.mxu0
    %3431 = vdwg.mxu0
    %3434 = vrot.lane.b32.xlu0 %v3424, 24
    %v3435 = vpop.permute.xlu0 %3434
    %3436 = vrot.lane.b32.xlu0 %v3429, 24
    %v3437 = vpop.permute.xlu0 %3436
    %3440 = vst.msk [vmem:[#allocation2] sm:$0xff] %vm1476, %v3435
    %3441 = vst.msk [vmem:[#allocation2 + $0x8] sm:$0xff] %vm1476, %v3437
    %3442 = vrot.lane.b32.xlu0 %v2616, 96
    %v3443 = vpop.permute.xlu0 %3442
    %3444 = vrot.lane.b32.xlu0 %v2621, 96
    %v3445 = vpop.permute.xlu0 %3444
    %3446 = vrot.lane.b32.xlu0 %v2537, 96
    %v3447 = vpop.permute.xlu0 %3446
    %v3448 = vsel %vm666, %v3443, 0
    %v3450 = vsel %vm666, %v3445, 0
    %v3452 = vsel %vm666, %v3447, 0
    %3454 = vmatprep.subr.mxu0 0.0
    %3455 = vmatpush1.xpose.msra.mxu0 0.0
    %3456 = vmatprep.subr.mxu0 0.0
    %3457 = vmatpush1.xpose.msra.mxu0 0.0
    %3458 = vmatprep.subr.mxu0 0.0
    %3459 = vmatpush1.xpose.msra.mxu0 0.0
    %3460 = vmatprep.subr.mxu0 0.0
    %3461 = vmatpush1.xpose.msra.mxu0 0.0
    %3462 = vmatprep.subr.mxu0 0.0
    %3463 = vmatpush1.xpose.msra.mxu0 0.0
    %3464 = vmatprep.subr.mxu0 0.0
    %3465 = vmatpush1.xpose.msra.mxu0 0.0
    %3466 = vmatprep.subr.mxu0 0.0
    %3467 = vmatpush1.xpose.msra.mxu0 0.0
    %3468 = vmatprep.subr.mxu0 0.0
    %3469 = vmatpush1.xpose.msra.mxu0 0.0
    %3470 = vmatprep.subr.mxu0 0.0
    %3471 = vmatpush1.xpose.msra.mxu0 0.0
    %3472 = vmatprep.subr.mxu0 0.0
    %3473 = vmatpush1.xpose.msra.mxu0 0.0
    %3474 = vmatprep.subr.mxu0 0.0
    %3475 = vmatpush1.xpose.msra.mxu0 0.0
    %3476 = vmatprep.subr.mxu0 0.0
    %3477 = vmatpush1.xpose.msra.mxu0 0.0
    %3478 = vmatprep.subr.mxu0 0.0
    %3479 = vmatpush1.xpose.msra.mxu0 0.0
    %3480 = vmatprep.subr.mxu0 0.0
    %3481 = vmatpush1.xpose.msra.mxu0 0.0
    %3482 = vmatprep.subr.mxu0 0.0
    %3483 = vmatpush1.xpose.msra.mxu0 0.0
    %3484 = vmatprep.subr.mxu0 0.0
    %3485 = vmatpush1.xpose.msra.mxu0 %v3452
    %3486 = vmatprep.subr.mxu0 0.0
    %3487 = vmatpush2.xpose.msra.mxu0 0.0
    %3488 = vmatprep.subr.mxu0 0.0
    %3489 = vmatpush2.xpose.msra.mxu0 0.0
    %3490 = vmatprep.subr.mxu0 0.0
    %3491 = vmatpush2.xpose.msra.mxu0 0.0
    %3492 = vmatprep.subr.mxu0 0.0
    %3493 = vmatpush2.xpose.msra.mxu0 0.0
    %3494 = vmatprep.subr.mxu0 0.0
    %3495 = vmatpush2.xpose.msra.mxu0 0.0
    %3496 = vmatprep.subr.mxu0 0.0
    %3497 = vmatpush2.xpose.msra.mxu0 0.0
    %3498 = vmatprep.subr.mxu0 0.0
    %3499 = vmatpush2.xpose.msra.mxu0 0.0
    %3500 = vmatprep.subr.mxu0 0.0
    %3501 = vmatpush2.xpose.msra.mxu0 0.0
    %3502 = vmatprep.subr.mxu0 0.0
    %3503 = vmatpush2.xpose.msra.mxu0 0.0
    %3504 = vmatprep.subr.mxu0 0.0
    %3505 = vmatpush2.xpose.msra.mxu0 0.0
    %3506 = vmatprep.subr.mxu0 0.0
    %3507 = vmatpush2.xpose.msra.mxu0 0.0
    %3508 = vmatprep.subr.mxu0 0.0
    %3509 = vmatpush2.xpose.msra.mxu0 0.0
    %3510 = vmatprep.subr.mxu0 0.0
    %3511 = vmatpush2.xpose.msra.mxu0 0.0
    %3512 = vmatprep.subr.mxu0 0.0
    %3513 = vmatpush2.xpose.msra.mxu0 0.0
    %3514 = vmatprep.subr.mxu0 0.0
    %3515 = vmatpush2.xpose.msra.mxu0 0.0
    %3516 = vmatprep.subr.mxu0 0.0
    %3517 = vmatpush2.xpose.msra.mxu0 0.0
    %3518 = vmatprep.mubr.f32.mxu0 0.0
    %3519 = vmatmul.mubr.f32.gmra.mxu0 %v3448
    %v3520 = vpop.f32.mrf.mxu0
    %v3521 = vadd.f32 0.0, %v3520
    %v3522 = vpop.f32.mrf.mxu0
    %3523 = vmatprep.mubr.f32.mxu0 0.0
    %3524 = vmatmul.mubr.f32.gmra.mxu0 %v3450
    %v3525 = vpop.f32.mrf.mxu0
    %v3526 = vadd.f32 0.0, %v3525
    %v3527 = vpop.f32.mrf.mxu0
    %3528 = vdwg.mxu0
    %v3529 = vmul.f32 %v3521, 0.35355338
    %v3530 = vmul.f32 %v3526, 0.35355338
    %v3531 = vsel %vm666, %v3529, -inf
    %3532 = vmax.xlane.f32.xlu0 %v3531
    %v3533 = vpop.xlane.xlu0 %3532
    %v3534 = vsel %vm666, %v3530, -inf
    %3535 = vmax.xlane.f32.xlu0 %v3534
    %v3536 = vpop.xlane.xlu0 %3535
    %v3537 = vsub.f32 %v3529, %v3533
    %v3538 = vsub.f32 %v3530, %v3536
    %v3539 = vmul.f32 %v3537, 1.442695
    %v3540 = vpow.pop %v3539
    %v3541 = vmul.f32 %v3538, 1.442695
    %v3542 = vpow.pop %v3541
    %v3543 = vsel %vm666, %v3540, 0.0
    %3544 = vadd.xlane.f32.xlu0 %v3543
    %v3545 = vpop.xlane.xlu0 %3544
    %v3546 = vsel %vm666, %v3542, 0.0
    %3547 = vadd.xlane.f32.xlu0 %v3546
    %v3548 = vpop.xlane.xlu0 %3547
    %v3549 = vrcp.pop %v3545
    %v3550 = vmul.f32 %v3540, %v3549
    %v3551 = vrcp.pop %v3548
    %v3552 = vmul.f32 %v3542, %v3551
    %3553 = vrot.lane.b32.xlu0 %v2537, 32
    %v3554 = vpop.permute.xlu0 %3553
    %v3557 = vsel %vm666, %v3550, 0
    %v3560 = vsel %vm666, %v3552, 0
    %3562 = vmatprep.subr.mxu0 0.0
    %3563 = vmatpush1.msra.mxu0 0.0
    %3564 = vmatprep.subr.mxu0 0.0
    %3565 = vmatpush1.msra.mxu0 0.0
    %3566 = vmatprep.subr.mxu0 0.0
    %3567 = vmatpush1.msra.mxu0 0.0
    %3568 = vmatprep.subr.mxu0 0.0
    %3569 = vmatpush1.msra.mxu0 0.0
    %3570 = vmatprep.subr.mxu0 0.0
    %3571 = vmatpush1.msra.mxu0 0.0
    %3572 = vmatprep.subr.mxu0 0.0
    %3573 = vmatpush1.msra.mxu0 0.0
    %3574 = vmatprep.subr.mxu0 0.0
    %3575 = vmatpush1.msra.mxu0 0.0
    %3576 = vmatprep.subr.mxu0 0.0
    %3577 = vmatpush1.msra.mxu0 0.0
    %3578 = vmatprep.subr.mxu0 0.0
    %3579 = vmatpush1.msra.mxu0 0.0
    %3580 = vmatprep.subr.mxu0 0.0
    %3581 = vmatpush1.msra.mxu0 0.0
    %3582 = vmatprep.subr.mxu0 0.0
    %3583 = vmatpush1.msra.mxu0 0.0
    %3584 = vmatprep.subr.mxu0 0.0
    %3585 = vmatpush1.msra.mxu0 0.0
    %3586 = vmatprep.subr.mxu0 0.0
    %3587 = vmatpush1.msra.mxu0 0.0
    %3588 = vmatprep.subr.mxu0 0.0
    %3589 = vmatpush1.msra.mxu0 0.0
    %3590 = vmatprep.subr.mxu0 0.0
    %3591 = vmatpush1.msra.mxu0 0.0
    %3592 = vmatprep.subr.mxu0 0.0
    %3593 = vmatpush1.msra.mxu0 %v3554
    %3594 = vmatprep.subr.mxu0 0.0
    %3595 = vmatpush2.msra.mxu0 0.0
    %3596 = vmatprep.subr.mxu0 0.0
    %3597 = vmatpush2.msra.mxu0 0.0
    %3598 = vmatprep.subr.mxu0 0.0
    %3599 = vmatpush2.msra.mxu0 0.0
    %3600 = vmatprep.subr.mxu0 0.0
    %3601 = vmatpush2.msra.mxu0 0.0
    %3602 = vmatprep.subr.mxu0 0.0
    %3603 = vmatpush2.msra.mxu0 0.0
    %3604 = vmatprep.subr.mxu0 0.0
    %3605 = vmatpush2.msra.mxu0 0.0
    %3606 = vmatprep.subr.mxu0 0.0
    %3607 = vmatpush2.msra.mxu0 0.0
    %3608 = vmatprep.subr.mxu0 0.0
    %3609 = vmatpush2.msra.mxu0 0.0
    %3610 = vmatprep.subr.mxu0 0.0
    %3611 = vmatpush2.msra.mxu0 0.0
    %3612 = vmatprep.subr.mxu0 0.0
    %3613 = vmatpush2.msra.mxu0 0.0
    %3614 = vmatprep.subr.mxu0 0.0
    %3615 = vmatpush2.msra.mxu0 0.0
    %3616 = vmatprep.subr.mxu0 0.0
    %3617 = vmatpush2.msra.mxu0 0.0
    %3618 = vmatprep.subr.mxu0 0.0
    %3619 = vmatpush2.msra.mxu0 0.0
    %3620 = vmatprep.subr.mxu0 0.0
    %3621 = vmatpush2.msra.mxu0 0.0
    %3622 = vmatprep.subr.mxu0 0.0
    %3623 = vmatpush2.msra.mxu0 0.0
    %3624 = vmatprep.subr.mxu0 0.0
    %3625 = vmatpush2.msra.mxu0 0.0
    %3626 = vmatprep.mubr.f32.mxu0 0.0
    %3627 = vmatmul.mubr.f32.gmra.mxu0 %v3557
    %v3628 = vpop.f32.mrf.mxu0
    %v3629 = vadd.f32 0.0, %v3628
    %v3630 = vpop.f32.mrf.mxu0
    %3631 = vmatprep.mubr.f32.mxu0 0.0
    %3632 = vmatmul.mubr.f32.gmra.mxu0 %v3560
    %v3633 = vpop.f32.mrf.mxu0
    %v3634 = vadd.f32 0.0, %v3633
    %v3635 = vpop.f32.mrf.mxu0
    %3636 = vdwg.mxu0
    %3639 = vrot.lane.b32.xlu0 %v3629, 32
    %v3640 = vpop.permute.xlu0 %3639
    %3641 = vrot.lane.b32.xlu0 %v3634, 32
    %v3642 = vpop.permute.xlu0 %3641
    %3645 = vst.msk [vmem:[#allocation2] sm:$0xff] %vm1682, %v3640
    %3646 = vst.msk [vmem:[#allocation2 + $0x8] sm:$0xff] %vm1682, %v3642
    %3647 = vrot.lane.b32.xlu0 %v2616, 88
    %v3648 = vpop.permute.xlu0 %3647
    %3649 = vrot.lane.b32.xlu0 %v2621, 88
    %v3650 = vpop.permute.xlu0 %3649
    %3651 = vrot.lane.b32.xlu0 %v2537, 88
    %v3652 = vpop.permute.xlu0 %3651
    %v3653 = vsel %vm666, %v3648, 0
    %v3655 = vsel %vm666, %v3650, 0
    %v3657 = vsel %vm666, %v3652, 0
    %3659 = vmatprep.subr.mxu0 0.0
    %3660 = vmatpush1.xpose.msra.mxu0 0.0
    %3661 = vmatprep.subr.mxu0 0.0
    %3662 = vmatpush1.xpose.msra.mxu0 0.0
    %3663 = vmatprep.subr.mxu0 0.0
    %3664 = vmatpush1.xpose.msra.mxu0 0.0
    %3665 = vmatprep.subr.mxu0 0.0
    %3666 = vmatpush1.xpose.msra.mxu0 0.0
    %3667 = vmatprep.subr.mxu0 0.0
    %3668 = vmatpush1.xpose.msra.mxu0 0.0
    %3669 = vmatprep.subr.mxu0 0.0
    %3670 = vmatpush1.xpose.msra.mxu0 0.0
    %3671 = vmatprep.subr.mxu0 0.0
    %3672 = vmatpush1.xpose.msra.mxu0 0.0
    %3673 = vmatprep.subr.mxu0 0.0
    %3674 = vmatpush1.xpose.msra.mxu0 0.0
    %3675 = vmatprep.subr.mxu0 0.0
    %3676 = vmatpush1.xpose.msra.mxu0 0.0
    %3677 = vmatprep.subr.mxu0 0.0
    %3678 = vmatpush1.xpose.msra.mxu0 0.0
    %3679 = vmatprep.subr.mxu0 0.0
    %3680 = vmatpush1.xpose.msra.mxu0 0.0
    %3681 = vmatprep.subr.mxu0 0.0
    %3682 = vmatpush1.xpose.msra.mxu0 0.0
    %3683 = vmatprep.subr.mxu0 0.0
    %3684 = vmatpush1.xpose.msra.mxu0 0.0
    %3685 = vmatprep.subr.mxu0 0.0
    %3686 = vmatpush1.xpose.msra.mxu0 0.0
    %3687 = vmatprep.subr.mxu0 0.0
    %3688 = vmatpush1.xpose.msra.mxu0 0.0
    %3689 = vmatprep.subr.mxu0 0.0
    %3690 = vmatpush1.xpose.msra.mxu0 %v3657
    %3691 = vmatprep.subr.mxu0 0.0
    %3692 = vmatpush2.xpose.msra.mxu0 0.0
    %3693 = vmatprep.subr.mxu0 0.0
    %3694 = vmatpush2.xpose.msra.mxu0 0.0
    %3695 = vmatprep.subr.mxu0 0.0
    %3696 = vmatpush2.xpose.msra.mxu0 0.0
    %3697 = vmatprep.subr.mxu0 0.0
    %3698 = vmatpush2.xpose.msra.mxu0 0.0
    %3699 = vmatprep.subr.mxu0 0.0
    %3700 = vmatpush2.xpose.msra.mxu0 0.0
    %3701 = vmatprep.subr.mxu0 0.0
    %3702 = vmatpush2.xpose.msra.mxu0 0.0
    %3703 = vmatprep.subr.mxu0 0.0
    %3704 = vmatpush2.xpose.msra.mxu0 0.0
    %3705 = vmatprep.subr.mxu0 0.0
    %3706 = vmatpush2.xpose.msra.mxu0 0.0
    %3707 = vmatprep.subr.mxu0 0.0
    %3708 = vmatpush2.xpose.msra.mxu0 0.0
    %3709 = vmatprep.subr.mxu0 0.0
    %3710 = vmatpush2.xpose.msra.mxu0 0.0
    %3711 = vmatprep.subr.mxu0 0.0
    %3712 = vmatpush2.xpose.msra.mxu0 0.0
    %3713 = vmatprep.subr.mxu0 0.0
    %3714 = vmatpush2.xpose.msra.mxu0 0.0
    %3715 = vmatprep.subr.mxu0 0.0
    %3716 = vmatpush2.xpose.msra.mxu0 0.0
    %3717 = vmatprep.subr.mxu0 0.0
    %3718 = vmatpush2.xpose.msra.mxu0 0.0
    %3719 = vmatprep.subr.mxu0 0.0
    %3720 = vmatpush2.xpose.msra.mxu0 0.0
    %3721 = vmatprep.subr.mxu0 0.0
    %3722 = vmatpush2.xpose.msra.mxu0 0.0
    %3723 = vmatprep.mubr.f32.mxu0 0.0
    %3724 = vmatmul.mubr.f32.gmra.mxu0 %v3653
    %v3725 = vpop.f32.mrf.mxu0
    %v3726 = vadd.f32 0.0, %v3725
    %v3727 = vpop.f32.mrf.mxu0
    %3728 = vmatprep.mubr.f32.mxu0 0.0
    %3729 = vmatmul.mubr.f32.gmra.mxu0 %v3655
    %v3730 = vpop.f32.mrf.mxu0
    %v3731 = vadd.f32 0.0, %v3730
    %v3732 = vpop.f32.mrf.mxu0
    %3733 = vdwg.mxu0
    %v3734 = vmul.f32 %v3726, 0.35355338
    %v3735 = vmul.f32 %v3731, 0.35355338
    %v3736 = vsel %vm666, %v3734, -inf
    %3737 = vmax.xlane.f32.xlu0 %v3736
    %v3738 = vpop.xlane.xlu0 %3737
    %v3739 = vsel %vm666, %v3735, -inf
    %3740 = vmax.xlane.f32.xlu0 %v3739
    %v3741 = vpop.xlane.xlu0 %3740
    %v3742 = vsub.f32 %v3734, %v3738
    %v3743 = vsub.f32 %v3735, %v3741
    %v3744 = vmul.f32 %v3742, 1.442695
    %v3745 = vpow.pop %v3744
    %v3746 = vmul.f32 %v3743, 1.442695
    %v3747 = vpow.pop %v3746
    %v3748 = vsel %vm666, %v3745, 0.0
    %3749 = vadd.xlane.f32.xlu0 %v3748
    %v3750 = vpop.xlane.xlu0 %3749
    %v3751 = vsel %vm666, %v3747, 0.0
    %3752 = vadd.xlane.f32.xlu0 %v3751
    %v3753 = vpop.xlane.xlu0 %3752
    %v3754 = vrcp.pop %v3750
    %v3755 = vmul.f32 %v3745, %v3754
    %v3756 = vrcp.pop %v3753
    %v3757 = vmul.f32 %v3747, %v3756
    %3758 = vrot.lane.b32.xlu0 %v2537, 24
    %v3759 = vpop.permute.xlu0 %3758
    %v3762 = vsel %vm666, %v3755, 0
    %v3765 = vsel %vm666, %v3757, 0
    %3767 = vmatprep.subr.mxu0 0.0
    %3768 = vmatpush1.msra.mxu0 0.0
    %3769 = vmatprep.subr.mxu0 0.0
    %3770 = vmatpush1.msra.mxu0 0.0
    %3771 = vmatprep.subr.mxu0 0.0
    %3772 = vmatpush1.msra.mxu0 0.0
    %3773 = vmatprep.subr.mxu0 0.0
    %3774 = vmatpush1.msra.mxu0 0.0
    %3775 = vmatprep.subr.mxu0 0.0
    %3776 = vmatpush1.msra.mxu0 0.0
    %3777 = vmatprep.subr.mxu0 0.0
    %3778 = vmatpush1.msra.mxu0 0.0
    %3779 = vmatprep.subr.mxu0 0.0
    %3780 = vmatpush1.msra.mxu0 0.0
    %3781 = vmatprep.subr.mxu0 0.0
    %3782 = vmatpush1.msra.mxu0 0.0
    %3783 = vmatprep.subr.mxu0 0.0
    %3784 = vmatpush1.msra.mxu0 0.0
    %3785 = vmatprep.subr.mxu0 0.0
    %3786 = vmatpush1.msra.mxu0 0.0
    %3787 = vmatprep.subr.mxu0 0.0
    %3788 = vmatpush1.msra.mxu0 0.0
    %3789 = vmatprep.subr.mxu0 0.0
    %3790 = vmatpush1.msra.mxu0 0.0
    %3791 = vmatprep.subr.mxu0 0.0
    %3792 = vmatpush1.msra.mxu0 0.0
    %3793 = vmatprep.subr.mxu0 0.0
    %3794 = vmatpush1.msra.mxu0 0.0
    %3795 = vmatprep.subr.mxu0 0.0
    %3796 = vmatpush1.msra.mxu0 0.0
    %3797 = vmatprep.subr.mxu0 0.0
    %3798 = vmatpush1.msra.mxu0 %v3759
    %3799 = vmatprep.subr.mxu0 0.0
    %3800 = vmatpush2.msra.mxu0 0.0
    %3801 = vmatprep.subr.mxu0 0.0
    %3802 = vmatpush2.msra.mxu0 0.0
    %3803 = vmatprep.subr.mxu0 0.0
    %3804 = vmatpush2.msra.mxu0 0.0
    %3805 = vmatprep.subr.mxu0 0.0
    %3806 = vmatpush2.msra.mxu0 0.0
    %3807 = vmatprep.subr.mxu0 0.0
    %3808 = vmatpush2.msra.mxu0 0.0
    %3809 = vmatprep.subr.mxu0 0.0
    %3810 = vmatpush2.msra.mxu0 0.0
    %3811 = vmatprep.subr.mxu0 0.0
    %3812 = vmatpush2.msra.mxu0 0.0
    %3813 = vmatprep.subr.mxu0 0.0
    %3814 = vmatpush2.msra.mxu0 0.0
    %3815 = vmatprep.subr.mxu0 0.0
    %3816 = vmatpush2.msra.mxu0 0.0
    %3817 = vmatprep.subr.mxu0 0.0
    %3818 = vmatpush2.msra.mxu0 0.0
    %3819 = vmatprep.subr.mxu0 0.0
    %3820 = vmatpush2.msra.mxu0 0.0
    %3821 = vmatprep.subr.mxu0 0.0
    %3822 = vmatpush2.msra.mxu0 0.0
    %3823 = vmatprep.subr.mxu0 0.0
    %3824 = vmatpush2.msra.mxu0 0.0
    %3825 = vmatprep.subr.mxu0 0.0
    %3826 = vmatpush2.msra.mxu0 0.0
    %3827 = vmatprep.subr.mxu0 0.0
    %3828 = vmatpush2.msra.mxu0 0.0
    %3829 = vmatprep.subr.mxu0 0.0
    %3830 = vmatpush2.msra.mxu0 0.0
    %3831 = vmatprep.mubr.f32.mxu0 0.0
    %3832 = vmatmul.mubr.f32.gmra.mxu0 %v3762
    %v3833 = vpop.f32.mrf.mxu0
    %v3834 = vadd.f32 0.0, %v3833
    %v3835 = vpop.f32.mrf.mxu0
    %3836 = vmatprep.mubr.f32.mxu0 0.0
    %3837 = vmatmul.mubr.f32.gmra.mxu0 %v3765
    %v3838 = vpop.f32.mrf.mxu0
    %v3839 = vadd.f32 0.0, %v3838
    %v3840 = vpop.f32.mrf.mxu0
    %3841 = vdwg.mxu0
    %3844 = vrot.lane.b32.xlu0 %v3834, 40
    %v3845 = vpop.permute.xlu0 %3844
    %3846 = vrot.lane.b32.xlu0 %v3839, 40
    %v3847 = vpop.permute.xlu0 %3846
    %3850 = vst.msk [vmem:[#allocation2] sm:$0xff] %vm1888, %v3845
    %3851 = vst.msk [vmem:[#allocation2 + $0x8] sm:$0xff] %vm1888, %v3847
    %3852 = vrot.lane.b32.xlu0 %v2616, 80
    %v3853 = vpop.permute.xlu0 %3852
    %3854 = vrot.lane.b32.xlu0 %v2621, 80
    %v3855 = vpop.permute.xlu0 %3854
    %3856 = vrot.lane.b32.xlu0 %v2537, 80
    %v3857 = vpop.permute.xlu0 %3856
    %v3858 = vsel %vm666, %v3853, 0
    %v3860 = vsel %vm666, %v3855, 0
    %v3862 = vsel %vm666, %v3857, 0
    %3864 = vmatprep.subr.mxu0 0.0
    %3865 = vmatpush1.xpose.msra.mxu0 0.0
    %3866 = vmatprep.subr.mxu0 0.0
    %3867 = vmatpush1.xpose.msra.mxu0 0.0
    %3868 = vmatprep.subr.mxu0 0.0
    %3869 = vmatpush1.xpose.msra.mxu0 0.0
    %3870 = vmatprep.subr.mxu0 0.0
    %3871 = vmatpush1.xpose.msra.mxu0 0.0
    %3872 = vmatprep.subr.mxu0 0.0
    %3873 = vmatpush1.xpose.msra.mxu0 0.0
    %3874 = vmatprep.subr.mxu0 0.0
    %3875 = vmatpush1.xpose.msra.mxu0 0.0
    %3876 = vmatprep.subr.mxu0 0.0
    %3877 = vmatpush1.xpose.msra.mxu0 0.0
    %3878 = vmatprep.subr.mxu0 0.0
    %3879 = vmatpush1.xpose.msra.mxu0 0.0
    %3880 = vmatprep.subr.mxu0 0.0
    %3881 = vmatpush1.xpose.msra.mxu0 0.0
    %3882 = vmatprep.subr.mxu0 0.0
    %3883 = vmatpush1.xpose.msra.mxu0 0.0
    %3884 = vmatprep.subr.mxu0 0.0
    %3885 = vmatpush1.xpose.msra.mxu0 0.0
    %3886 = vmatprep.subr.mxu0 0.0
    %3887 = vmatpush1.xpose.msra.mxu0 0.0
    %3888 = vmatprep.subr.mxu0 0.0
    %3889 = vmatpush1.xpose.msra.mxu0 0.0
    %3890 = vmatprep.subr.mxu0 0.0
    %3891 = vmatpush1.xpose.msra.mxu0 0.0
    %3892 = vmatprep.subr.mxu0 0.0
    %3893 = vmatpush1.xpose.msra.mxu0 0.0
    %3894 = vmatprep.subr.mxu0 0.0
    %3895 = vmatpush1.xpose.msra.mxu0 %v3862
    %3896 = vmatprep.subr.mxu0 0.0
    %3897 = vmatpush2.xpose.msra.mxu0 0.0
    %3898 = vmatprep.subr.mxu0 0.0
    %3899 = vmatpush2.xpose.msra.mxu0 0.0
    %3900 = vmatprep.subr.mxu0 0.0
    %3901 = vmatpush2.xpose.msra.mxu0 0.0
    %3902 = vmatprep.subr.mxu0 0.0
    %3903 = vmatpush2.xpose.msra.mxu0 0.0
    %3904 = vmatprep.subr.mxu0 0.0
    %3905 = vmatpush2.xpose.msra.mxu0 0.0
    %3906 = vmatprep.subr.mxu0 0.0
    %3907 = vmatpush2.xpose.msra.mxu0 0.0
    %3908 = vmatprep.subr.mxu0 0.0
    %3909 = vmatpush2.xpose.msra.mxu0 0.0
    %3910 = vmatprep.subr.mxu0 0.0
    %3911 = vmatpush2.xpose.msra.mxu0 0.0
    %3912 = vmatprep.subr.mxu0 0.0
    %3913 = vmatpush2.xpose.msra.mxu0 0.0
    %3914 = vmatprep.subr.mxu0 0.0
    %3915 = vmatpush2.xpose.msra.mxu0 0.0
    %3916 = vmatprep.subr.mxu0 0.0
    %3917 = vmatpush2.xpose.msra.mxu0 0.0
    %3918 = vmatprep.subr.mxu0 0.0
    %3919 = vmatpush2.xpose.msra.mxu0 0.0
    %3920 = vmatprep.subr.mxu0 0.0
    %3921 = vmatpush2.xpose.msra.mxu0 0.0
    %3922 = vmatprep.subr.mxu0 0.0
    %3923 = vmatpush2.xpose.msra.mxu0 0.0
    %3924 = vmatprep.subr.mxu0 0.0
    %3925 = vmatpush2.xpose.msra.mxu0 0.0
    %3926 = vmatprep.subr.mxu0 0.0
    %3927 = vmatpush2.xpose.msra.mxu0 0.0
    %3928 = vmatprep.mubr.f32.mxu0 0.0
    %3929 = vmatmul.mubr.f32.gmra.mxu0 %v3858
    %v3930 = vpop.f32.mrf.mxu0
    %v3931 = vadd.f32 0.0, %v3930
    %v3932 = vpop.f32.mrf.mxu0
    %3933 = vmatprep.mubr.f32.mxu0 0.0
    %3934 = vmatmul.mubr.f32.gmra.mxu0 %v3860
    %v3935 = vpop.f32.mrf.mxu0
    %v3936 = vadd.f32 0.0, %v3935
    %v3937 = vpop.f32.mrf.mxu0
    %3938 = vdwg.mxu0
    %v3939 = vmul.f32 %v3931, 0.35355338
    %v3940 = vmul.f32 %v3936, 0.35355338
    %v3941 = vsel %vm666, %v3939, -inf
    %3942 = vmax.xlane.f32.xlu0 %v3941
    %v3943 = vpop.xlane.xlu0 %3942
    %v3944 = vsel %vm666, %v3940, -inf
    %3945 = vmax.xlane.f32.xlu0 %v3944
    %v3946 = vpop.xlane.xlu0 %3945
    %v3947 = vsub.f32 %v3939, %v3943
    %v3948 = vsub.f32 %v3940, %v3946
    %v3949 = vmul.f32 %v3947, 1.442695
    %v3950 = vpow.pop %v3949
    %v3951 = vmul.f32 %v3948, 1.442695
    %v3952 = vpow.pop %v3951
    %v3953 = vsel %vm666, %v3950, 0.0
    %3954 = vadd.xlane.f32.xlu0 %v3953
    %v3955 = vpop.xlane.xlu0 %3954
    %v3956 = vsel %vm666, %v3952, 0.0
    %3957 = vadd.xlane.f32.xlu0 %v3956
    %v3958 = vpop.xlane.xlu0 %3957
    %v3959 = vrcp.pop %v3955
    %v3960 = vmul.f32 %v3950, %v3959
    %v3961 = vrcp.pop %v3958
    %v3962 = vmul.f32 %v3952, %v3961
    %3963 = vrot.lane.b32.xlu0 %v2537, 16
    %v3964 = vpop.permute.xlu0 %3963
    %v3967 = vsel %vm666, %v3960, 0
    %v3970 = vsel %vm666, %v3962, 0
    %3972 = vmatprep.subr.mxu0 0.0
    %3973 = vmatpush1.msra.mxu0 0.0
    %3974 = vmatprep.subr.mxu0 0.0
    %3975 = vmatpush1.msra.mxu0 0.0
    %3976 = vmatprep.subr.mxu0 0.0
    %3977 = vmatpush1.msra.mxu0 0.0
    %3978 = vmatprep.subr.mxu0 0.0
    %3979 = vmatpush1.msra.mxu0 0.0
    %3980 = vmatprep.subr.mxu0 0.0
    %3981 = vmatpush1.msra.mxu0 0.0
    %3982 = vmatprep.subr.mxu0 0.0
    %3983 = vmatpush1.msra.mxu0 0.0
    %3984 = vmatprep.subr.mxu0 0.0
    %3985 = vmatpush1.msra.mxu0 0.0
    %3986 = vmatprep.subr.mxu0 0.0
    %3987 = vmatpush1.msra.mxu0 0.0
    %3988 = vmatprep.subr.mxu0 0.0
    %3989 = vmatpush1.msra.mxu0 0.0
    %3990 = vmatprep.subr.mxu0 0.0
    %3991 = vmatpush1.msra.mxu0 0.0
    %3992 = vmatprep.subr.mxu0 0.0
    %3993 = vmatpush1.msra.mxu0 0.0
    %3994 = vmatprep.subr.mxu0 0.0
    %3995 = vmatpush1.msra.mxu0 0.0
    %3996 = vmatprep.subr.mxu0 0.0
    %3997 = vmatpush1.msra.mxu0 0.0
    %3998 = vmatprep.subr.mxu0 0.0
    %3999 = vmatpush1.msra.mxu0 0.0
    %4000 = vmatprep.subr.mxu0 0.0
    %4001 = vmatpush1.msra.mxu0 0.0
    %4002 = vmatprep.subr.mxu0 0.0
    %4003 = vmatpush1.msra.mxu0 %v3964
    %4004 = vmatprep.subr.mxu0 0.0
    %4005 = vmatpush2.msra.mxu0 0.0
    %4006 = vmatprep.subr.mxu0 0.0
    %4007 = vmatpush2.msra.mxu0 0.0
    %4008 = vmatprep.subr.mxu0 0.0
    %4009 = vmatpush2.msra.mxu0 0.0
    %4010 = vmatprep.subr.mxu0 0.0
    %4011 = vmatpush2.msra.mxu0 0.0
    %4012 = vmatprep.subr.mxu0 0.0
    %4013 = vmatpush2.msra.mxu0 0.0
    %4014 = vmatprep.subr.mxu0 0.0
    %4015 = vmatpush2.msra.mxu0 0.0
    %4016 = vmatprep.subr.mxu0 0.0
    %4017 = vmatpush2.msra.mxu0 0.0
    %4018 = vmatprep.subr.mxu0 0.0
    %4019 = vmatpush2.msra.mxu0 0.0
    %4020 = vmatprep.subr.mxu0 0.0
    %4021 = vmatpush2.msra.mxu0 0.0
    %4022 = vmatprep.subr.mxu0 0.0
    %4023 = vmatpush2.msra.mxu0 0.0
    %4024 = vmatprep.subr.mxu0 0.0
    %4025 = vmatpush2.msra.mxu0 0.0
    %4026 = vmatprep.subr.mxu0 0.0
    %4027 = vmatpush2.msra.mxu0 0.0
    %4028 = vmatprep.subr.mxu0 0.0
    %4029 = vmatpush2.msra.mxu0 0.0
    %4030 = vmatprep.subr.mxu0 0.0
    %4031 = vmatpush2.msra.mxu0 0.0
    %4032 = vmatprep.subr.mxu0 0.0
    %4033 = vmatpush2.msra.mxu0 0.0
    %4034 = vmatprep.subr.mxu0 0.0
    %4035 = vmatpush2.msra.mxu0 0.0
    %4036 = vmatprep.mubr.f32.mxu0 0.0
    %4037 = vmatmul.mubr.f32.gmra.mxu0 %v3967
    %v4038 = vpop.f32.mrf.mxu0
    %v4039 = vadd.f32 0.0, %v4038
    %v4040 = vpop.f32.mrf.mxu0
    %4041 = vmatprep.mubr.f32.mxu0 0.0
    %4042 = vmatmul.mubr.f32.gmra.mxu0 %v3970
    %v4043 = vpop.f32.mrf.mxu0
    %v4044 = vadd.f32 0.0, %v4043
    %v4045 = vpop.f32.mrf.mxu0
    %4046 = vdwg.mxu0
    %4049 = vrot.lane.b32.xlu0 %v4039, 48
    %v4050 = vpop.permute.xlu0 %4049
    %4051 = vrot.lane.b32.xlu0 %v4044, 48
    %v4052 = vpop.permute.xlu0 %4051
    %4055 = vst.msk [vmem:[#allocation2] sm:$0xff] %vm2094, %v4050
    %4056 = vst.msk [vmem:[#allocation2 + $0x8] sm:$0xff] %vm2094, %v4052
    %4057 = vrot.lane.b32.xlu0 %v2616, 72
    %v4058 = vpop.permute.xlu0 %4057
    %4059 = vrot.lane.b32.xlu0 %v2621, 72
    %v4060 = vpop.permute.xlu0 %4059
    %4061 = vrot.lane.b32.xlu0 %v2537, 72
    %v4062 = vpop.permute.xlu0 %4061
    %v4063 = vsel %vm666, %v4058, 0
    %v4065 = vsel %vm666, %v4060, 0
    %v4067 = vsel %vm666, %v4062, 0
    %4069 = vmatprep.subr.mxu0 0.0
    %4070 = vmatpush1.xpose.msra.mxu0 0.0
    %4071 = vmatprep.subr.mxu0 0.0
    %4072 = vmatpush1.xpose.msra.mxu0 0.0
    %4073 = vmatprep.subr.mxu0 0.0
    %4074 = vmatpush1.xpose.msra.mxu0 0.0
    %4075 = vmatprep.subr.mxu0 0.0
    %4076 = vmatpush1.xpose.msra.mxu0 0.0
    %4077 = vmatprep.subr.mxu0 0.0
    %4078 = vmatpush1.xpose.msra.mxu0 0.0
    %4079 = vmatprep.subr.mxu0 0.0
    %4080 = vmatpush1.xpose.msra.mxu0 0.0
    %4081 = vmatprep.subr.mxu0 0.0
    %4082 = vmatpush1.xpose.msra.mxu0 0.0
    %4083 = vmatprep.subr.mxu0 0.0
    %4084 = vmatpush1.xpose.msra.mxu0 0.0
    %4085 = vmatprep.subr.mxu0 0.0
    %4086 = vmatpush1.xpose.msra.mxu0 0.0
    %4087 = vmatprep.subr.mxu0 0.0
    %4088 = vmatpush1.xpose.msra.mxu0 0.0
    %4089 = vmatprep.subr.mxu0 0.0
    %4090 = vmatpush1.xpose.msra.mxu0 0.0
    %4091 = vmatprep.subr.mxu0 0.0
    %4092 = vmatpush1.xpose.msra.mxu0 0.0
    %4093 = vmatprep.subr.mxu0 0.0
    %4094 = vmatpush1.xpose.msra.mxu0 0.0
    %4095 = vmatprep.subr.mxu0 0.0
    %4096 = vmatpush1.xpose.msra.mxu0 0.0
    %4097 = vmatprep.subr.mxu0 0.0
    %4098 = vmatpush1.xpose.msra.mxu0 0.0
    %4099 = vmatprep.subr.mxu0 0.0
    %4100 = vmatpush1.xpose.msra.mxu0 %v4067
    %4101 = vmatprep.subr.mxu0 0.0
    %4102 = vmatpush2.xpose.msra.mxu0 0.0
    %4103 = vmatprep.subr.mxu0 0.0
    %4104 = vmatpush2.xpose.msra.mxu0 0.0
    %4105 = vmatprep.subr.mxu0 0.0
    %4106 = vmatpush2.xpose.msra.mxu0 0.0
    %4107 = vmatprep.subr.mxu0 0.0
    %4108 = vmatpush2.xpose.msra.mxu0 0.0
    %4109 = vmatprep.subr.mxu0 0.0
    %4110 = vmatpush2.xpose.msra.mxu0 0.0
    %4111 = vmatprep.subr.mxu0 0.0
    %4112 = vmatpush2.xpose.msra.mxu0 0.0
    %4113 = vmatprep.subr.mxu0 0.0
    %4114 = vmatpush2.xpose.msra.mxu0 0.0
    %4115 = vmatprep.subr.mxu0 0.0
    %4116 = vmatpush2.xpose.msra.mxu0 0.0
    %4117 = vmatprep.subr.mxu0 0.0
    %4118 = vmatpush2.xpose.msra.mxu0 0.0
    %4119 = vmatprep.subr.mxu0 0.0
    %4120 = vmatpush2.xpose.msra.mxu0 0.0
    %4121 = vmatprep.subr.mxu0 0.0
    %4122 = vmatpush2.xpose.msra.mxu0 0.0
    %4123 = vmatprep.subr.mxu0 0.0
    %4124 = vmatpush2.xpose.msra.mxu0 0.0
    %4125 = vmatprep.subr.mxu0 0.0
    %4126 = vmatpush2.xpose.msra.mxu0 0.0
    %4127 = vmatprep.subr.mxu0 0.0
    %4128 = vmatpush2.xpose.msra.mxu0 0.0
    %4129 = vmatprep.subr.mxu0 0.0
    %4130 = vmatpush2.xpose.msra.mxu0 0.0
    %4131 = vmatprep.subr.mxu0 0.0
    %4132 = vmatpush2.xpose.msra.mxu0 0.0
    %4133 = vmatprep.mubr.f32.mxu0 0.0
    %4134 = vmatmul.mubr.f32.gmra.mxu0 %v4063
    %v4135 = vpop.f32.mrf.mxu0
    %v4136 = vadd.f32 0.0, %v4135
    %v4137 = vpop.f32.mrf.mxu0
    %4138 = vmatprep.mubr.f32.mxu0 0.0
    %4139 = vmatmul.mubr.f32.gmra.mxu0 %v4065
    %v4140 = vpop.f32.mrf.mxu0
    %v4141 = vadd.f32 0.0, %v4140
    %v4142 = vpop.f32.mrf.mxu0
    %4143 = vdwg.mxu0
    %v4144 = vmul.f32 %v4136, 0.35355338
    %v4145 = vmul.f32 %v4141, 0.35355338
    %v4146 = vsel %vm666, %v4144, -inf
    %4147 = vmax.xlane.f32.xlu0 %v4146
    %v4148 = vpop.xlane.xlu0 %4147
    %v4149 = vsel %vm666, %v4145, -inf
    %4150 = vmax.xlane.f32.xlu0 %v4149
    %v4151 = vpop.xlane.xlu0 %4150
    %v4152 = vsub.f32 %v4144, %v4148
    %v4153 = vsub.f32 %v4145, %v4151
    %v4154 = vmul.f32 %v4152, 1.442695
    %v4155 = vpow.pop %v4154
    %v4156 = vmul.f32 %v4153, 1.442695
    %v4157 = vpow.pop %v4156
    %v4158 = vsel %vm666, %v4155, 0.0
    %4159 = vadd.xlane.f32.xlu0 %v4158
    %v4160 = vpop.xlane.xlu0 %4159
    %v4161 = vsel %vm666, %v4157, 0.0
    %4162 = vadd.xlane.f32.xlu0 %v4161
    %v4163 = vpop.xlane.xlu0 %4162
    %v4164 = vrcp.pop %v4160
    %v4165 = vmul.f32 %v4155, %v4164
    %v4166 = vrcp.pop %v4163
    %v4167 = vmul.f32 %v4157, %v4166
    %4168 = vrot.lane.b32.xlu0 %v2537, 8
    %v4169 = vpop.permute.xlu0 %4168
    %v4172 = vsel %vm666, %v4165, 0
    %v4175 = vsel %vm666, %v4167, 0
    %4177 = vmatprep.subr.mxu0 0.0
    %4178 = vmatpush1.msra.mxu0 0.0
    %4179 = vmatprep.subr.mxu0 0.0
    %4180 = vmatpush1.msra.mxu0 0.0
    %4181 = vmatprep.subr.mxu0 0.0
    %4182 = vmatpush1.msra.mxu0 0.0
    %4183 = vmatprep.subr.mxu0 0.0
    %4184 = vmatpush1.msra.mxu0 0.0
    %4185 = vmatprep.subr.mxu0 0.0
    %4186 = vmatpush1.msra.mxu0 0.0
    %4187 = vmatprep.subr.mxu0 0.0
    %4188 = vmatpush1.msra.mxu0 0.0
    %4189 = vmatprep.subr.mxu0 0.0
    %4190 = vmatpush1.msra.mxu0 0.0
    %4191 = vmatprep.subr.mxu0 0.0
    %4192 = vmatpush1.msra.mxu0 0.0
    %4193 = vmatprep.subr.mxu0 0.0
    %4194 = vmatpush1.msra.mxu0 0.0
    %4195 = vmatprep.subr.mxu0 0.0
    %4196 = vmatpush1.msra.mxu0 0.0
    %4197 = vmatprep.subr.mxu0 0.0
    %4198 = vmatpush1.msra.mxu0 0.0
    %4199 = vmatprep.subr.mxu0 0.0
    %4200 = vmatpush1.msra.mxu0 0.0
    %4201 = vmatprep.subr.mxu0 0.0
    %4202 = vmatpush1.msra.mxu0 0.0
    %4203 = vmatprep.subr.mxu0 0.0
    %4204 = vmatpush1.msra.mxu0 0.0
    %4205 = vmatprep.subr.mxu0 0.0
    %4206 = vmatpush1.msra.mxu0 0.0
    %4207 = vmatprep.subr.mxu0 0.0
    %4208 = vmatpush1.msra.mxu0 %v4169
    %4209 = vmatprep.subr.mxu0 0.0
    %4210 = vmatpush2.msra.mxu0 0.0
    %4211 = vmatprep.subr.mxu0 0.0
    %4212 = vmatpush2.msra.mxu0 0.0
    %4213 = vmatprep.subr.mxu0 0.0
    %4214 = vmatpush2.msra.mxu0 0.0
    %4215 = vmatprep.subr.mxu0 0.0
    %4216 = vmatpush2.msra.mxu0 0.0
    %4217 = vmatprep.subr.mxu0 0.0
    %4218 = vmatpush2.msra.mxu0 0.0
    %4219 = vmatprep.subr.mxu0 0.0
    %4220 = vmatpush2.msra.mxu0 0.0
    %4221 = vmatprep.subr.mxu0 0.0
    %4222 = vmatpush2.msra.mxu0 0.0
    %4223 = vmatprep.subr.mxu0 0.0
    %4224 = vmatpush2.msra.mxu0 0.0
    %4225 = vmatprep.subr.mxu0 0.0
    %4226 = vmatpush2.msra.mxu0 0.0
    %4227 = vmatprep.subr.mxu0 0.0
    %4228 = vmatpush2.msra.mxu0 0.0
    %4229 = vmatprep.subr.mxu0 0.0
    %4230 = vmatpush2.msra.mxu0 0.0
    %4231 = vmatprep.subr.mxu0 0.0
    %4232 = vmatpush2.msra.mxu0 0.0
    %4233 = vmatprep.subr.mxu0 0.0
    %4234 = vmatpush2.msra.mxu0 0.0
    %4235 = vmatprep.subr.mxu0 0.0
    %4236 = vmatpush2.msra.mxu0 0.0
    %4237 = vmatprep.subr.mxu0 0.0
    %4238 = vmatpush2.msra.mxu0 0.0
    %4239 = vmatprep.subr.mxu0 0.0
    %4240 = vmatpush2.msra.mxu0 0.0
    %4241 = vmatprep.mubr.f32.mxu0 0.0
    %4242 = vmatmul.mubr.f32.gmra.mxu0 %v4172
    %v4243 = vpop.f32.mrf.mxu0
    %v4244 = vadd.f32 0.0, %v4243
    %v4245 = vpop.f32.mrf.mxu0
    %4246 = vmatprep.mubr.f32.mxu0 0.0
    %4247 = vmatmul.mubr.f32.gmra.mxu0 %v4175
    %v4248 = vpop.f32.mrf.mxu0
    %v4249 = vadd.f32 0.0, %v4248
    %v4250 = vpop.f32.mrf.mxu0
    %4251 = vdwg.mxu0
    %4254 = vrot.lane.b32.xlu0 %v4244, 56
    %v4255 = vpop.permute.xlu0 %4254
    %4256 = vrot.lane.b32.xlu0 %v4249, 56
    %v4257 = vpop.permute.xlu0 %4256
    %4260 = vst.msk [vmem:[#allocation2] sm:$0xff] %vm2300, %v4255
    %4261 = vst.msk [vmem:[#allocation2 + $0x8] sm:$0xff] %vm2300, %v4257
    %v4262 = vld [vmem:[#allocation2] sm:$0xff]
    %v4263 = vld [vmem:[#allocation2 + $0x8] sm:$0xff]
    %v4265 = vsel %vm254, %v4262, 0
    %v4268 = vsel %vm254, %v4263, 0
    %4270 = vmatprep.subr.mxu0 0.0
    %4271 = vmatpush1.msra.mxu0 0.0
    %4272 = vmatprep.subr.mxu0 0.0
    %4273 = vmatpush1.msra.mxu0 0.0
    %4274 = vmatprep.subr.mxu0 0.0
    %4275 = vmatpush1.msra.mxu0 0.0
    %4276 = vmatprep.subr.mxu0 0.0
    %4277 = vmatpush1.msra.mxu0 0.0
    %4278 = vmatprep.subr.mxu0 0.0
    %4279 = vmatpush1.msra.mxu0 0.0
    %4280 = vmatprep.subr.mxu0 0.0
    %4281 = vmatpush1.msra.mxu0 0.0
    %4282 = vmatprep.subr.mxu0 0.0
    %4283 = vmatpush1.msra.mxu0 0.0
    %4284 = vmatprep.subr.mxu0 0.0
    %4285 = vmatpush1.msra.mxu0 0.0
    %4286 = vmatprep.subr.mxu0 0.0
    %4287 = vmatpush1.msra.mxu0 %v2631
    %4288 = vmatprep.subr.mxu0 0.0
    %4289 = vmatpush1.msra.mxu0 %v2630
    %4290 = vmatprep.subr.mxu0 0.0
    %4291 = vmatpush1.msra.mxu0 %v2629
    %4292 = vmatprep.subr.mxu0 0.0
    %4293 = vmatpush1.msra.mxu0 %v2628
    %4294 = vmatprep.subr.mxu0 0.0
    %4295 = vmatpush1.msra.mxu0 %v2627
    %4296 = vmatprep.subr.mxu0 0.0
    %4297 = vmatpush1.msra.mxu0 %v2626
    %4298 = vmatprep.subr.mxu0 0.0
    %4299 = vmatpush1.msra.mxu0 %v2625
    %4300 = vmatprep.subr.mxu0 0.0
    %4301 = vmatpush1.msra.mxu0 %v2624
    %4302 = vmatprep.subr.mxu0 0.0
    %4303 = vmatpush2.msra.mxu0 0.0
    %4304 = vmatprep.subr.mxu0 0.0
    %4305 = vmatpush2.msra.mxu0 0.0
    %4306 = vmatprep.subr.mxu0 0.0
    %4307 = vmatpush2.msra.mxu0 0.0
    %4308 = vmatprep.subr.mxu0 0.0
    %4309 = vmatpush2.msra.mxu0 0.0
    %4310 = vmatprep.subr.mxu0 0.0
    %4311 = vmatpush2.msra.mxu0 0.0
    %4312 = vmatprep.subr.mxu0 0.0
    %4313 = vmatpush2.msra.mxu0 0.0
    %4314 = vmatprep.subr.mxu0 0.0
    %4315 = vmatpush2.msra.mxu0 0.0
    %4316 = vmatprep.subr.mxu0 0.0
    %4317 = vmatpush2.msra.mxu0 0.0
    %4318 = vmatprep.subr.mxu0 0.0
    %4319 = vmatpush2.msra.mxu0 0.0
    %4320 = vmatprep.subr.mxu0 0.0
    %4321 = vmatpush2.msra.mxu0 0.0
    %4322 = vmatprep.subr.mxu0 0.0
    %4323 = vmatpush2.msra.mxu0 0.0
    %4324 = vmatprep.subr.mxu0 0.0
    %4325 = vmatpush2.msra.mxu0 0.0
    %4326 = vmatprep.subr.mxu0 0.0
    %4327 = vmatpush2.msra.mxu0 0.0
    %4328 = vmatprep.subr.mxu0 0.0
    %4329 = vmatpush2.msra.mxu0 0.0
    %4330 = vmatprep.subr.mxu0 0.0
    %4331 = vmatpush2.msra.mxu0 0.0
    %4332 = vmatprep.subr.mxu0 0.0
    %4333 = vmatpush2.msra.mxu0 0.0
    %4334 = vmatprep.mubr.f32.mxu0 0.0
    %4335 = vmatmul.mubr.f32.gmra.mxu0 %v4265
    %v4336 = vpop.f32.mrf.mxu0
    %v4337 = vadd.f32 %v2632, %v4336
    %v4338 = vpop.f32.mrf.mxu0
    %4339 = vmatprep.mubr.f32.mxu0 0.0
    %4340 = vmatmul.mubr.f32.gmra.mxu0 %v4268
    %v4341 = vpop.f32.mrf.mxu0
    %v4342 = vadd.f32 %v2632, %v4341
    %v4343 = vpop.f32.mrf.mxu0
    %4344 = vdwg.mxu0
    %v4345 = vadd.f32 %v476, %v4337
    %v4346 = vadd.f32 %v477, %v4342
    %v4347 = vld [vmem:[%s6 + $0x42] ss:$0 sm:$0xff]
    %v4348 = vld [vmem:[%s6 + $0x43] ss:$0 sm:$0xff]
    %v4349 = vsel %vm254, %v4345, 0.0
    %4350 = vadd.xlane.f32.xlu0 %v4349
    %v4351 = vpop.xlane.xlu0 %4350
    %v4352 = vsel %vm254, %v4346, 0.0
    %4353 = vadd.xlane.f32.xlu0 %v4352
    %v4354 = vpop.xlane.xlu0 %4353
    %v4355 = vmul.f32 %v4351, %v2396
    %v4356 = vmul.f32 %v4354, %v2396
    %v4357 = vsub.f32 %v4345, %v4355
    %v4358 = vsub.f32 %v4346, %v4356
    %v4359 = vmul.f32 %v4357, %v4357
    %v4360 = vmul.f32 %v4358, %v4358
    %v4361 = vsel %vm254, %v4359, 0.0
    %4362 = vadd.xlane.f32.xlu0 %v4361
    %v4363 = vpop.xlane.xlu0 %4362
    %v4364 = vsel %vm254, %v4360, 0.0
    %4365 = vadd.xlane.f32.xlu0 %v4364
    %v4366 = vpop.xlane.xlu0 %4365
    %v4367 = vmul.f32 %v4363, %v2396
    %v4368 = vmul.f32 %v4366, %v2396
    %v4369 = vadd.f32 %v4367, 1e-06
    %v4370 = vadd.f32 %v4368, 1e-06
    %v4371 = vrsqrt.pop %v4369
    %v4372 = vrsqrt.pop %v4370
    %v4373 = vmul.f32 %v4357, %v4371
    %v4374 = vmul.f32 %v4358, %v4372
    %v4375 = vmul.f32 %v4373, %v4347
    %v4376 = vmul.f32 %v4374, %v4347
    %v4377 = vadd.f32 %v4375, %v4348
    %v4378 = vadd.f32 %v4376, %v4348
    %v4379 = vmax.f32 %v4377, 0.0
    %v4380 = vmax.f32 %v4378, 0.0
    %v4381 = vadd.f32 %v4377, %v4379
    %v4382 = vadd.f32 %v4378, %v4380
    %v4383 = vld [vmem:[%s6 + $0x40] ss:$0 sm:$0xff]
    %v4384 = vld [vmem:[%s6 + $0x41] ss:$0 sm:$0xff]
    %v4385 = vsel %vm254, %v4381, 0.0
    %4386 = vadd.xlane.f32.xlu0 %v4385
    %v4387 = vpop.xlane.xlu0 %4386
    %v4388 = vsel %vm254, %v4382, 0.0
    %4389 = vadd.xlane.f32.xlu0 %v4388
    %v4390 = vpop.xlane.xlu0 %4389
    %v4391 = vmul.f32 %v4387, %v2396
    %v4392 = vmul.f32 %v4390, %v2396
    %v4393 = vsub.f32 %v4381, %v4391
    %v4394 = vsub.f32 %v4382, %v4392
    %v4395 = vmul.f32 %v4393, %v4393
    %v4396 = vmul.f32 %v4394, %v4394
    %v4397 = vsel %vm254, %v4395, 0.0
    %4398 = vadd.xlane.f32.xlu0 %v4397
    %v4399 = vpop.xlane.xlu0 %4398
    %v4400 = vsel %vm254, %v4396, 0.0
    %4401 = vadd.xlane.f32.xlu0 %v4400
    %v4402 = vpop.xlane.xlu0 %4401
    %v4403 = vmul.f32 %v4399, %v2396
    %v4404 = vmul.f32 %v4402, %v2396
    %v4405 = vadd.f32 %v4403, 1e-06
    %v4406 = vadd.f32 %v4404, 1e-06
    %v4407 = vrsqrt.pop %v4405
    %v4408 = vrsqrt.pop %v4406
    %v4409 = vmul.f32 %v4393, %v4407
    %v4410 = vmul.f32 %v4394, %v4408
    %v4411 = vmul.f32 %v4409, %v4383
    %v4412 = vmul.f32 %v4410, %v4383
    %v4413 = vadd.f32 %v4411, %v4384
    %v4414 = vadd.f32 %v4412, %v4384
    %v4415 = vld [vmem:[#allocation3 + $0x8] sm:$0xff]
    %v4416 = vld [vmem:[#allocation3 + $0xb0] sm:$0xff]
    %v4417 = vld [vmem:[#allocation3 + $0x158] sm:$0xff]
    %v4418 = vld [vmem:[#allocation3 + $0x200] sm:$0xff]
    %v4419 = vld [vmem:[#allocation3 + $0x2a8] sm:$0xff]
    %v4420 = vld [vmem:[#allocation3 + $0x350] sm:$0xff]
    %v4421 = vld [vmem:[#allocation3 + $0x3f8] sm:$0xff]
    %v4422 = vld [vmem:[#allocation3 + $0x4a0] sm:$0xff]
    %v4423 = vld [vmem:[%s6 + $0x2] ss:$0 sm:$0xff]
    %4424 = vmatprep.subr.mxu0 0.0
    %4425 = vmatpush1.msra.mxu0 0.0
    %4426 = vmatprep.subr.mxu0 0.0
    %4427 = vmatpush1.msra.mxu0 0.0
    %4428 = vmatprep.subr.mxu0 0.0
    %4429 = vmatpush1.msra.mxu0 0.0
    %4430 = vmatprep.subr.mxu0 0.0
    %4431 = vmatpush1.msra.mxu0 0.0
    %4432 = vmatprep.subr.mxu0 0.0
    %4433 = vmatpush1.msra.mxu0 0.0
    %4434 = vmatprep.subr.mxu0 0.0
    %4435 = vmatpush1.msra.mxu0 0.0
    %4436 = vmatprep.subr.mxu0 0.0
    %4437 = vmatpush1.msra.mxu0 0.0
    %4438 = vmatprep.subr.mxu0 0.0
    %4439 = vmatpush1.msra.mxu0 0.0
    %4440 = vmatprep.subr.mxu0 0.0
    %4441 = vmatpush1.msra.mxu0 0.0
    %4442 = vmatprep.subr.mxu0 0.0
    %4443 = vmatpush1.msra.mxu0 0.0
    %4444 = vmatprep.subr.mxu0 0.0
    %4445 = vmatpush1.msra.mxu0 0.0
    %4446 = vmatprep.subr.mxu0 0.0
    %4447 = vmatpush1.msra.mxu0 0.0
    %4448 = vmatprep.subr.mxu0 0.0
    %4449 = vmatpush1.msra.mxu0 0.0
    %4450 = vmatprep.subr.mxu0 0.0
    %4451 = vmatpush1.msra.mxu0 0.0
    %4452 = vmatprep.subr.mxu0 0.0
    %4453 = vmatpush1.msra.mxu0 %v4414
    %4454 = vmatprep.subr.mxu0 0.0
    %4455 = vmatpush1.msra.mxu0 %v4413
    %4456 = vmatprep.subr.mxu0 0.0
    %4457 = vmatpush2.msra.mxu0 0.0
    %4458 = vmatprep.subr.mxu0 0.0
    %4459 = vmatpush2.msra.mxu0 0.0
    %4460 = vmatprep.subr.mxu0 0.0
    %4461 = vmatpush2.msra.mxu0 0.0
    %4462 = vmatprep.subr.mxu0 0.0
    %4463 = vmatpush2.msra.mxu0 0.0
    %4464 = vmatprep.subr.mxu0 0.0
    %4465 = vmatpush2.msra.mxu0 0.0
    %4466 = vmatprep.subr.mxu0 0.0
    %4467 = vmatpush2.msra.mxu0 0.0
    %4468 = vmatprep.subr.mxu0 0.0
    %4469 = vmatpush2.msra.mxu0 0.0
    %4470 = vmatprep.subr.mxu0 0.0
    %4471 = vmatpush2.msra.mxu0 0.0
    %4472 = vmatprep.subr.mxu0 0.0
    %4473 = vmatpush2.msra.mxu0 0.0
    %4474 = vmatprep.subr.mxu0 0.0
    %4475 = vmatpush2.msra.mxu0 0.0
    %4476 = vmatprep.subr.mxu0 0.0
    %4477 = vmatpush2.msra.mxu0 0.0
    %4478 = vmatprep.subr.mxu0 0.0
    %4479 = vmatpush2.msra.mxu0 0.0
    %4480 = vmatprep.subr.mxu0 0.0
    %4481 = vmatpush2.msra.mxu0 0.0
    %4482 = vmatprep.subr.mxu0 0.0
    %4483 = vmatpush2.msra.mxu0 0.0
    %4484 = vmatprep.subr.mxu0 0.0
    %4485 = vmatpush2.msra.mxu0 0.0
    %4486 = vmatprep.subr.mxu0 0.0
    %4487 = vmatpush2.msra.mxu0 0.0
    %4488 = vmatprep.mubr.f32.mxu0 0.0
    %4489 = vmatmul.mubr.f32.gmra.mxu0 %v97
    %v4490 = vpop.f32.mrf.mxu0
    %v4491 = vadd.f32 %v4413, %v4490
    %v4492 = vpop.f32.mrf.mxu0
    %4493 = vmatprep.mubr.f32.mxu0 0.0
    %4494 = vmatmul.mubr.f32.gmra.mxu0 %v100
    %v4495 = vpop.f32.mrf.mxu0
    %v4496 = vadd.f32 %v4414, %v4495
    %v4497 = vpop.f32.mrf.mxu0
    %4498 = vdwg.mxu0
    %v4500 = vsel %vm254, %v4491, 0
    %v4503 = vsel %vm254, %v4496, 0
    %4505 = vmatprep.subr.mxu0 0.0
    %4506 = vmatpush1.msra.mxu0 0.0
    %4507 = vmatprep.subr.mxu0 0.0
    %4508 = vmatpush1.msra.mxu0 0.0
    %4509 = vmatprep.subr.mxu0 0.0
    %4510 = vmatpush1.msra.mxu0 0.0
    %4511 = vmatprep.subr.mxu0 0.0
    %4512 = vmatpush1.msra.mxu0 0.0
    %4513 = vmatprep.subr.mxu0 0.0
    %4514 = vmatpush1.msra.mxu0 0.0
    %4515 = vmatprep.subr.mxu0 0.0
    %4516 = vmatpush1.msra.mxu0 0.0
    %4517 = vmatprep.subr.mxu0 0.0
    %4518 = vmatpush1.msra.mxu0 0.0
    %4519 = vmatprep.subr.mxu0 0.0
    %4520 = vmatpush1.msra.mxu0 0.0
    %4521 = vmatprep.subr.mxu0 0.0
    %4522 = vmatpush1.msra.mxu0 %v4422
    %4523 = vmatprep.subr.mxu0 0.0
    %4524 = vmatpush1.msra.mxu0 %v4421
    %4525 = vmatprep.subr.mxu0 0.0
    %4526 = vmatpush1.msra.mxu0 %v4420
    %4527 = vmatprep.subr.mxu0 0.0
    %4528 = vmatpush1.msra.mxu0 %v4419
    %4529 = vmatprep.subr.mxu0 0.0
    %4530 = vmatpush1.msra.mxu0 %v4418
    %4531 = vmatprep.subr.mxu0 0.0
    %4532 = vmatpush1.msra.mxu0 %v4417
    %4533 = vmatprep.subr.mxu0 0.0
    %4534 = vmatpush1.msra.mxu0 %v4416
    %4535 = vmatprep.subr.mxu0 0.0
    %4536 = vmatpush1.msra.mxu0 %v4415
    %4537 = vmatprep.subr.mxu0 0.0
    %4538 = vmatpush2.msra.mxu0 0.0
    %4539 = vmatprep.subr.mxu0 0.0
    %4540 = vmatpush2.msra.mxu0 0.0
    %4541 = vmatprep.subr.mxu0 0.0
    %4542 = vmatpush2.msra.mxu0 0.0
    %4543 = vmatprep.subr.mxu0 0.0
    %4544 = vmatpush2.msra.mxu0 0.0
    %4545 = vmatprep.subr.mxu0 0.0
    %4546 = vmatpush2.msra.mxu0 0.0
    %4547 = vmatprep.subr.mxu0 0.0
    %4548 = vmatpush2.msra.mxu0 0.0
    %4549 = vmatprep.subr.mxu0 0.0
    %4550 = vmatpush2.msra.mxu0 0.0
    %4551 = vmatprep.subr.mxu0 0.0
    %4552 = vmatpush2.msra.mxu0 0.0
    %4553 = vmatprep.subr.mxu0 0.0
    %4554 = vmatpush2.msra.mxu0 0.0
    %4555 = vmatprep.subr.mxu0 0.0
    %4556 = vmatpush2.msra.mxu0 0.0
    %4557 = vmatprep.subr.mxu0 0.0
    %4558 = vmatpush2.msra.mxu0 0.0
    %4559 = vmatprep.subr.mxu0 0.0
    %4560 = vmatpush2.msra.mxu0 0.0
    %4561 = vmatprep.subr.mxu0 0.0
    %4562 = vmatpush2.msra.mxu0 0.0
    %4563 = vmatprep.subr.mxu0 0.0
    %4564 = vmatpush2.msra.mxu0 0.0
    %4565 = vmatprep.subr.mxu0 0.0
    %4566 = vmatpush2.msra.mxu0 0.0
    %4567 = vmatprep.subr.mxu0 0.0
    %4568 = vmatpush2.msra.mxu0 0.0
    %4569 = vmatprep.mubr.f32.mxu0 0.0
    %4570 = vmatmul.mubr.f32.gmra.mxu0 %v4500
    %v4571 = vpop.f32.mrf.mxu0
    %v4572 = vadd.f32 %v4423, %v4571
    %v4573 = vpop.f32.mrf.mxu0
    %4574 = vmatprep.mubr.f32.mxu0 0.0
    %4575 = vmatmul.mubr.f32.gmra.mxu0 %v4503
    %v4576 = vpop.f32.mrf.mxu0
    %v4577 = vadd.f32 %v4423, %v4576
    %v4578 = vpop.f32.mrf.mxu0
    %4579 = vdwg.mxu0
    %v4580 = vmul.f32 %v4572, %v4572
    %v4581 = vmul.f32 %v4577, %v4577
    %v4582 = vsel %vm254, %v4580, 0.0
    %4583 = vadd.xlane.f32.xlu0 %v4582
    %v4584 = vpop.xlane.xlu0 %4583
    %v4585 = vsel %vm254, %v4581, 0.0
    %4586 = vadd.xlane.f32.xlu0 %v4585
    %v4587 = vpop.xlane.xlu0 %4586
    %v4588 = vrsqrt.pop %v4584
    %v4589 = vmul.f32 %v4584, %v4588
    %vm4590 = vcmp.eq.f32.partialorder %v4584, inf
    %v4591 = vsel %vm4590, %v4584, %v4589
    %vm4592 = vcmp.eq.f32.partialorder %v4584, 0.0
    %v4593 = vand.u32 %v4584, 2147483648
    %v4594 = vsel %vm4592, %v4593, %v4591
    %v4595 = vrsqrt.pop %v4587
    %v4596 = vmul.f32 %v4587, %v4595
    %vm4597 = vcmp.eq.f32.partialorder %v4587, inf
    %v4598 = vsel %vm4597, %v4587, %v4596
    %vm4599 = vcmp.eq.f32.partialorder %v4587, 0.0
    %v4600 = vand.u32 %v4587, 2147483648
    %v4601 = vsel %vm4599, %v4600, %v4598
    %v4602 = vmax.f32 %v4594, 1e-12
    %v4603 = vmax.f32 %v4601, 1e-12
    %v4604 = vrcp.pop %v4602
    %v4605 = vmul.f32 %v4572, %v4604
    %v4606 = vrcp.pop %v4603
    %v4607 = vmul.f32 %v4577, %v4606
    %v4608 = vmul.f32 %v4605, %v69
    %v4609 = vmul.f32 %v4607, %v74
    %v4610 = vld [vmem:[#allocation3 + $0x10] sm:$0xff]
    %v4611 = vld [vmem:[#allocation3 + $0xb8] sm:$0xff]
    %v4612 = vld [vmem:[#allocation3 + $0x160] sm:$0xff]
    %v4613 = vld [vmem:[#allocation3 + $0x208] sm:$0xff]
    %v4614 = vld [vmem:[#allocation3 + $0x2b0] sm:$0xff]
    %v4615 = vld [vmem:[#allocation3 + $0x358] sm:$0xff]
    %v4616 = vld [vmem:[#allocation3 + $0x400] sm:$0xff]
    %v4617 = vld [vmem:[#allocation3 + $0x4a8] sm:$0xff]
    %v4618 = vld [vmem:[%s6 + $0x3] ss:$0 sm:$0xff]
    %v4620 = vsel %vm254, %v4608, 0
    %v4623 = vsel %vm254, %v4609, 0
    %4625 = vmatprep.subr.mxu0 0.0
    %4626 = vmatpush1.msra.mxu0 0.0
    %4627 = vmatprep.subr.mxu0 0.0
    %4628 = vmatpush1.msra.mxu0 0.0
    %4629 = vmatprep.subr.mxu0 0.0
    %4630 = vmatpush1.msra.mxu0 0.0
    %4631 = vmatprep.subr.mxu0 0.0
    %4632 = vmatpush1.msra.mxu0 0.0
    %4633 = vmatprep.subr.mxu0 0.0
    %4634 = vmatpush1.msra.mxu0 0.0
    %4635 = vmatprep.subr.mxu0 0.0
    %4636 = vmatpush1.msra.mxu0 0.0
    %4637 = vmatprep.subr.mxu0 0.0
    %4638 = vmatpush1.msra.mxu0 0.0
    %4639 = vmatprep.subr.mxu0 0.0
    %4640 = vmatpush1.msra.mxu0 0.0
    %4641 = vmatprep.subr.mxu0 0.0
    %4642 = vmatpush1.msra.mxu0 %v4617
    %4643 = vmatprep.subr.mxu0 0.0
    %4644 = vmatpush1.msra.mxu0 %v4616
    %4645 = vmatprep.subr.mxu0 0.0
    %4646 = vmatpush1.msra.mxu0 %v4615
    %4647 = vmatprep.subr.mxu0 0.0
    %4648 = vmatpush1.msra.mxu0 %v4614
    %4649 = vmatprep.subr.mxu0 0.0
    %4650 = vmatpush1.msra.mxu0 %v4613
    %4651 = vmatprep.subr.mxu0 0.0
    %4652 = vmatpush1.msra.mxu0 %v4612
    %4653 = vmatprep.subr.mxu0 0.0
    %4654 = vmatpush1.msra.mxu0 %v4611
    %4655 = vmatprep.subr.mxu0 0.0
    %4656 = vmatpush1.msra.mxu0 %v4610
    %4657 = vmatprep.subr.mxu0 0.0
    %4658 = vmatpush2.msra.mxu0 0.0
    %4659 = vmatprep.subr.mxu0 0.0
    %4660 = vmatpush2.msra.mxu0 0.0
    %4661 = vmatprep.subr.mxu0 0.0
    %4662 = vmatpush2.msra.mxu0 0.0
    %4663 = vmatprep.subr.mxu0 0.0
    %4664 = vmatpush2.msra.mxu0 0.0
    %4665 = vmatprep.subr.mxu0 0.0
    %4666 = vmatpush2.msra.mxu0 0.0
    %4667 = vmatprep.subr.mxu0 0.0
    %4668 = vmatpush2.msra.mxu0 0.0
    %4669 = vmatprep.subr.mxu0 0.0
    %4670 = vmatpush2.msra.mxu0 0.0
    %4671 = vmatprep.subr.mxu0 0.0
    %4672 = vmatpush2.msra.mxu0 0.0
    %4673 = vmatprep.subr.mxu0 0.0
    %4674 = vmatpush2.msra.mxu0 0.0
    %4675 = vmatprep.subr.mxu0 0.0
    %4676 = vmatpush2.msra.mxu0 0.0
    %4677 = vmatprep.subr.mxu0 0.0
    %4678 = vmatpush2.msra.mxu0 0.0
    %4679 = vmatprep.subr.mxu0 0.0
    %4680 = vmatpush2.msra.mxu0 0.0
    %4681 = vmatprep.subr.mxu0 0.0
    %4682 = vmatpush2.msra.mxu0 0.0
    %4683 = vmatprep.subr.mxu0 0.0
    %4684 = vmatpush2.msra.mxu0 0.0
    %4685 = vmatprep.subr.mxu0 0.0
    %4686 = vmatpush2.msra.mxu0 0.0
    %4687 = vmatprep.subr.mxu0 0.0
    %4688 = vmatpush2.msra.mxu0 0.0
    %4689 = vmatprep.mubr.f32.mxu0 0.0
    %4690 = vmatmul.mubr.f32.gmra.mxu0 %v4620
    %v4691 = vpop.f32.mrf.mxu0
    %v4692 = vadd.f32 %v4618, %v4691
    %v4693 = vpop.f32.mrf.mxu0
    %4694 = vmatprep.mubr.f32.mxu0 0.0
    %4695 = vmatmul.mubr.f32.gmra.mxu0 %v4623
    %v4696 = vpop.f32.mrf.mxu0
    %v4697 = vadd.f32 %v4618, %v4696
    %v4698 = vpop.f32.mrf.mxu0
    %4699 = vdwg.mxu0
    %vm4700 = vcmask 31744
    %v4701 = vsel %vm4700, %v4692, -inf
    %4702 = vmax.xlane.f32.xlu0 %v4701
    %v4703 = vpop.xlane.xlu0 %4702
    %v4704 = vsel %vm4700, %v4697, -inf
    %4705 = vmax.xlane.f32.xlu0 %v4704
    %v4706 = vpop.xlane.xlu0 %4705
    %v4707 = vsub.f32 %v4692, %v4703
    %v4708 = vsub.f32 %v4697, %v4706
    %v4709 = vmul.f32 %v4707, 1.442695
    %v4710 = vpow.pop %v4709
    %v4711 = vmul.f32 %v4708, 1.442695
    %v4712 = vpow.pop %v4711
    %v4713 = vsel %vm4700, %v4710, 0.0
    %4714 = vadd.xlane.f32.xlu0 %v4713
    %v4715 = vpop.xlane.xlu0 %4714
    %v4716 = vsel %vm4700, %v4712, 0.0
    %4717 = vadd.xlane.f32.xlu0 %v4716
    %v4718 = vpop.xlane.xlu0 %4717
    %v4719 = vrcp.pop %v4715
    %v4720 = vmul.f32 %v4710, %v4719
    %v4721 = vrcp.pop %v4718
    %v4722 = vmul.f32 %v4712, %v4721
    %v4723 = vmul.f32 %v4413, %v69
    %v4724 = vmul.f32 %v4414, %v74
    %v4725 = vmul.f32 %v4720, %v69
    %v4726 = vmul.f32 %v4722, %v74
    %4727 = vxpose.xlu0.b32.start [1/16] %v4725, 128
    %4728 = vxpose.xlu0.b32.cont [2/16] %v4726, 128
    %4729 = vxpose.xlu0.b32.cont [3/16] 0.0, 128
    %4730 = vxpose.xlu0.b32.cont [4/16] 0.0, 128
    %4731 = vxpose.xlu0.b32.cont [5/16] 0.0, 128
    %4732 = vxpose.xlu0.b32.cont [6/16] 0.0, 128
    %4733 = vxpose.xlu0.b32.cont [7/16] 0.0, 128
    %4734 = vxpose.xlu0.b32.cont [8/16] 0.0, 128
    %4735 = vxpose.xlu0.b32.cont [9/16] 0.0, 128
    %4736 = vxpose.xlu0.b32.cont [10/16] 0.0, 128
    %4737 = vxpose.xlu0.b32.cont [11/16] 0.0, 128
    %4738 = vxpose.xlu0.b32.cont [12/16] 0.0, 128
    %4739 = vxpose.xlu0.b32.cont [13/16] 0.0, 128
    %4740 = vxpose.xlu0.b32.cont [14/16] 0.0, 128
    %4741 = vxpose.xlu0.b32.cont [15/16] 0.0, 128
    %4742 = vxpose.xlu0.b32.end [16/16] 0.0, 128
    %v4743 = vpop.trf.xlu0
    %v4744 = vpop.trf.xlu0
    %v4745 = vpop.trf.xlu0
    %v4746 = vpop.trf.xlu0
    %v4747 = vpop.trf.xlu0
    %v4748 = vpop.trf.xlu0
    %v4749 = vpop.trf.xlu0
    %v4750 = vpop.trf.xlu0
    %v4751 = vpop.trf.xlu0
    %v4752 = vpop.trf.xlu0
    %v4753 = vpop.trf.xlu0
    %v4754 = vpop.trf.xlu0
    %v4755 = vpop.trf.xlu0
    %v4756 = vpop.trf.xlu0
    %v4757 = vpop.trf.xlu0
    %v4758 = vpop.trf.xlu0
    %v4760 = vsel %vm95, %v4743, 0
    %4762 = vmatprep.subr.mxu0 0.0
    %4763 = vmatpush1.msra.mxu0 0.0
    %4764 = vmatprep.subr.mxu0 0.0
    %4765 = vmatpush1.msra.mxu0 0.0
    %4766 = vmatprep.subr.mxu0 0.0
    %4767 = vmatpush1.msra.mxu0 0.0
    %4768 = vmatprep.subr.mxu0 0.0
    %4769 = vmatpush1.msra.mxu0 0.0
    %4770 = vmatprep.subr.mxu0 0.0
    %4771 = vmatpush1.msra.mxu0 0.0
    %4772 = vmatprep.subr.mxu0 0.0
    %4773 = vmatpush1.msra.mxu0 0.0
    %4774 = vmatprep.subr.mxu0 0.0
    %4775 = vmatpush1.msra.mxu0 0.0
    %4776 = vmatprep.subr.mxu0 0.0
    %4777 = vmatpush1.msra.mxu0 0.0
    %4778 = vmatprep.subr.mxu0 0.0
    %4779 = vmatpush1.msra.mxu0 0.0
    %4780 = vmatprep.subr.mxu0 0.0
    %4781 = vmatpush1.msra.mxu0 0.0
    %4782 = vmatprep.subr.mxu0 0.0
    %4783 = vmatpush1.msra.mxu0 0.0
    %4784 = vmatprep.subr.mxu0 0.0
    %4785 = vmatpush1.msra.mxu0 0.0
    %4786 = vmatprep.subr.mxu0 0.0
    %4787 = vmatpush1.msra.mxu0 0.0
    %4788 = vmatprep.subr.mxu0 0.0
    %4789 = vmatpush1.msra.mxu0 0.0
    %4790 = vmatprep.subr.mxu0 0.0
    %4791 = vmatpush1.msra.mxu0 %v4724
    %4792 = vmatprep.subr.mxu0 0.0
    %4793 = vmatpush1.msra.mxu0 %v4723
    %4794 = vmatprep.subr.mxu0 0.0
    %4795 = vmatpush2.msra.mxu0 0.0
    %4796 = vmatprep.subr.mxu0 0.0
    %4797 = vmatpush2.msra.mxu0 0.0
    %4798 = vmatprep.subr.mxu0 0.0
    %4799 = vmatpush2.msra.mxu0 0.0
    %4800 = vmatprep.subr.mxu0 0.0
    %4801 = vmatpush2.msra.mxu0 0.0
    %4802 = vmatprep.subr.mxu0 0.0
    %4803 = vmatpush2.msra.mxu0 0.0
    %4804 = vmatprep.subr.mxu0 0.0
    %4805 = vmatpush2.msra.mxu0 0.0
    %4806 = vmatprep.subr.mxu0 0.0
    %4807 = vmatpush2.msra.mxu0 0.0
    %4808 = vmatprep.subr.mxu0 0.0
    %4809 = vmatpush2.msra.mxu0 0.0
    %4810 = vmatprep.subr.mxu0 0.0
    %4811 = vmatpush2.msra.mxu0 0.0
    %4812 = vmatprep.subr.mxu0 0.0
    %4813 = vmatpush2.msra.mxu0 0.0
    %4814 = vmatprep.subr.mxu0 0.0
    %4815 = vmatpush2.msra.mxu0 0.0
    %4816 = vmatprep.subr.mxu0 0.0
    %4817 = vmatpush2.msra.mxu0 0.0
    %4818 = vmatprep.subr.mxu0 0.0
    %4819 = vmatpush2.msra.mxu0 0.0
    %4820 = vmatprep.subr.mxu0 0.0
    %4821 = vmatpush2.msra.mxu0 0.0
    %4822 = vmatprep.subr.mxu0 0.0
    %4823 = vmatpush2.msra.mxu0 0.0
    %4824 = vmatprep.subr.mxu0 0.0
    %4825 = vmatpush2.msra.mxu0 0.0
    %4826 = vmatprep.mubr.f32.mxu0 0.0
    %4827 = vmatmul.mubr.f32.gmra.mxu0 %v4760
    %v4828 = vpop.f32.mrf.mxu0
    %v4829 = vadd.f32 0.0, %v4828
    %v4830 = vpop.f32.mrf.mxu0
    %4831 = vdwg.mxu0
    %4832 = vmatprep.subr.mxu0 0.0
    %4833 = vmatpush1.msra.mxu0 0.0
    %4834 = vmatprep.subr.mxu0 0.0
    %4835 = vmatpush1.msra.mxu0 0.0
    %4836 = vmatprep.subr.mxu0 0.0
    %4837 = vmatpush1.msra.mxu0 0.0
    %4838 = vmatprep.subr.mxu0 0.0
    %4839 = vmatpush1.msra.mxu0 0.0
    %4840 = vmatprep.subr.mxu0 0.0
    %4841 = vmatpush1.msra.mxu0 0.0
    %4842 = vmatprep.subr.mxu0 0.0
    %4843 = vmatpush1.msra.mxu0 0.0
    %4844 = vmatprep.subr.mxu0 0.0
    %4845 = vmatpush1.msra.mxu0 0.0
    %4846 = vmatprep.subr.mxu0 0.0
    %4847 = vmatpush1.msra.mxu0 0.0
    %4848 = vmatprep.subr.mxu0 0.0
    %4849 = vmatpush1.msra.mxu0 0.0
    %4850 = vmatprep.subr.mxu0 0.0
    %4851 = vmatpush1.msra.mxu0 0.0
    %4852 = vmatprep.subr.mxu0 0.0
    %4853 = vmatpush1.msra.mxu0 0.0
    %4854 = vmatprep.subr.mxu0 0.0
    %4855 = vmatpush1.msra.mxu0 0.0
    %4856 = vmatprep.subr.mxu0 0.0
    %4857 = vmatpush1.msra.mxu0 0.0
    %4858 = vmatprep.subr.mxu0 0.0
    %4859 = vmatpush1.msra.mxu0 0.0
    %4860 = vmatprep.subr.mxu0 0.0
    %4861 = vmatpush1.msra.mxu0 %v61
    %4862 = vmatprep.subr.mxu0 0.0
    %4863 = vmatpush1.msra.mxu0 %v60
    %4864 = vmatprep.subr.mxu0 0.0
    %4865 = vmatpush2.msra.mxu0 0.0
    %4866 = vmatprep.subr.mxu0 0.0
    %4867 = vmatpush2.msra.mxu0 0.0
    %4868 = vmatprep.subr.mxu0 0.0
    %4869 = vmatpush2.msra.mxu0 0.0
    %4870 = vmatprep.subr.mxu0 0.0
    %4871 = vmatpush2.msra.mxu0 0.0
    %4872 = vmatprep.subr.mxu0 0.0
    %4873 = vmatpush2.msra.mxu0 0.0
    %4874 = vmatprep.subr.mxu0 0.0
    %4875 = vmatpush2.msra.mxu0 0.0
    %4876 = vmatprep.subr.mxu0 0.0
    %4877 = vmatpush2.msra.mxu0 0.0
    %4878 = vmatprep.subr.mxu0 0.0
    %4879 = vmatpush2.msra.mxu0 0.0
    %4880 = vmatprep.subr.mxu0 0.0
    %4881 = vmatpush2.msra.mxu0 0.0
    %4882 = vmatprep.subr.mxu0 0.0
    %4883 = vmatpush2.msra.mxu0 0.0
    %4884 = vmatprep.subr.mxu0 0.0
    %4885 = vmatpush2.msra.mxu0 0.0
    %4886 = vmatprep.subr.mxu0 0.0
    %4887 = vmatpush2.msra.mxu0 0.0
    %4888 = vmatprep.subr.mxu0 0.0
    %4889 = vmatpush2.msra.mxu0 0.0
    %4890 = vmatprep.subr.mxu0 0.0
    %4891 = vmatpush2.msra.mxu0 0.0
    %4892 = vmatprep.subr.mxu0 0.0
    %4893 = vmatpush2.msra.mxu0 0.0
    %4894 = vmatprep.subr.mxu0 0.0
    %4895 = vmatpush2.msra.mxu0 0.0
    %4896 = vmatprep.mubr.f32.mxu0 0.0
    %4897 = vmatmul.mubr.f32.gmra.mxu0 %v4760
    %v4898 = vpop.f32.mrf.mxu0
    %v4899 = vadd.f32 0.0, %v4898
    %v4900 = vpop.f32.mrf.mxu0
    %4901 = vdwg.mxu0
    %v4903 = vsel %vm95, %v4899, 0
    %4905 = vmatprep.subr.mxu0 0.0
    %4906 = vmatpush1.msra.mxu0 0.0
    %4907 = vmatprep.subr.mxu0 0.0
    %4908 = vmatpush1.msra.mxu0 0.0
    %4909 = vmatprep.subr.mxu0 0.0
    %4910 = vmatpush1.msra.mxu0 0.0
    %4911 = vmatprep.subr.mxu0 0.0
    %4912 = vmatpush1.msra.mxu0 0.0
    %4913 = vmatprep.subr.mxu0 0.0
    %4914 = vmatpush1.msra.mxu0 0.0
    %4915 = vmatprep.subr.mxu0 0.0
    %4916 = vmatpush1.msra.mxu0 0.0
    %4917 = vmatprep.subr.mxu0 0.0
    %4918 = vmatpush1.msra.mxu0 0.0
    %4919 = vmatprep.subr.mxu0 0.0
    %4920 = vmatpush1.msra.mxu0 0.0
    %4921 = vmatprep.subr.mxu0 0.0
    %4922 = vmatpush1.msra.mxu0 0.0
    %4923 = vmatprep.subr.mxu0 0.0
    %4924 = vmatpush1.msra.mxu0 0.0
    %4925 = vmatprep.subr.mxu0 0.0
    %4926 = vmatpush1.msra.mxu0 0.0
    %4927 = vmatprep.subr.mxu0 0.0
    %4928 = vmatpush1.msra.mxu0 0.0
    %4929 = vmatprep.subr.mxu0 0.0
    %4930 = vmatpush1.msra.mxu0 0.0
    %4931 = vmatprep.subr.mxu0 0.0
    %4932 = vmatpush1.msra.mxu0 0.0
    %4933 = vmatprep.subr.mxu0 0.0
    %4934 = vmatpush1.msra.mxu0 %v4726
    %4935 = vmatprep.subr.mxu0 0.0
    %4936 = vmatpush1.msra.mxu0 %v4725
    %4937 = vmatprep.subr.mxu0 0.0
    %4938 = vmatpush2.msra.mxu0 0.0
    %4939 = vmatprep.subr.mxu0 0.0
    %4940 = vmatpush2.msra.mxu0 0.0
    %4941 = vmatprep.subr.mxu0 0.0
    %4942 = vmatpush2.msra.mxu0 0.0
    %4943 = vmatprep.subr.mxu0 0.0
    %4944 = vmatpush2.msra.mxu0 0.0
    %4945 = vmatprep.subr.mxu0 0.0
    %4946 = vmatpush2.msra.mxu0 0.0
    %4947 = vmatprep.subr.mxu0 0.0
    %4948 = vmatpush2.msra.mxu0 0.0
    %4949 = vmatprep.subr.mxu0 0.0
    %4950 = vmatpush2.msra.mxu0 0.0
    %4951 = vmatprep.subr.mxu0 0.0
    %4952 = vmatpush2.msra.mxu0 0.0
    %4953 = vmatprep.subr.mxu0 0.0
    %4954 = vmatpush2.msra.mxu0 0.0
    %4955 = vmatprep.subr.mxu0 0.0
    %4956 = vmatpush2.msra.mxu0 0.0
    %4957 = vmatprep.subr.mxu0 0.0
    %4958 = vmatpush2.msra.mxu0 0.0
    %4959 = vmatprep.subr.mxu0 0.0
    %4960 = vmatpush2.msra.mxu0 0.0
    %4961 = vmatprep.subr.mxu0 0.0
    %4962 = vmatpush2.msra.mxu0 0.0
    %4963 = vmatprep.subr.mxu0 0.0
    %4964 = vmatpush2.msra.mxu0 0.0
    %4965 = vmatprep.subr.mxu0 0.0
    %4966 = vmatpush2.msra.mxu0 0.0
    %4967 = vmatprep.subr.mxu0 0.0
    %4968 = vmatpush2.msra.mxu0 0.0
    %4969 = vmatprep.mubr.f32.mxu0 0.0
    %4970 = vmatmul.mubr.f32.gmra.mxu0 %v4903
    %v4971 = vpop.f32.mrf.mxu0
    %v4972 = vadd.f32 0.0, %v4971
    %v4973 = vpop.f32.mrf.mxu0
    %4974 = vdwg.mxu0
    %v4975 = vlaneseq
    %v4976 = vshrl.u32 %v4975, 7
    %v4977 = vlaneseq
    %v4978 = vand.u32 %v4977, 127
    %vm4979 = vcmp.eq.s32.totalorder %v4976, %v4978
    %v4980 = vsel %vm4979, 1, 0
    %v4981 = vcvt.s32.f32 %v4980
    %v4982 = vmul.f32 %v4972, %v4981
    %vm4983 = vcmask 27648
    %v4984 = vsel %vm4983, %v4982, 0.0
    %4985 = vadd.xlane.f32.xlu0 %v4984
    %v4986 = vpop.xlane.xlu0 %4985
    %v4987 = vsel %vm491, %v4986, 0.0
    %v4988 = vrot.slane %v4987, 4
    %v4989 = vadd.f32 %v4987, %v4988
    %v4990 = vrot.slane %v4989, 2
    %v4991 = vadd.f32 %v4989, %v4990
    %v4992 = vrot.slane %v4991, 1
    %v4993 = vadd.f32 %v4991, %v4992
    %v4994 = vsel %vm95, %v60, 0.0
    %4995 = vadd.xlane.f32.xlu0 %v4994
    %v4996 = vpop.xlane.xlu0 %4995
    %v4997 = vsel %vm95, %v61, 0.0
    %4998 = vadd.xlane.f32.xlu0 %v4997
    %v4999 = vpop.xlane.xlu0 %4998
    %v5000 = vmul.f32 %v4996, %v4725
    %v5001 = vmul.f32 %v4999, %v4726
    %v5002 = vmul.f32 %v5000, %v4725
    %v5003 = vmul.f32 %v5001, %v4726
    %v5004 = vsel %vm4700, %v5002, 0.0
    %5005 = vadd.xlane.f32.xlu0 %v5004
    %v5006 = vpop.xlane.xlu0 %5005
    %v5007 = vsel %vm4700, %v5003, 0.0
    %5008 = vadd.xlane.f32.xlu0 %v5007
    %v5009 = vpop.xlane.xlu0 %5008
    %v5010 = vadd.f32 %v5006, %v5009
    %v5011 = vrot.slane %v5010, 4
    %v5012 = vadd.f32 %v5010, %v5011
    %v5013 = vrot.slane %v5012, 2
    %v5014 = vadd.f32 %v5012, %v5013
    %v5015 = vrot.slane %v5014, 1
    %v5016 = vadd.f32 %v5014, %v5015
    %v5017 = vrcp.pop %v5016
    %v5018 = vmul.f32 %v4993, %v5017
    %v5019 = vsub.f32 0.0, %v5018
    %5020 = vmatprep.subr.mxu0 0.0
    %5021 = vmatpush1.msra.mxu0 0.0
    %5022 = vmatprep.subr.mxu0 0.0
    %5023 = vmatpush1.msra.mxu0 0.0
    %5024 = vmatprep.subr.mxu0 0.0
    %5025 = vmatpush1.msra.mxu0 0.0
    %5026 = vmatprep.subr.mxu0 0.0
    %5027 = vmatpush1.msra.mxu0 0.0
    %5028 = vmatprep.subr.mxu0 0.0
    %5029 = vmatpush1.msra.mxu0 0.0
    %5030 = vmatprep.subr.mxu0 0.0
    %5031 = vmatpush1.msra.mxu0 0.0
    %5032 = vmatprep.subr.mxu0 0.0
    %5033 = vmatpush1.msra.mxu0 0.0
    %5034 = vmatprep.subr.mxu0 0.0
    %5035 = vmatpush1.msra.mxu0 0.0
    %5036 = vmatprep.subr.mxu0 0.0
    %5037 = vmatpush1.msra.mxu0 0.0
    %5038 = vmatprep.subr.mxu0 0.0
    %5039 = vmatpush1.msra.mxu0 0.0
    %5040 = vmatprep.subr.mxu0 0.0
    %5041 = vmatpush1.msra.mxu0 0.0
    %5042 = vmatprep.subr.mxu0 0.0
    %5043 = vmatpush1.msra.mxu0 0.0
    %5044 = vmatprep.subr.mxu0 0.0
    %5045 = vmatpush1.msra.mxu0 0.0
    %5046 = vmatprep.subr.mxu0 0.0
    %5047 = vmatpush1.msra.mxu0 0.0
    %5048 = vmatprep.subr.mxu0 0.0
    %5049 = vmatpush1.msra.mxu0 %v4726
    %5050 = vmatprep.subr.mxu0 0.0
    %5051 = vmatpush1.msra.mxu0 %v4725
    %5052 = vmatprep.subr.mxu0 0.0
    %5053 = vmatpush2.msra.mxu0 0.0
    %5054 = vmatprep.subr.mxu0 0.0
    %5055 = vmatpush2.msra.mxu0 0.0
    %5056 = vmatprep.subr.mxu0 0.0
    %5057 = vmatpush2.msra.mxu0 0.0
    %5058 = vmatprep.subr.mxu0 0.0
    %5059 = vmatpush2.msra.mxu0 0.0
    %5060 = vmatprep.subr.mxu0 0.0
    %5061 = vmatpush2.msra.mxu0 0.0
    %5062 = vmatprep.subr.mxu0 0.0
    %5063 = vmatpush2.msra.mxu0 0.0
    %5064 = vmatprep.subr.mxu0 0.0
    %5065 = vmatpush2.msra.mxu0 0.0
    %5066 = vmatprep.subr.mxu0 0.0
    %5067 = vmatpush2.msra.mxu0 0.0
    %5068 = vmatprep.subr.mxu0 0.0
    %5069 = vmatpush2.msra.mxu0 0.0
    %5070 = vmatprep.subr.mxu0 0.0
    %5071 = vmatpush2.msra.mxu0 0.0
    %5072 = vmatprep.subr.mxu0 0.0
    %5073 = vmatpush2.msra.mxu0 0.0
    %5074 = vmatprep.subr.mxu0 0.0
    %5075 = vmatpush2.msra.mxu0 0.0
    %5076 = vmatprep.subr.mxu0 0.0
    %5077 = vmatpush2.msra.mxu0 0.0
    %5078 = vmatprep.subr.mxu0 0.0
    %5079 = vmatpush2.msra.mxu0 0.0
    %5080 = vmatprep.subr.mxu0 0.0
    %5081 = vmatpush2.msra.mxu0 0.0
    %5082 = vmatprep.subr.mxu0 0.0
    %5083 = vmatpush2.msra.mxu0 0.0
    %5084 = vmatprep.mubr.f32.mxu0 0.0
    %5085 = vmatmul.mubr.f32.gmra.mxu0 %v4760
    %v5086 = vpop.f32.mrf.mxu0
    %v5087 = vadd.f32 0.0, %v5086
    %v5088 = vpop.f32.mrf.mxu0
    %5089 = vdwg.mxu0
    %v5090 = vmul.f32 %v5087, %v5087
    %v5091 = vsel %vm4983, %v5090, 0.0
    %5092 = vadd.xlane.f32.xlu0 %v5091
    %v5093 = vpop.xlane.xlu0 %5092
    %v5094 = vsel %vm491, %v5093, 0.0
    %v5095 = vrot.slane %v5094, 4
    %v5096 = vadd.f32 %v5094, %v5095
    %v5097 = vrot.slane %v5096, 2
    %v5098 = vadd.f32 %v5096, %v5097
    %v5099 = vrot.slane %v5098, 1
    %v5100 = vadd.f32 %v5098, %v5099
    %v5101 = vrsqrt.pop %v5100
    %v5102 = vmul.f32 %v5100, %v5101
    %vm5103 = vcmp.eq.f32.partialorder %v5100, inf
    %v5104 = vsel %vm5103, %v5100, %v5102
    %vm5105 = vcmp.eq.f32.partialorder %v5100, 0.0
    %v5106 = vand.u32 %v5100, 2147483648
    %v5107 = vsel %vm5105, %v5106, %v5104
    %v5108 = vrcp.pop %v5107
    %v5109 = vmul.f32 %v5087, %v5108
    %v5110 = vmul.f32 %v4981, 0.5
    %v5111 = vsub.f32 %v5109, %v5110
    %v5112 = vmul.f32 %v5111, %v5111
    %v5113 = vsel %vm4983, %v5112, 0.0
    %5114 = vadd.xlane.f32.xlu0 %v5113
    %v5115 = vpop.xlane.xlu0 %5114
    %v5116 = vsel %vm491, %v5115, 0.0
    %v5117 = vrot.slane %v5116, 4
    %v5118 = vadd.f32 %v5116, %v5117
    %v5119 = vrot.slane %v5118, 2
    %v5120 = vadd.f32 %v5118, %v5119
    %v5121 = vrot.slane %v5120, 1
    %v5122 = vadd.f32 %v5120, %v5121
    %v5123 = vrsqrt.pop %v5122
    %v5124 = vmul.f32 %v5122, %v5123
    %vm5125 = vcmp.eq.f32.partialorder %v5122, inf
    %v5126 = vsel %vm5125, %v5122, %v5124
    %vm5127 = vcmp.eq.f32.partialorder %v5122, 0.0
    %v5128 = vand.u32 %v5122, 2147483648
    %v5129 = vsel %vm5127, %v5128, %v5126
    %vm5130 = vcmask 0
    %5131 = vst.msk [vmem:[#allocation8] sm:$0x1] %vm5130, %v5019
    %5132 = vst.msk [vmem:[#allocation9] sm:$0x1] %vm5130, %v5129
    %v5133 = vld [vmem:[%s6 + $0x17] ss:$0 sm:$0xff]
    %vm5134 = vcmask 516096
    %5135 = vst.msk [vmem:[#allocation2] sm:$0x1] %vm5134, %v5133
    %vm5136 = vcmask 521221
    %5137 = vst.msk [vmem:[#allocation2 - $0x4] sm:$0x20] %vm5136, %v2456
    %vm5138 = vcmask 522246
    %5139 = vst.msk [vmem:[#allocation2 - $0x4] sm:$0x40] %vm5138, %v2455
    %vm5140 = vcmask 520196
    %5141 = vst.msk [vmem:[#allocation2 - $0x1] sm:$0x10] %vm5140, %v2456
    %5142 = vst.msk [vmem:[#allocation2 - $0x2] sm:$0x40] %vm5138, %v2456
    %v5143 = vld [vmem:[#allocation2] sm:$0x1f]
    %v5144 = vld [vmem:[%s6 + $0x44] ss:$0 sm:$0xff]
    %v5145 = vld [vmem:[%s6 + $0x45] ss:$0 sm:$0xff]
    %vm5146 = vcmask 520192
    %v5147 = vsel %vm5146, %v5143, 0.0
    %5148 = vadd.xlane.f32.xlu0 %v5147
    %v5149 = vpop.xlane.xlu0 %5148
    %v5150 = vmul.f32 %v5149, %v2396
    %v5151 = vsub.f32 %v5143, %v5150
    %v5152 = vmul.f32 %v5151, %v5151
    %v5153 = vsel %vm5146, %v5152, 0.0
    %5154 = vadd.xlane.f32.xlu0 %v5153
    %v5155 = vpop.xlane.xlu0 %5154
    %v5156 = vmul.f32 %v5155, %v2396
    %v5157 = vadd.f32 %v5156, 1e-06
    %v5158 = vrsqrt.pop %v5157
    %v5159 = vmul.f32 %v5151, %v5158
    %v5160 = vmul.f32 %v5159, %v5144
    %v5161 = vadd.f32 %v5160, %v5145
    %v5162 = vld [vmem:[#allocation3 + $0x48] sm:$0xff]
    %v5163 = vld [vmem:[#allocation3 + $0x50] sm:$0xff]
    %v5164 = vld [vmem:[#allocation3 + $0xf0] sm:$0xff]
    %v5165 = vld [vmem:[#allocation3 + $0xf8] sm:$0xff]
    %v5166 = vld [vmem:[#allocation3 + $0x198] sm:$0xff]
    %v5167 = vld [vmem:[#allocation3 + $0x1a0] sm:$0xff]
    %v5168 = vld [vmem:[#allocation3 + $0x240] sm:$0xff]
    %v5169 = vld [vmem:[#allocation3 + $0x248] sm:$0xff]
    %v5170 = vld [vmem:[#allocation3 + $0x2e8] sm:$0xff]
    %v5171 = vld [vmem:[#allocation3 + $0x2f0] sm:$0xff]
    %v5172 = vld [vmem:[#allocation3 + $0x390] sm:$0xff]
    %v5173 = vld [vmem:[#allocation3 + $0x398] sm:$0xff]
    %v5174 = vld [vmem:[#allocation3 + $0x438] sm:$0xff]
    %v5175 = vld [vmem:[#allocation3 + $0x440] sm:$0xff]
    %v5176 = vld [vmem:[#allocation3 + $0x4e0] sm:$0xff]
    %v5177 = vld [vmem:[#allocation3 + $0x4e8] sm:$0xff]
    %s5178 = scalar_lea.vmem %s6, 70
    %v5179 = vld [vmem:[%s5178] ss:$8 sm:$0x3]
    %v5181 = vlaneseq
    %v5182 = vshrl.u32 %v5181, 7
    %v5183 = vsub.s32 0, %v5182
    %v5184 = vrot.slane %v5179, %v5183
    %v5185 = vlaneseq
    %v5186 = vshrl.u32 %v5185, 7
    %v5187 = vsub.s32 1, %v5186
    %v5188 = vrot.slane %v5179, %v5187
    %v5192 = vsel %vm254, %v5161, 0
    %5194 = vmatprep.subr.mxu0 0.0
    %5195 = vmatpush1.msra.mxu0 0.0
    %5196 = vmatprep.subr.mxu0 0.0
    %5197 = vmatpush1.msra.mxu0 0.0
    %5198 = vmatprep.subr.mxu0 0.0
    %5199 = vmatpush1.msra.mxu0 0.0
    %5200 = vmatprep.subr.mxu0 0.0
    %5201 = vmatpush1.msra.mxu0 0.0
    %5202 = vmatprep.subr.mxu0 0.0
    %5203 = vmatpush1.msra.mxu0 0.0
    %5204 = vmatprep.subr.mxu0 0.0
    %5205 = vmatpush1.msra.mxu0 0.0
    %5206 = vmatprep.subr.mxu0 0.0
    %5207 = vmatpush1.msra.mxu0 0.0
    %5208 = vmatprep.subr.mxu0 0.0
    %5209 = vmatpush1.msra.mxu0 0.0
    %5210 = vmatprep.subr.mxu0 %v5177
    %5211 = vmatpush1.msra.mxu0 %v5176
    %5212 = vmatprep.subr.mxu0 %v5175
    %5213 = vmatpush1.msra.mxu0 %v5174
    %5214 = vmatprep.subr.mxu0 %v5173
    %5215 = vmatpush1.msra.mxu0 %v5172
    %5216 = vmatprep.subr.mxu0 %v5171
    %5217 = vmatpush1.msra.mxu0 %v5170
    %5218 = vmatprep.subr.mxu0 %v5169
    %5219 = vmatpush1.msra.mxu0 %v5168
    %5220 = vmatprep.subr.mxu0 %v5167
    %5221 = vmatpush1.msra.mxu0 %v5166
    %5222 = vmatprep.subr.mxu0 %v5165
    %5223 = vmatpush1.msra.mxu0 %v5164
    %5224 = vmatprep.subr.mxu0 %v5163
    %5225 = vmatpush1.msra.mxu0 %v5162
    %5226 = vmatprep.subr.mxu0 0.0
    %5227 = vmatpush2.msra.mxu0 0.0
    %5228 = vmatprep.subr.mxu0 0.0
    %5229 = vmatpush2.msra.mxu0 0.0
    %5230 = vmatprep.subr.mxu0 0.0
    %5231 = vmatpush2.msra.mxu0 0.0
    %5232 = vmatprep.subr.mxu0 0.0
    %5233 = vmatpush2.msra.mxu0 0.0
    %5234 = vmatprep.subr.mxu0 0.0
    %5235 = vmatpush2.msra.mxu0 0.0
    %5236 = vmatprep.subr.mxu0 0.0
    %5237 = vmatpush2.msra.mxu0 0.0
    %5238 = vmatprep.subr.mxu0 0.0
    %5239 = vmatpush2.msra.mxu0 0.0
    %5240 = vmatprep.subr.mxu0 0.0
    %5241 = vmatpush2.msra.mxu0 0.0
    %5242 = vmatprep.subr.mxu0 0.0
    %5243 = vmatpush2.msra.mxu0 0.0
    %5244 = vmatprep.subr.mxu0 0.0
    %5245 = vmatpush2.msra.mxu0 0.0
    %5246 = vmatprep.subr.mxu0 0.0
    %5247 = vmatpush2.msra.mxu0 0.0
    %5248 = vmatprep.subr.mxu0 0.0
    %5249 = vmatpush2.msra.mxu0 0.0
    %5250 = vmatprep.subr.mxu0 0.0
    %5251 = vmatpush2.msra.mxu0 0.0
    %5252 = vmatprep.subr.mxu0 0.0
    %5253 = vmatpush2.msra.mxu0 0.0
    %5254 = vmatprep.subr.mxu0 0.0
    %5255 = vmatpush2.msra.mxu0 0.0
    %5256 = vmatprep.subr.mxu0 0.0
    %5257 = vmatpush2.msra.mxu0 0.0
    %5258 = vmatprep.mubr.f32.mxu0 0.0
    %5259 = vmatmul.mubr.f32.gmra.mxu0 %v5192
    %v5260 = vpop.f32.mrf.mxu0
    %v5261 = vadd.f32 %v5184, %v5260
    %v5262 = vpop.f32.mrf.mxu0
    %v5263 = vadd.f32 %v5188, %v5262
    %5264 = vdwg.mxu0
    %v5265 = vld [vmem:[#allocation3 + $0x58] sm:$0xff]
    %v5266 = vld [vmem:[#allocation3 + $0x100] sm:$0xff]
    %v5267 = vld [vmem:[#allocation3 + $0x1a8] sm:$0xff]
    %v5268 = vld [vmem:[#allocation3 + $0x250] sm:$0xff]
    %v5269 = vld [vmem:[#allocation3 + $0x2f8] sm:$0xff]
    %v5270 = vld [vmem:[#allocation3 + $0x3a0] sm:$0xff]
    %v5271 = vld [vmem:[#allocation3 + $0x448] sm:$0xff]
    %v5272 = vld [vmem:[#allocation3 + $0x4f0] sm:$0xff]
    %v5273 = vld [vmem:[%s6 + $0x47] ss:$0 sm:$0xff]
    %5275 = vrot.lane.b32.xlu0 %v5261, 64
    %v5276 = vpop.permute.xlu0 %5275
    %v5277 = vsel %vm666, %v5261, 0
    %v5279 = vsel %vm666, %v5276, 0
    %5281 = vmatprep.subr.mxu0 0.0
    %5282 = vmatpush1.xpose.msra.mxu0 0.0
    %5283 = vmatprep.subr.mxu0 0.0
    %5284 = vmatpush1.xpose.msra.mxu0 0.0
    %5285 = vmatprep.subr.mxu0 0.0
    %5286 = vmatpush1.xpose.msra.mxu0 0.0
    %5287 = vmatprep.subr.mxu0 0.0
    %5288 = vmatpush1.xpose.msra.mxu0 0.0
    %5289 = vmatprep.subr.mxu0 0.0
    %5290 = vmatpush1.xpose.msra.mxu0 0.0
    %5291 = vmatprep.subr.mxu0 0.0
    %5292 = vmatpush1.xpose.msra.mxu0 0.0
    %5293 = vmatprep.subr.mxu0 0.0
    %5294 = vmatpush1.xpose.msra.mxu0 0.0
    %5295 = vmatprep.subr.mxu0 0.0
    %5296 = vmatpush1.xpose.msra.mxu0 0.0
    %5297 = vmatprep.subr.mxu0 0.0
    %5298 = vmatpush1.xpose.msra.mxu0 0.0
    %5299 = vmatprep.subr.mxu0 0.0
    %5300 = vmatpush1.xpose.msra.mxu0 0.0
    %5301 = vmatprep.subr.mxu0 0.0
    %5302 = vmatpush1.xpose.msra.mxu0 0.0
    %5303 = vmatprep.subr.mxu0 0.0
    %5304 = vmatpush1.xpose.msra.mxu0 0.0
    %5305 = vmatprep.subr.mxu0 0.0
    %5306 = vmatpush1.xpose.msra.mxu0 0.0
    %5307 = vmatprep.subr.mxu0 0.0
    %5308 = vmatpush1.xpose.msra.mxu0 0.0
    %5309 = vmatprep.subr.mxu0 0.0
    %5310 = vmatpush1.xpose.msra.mxu0 0.0
    %5311 = vmatprep.subr.mxu0 0.0
    %5312 = vmatpush1.xpose.msra.mxu0 %v5279
    %5313 = vmatprep.subr.mxu0 0.0
    %5314 = vmatpush2.xpose.msra.mxu0 0.0
    %5315 = vmatprep.subr.mxu0 0.0
    %5316 = vmatpush2.xpose.msra.mxu0 0.0
    %5317 = vmatprep.subr.mxu0 0.0
    %5318 = vmatpush2.xpose.msra.mxu0 0.0
    %5319 = vmatprep.subr.mxu0 0.0
    %5320 = vmatpush2.xpose.msra.mxu0 0.0
    %5321 = vmatprep.subr.mxu0 0.0
    %5322 = vmatpush2.xpose.msra.mxu0 0.0
    %5323 = vmatprep.subr.mxu0 0.0
    %5324 = vmatpush2.xpose.msra.mxu0 0.0
    %5325 = vmatprep.subr.mxu0 0.0
    %5326 = vmatpush2.xpose.msra.mxu0 0.0
    %5327 = vmatprep.subr.mxu0 0.0
    %5328 = vmatpush2.xpose.msra.mxu0 0.0
    %5329 = vmatprep.subr.mxu0 0.0
    %5330 = vmatpush2.xpose.msra.mxu0 0.0
    %5331 = vmatprep.subr.mxu0 0.0
    %5332 = vmatpush2.xpose.msra.mxu0 0.0
    %5333 = vmatprep.subr.mxu0 0.0
    %5334 = vmatpush2.xpose.msra.mxu0 0.0
    %5335 = vmatprep.subr.mxu0 0.0
    %5336 = vmatpush2.xpose.msra.mxu0 0.0
    %5337 = vmatprep.subr.mxu0 0.0
    %5338 = vmatpush2.xpose.msra.mxu0 0.0
    %5339 = vmatprep.subr.mxu0 0.0
    %5340 = vmatpush2.xpose.msra.mxu0 0.0
    %5341 = vmatprep.subr.mxu0 0.0
    %5342 = vmatpush2.xpose.msra.mxu0 0.0
    %5343 = vmatprep.subr.mxu0 0.0
    %5344 = vmatpush2.xpose.msra.mxu0 0.0
    %5345 = vmatprep.mubr.f32.mxu0 0.0
    %5346 = vmatmul.mubr.f32.gmra.mxu0 %v5277
    %v5347 = vpop.f32.mrf.mxu0
    %v5348 = vadd.f32 0.0, %v5347
    %v5349 = vpop.f32.mrf.mxu0
    %5350 = vdwg.mxu0
    %v5351 = vmul.f32 %v5348, 0.35355338
    %vm5352 = vcmask 36864
    %v5353 = vsel %vm5352, %v5351, -inf
    %5354 = vmax.xlane.f32.xlu0 %v5353
    %v5355 = vpop.xlane.xlu0 %5354
    %v5356 = vsub.f32 %v5351, %v5355
    %v5357 = vmul.f32 %v5356, 1.442695
    %v5358 = vpow.pop %v5357
    %v5359 = vsel %vm5352, %v5358, 0.0
    %5360 = vadd.xlane.f32.xlu0 %v5359
    %v5361 = vpop.xlane.xlu0 %5360
    %v5362 = vrcp.pop %v5361
    %v5363 = vmul.f32 %v5358, %v5362
    %vm5364 = vcmask 39936
    %v5366 = vsel %vm5364, %v5363, 0
    %vm5368 = vcmask 1044480
    %v5370 = vsel %vm5368, %v5263, 0
    %5372 = vmatprep.subr.mxu0 0.0
    %5373 = vmatpush1.msra.mxu0 0.0
    %5374 = vmatprep.subr.mxu0 0.0
    %5375 = vmatpush1.msra.mxu0 0.0
    %5376 = vmatprep.subr.mxu0 0.0
    %5377 = vmatpush1.msra.mxu0 0.0
    %5378 = vmatprep.subr.mxu0 0.0
    %5379 = vmatpush1.msra.mxu0 0.0
    %5380 = vmatprep.subr.mxu0 0.0
    %5381 = vmatpush1.msra.mxu0 0.0
    %5382 = vmatprep.subr.mxu0 0.0
    %5383 = vmatpush1.msra.mxu0 0.0
    %5384 = vmatprep.subr.mxu0 0.0
    %5385 = vmatpush1.msra.mxu0 0.0
    %5386 = vmatprep.subr.mxu0 0.0
    %5387 = vmatpush1.msra.mxu0 0.0
    %5388 = vmatprep.subr.mxu0 0.0
    %5389 = vmatpush1.msra.mxu0 0.0
    %5390 = vmatprep.subr.mxu0 0.0
    %5391 = vmatpush1.msra.mxu0 0.0
    %5392 = vmatprep.subr.mxu0 0.0
    %5393 = vmatpush1.msra.mxu0 0.0
    %5394 = vmatprep.subr.mxu0 0.0
    %5395 = vmatpush1.msra.mxu0 0.0
    %5396 = vmatprep.subr.mxu0 0.0
    %5397 = vmatpush1.msra.mxu0 0.0
    %5398 = vmatprep.subr.mxu0 0.0
    %5399 = vmatpush1.msra.mxu0 0.0
    %5400 = vmatprep.subr.mxu0 0.0
    %5401 = vmatpush1.msra.mxu0 0.0
    %5402 = vmatprep.subr.mxu0 0.0
    %5403 = vmatpush1.msra.mxu0 %v5370
    %5404 = vmatprep.subr.mxu0 0.0
    %5405 = vmatpush2.msra.mxu0 0.0
    %5406 = vmatprep.subr.mxu0 0.0
    %5407 = vmatpush2.msra.mxu0 0.0
    %5408 = vmatprep.subr.mxu0 0.0
    %5409 = vmatpush2.msra.mxu0 0.0
    %5410 = vmatprep.subr.mxu0 0.0
    %5411 = vmatpush2.msra.mxu0 0.0
    %5412 = vmatprep.subr.mxu0 0.0
    %5413 = vmatpush2.msra.mxu0 0.0
    %5414 = vmatprep.subr.mxu0 0.0
    %5415 = vmatpush2.msra.mxu0 0.0
    %5416 = vmatprep.subr.mxu0 0.0
    %5417 = vmatpush2.msra.mxu0 0.0
    %5418 = vmatprep.subr.mxu0 0.0
    %5419 = vmatpush2.msra.mxu0 0.0
    %5420 = vmatprep.subr.mxu0 0.0
    %5421 = vmatpush2.msra.mxu0 0.0
    %5422 = vmatprep.subr.mxu0 0.0
    %5423 = vmatpush2.msra.mxu0 0.0
    %5424 = vmatprep.subr.mxu0 0.0
    %5425 = vmatpush2.msra.mxu0 0.0
    %5426 = vmatprep.subr.mxu0 0.0
    %5427 = vmatpush2.msra.mxu0 0.0
    %5428 = vmatprep.subr.mxu0 0.0
    %5429 = vmatpush2.msra.mxu0 0.0
    %5430 = vmatprep.subr.mxu0 0.0
    %5431 = vmatpush2.msra.mxu0 0.0
    %5432 = vmatprep.subr.mxu0 0.0
    %5433 = vmatpush2.msra.mxu0 0.0
    %5434 = vmatprep.subr.mxu0 0.0
    %5435 = vmatpush2.msra.mxu0 0.0
    %5436 = vmatprep.mubr.f32.mxu0 0.0
    %5437 = vmatmul.mubr.f32.gmra.mxu0 %v5366
    %v5438 = vpop.f32.mrf.mxu0
    %v5439 = vadd.f32 0.0, %v5438
    %v5440 = vpop.f32.mrf.mxu0
    %5441 = vdwg.mxu0
    %vm5442 = vcmask 61440
    %5443 = vst.msk [vmem:[#allocation2] sm:$0x1f] %vm5442, %v5439
    %5444 = vrot.lane.b32.xlu0 %v5261, 120
    %v5445 = vpop.permute.xlu0 %5444
    %5446 = vrot.lane.b32.xlu0 %v5261, 56
    %v5447 = vpop.permute.xlu0 %5446
    %v5448 = vsel %vm666, %v5445, 0
    %v5450 = vsel %vm666, %v5447, 0
    %5452 = vmatprep.subr.mxu0 0.0
    %5453 = vmatpush1.xpose.msra.mxu0 0.0
    %5454 = vmatprep.subr.mxu0 0.0
    %5455 = vmatpush1.xpose.msra.mxu0 0.0
    %5456 = vmatprep.subr.mxu0 0.0
    %5457 = vmatpush1.xpose.msra.mxu0 0.0
    %5458 = vmatprep.subr.mxu0 0.0
    %5459 = vmatpush1.xpose.msra.mxu0 0.0
    %5460 = vmatprep.subr.mxu0 0.0
    %5461 = vmatpush1.xpose.msra.mxu0 0.0
    %5462 = vmatprep.subr.mxu0 0.0
    %5463 = vmatpush1.xpose.msra.mxu0 0.0
    %5464 = vmatprep.subr.mxu0 0.0
    %5465 = vmatpush1.xpose.msra.mxu0 0.0
    %5466 = vmatprep.subr.mxu0 0.0
    %5467 = vmatpush1.xpose.msra.mxu0 0.0
    %5468 = vmatprep.subr.mxu0 0.0
    %5469 = vmatpush1.xpose.msra.mxu0 0.0
    %5470 = vmatprep.subr.mxu0 0.0
    %5471 = vmatpush1.xpose.msra.mxu0 0.0
    %5472 = vmatprep.subr.mxu0 0.0
    %5473 = vmatpush1.xpose.msra.mxu0 0.0
    %5474 = vmatprep.subr.mxu0 0.0
    %5475 = vmatpush1.xpose.msra.mxu0 0.0
    %5476 = vmatprep.subr.mxu0 0.0
    %5477 = vmatpush1.xpose.msra.mxu0 0.0
    %5478 = vmatprep.subr.mxu0 0.0
    %5479 = vmatpush1.xpose.msra.mxu0 0.0
    %5480 = vmatprep.subr.mxu0 0.0
    %5481 = vmatpush1.xpose.msra.mxu0 0.0
    %5482 = vmatprep.subr.mxu0 0.0
    %5483 = vmatpush1.xpose.msra.mxu0 %v5450
    %5484 = vmatprep.subr.mxu0 0.0
    %5485 = vmatpush2.xpose.msra.mxu0 0.0
    %5486 = vmatprep.subr.mxu0 0.0
    %5487 = vmatpush2.xpose.msra.mxu0 0.0
    %5488 = vmatprep.subr.mxu0 0.0
    %5489 = vmatpush2.xpose.msra.mxu0 0.0
    %5490 = vmatprep.subr.mxu0 0.0
    %5491 = vmatpush2.xpose.msra.mxu0 0.0
    %5492 = vmatprep.subr.mxu0 0.0
    %5493 = vmatpush2.xpose.msra.mxu0 0.0
    %5494 = vmatprep.subr.mxu0 0.0
    %5495 = vmatpush2.xpose.msra.mxu0 0.0
    %5496 = vmatprep.subr.mxu0 0.0
    %5497 = vmatpush2.xpose.msra.mxu0 0.0
    %5498 = vmatprep.subr.mxu0 0.0
    %5499 = vmatpush2.xpose.msra.mxu0 0.0
    %5500 = vmatprep.subr.mxu0 0.0
    %5501 = vmatpush2.xpose.msra.mxu0 0.0
    %5502 = vmatprep.subr.mxu0 0.0
    %5503 = vmatpush2.xpose.msra.mxu0 0.0
    %5504 = vmatprep.subr.mxu0 0.0
    %5505 = vmatpush2.xpose.msra.mxu0 0.0
    %5506 = vmatprep.subr.mxu0 0.0
    %5507 = vmatpush2.xpose.msra.mxu0 0.0
    %5508 = vmatprep.subr.mxu0 0.0
    %5509 = vmatpush2.xpose.msra.mxu0 0.0
    %5510 = vmatprep.subr.mxu0 0.0
    %5511 = vmatpush2.xpose.msra.mxu0 0.0
    %5512 = vmatprep.subr.mxu0 0.0
    %5513 = vmatpush2.xpose.msra.mxu0 0.0
    %5514 = vmatprep.subr.mxu0 0.0
    %5515 = vmatpush2.xpose.msra.mxu0 0.0
    %5516 = vmatprep.mubr.f32.mxu0 0.0
    %5517 = vmatmul.mubr.f32.gmra.mxu0 %v5448
    %v5518 = vpop.f32.mrf.mxu0
    %v5519 = vadd.f32 0.0, %v5518
    %v5520 = vpop.f32.mrf.mxu0
    %5521 = vdwg.mxu0
    %v5522 = vmul.f32 %v5519, 0.35355338
    %v5523 = vsel %vm5352, %v5522, -inf
    %5524 = vmax.xlane.f32.xlu0 %v5523
    %v5525 = vpop.xlane.xlu0 %5524
    %v5526 = vsub.f32 %v5522, %v5525
    %v5527 = vmul.f32 %v5526, 1.442695
    %v5528 = vpow.pop %v5527
    %v5529 = vsel %vm5352, %v5528, 0.0
    %5530 = vadd.xlane.f32.xlu0 %v5529
    %v5531 = vpop.xlane.xlu0 %5530
    %v5532 = vrcp.pop %v5531
    %v5533 = vmul.f32 %v5528, %v5532
    %5534 = vrot.lane.b32.xlu0 %v5263, 120
    %v5535 = vpop.permute.xlu0 %5534
    %v5537 = vsel %vm5364, %v5533, 0
    %v5539 = vsel %vm5368, %v5535, 0
    %5541 = vmatprep.subr.mxu0 0.0
    %5542 = vmatpush1.msra.mxu0 0.0
    %5543 = vmatprep.subr.mxu0 0.0
    %5544 = vmatpush1.msra.mxu0 0.0
    %5545 = vmatprep.subr.mxu0 0.0
    %5546 = vmatpush1.msra.mxu0 0.0
    %5547 = vmatprep.subr.mxu0 0.0
    %5548 = vmatpush1.msra.mxu0 0.0
    %5549 = vmatprep.subr.mxu0 0.0
    %5550 = vmatpush1.msra.mxu0 0.0
    %5551 = vmatprep.subr.mxu0 0.0
    %5552 = vmatpush1.msra.mxu0 0.0
    %5553 = vmatprep.subr.mxu0 0.0
    %5554 = vmatpush1.msra.mxu0 0.0
    %5555 = vmatprep.subr.mxu0 0.0
    %5556 = vmatpush1.msra.mxu0 0.0
    %5557 = vmatprep.subr.mxu0 0.0
    %5558 = vmatpush1.msra.mxu0 0.0
    %5559 = vmatprep.subr.mxu0 0.0
    %5560 = vmatpush1.msra.mxu0 0.0
    %5561 = vmatprep.subr.mxu0 0.0
    %5562 = vmatpush1.msra.mxu0 0.0
    %5563 = vmatprep.subr.mxu0 0.0
    %5564 = vmatpush1.msra.mxu0 0.0
    %5565 = vmatprep.subr.mxu0 0.0
    %5566 = vmatpush1.msra.mxu0 0.0
    %5567 = vmatprep.subr.mxu0 0.0
    %5568 = vmatpush1.msra.mxu0 0.0
    %5569 = vmatprep.subr.mxu0 0.0
    %5570 = vmatpush1.msra.mxu0 0.0
    %5571 = vmatprep.subr.mxu0 0.0
    %5572 = vmatpush1.msra.mxu0 %v5539
    %5573 = vmatprep.subr.mxu0 0.0
    %5574 = vmatpush2.msra.mxu0 0.0
    %5575 = vmatprep.subr.mxu0 0.0
    %5576 = vmatpush2.msra.mxu0 0.0
    %5577 = vmatprep.subr.mxu0 0.0
    %5578 = vmatpush2.msra.mxu0 0.0
    %5579 = vmatprep.subr.mxu0 0.0
    %5580 = vmatpush2.msra.mxu0 0.0
    %5581 = vmatprep.subr.mxu0 0.0
    %5582 = vmatpush2.msra.mxu0 0.0
    %5583 = vmatprep.subr.mxu0 0.0
    %5584 = vmatpush2.msra.mxu0 0.0
    %5585 = vmatprep.subr.mxu0 0.0
    %5586 = vmatpush2.msra.mxu0 0.0
    %5587 = vmatprep.subr.mxu0 0.0
    %5588 = vmatpush2.msra.mxu0 0.0
    %5589 = vmatprep.subr.mxu0 0.0
    %5590 = vmatpush2.msra.mxu0 0.0
    %5591 = vmatprep.subr.mxu0 0.0
    %5592 = vmatpush2.msra.mxu0 0.0
    %5593 = vmatprep.subr.mxu0 0.0
    %5594 = vmatpush2.msra.mxu0 0.0
    %5595 = vmatprep.subr.mxu0 0.0
    %5596 = vmatpush2.msra.mxu0 0.0
    %5597 = vmatprep.subr.mxu0 0.0
    %5598 = vmatpush2.msra.mxu0 0.0
    %5599 = vmatprep.subr.mxu0 0.0
    %5600 = vmatpush2.msra.mxu0 0.0
    %5601 = vmatprep.subr.mxu0 0.0
    %5602 = vmatpush2.msra.mxu0 0.0
    %5603 = vmatprep.subr.mxu0 0.0
    %5604 = vmatpush2.msra.mxu0 0.0
    %5605 = vmatprep.mubr.f32.mxu0 0.0
    %5606 = vmatmul.mubr.f32.gmra.mxu0 %v5537
    %v5607 = vpop.f32.mrf.mxu0
    %v5608 = vadd.f32 0.0, %v5607
    %v5609 = vpop.f32.mrf.mxu0
    %5610 = vdwg.mxu0
    %5612 = vrot.lane.b32.xlu0 %v5608, 8
    %v5613 = vpop.permute.xlu0 %5612
    %vm5615 = vcmask 127040
    %5616 = vst.msk [vmem:[#allocation2] sm:$0x1f] %vm5615, %v5613
    %5617 = vrot.lane.b32.xlu0 %v5261, 112
    %v5618 = vpop.permute.xlu0 %5617
    %5619 = vrot.lane.b32.xlu0 %v5261, 48
    %v5620 = vpop.permute.xlu0 %5619
    %v5621 = vsel %vm666, %v5618, 0
    %v5623 = vsel %vm666, %v5620, 0
    %5625 = vmatprep.subr.mxu0 0.0
    %5626 = vmatpush1.xpose.msra.mxu0 0.0
    %5627 = vmatprep.subr.mxu0 0.0
    %5628 = vmatpush1.xpose.msra.mxu0 0.0
    %5629 = vmatprep.subr.mxu0 0.0
    %5630 = vmatpush1.xpose.msra.mxu0 0.0
    %5631 = vmatprep.subr.mxu0 0.0
    %5632 = vmatpush1.xpose.msra.mxu0 0.0
    %5633 = vmatprep.subr.mxu0 0.0
    %5634 = vmatpush1.xpose.msra.mxu0 0.0
    %5635 = vmatprep.subr.mxu0 0.0
    %5636 = vmatpush1.xpose.msra.mxu0 0.0
    %5637 = vmatprep.subr.mxu0 0.0
    %5638 = vmatpush1.xpose.msra.mxu0 0.0
    %5639 = vmatprep.subr.mxu0 0.0
    %5640 = vmatpush1.xpose.msra.mxu0 0.0
    %5641 = vmatprep.subr.mxu0 0.0
    %5642 = vmatpush1.xpose.msra.mxu0 0.0
    %5643 = vmatprep.subr.mxu0 0.0
    %5644 = vmatpush1.xpose.msra.mxu0 0.0
    %5645 = vmatprep.subr.mxu0 0.0
    %5646 = vmatpush1.xpose.msra.mxu0 0.0
    %5647 = vmatprep.subr.mxu0 0.0
    %5648 = vmatpush1.xpose.msra.mxu0 0.0
    %5649 = vmatprep.subr.mxu0 0.0
    %5650 = vmatpush1.xpose.msra.mxu0 0.0
    %5651 = vmatprep.subr.mxu0 0.0
    %5652 = vmatpush1.xpose.msra.mxu0 0.0
    %5653 = vmatprep.subr.mxu0 0.0
    %5654 = vmatpush1.xpose.msra.mxu0 0.0
    %5655 = vmatprep.subr.mxu0 0.0
    %5656 = vmatpush1.xpose.msra.mxu0 %v5623
    %5657 = vmatprep.subr.mxu0 0.0
    %5658 = vmatpush2.xpose.msra.mxu0 0.0
    %5659 = vmatprep.subr.mxu0 0.0
    %5660 = vmatpush2.xpose.msra.mxu0 0.0
    %5661 = vmatprep.subr.mxu0 0.0
    %5662 = vmatpush2.xpose.msra.mxu0 0.0
    %5663 = vmatprep.subr.mxu0 0.0
    %5664 = vmatpush2.xpose.msra.mxu0 0.0
    %5665 = vmatprep.subr.mxu0 0.0
    %5666 = vmatpush2.xpose.msra.mxu0 0.0
    %5667 = vmatprep.subr.mxu0 0.0
    %5668 = vmatpush2.xpose.msra.mxu0 0.0
    %5669 = vmatprep.subr.mxu0 0.0
    %5670 = vmatpush2.xpose.msra.mxu0 0.0
    %5671 = vmatprep.subr.mxu0 0.0
    %5672 = vmatpush2.xpose.msra.mxu0 0.0
    %5673 = vmatprep.subr.mxu0 0.0
    %5674 = vmatpush2.xpose.msra.mxu0 0.0
    %5675 = vmatprep.subr.mxu0 0.0
    %5676 = vmatpush2.xpose.msra.mxu0 0.0
    %5677 = vmatprep.subr.mxu0 0.0
    %5678 = vmatpush2.xpose.msra.mxu0 0.0
    %5679 = vmatprep.subr.mxu0 0.0
    %5680 = vmatpush2.xpose.msra.mxu0 0.0
    %5681 = vmatprep.subr.mxu0 0.0
    %5682 = vmatpush2.xpose.msra.mxu0 0.0
    %5683 = vmatprep.subr.mxu0 0.0
    %5684 = vmatpush2.xpose.msra.mxu0 0.0
    %5685 = vmatprep.subr.mxu0 0.0
    %5686 = vmatpush2.xpose.msra.mxu0 0.0
    %5687 = vmatprep.subr.mxu0 0.0
    %5688 = vmatpush2.xpose.msra.mxu0 0.0
    %5689 = vmatprep.mubr.f32.mxu0 0.0
    %5690 = vmatmul.mubr.f32.gmra.mxu0 %v5621
    %v5691 = vpop.f32.mrf.mxu0
    %v5692 = vadd.f32 0.0, %v5691
    %v5693 = vpop.f32.mrf.mxu0
    %5694 = vdwg.mxu0
    %v5695 = vmul.f32 %v5692, 0.35355338
    %v5696 = vsel %vm5352, %v5695, -inf
    %5697 = vmax.xlane.f32.xlu0 %v5696
    %v5698 = vpop.xlane.xlu0 %5697
    %v5699 = vsub.f32 %v5695, %v5698
    %v5700 = vmul.f32 %v5699, 1.442695
    %v5701 = vpow.pop %v5700
    %v5702 = vsel %vm5352, %v5701, 0.0
    %5703 = vadd.xlane.f32.xlu0 %v5702
    %v5704 = vpop.xlane.xlu0 %5703
    %v5705 = vrcp.pop %v5704
    %v5706 = vmul.f32 %v5701, %v5705
    %5707 = vrot.lane.b32.xlu0 %v5263, 112
    %v5708 = vpop.permute.xlu0 %5707
    %v5710 = vsel %vm5364, %v5706, 0
    %v5712 = vsel %vm5368, %v5708, 0
    %5714 = vmatprep.subr.mxu0 0.0
    %5715 = vmatpush1.msra.mxu0 0.0
    %5716 = vmatprep.subr.mxu0 0.0
    %5717 = vmatpush1.msra.mxu0 0.0
    %5718 = vmatprep.subr.mxu0 0.0
    %5719 = vmatpush1.msra.mxu0 0.0
    %5720 = vmatprep.subr.mxu0 0.0
    %5721 = vmatpush1.msra.mxu0 0.0
    %5722 = vmatprep.subr.mxu0 0.0
    %5723 = vmatpush1.msra.mxu0 0.0
    %5724 = vmatprep.subr.mxu0 0.0
    %5725 = vmatpush1.msra.mxu0 0.0
    %5726 = vmatprep.subr.mxu0 0.0
    %5727 = vmatpush1.msra.mxu0 0.0
    %5728 = vmatprep.subr.mxu0 0.0
    %5729 = vmatpush1.msra.mxu0 0.0
    %5730 = vmatprep.subr.mxu0 0.0
    %5731 = vmatpush1.msra.mxu0 0.0
    %5732 = vmatprep.subr.mxu0 0.0
    %5733 = vmatpush1.msra.mxu0 0.0
    %5734 = vmatprep.subr.mxu0 0.0
    %5735 = vmatpush1.msra.mxu0 0.0
    %5736 = vmatprep.subr.mxu0 0.0
    %5737 = vmatpush1.msra.mxu0 0.0
    %5738 = vmatprep.subr.mxu0 0.0
    %5739 = vmatpush1.msra.mxu0 0.0
    %5740 = vmatprep.subr.mxu0 0.0
    %5741 = vmatpush1.msra.mxu0 0.0
    %5742 = vmatprep.subr.mxu0 0.0
    %5743 = vmatpush1.msra.mxu0 0.0
    %5744 = vmatprep.subr.mxu0 0.0
    %5745 = vmatpush1.msra.mxu0 %v5712
    %5746 = vmatprep.subr.mxu0 0.0
    %5747 = vmatpush2.msra.mxu0 0.0
    %5748 = vmatprep.subr.mxu0 0.0
    %5749 = vmatpush2.msra.mxu0 0.0
    %5750 = vmatprep.subr.mxu0 0.0
    %5751 = vmatpush2.msra.mxu0 0.0
    %5752 = vmatprep.subr.mxu0 0.0
    %5753 = vmatpush2.msra.mxu0 0.0
    %5754 = vmatprep.subr.mxu0 0.0
    %5755 = vmatpush2.msra.mxu0 0.0
    %5756 = vmatprep.subr.mxu0 0.0
    %5757 = vmatpush2.msra.mxu0 0.0
    %5758 = vmatprep.subr.mxu0 0.0
    %5759 = vmatpush2.msra.mxu0 0.0
    %5760 = vmatprep.subr.mxu0 0.0
    %5761 = vmatpush2.msra.mxu0 0.0
    %5762 = vmatprep.subr.mxu0 0.0
    %5763 = vmatpush2.msra.mxu0 0.0
    %5764 = vmatprep.subr.mxu0 0.0
    %5765 = vmatpush2.msra.mxu0 0.0
    %5766 = vmatprep.subr.mxu0 0.0
    %5767 = vmatpush2.msra.mxu0 0.0
    %5768 = vmatprep.subr.mxu0 0.0
    %5769 = vmatpush2.msra.mxu0 0.0
    %5770 = vmatprep.subr.mxu0 0.0
    %5771 = vmatpush2.msra.mxu0 0.0
    %5772 = vmatprep.subr.mxu0 0.0
    %5773 = vmatpush2.msra.mxu0 0.0
    %5774 = vmatprep.subr.mxu0 0.0
    %5775 = vmatpush2.msra.mxu0 0.0
    %5776 = vmatprep.subr.mxu0 0.0
    %5777 = vmatpush2.msra.mxu0 0.0
    %5778 = vmatprep.mubr.f32.mxu0 0.0
    %5779 = vmatmul.mubr.f32.gmra.mxu0 %v5710
    %v5780 = vpop.f32.mrf.mxu0
    %v5781 = vadd.f32 0.0, %v5780
    %v5782 = vpop.f32.mrf.mxu0
    %5783 = vdwg.mxu0
    %5785 = vrot.lane.b32.xlu0 %v5781, 16
    %v5786 = vpop.permute.xlu0 %5785
    %vm5788 = vcmask 192640
    %5789 = vst.msk [vmem:[#allocation2] sm:$0x1f] %vm5788, %v5786
    %5790 = vrot.lane.b32.xlu0 %v5261, 104
    %v5791 = vpop.permute.xlu0 %5790
    %5792 = vrot.lane.b32.xlu0 %v5261, 40
    %v5793 = vpop.permute.xlu0 %5792
    %v5794 = vsel %vm666, %v5791, 0
    %v5796 = vsel %vm666, %v5793, 0
    %5798 = vmatprep.subr.mxu0 0.0
    %5799 = vmatpush1.xpose.msra.mxu0 0.0
    %5800 = vmatprep.subr.mxu0 0.0
    %5801 = vmatpush1.xpose.msra.mxu0 0.0
    %5802 = vmatprep.subr.mxu0 0.0
    %5803 = vmatpush1.xpose.msra.mxu0 0.0
    %5804 = vmatprep.subr.mxu0 0.0
    %5805 = vmatpush1.xpose.msra.mxu0 0.0
    %5806 = vmatprep.subr.mxu0 0.0
    %5807 = vmatpush1.xpose.msra.mxu0 0.0
    %5808 = vmatprep.subr.mxu0 0.0
    %5809 = vmatpush1.xpose.msra.mxu0 0.0
    %5810 = vmatprep.subr.mxu0 0.0
    %5811 = vmatpush1.xpose.msra.mxu0 0.0
    %5812 = vmatprep.subr.mxu0 0.0
    %5813 = vmatpush1.xpose.msra.mxu0 0.0
    %5814 = vmatprep.subr.mxu0 0.0
    %5815 = vmatpush1.xpose.msra.mxu0 0.0
    %5816 = vmatprep.subr.mxu0 0.0
    %5817 = vmatpush1.xpose.msra.mxu0 0.0
    %5818 = vmatprep.subr.mxu0 0.0
    %5819 = vmatpush1.xpose.msra.mxu0 0.0
    %5820 = vmatprep.subr.mxu0 0.0
    %5821 = vmatpush1.xpose.msra.mxu0 0.0
    %5822 = vmatprep.subr.mxu0 0.0
    %5823 = vmatpush1.xpose.msra.mxu0 0.0
    %5824 = vmatprep.subr.mxu0 0.0
    %5825 = vmatpush1.xpose.msra.mxu0 0.0
    %5826 = vmatprep.subr.mxu0 0.0
    %5827 = vmatpush1.xpose.msra.mxu0 0.0
    %5828 = vmatprep.subr.mxu0 0.0
    %5829 = vmatpush1.xpose.msra.mxu0 %v5796
    %5830 = vmatprep.subr.mxu0 0.0
    %5831 = vmatpush2.xpose.msra.mxu0 0.0
    %5832 = vmatprep.subr.mxu0 0.0
    %5833 = vmatpush2.xpose.msra.mxu0 0.0
    %5834 = vmatprep.subr.mxu0 0.0
    %5835 = vmatpush2.xpose.msra.mxu0 0.0
    %5836 = vmatprep.subr.mxu0 0.0
    %5837 = vmatpush2.xpose.msra.mxu0 0.0
    %5838 = vmatprep.subr.mxu0 0.0
    %5839 = vmatpush2.xpose.msra.mxu0 0.0
    %5840 = vmatprep.subr.mxu0 0.0
    %5841 = vmatpush2.xpose.msra.mxu0 0.0
    %5842 = vmatprep.subr.mxu0 0.0
    %5843 = vmatpush2.xpose.msra.mxu0 0.0
    %5844 = vmatprep.subr.mxu0 0.0
    %5845 = vmatpush2.xpose.msra.mxu0 0.0
    %5846 = vmatprep.subr.mxu0 0.0
    %5847 = vmatpush2.xpose.msra.mxu0 0.0
    %5848 = vmatprep.subr.mxu0 0.0
    %5849 = vmatpush2.xpose.msra.mxu0 0.0
    %5850 = vmatprep.subr.mxu0 0.0
    %5851 = vmatpush2.xpose.msra.mxu0 0.0
    %5852 = vmatprep.subr.mxu0 0.0
    %5853 = vmatpush2.xpose.msra.mxu0 0.0
    %5854 = vmatprep.subr.mxu0 0.0
    %5855 = vmatpush2.xpose.msra.mxu0 0.0
    %5856 = vmatprep.subr.mxu0 0.0
    %5857 = vmatpush2.xpose.msra.mxu0 0.0
    %5858 = vmatprep.subr.mxu0 0.0
    %5859 = vmatpush2.xpose.msra.mxu0 0.0
    %5860 = vmatprep.subr.mxu0 0.0
    %5861 = vmatpush2.xpose.msra.mxu0 0.0
    %5862 = vmatprep.mubr.f32.mxu0 0.0
    %5863 = vmatmul.mubr.f32.gmra.mxu0 %v5794
    %v5864 = vpop.f32.mrf.mxu0
    %v5865 = vadd.f32 0.0, %v5864
    %v5866 = vpop.f32.mrf.mxu0
    %5867 = vdwg.mxu0
    %v5868 = vmul.f32 %v5865, 0.35355338
    %v5869 = vsel %vm5352, %v5868, -inf
    %5870 = vmax.xlane.f32.xlu0 %v5869
    %v5871 = vpop.xlane.xlu0 %5870
    %v5872 = vsub.f32 %v5868, %v5871
    %v5873 = vmul.f32 %v5872, 1.442695
    %v5874 = vpow.pop %v5873
    %v5875 = vsel %vm5352, %v5874, 0.0
    %5876 = vadd.xlane.f32.xlu0 %v5875
    %v5877 = vpop.xlane.xlu0 %5876
    %v5878 = vrcp.pop %v5877
    %v5879 = vmul.f32 %v5874, %v5878
    %5880 = vrot.lane.b32.xlu0 %v5263, 104
    %v5881 = vpop.permute.xlu0 %5880
    %v5883 = vsel %vm5364, %v5879, 0
    %v5885 = vsel %vm5368, %v5881, 0
    %5887 = vmatprep.subr.mxu0 0.0
    %5888 = vmatpush1.msra.mxu0 0.0
    %5889 = vmatprep.subr.mxu0 0.0
    %5890 = vmatpush1.msra.mxu0 0.0
    %5891 = vmatprep.subr.mxu0 0.0
    %5892 = vmatpush1.msra.mxu0 0.0
    %5893 = vmatprep.subr.mxu0 0.0
    %5894 = vmatpush1.msra.mxu0 0.0
    %5895 = vmatprep.subr.mxu0 0.0
    %5896 = vmatpush1.msra.mxu0 0.0
    %5897 = vmatprep.subr.mxu0 0.0
    %5898 = vmatpush1.msra.mxu0 0.0
    %5899 = vmatprep.subr.mxu0 0.0
    %5900 = vmatpush1.msra.mxu0 0.0
    %5901 = vmatprep.subr.mxu0 0.0
    %5902 = vmatpush1.msra.mxu0 0.0
    %5903 = vmatprep.subr.mxu0 0.0
    %5904 = vmatpush1.msra.mxu0 0.0
    %5905 = vmatprep.subr.mxu0 0.0
    %5906 = vmatpush1.msra.mxu0 0.0
    %5907 = vmatprep.subr.mxu0 0.0
    %5908 = vmatpush1.msra.mxu0 0.0
    %5909 = vmatprep.subr.mxu0 0.0
    %5910 = vmatpush1.msra.mxu0 0.0
    %5911 = vmatprep.subr.mxu0 0.0
    %5912 = vmatpush1.msra.mxu0 0.0
    %5913 = vmatprep.subr.mxu0 0.0
    %5914 = vmatpush1.msra.mxu0 0.0
    %5915 = vmatprep.subr.mxu0 0.0
    %5916 = vmatpush1.msra.mxu0 0.0
    %5917 = vmatprep.subr.mxu0 0.0
    %5918 = vmatpush1.msra.mxu0 %v5885
    %5919 = vmatprep.subr.mxu0 0.0
    %5920 = vmatpush2.msra.mxu0 0.0
    %5921 = vmatprep.subr.mxu0 0.0
    %5922 = vmatpush2.msra.mxu0 0.0
    %5923 = vmatprep.subr.mxu0 0.0
    %5924 = vmatpush2.msra.mxu0 0.0
    %5925 = vmatprep.subr.mxu0 0.0
    %5926 = vmatpush2.msra.mxu0 0.0
    %5927 = vmatprep.subr.mxu0 0.0
    %5928 = vmatpush2.msra.mxu0 0.0
    %5929 = vmatprep.subr.mxu0 0.0
    %5930 = vmatpush2.msra.mxu0 0.0
    %5931 = vmatprep.subr.mxu0 0.0
    %5932 = vmatpush2.msra.mxu0 0.0
    %5933 = vmatprep.subr.mxu0 0.0
    %5934 = vmatpush2.msra.mxu0 0.0
    %5935 = vmatprep.subr.mxu0 0.0
    %5936 = vmatpush2.msra.mxu0 0.0
    %5937 = vmatprep.subr.mxu0 0.0
    %5938 = vmatpush2.msra.mxu0 0.0
    %5939 = vmatprep.subr.mxu0 0.0
    %5940 = vmatpush2.msra.mxu0 0.0
    %5941 = vmatprep.subr.mxu0 0.0
    %5942 = vmatpush2.msra.mxu0 0.0
    %5943 = vmatprep.subr.mxu0 0.0
    %5944 = vmatpush2.msra.mxu0 0.0
    %5945 = vmatprep.subr.mxu0 0.0
    %5946 = vmatpush2.msra.mxu0 0.0
    %5947 = vmatprep.subr.mxu0 0.0
    %5948 = vmatpush2.msra.mxu0 0.0
    %5949 = vmatprep.subr.mxu0 0.0
    %5950 = vmatpush2.msra.mxu0 0.0
    %5951 = vmatprep.mubr.f32.mxu0 0.0
    %5952 = vmatmul.mubr.f32.gmra.mxu0 %v5883
    %v5953 = vpop.f32.mrf.mxu0
    %v5954 = vadd.f32 0.0, %v5953
    %v5955 = vpop.f32.mrf.mxu0
    %5956 = vdwg.mxu0
    %5958 = vrot.lane.b32.xlu0 %v5954, 24
    %v5959 = vpop.permute.xlu0 %5958
    %vm5961 = vcmask 258240
    %5962 = vst.msk [vmem:[#allocation2] sm:$0x1f] %vm5961, %v5959
    %5963 = vrot.lane.b32.xlu0 %v5261, 96
    %v5964 = vpop.permute.xlu0 %5963
    %5965 = vrot.lane.b32.xlu0 %v5261, 32
    %v5966 = vpop.permute.xlu0 %5965
    %v5967 = vsel %vm666, %v5964, 0
    %v5969 = vsel %vm666, %v5966, 0
    %5971 = vmatprep.subr.mxu0 0.0
    %5972 = vmatpush1.xpose.msra.mxu0 0.0
    %5973 = vmatprep.subr.mxu0 0.0
    %5974 = vmatpush1.xpose.msra.mxu0 0.0
    %5975 = vmatprep.subr.mxu0 0.0
    %5976 = vmatpush1.xpose.msra.mxu0 0.0
    %5977 = vmatprep.subr.mxu0 0.0
    %5978 = vmatpush1.xpose.msra.mxu0 0.0
    %5979 = vmatprep.subr.mxu0 0.0
    %5980 = vmatpush1.xpose.msra.mxu0 0.0
    %5981 = vmatprep.subr.mxu0 0.0
    %5982 = vmatpush1.xpose.msra.mxu0 0.0
    %5983 = vmatprep.subr.mxu0 0.0
    %5984 = vmatpush1.xpose.msra.mxu0 0.0
    %5985 = vmatprep.subr.mxu0 0.0
    %5986 = vmatpush1.xpose.msra.mxu0 0.0
    %5987 = vmatprep.subr.mxu0 0.0
    %5988 = vmatpush1.xpose.msra.mxu0 0.0
    %5989 = vmatprep.subr.mxu0 0.0
    %5990 = vmatpush1.xpose.msra.mxu0 0.0
    %5991 = vmatprep.subr.mxu0 0.0
    %5992 = vmatpush1.xpose.msra.mxu0 0.0
    %5993 = vmatprep.subr.mxu0 0.0
    %5994 = vmatpush1.xpose.msra.mxu0 0.0
    %5995 = vmatprep.subr.mxu0 0.0
    %5996 = vmatpush1.xpose.msra.mxu0 0.0
    %5997 = vmatprep.subr.mxu0 0.0
    %5998 = vmatpush1.xpose.msra.mxu0 0.0
    %5999 = vmatprep.subr.mxu0 0.0
    %6000 = vmatpush1.xpose.msra.mxu0 0.0
    %6001 = vmatprep.subr.mxu0 0.0
    %6002 = vmatpush1.xpose.msra.mxu0 %v5969
    %6003 = vmatprep.subr.mxu0 0.0
    %6004 = vmatpush2.xpose.msra.mxu0 0.0
    %6005 = vmatprep.subr.mxu0 0.0
    %6006 = vmatpush2.xpose.msra.mxu0 0.0
    %6007 = vmatprep.subr.mxu0 0.0
    %6008 = vmatpush2.xpose.msra.mxu0 0.0
    %6009 = vmatprep.subr.mxu0 0.0
    %6010 = vmatpush2.xpose.msra.mxu0 0.0
    %6011 = vmatprep.subr.mxu0 0.0
    %6012 = vmatpush2.xpose.msra.mxu0 0.0
    %6013 = vmatprep.subr.mxu0 0.0
    %6014 = vmatpush2.xpose.msra.mxu0 0.0
    %6015 = vmatprep.subr.mxu0 0.0
    %6016 = vmatpush2.xpose.msra.mxu0 0.0
    %6017 = vmatprep.subr.mxu0 0.0
    %6018 = vmatpush2.xpose.msra.mxu0 0.0
    %6019 = vmatprep.subr.mxu0 0.0
    %6020 = vmatpush2.xpose.msra.mxu0 0.0
    %6021 = vmatprep.subr.mxu0 0.0
    %6022 = vmatpush2.xpose.msra.mxu0 0.0
    %6023 = vmatprep.subr.mxu0 0.0
    %6024 = vmatpush2.xpose.msra.mxu0 0.0
    %6025 = vmatprep.subr.mxu0 0.0
    %6026 = vmatpush2.xpose.msra.mxu0 0.0
    %6027 = vmatprep.subr.mxu0 0.0
    %6028 = vmatpush2.xpose.msra.mxu0 0.0
    %6029 = vmatprep.subr.mxu0 0.0
    %6030 = vmatpush2.xpose.msra.mxu0 0.0
    %6031 = vmatprep.subr.mxu0 0.0
    %6032 = vmatpush2.xpose.msra.mxu0 0.0
    %6033 = vmatprep.subr.mxu0 0.0
    %6034 = vmatpush2.xpose.msra.mxu0 0.0
    %6035 = vmatprep.mubr.f32.mxu0 0.0
    %6036 = vmatmul.mubr.f32.gmra.mxu0 %v5967
    %v6037 = vpop.f32.mrf.mxu0
    %v6038 = vadd.f32 0.0, %v6037
    %v6039 = vpop.f32.mrf.mxu0
    %6040 = vdwg.mxu0
    %v6041 = vmul.f32 %v6038, 0.35355338
    %v6042 = vsel %vm5352, %v6041, -inf
    %6043 = vmax.xlane.f32.xlu0 %v6042
    %v6044 = vpop.xlane.xlu0 %6043
    %v6045 = vsub.f32 %v6041, %v6044
    %v6046 = vmul.f32 %v6045, 1.442695
    %v6047 = vpow.pop %v6046
    %v6048 = vsel %vm5352, %v6047, 0.0
    %6049 = vadd.xlane.f32.xlu0 %v6048
    %v6050 = vpop.xlane.xlu0 %6049
    %v6051 = vrcp.pop %v6050
    %v6052 = vmul.f32 %v6047, %v6051
    %6053 = vrot.lane.b32.xlu0 %v5263, 96
    %v6054 = vpop.permute.xlu0 %6053
    %v6056 = vsel %vm5364, %v6052, 0
    %v6058 = vsel %vm5368, %v6054, 0
    %6060 = vmatprep.subr.mxu0 0.0
    %6061 = vmatpush1.msra.mxu0 0.0
    %6062 = vmatprep.subr.mxu0 0.0
    %6063 = vmatpush1.msra.mxu0 0.0
    %6064 = vmatprep.subr.mxu0 0.0
    %6065 = vmatpush1.msra.mxu0 0.0
    %6066 = vmatprep.subr.mxu0 0.0
    %6067 = vmatpush1.msra.mxu0 0.0
    %6068 = vmatprep.subr.mxu0 0.0
    %6069 = vmatpush1.msra.mxu0 0.0
    %6070 = vmatprep.subr.mxu0 0.0
    %6071 = vmatpush1.msra.mxu0 0.0
    %6072 = vmatprep.subr.mxu0 0.0
    %6073 = vmatpush1.msra.mxu0 0.0
    %6074 = vmatprep.subr.mxu0 0.0
    %6075 = vmatpush1.msra.mxu0 0.0
    %6076 = vmatprep.subr.mxu0 0.0
    %6077 = vmatpush1.msra.mxu0 0.0
    %6078 = vmatprep.subr.mxu0 0.0
    %6079 = vmatpush1.msra.mxu0 0.0
    %6080 = vmatprep.subr.mxu0 0.0
    %6081 = vmatpush1.msra.mxu0 0.0
    %6082 = vmatprep.subr.mxu0 0.0
    %6083 = vmatpush1.msra.mxu0 0.0
    %6084 = vmatprep.subr.mxu0 0.0
    %6085 = vmatpush1.msra.mxu0 0.0
    %6086 = vmatprep.subr.mxu0 0.0
    %6087 = vmatpush1.msra.mxu0 0.0
    %6088 = vmatprep.subr.mxu0 0.0
    %6089 = vmatpush1.msra.mxu0 0.0
    %6090 = vmatprep.subr.mxu0 0.0
    %6091 = vmatpush1.msra.mxu0 %v6058
    %6092 = vmatprep.subr.mxu0 0.0
    %6093 = vmatpush2.msra.mxu0 0.0
    %6094 = vmatprep.subr.mxu0 0.0
    %6095 = vmatpush2.msra.mxu0 0.0
    %6096 = vmatprep.subr.mxu0 0.0
    %6097 = vmatpush2.msra.mxu0 0.0
    %6098 = vmatprep.subr.mxu0 0.0
    %6099 = vmatpush2.msra.mxu0 0.0
    %6100 = vmatprep.subr.mxu0 0.0
    %6101 = vmatpush2.msra.mxu0 0.0
    %6102 = vmatprep.subr.mxu0 0.0
    %6103 = vmatpush2.msra.mxu0 0.0
    %6104 = vmatprep.subr.mxu0 0.0
    %6105 = vmatpush2.msra.mxu0 0.0
    %6106 = vmatprep.subr.mxu0 0.0
    %6107 = vmatpush2.msra.mxu0 0.0
    %6108 = vmatprep.subr.mxu0 0.0
    %6109 = vmatpush2.msra.mxu0 0.0
    %6110 = vmatprep.subr.mxu0 0.0
    %6111 = vmatpush2.msra.mxu0 0.0
    %6112 = vmatprep.subr.mxu0 0.0
    %6113 = vmatpush2.msra.mxu0 0.0
    %6114 = vmatprep.subr.mxu0 0.0
    %6115 = vmatpush2.msra.mxu0 0.0
    %6116 = vmatprep.subr.mxu0 0.0
    %6117 = vmatpush2.msra.mxu0 0.0
    %6118 = vmatprep.subr.mxu0 0.0
    %6119 = vmatpush2.msra.mxu0 0.0
    %6120 = vmatprep.subr.mxu0 0.0
    %6121 = vmatpush2.msra.mxu0 0.0
    %6122 = vmatprep.subr.mxu0 0.0
    %6123 = vmatpush2.msra.mxu0 0.0
    %6124 = vmatprep.mubr.f32.mxu0 0.0
    %6125 = vmatmul.mubr.f32.gmra.mxu0 %v6056
    %v6126 = vpop.f32.mrf.mxu0
    %v6127 = vadd.f32 0.0, %v6126
    %v6128 = vpop.f32.mrf.mxu0
    %6129 = vdwg.mxu0
    %6131 = vrot.lane.b32.xlu0 %v6127, 32
    %v6132 = vpop.permute.xlu0 %6131
    %vm6134 = vcmask 323840
    %6135 = vst.msk [vmem:[#allocation2] sm:$0x1f] %vm6134, %v6132
    %6136 = vrot.lane.b32.xlu0 %v5261, 88
    %v6137 = vpop.permute.xlu0 %6136
    %6138 = vrot.lane.b32.xlu0 %v5261, 24
    %v6139 = vpop.permute.xlu0 %6138
    %v6140 = vsel %vm666, %v6137, 0
    %v6142 = vsel %vm666, %v6139, 0
    %6144 = vmatprep.subr.mxu0 0.0
    %6145 = vmatpush1.xpose.msra.mxu0 0.0
    %6146 = vmatprep.subr.mxu0 0.0
    %6147 = vmatpush1.xpose.msra.mxu0 0.0
    %6148 = vmatprep.subr.mxu0 0.0
    %6149 = vmatpush1.xpose.msra.mxu0 0.0
    %6150 = vmatprep.subr.mxu0 0.0
    %6151 = vmatpush1.xpose.msra.mxu0 0.0
    %6152 = vmatprep.subr.mxu0 0.0
    %6153 = vmatpush1.xpose.msra.mxu0 0.0
    %6154 = vmatprep.subr.mxu0 0.0
    %6155 = vmatpush1.xpose.msra.mxu0 0.0
    %6156 = vmatprep.subr.mxu0 0.0
    %6157 = vmatpush1.xpose.msra.mxu0 0.0
    %6158 = vmatprep.subr.mxu0 0.0
    %6159 = vmatpush1.xpose.msra.mxu0 0.0
    %6160 = vmatprep.subr.mxu0 0.0
    %6161 = vmatpush1.xpose.msra.mxu0 0.0
    %6162 = vmatprep.subr.mxu0 0.0
    %6163 = vmatpush1.xpose.msra.mxu0 0.0
    %6164 = vmatprep.subr.mxu0 0.0
    %6165 = vmatpush1.xpose.msra.mxu0 0.0
    %6166 = vmatprep.subr.mxu0 0.0
    %6167 = vmatpush1.xpose.msra.mxu0 0.0
    %6168 = vmatprep.subr.mxu0 0.0
    %6169 = vmatpush1.xpose.msra.mxu0 0.0
    %6170 = vmatprep.subr.mxu0 0.0
    %6171 = vmatpush1.xpose.msra.mxu0 0.0
    %6172 = vmatprep.subr.mxu0 0.0
    %6173 = vmatpush1.xpose.msra.mxu0 0.0
    %6174 = vmatprep.subr.mxu0 0.0
    %6175 = vmatpush1.xpose.msra.mxu0 %v6142
    %6176 = vmatprep.subr.mxu0 0.0
    %6177 = vmatpush2.xpose.msra.mxu0 0.0
    %6178 = vmatprep.subr.mxu0 0.0
    %6179 = vmatpush2.xpose.msra.mxu0 0.0
    %6180 = vmatprep.subr.mxu0 0.0
    %6181 = vmatpush2.xpose.msra.mxu0 0.0
    %6182 = vmatprep.subr.mxu0 0.0
    %6183 = vmatpush2.xpose.msra.mxu0 0.0
    %6184 = vmatprep.subr.mxu0 0.0
    %6185 = vmatpush2.xpose.msra.mxu0 0.0
    %6186 = vmatprep.subr.mxu0 0.0
    %6187 = vmatpush2.xpose.msra.mxu0 0.0
    %6188 = vmatprep.subr.mxu0 0.0
    %6189 = vmatpush2.xpose.msra.mxu0 0.0
    %6190 = vmatprep.subr.mxu0 0.0
    %6191 = vmatpush2.xpose.msra.mxu0 0.0
    %6192 = vmatprep.subr.mxu0 0.0
    %6193 = vmatpush2.xpose.msra.mxu0 0.0
    %6194 = vmatprep.subr.mxu0 0.0
    %6195 = vmatpush2.xpose.msra.mxu0 0.0
    %6196 = vmatprep.subr.mxu0 0.0
    %6197 = vmatpush2.xpose.msra.mxu0 0.0
    %6198 = vmatprep.subr.mxu0 0.0
    %6199 = vmatpush2.xpose.msra.mxu0 0.0
    %6200 = vmatprep.subr.mxu0 0.0
    %6201 = vmatpush2.xpose.msra.mxu0 0.0
    %6202 = vmatprep.subr.mxu0 0.0
    %6203 = vmatpush2.xpose.msra.mxu0 0.0
    %6204 = vmatprep.subr.mxu0 0.0
    %6205 = vmatpush2.xpose.msra.mxu0 0.0
    %6206 = vmatprep.subr.mxu0 0.0
    %6207 = vmatpush2.xpose.msra.mxu0 0.0
    %6208 = vmatprep.mubr.f32.mxu0 0.0
    %6209 = vmatmul.mubr.f32.gmra.mxu0 %v6140
    %v6210 = vpop.f32.mrf.mxu0
    %v6211 = vadd.f32 0.0, %v6210
    %v6212 = vpop.f32.mrf.mxu0
    %6213 = vdwg.mxu0
    %v6214 = vmul.f32 %v6211, 0.35355338
    %v6215 = vsel %vm5352, %v6214, -inf
    %6216 = vmax.xlane.f32.xlu0 %v6215
    %v6217 = vpop.xlane.xlu0 %6216
    %v6218 = vsub.f32 %v6214, %v6217
    %v6219 = vmul.f32 %v6218, 1.442695
    %v6220 = vpow.pop %v6219
    %v6221 = vsel %vm5352, %v6220, 0.0
    %6222 = vadd.xlane.f32.xlu0 %v6221
    %v6223 = vpop.xlane.xlu0 %6222
    %v6224 = vrcp.pop %v6223
    %v6225 = vmul.f32 %v6220, %v6224
    %6226 = vrot.lane.b32.xlu0 %v5263, 88
    %v6227 = vpop.permute.xlu0 %6226
    %v6229 = vsel %vm5364, %v6225, 0
    %v6231 = vsel %vm5368, %v6227, 0
    %6233 = vmatprep.subr.mxu0 0.0
    %6234 = vmatpush1.msra.mxu0 0.0
    %6235 = vmatprep.subr.mxu0 0.0
    %6236 = vmatpush1.msra.mxu0 0.0
    %6237 = vmatprep.subr.mxu0 0.0
    %6238 = vmatpush1.msra.mxu0 0.0
    %6239 = vmatprep.subr.mxu0 0.0
    %6240 = vmatpush1.msra.mxu0 0.0
    %6241 = vmatprep.subr.mxu0 0.0
    %6242 = vmatpush1.msra.mxu0 0.0
    %6243 = vmatprep.subr.mxu0 0.0
    %6244 = vmatpush1.msra.mxu0 0.0
    %6245 = vmatprep.subr.mxu0 0.0
    %6246 = vmatpush1.msra.mxu0 0.0
    %6247 = vmatprep.subr.mxu0 0.0
    %6248 = vmatpush1.msra.mxu0 0.0
    %6249 = vmatprep.subr.mxu0 0.0
    %6250 = vmatpush1.msra.mxu0 0.0
    %6251 = vmatprep.subr.mxu0 0.0
    %6252 = vmatpush1.msra.mxu0 0.0
    %6253 = vmatprep.subr.mxu0 0.0
    %6254 = vmatpush1.msra.mxu0 0.0
    %6255 = vmatprep.subr.mxu0 0.0
    %6256 = vmatpush1.msra.mxu0 0.0
    %6257 = vmatprep.subr.mxu0 0.0
    %6258 = vmatpush1.msra.mxu0 0.0
    %6259 = vmatprep.subr.mxu0 0.0
    %6260 = vmatpush1.msra.mxu0 0.0
    %6261 = vmatprep.subr.mxu0 0.0
    %6262 = vmatpush1.msra.mxu0 0.0
    %6263 = vmatprep.subr.mxu0 0.0
    %6264 = vmatpush1.msra.mxu0 %v6231
    %6265 = vmatprep.subr.mxu0 0.0
    %6266 = vmatpush2.msra.mxu0 0.0
    %6267 = vmatprep.subr.mxu0 0.0
    %6268 = vmatpush2.msra.mxu0 0.0
    %6269 = vmatprep.subr.mxu0 0.0
    %6270 = vmatpush2.msra.mxu0 0.0
    %6271 = vmatprep.subr.mxu0 0.0
    %6272 = vmatpush2.msra.mxu0 0.0
    %6273 = vmatprep.subr.mxu0 0.0
    %6274 = vmatpush2.msra.mxu0 0.0
    %6275 = vmatprep.subr.mxu0 0.0
    %6276 = vmatpush2.msra.mxu0 0.0
    %6277 = vmatprep.subr.mxu0 0.0
    %6278 = vmatpush2.msra.mxu0 0.0
    %6279 = vmatprep.subr.mxu0 0.0
    %6280 = vmatpush2.msra.mxu0 0.0
    %6281 = vmatprep.subr.mxu0 0.0
    %6282 = vmatpush2.msra.mxu0 0.0
    %6283 = vmatprep.subr.mxu0 0.0
    %6284 = vmatpush2.msra.mxu0 0.0
    %6285 = vmatprep.subr.mxu0 0.0
    %6286 = vmatpush2.msra.mxu0 0.0
    %6287 = vmatprep.subr.mxu0 0.0
    %6288 = vmatpush2.msra.mxu0 0.0
    %6289 = vmatprep.subr.mxu0 0.0
    %6290 = vmatpush2.msra.mxu0 0.0
    %6291 = vmatprep.subr.mxu0 0.0
    %6292 = vmatpush2.msra.mxu0 0.0
    %6293 = vmatprep.subr.mxu0 0.0
    %6294 = vmatpush2.msra.mxu0 0.0
    %6295 = vmatprep.subr.mxu0 0.0
    %6296 = vmatpush2.msra.mxu0 0.0
    %6297 = vmatprep.mubr.f32.mxu0 0.0
    %6298 = vmatmul.mubr.f32.gmra.mxu0 %v6229
    %v6299 = vpop.f32.mrf.mxu0
    %v6300 = vadd.f32 0.0, %v6299
    %v6301 = vpop.f32.mrf.mxu0
    %6302 = vdwg.mxu0
    %6304 = vrot.lane.b32.xlu0 %v6300, 40
    %v6305 = vpop.permute.xlu0 %6304
    %vm6307 = vcmask 389440
    %6308 = vst.msk [vmem:[#allocation2] sm:$0x1f] %vm6307, %v6305
    %6309 = vrot.lane.b32.xlu0 %v5261, 80
    %v6310 = vpop.permute.xlu0 %6309
    %6311 = vrot.lane.b32.xlu0 %v5261, 16
    %v6312 = vpop.permute.xlu0 %6311
    %v6313 = vsel %vm666, %v6310, 0
    %v6315 = vsel %vm666, %v6312, 0
    %6317 = vmatprep.subr.mxu0 0.0
    %6318 = vmatpush1.xpose.msra.mxu0 0.0
    %6319 = vmatprep.subr.mxu0 0.0
    %6320 = vmatpush1.xpose.msra.mxu0 0.0
    %6321 = vmatprep.subr.mxu0 0.0
    %6322 = vmatpush1.xpose.msra.mxu0 0.0
    %6323 = vmatprep.subr.mxu0 0.0
    %6324 = vmatpush1.xpose.msra.mxu0 0.0
    %6325 = vmatprep.subr.mxu0 0.0
    %6326 = vmatpush1.xpose.msra.mxu0 0.0
    %6327 = vmatprep.subr.mxu0 0.0
    %6328 = vmatpush1.xpose.msra.mxu0 0.0
    %6329 = vmatprep.subr.mxu0 0.0
    %6330 = vmatpush1.xpose.msra.mxu0 0.0
    %6331 = vmatprep.subr.mxu0 0.0
    %6332 = vmatpush1.xpose.msra.mxu0 0.0
    %6333 = vmatprep.subr.mxu0 0.0
    %6334 = vmatpush1.xpose.msra.mxu0 0.0
    %6335 = vmatprep.subr.mxu0 0.0
    %6336 = vmatpush1.xpose.msra.mxu0 0.0
    %6337 = vmatprep.subr.mxu0 0.0
    %6338 = vmatpush1.xpose.msra.mxu0 0.0
    %6339 = vmatprep.subr.mxu0 0.0
    %6340 = vmatpush1.xpose.msra.mxu0 0.0
    %6341 = vmatprep.subr.mxu0 0.0
    %6342 = vmatpush1.xpose.msra.mxu0 0.0
    %6343 = vmatprep.subr.mxu0 0.0
    %6344 = vmatpush1.xpose.msra.mxu0 0.0
    %6345 = vmatprep.subr.mxu0 0.0
    %6346 = vmatpush1.xpose.msra.mxu0 0.0
    %6347 = vmatprep.subr.mxu0 0.0
    %6348 = vmatpush1.xpose.msra.mxu0 %v6315
    %6349 = vmatprep.subr.mxu0 0.0
    %6350 = vmatpush2.xpose.msra.mxu0 0.0
    %6351 = vmatprep.subr.mxu0 0.0
    %6352 = vmatpush2.xpose.msra.mxu0 0.0
    %6353 = vmatprep.subr.mxu0 0.0
    %6354 = vmatpush2.xpose.msra.mxu0 0.0
    %6355 = vmatprep.subr.mxu0 0.0
    %6356 = vmatpush2.xpose.msra.mxu0 0.0
    %6357 = vmatprep.subr.mxu0 0.0
    %6358 = vmatpush2.xpose.msra.mxu0 0.0
    %6359 = vmatprep.subr.mxu0 0.0
    %6360 = vmatpush2.xpose.msra.mxu0 0.0
    %6361 = vmatprep.subr.mxu0 0.0
    %6362 = vmatpush2.xpose.msra.mxu0 0.0
    %6363 = vmatprep.subr.mxu0 0.0
    %6364 = vmatpush2.xpose.msra.mxu0 0.0
    %6365 = vmatprep.subr.mxu0 0.0
    %6366 = vmatpush2.xpose.msra.mxu0 0.0
    %6367 = vmatprep.subr.mxu0 0.0
    %6368 = vmatpush2.xpose.msra.mxu0 0.0
    %6369 = vmatprep.subr.mxu0 0.0
    %6370 = vmatpush2.xpose.msra.mxu0 0.0
    %6371 = vmatprep.subr.mxu0 0.0
    %6372 = vmatpush2.xpose.msra.mxu0 0.0
    %6373 = vmatprep.subr.mxu0 0.0
    %6374 = vmatpush2.xpose.msra.mxu0 0.0
    %6375 = vmatprep.subr.mxu0 0.0
    %6376 = vmatpush2.xpose.msra.mxu0 0.0
    %6377 = vmatprep.subr.mxu0 0.0
    %6378 = vmatpush2.xpose.msra.mxu0 0.0
    %6379 = vmatprep.subr.mxu0 0.0
    %6380 = vmatpush2.xpose.msra.mxu0 0.0
    %6381 = vmatprep.mubr.f32.mxu0 0.0
    %6382 = vmatmul.mubr.f32.gmra.mxu0 %v6313
    %v6383 = vpop.f32.mrf.mxu0
    %v6384 = vadd.f32 0.0, %v6383
    %v6385 = vpop.f32.mrf.mxu0
    %6386 = vdwg.mxu0
    %v6387 = vmul.f32 %v6384, 0.35355338
    %v6388 = vsel %vm5352, %v6387, -inf
    %6389 = vmax.xlane.f32.xlu0 %v6388
    %v6390 = vpop.xlane.xlu0 %6389
    %v6391 = vsub.f32 %v6387, %v6390
    %v6392 = vmul.f32 %v6391, 1.442695
    %v6393 = vpow.pop %v6392
    %v6394 = vsel %vm5352, %v6393, 0.0
    %6395 = vadd.xlane.f32.xlu0 %v6394
    %v6396 = vpop.xlane.xlu0 %6395
    %v6397 = vrcp.pop %v6396
    %v6398 = vmul.f32 %v6393, %v6397
    %6399 = vrot.lane.b32.xlu0 %v5263, 80
    %v6400 = vpop.permute.xlu0 %6399
    %v6402 = vsel %vm5364, %v6398, 0
    %v6404 = vsel %vm5368, %v6400, 0
    %6406 = vmatprep.subr.mxu0 0.0
    %6407 = vmatpush1.msra.mxu0 0.0
    %6408 = vmatprep.subr.mxu0 0.0
    %6409 = vmatpush1.msra.mxu0 0.0
    %6410 = vmatprep.subr.mxu0 0.0
    %6411 = vmatpush1.msra.mxu0 0.0
    %6412 = vmatprep.subr.mxu0 0.0
    %6413 = vmatpush1.msra.mxu0 0.0
    %6414 = vmatprep.subr.mxu0 0.0
    %6415 = vmatpush1.msra.mxu0 0.0
    %6416 = vmatprep.subr.mxu0 0.0
    %6417 = vmatpush1.msra.mxu0 0.0
    %6418 = vmatprep.subr.mxu0 0.0
    %6419 = vmatpush1.msra.mxu0 0.0
    %6420 = vmatprep.subr.mxu0 0.0
    %6421 = vmatpush1.msra.mxu0 0.0
    %6422 = vmatprep.subr.mxu0 0.0
    %6423 = vmatpush1.msra.mxu0 0.0
    %6424 = vmatprep.subr.mxu0 0.0
    %6425 = vmatpush1.msra.mxu0 0.0
    %6426 = vmatprep.subr.mxu0 0.0
    %6427 = vmatpush1.msra.mxu0 0.0
    %6428 = vmatprep.subr.mxu0 0.0
    %6429 = vmatpush1.msra.mxu0 0.0
    %6430 = vmatprep.subr.mxu0 0.0
    %6431 = vmatpush1.msra.mxu0 0.0
    %6432 = vmatprep.subr.mxu0 0.0
    %6433 = vmatpush1.msra.mxu0 0.0
    %6434 = vmatprep.subr.mxu0 0.0
    %6435 = vmatpush1.msra.mxu0 0.0
    %6436 = vmatprep.subr.mxu0 0.0
    %6437 = vmatpush1.msra.mxu0 %v6404
    %6438 = vmatprep.subr.mxu0 0.0
    %6439 = vmatpush2.msra.mxu0 0.0
    %6440 = vmatprep.subr.mxu0 0.0
    %6441 = vmatpush2.msra.mxu0 0.0
    %6442 = vmatprep.subr.mxu0 0.0
    %6443 = vmatpush2.msra.mxu0 0.0
    %6444 = vmatprep.subr.mxu0 0.0
    %6445 = vmatpush2.msra.mxu0 0.0
    %6446 = vmatprep.subr.mxu0 0.0
    %6447 = vmatpush2.msra.mxu0 0.0
    %6448 = vmatprep.subr.mxu0 0.0
    %6449 = vmatpush2.msra.mxu0 0.0
    %6450 = vmatprep.subr.mxu0 0.0
    %6451 = vmatpush2.msra.mxu0 0.0
    %6452 = vmatprep.subr.mxu0 0.0
    %6453 = vmatpush2.msra.mxu0 0.0
    %6454 = vmatprep.subr.mxu0 0.0
    %6455 = vmatpush2.msra.mxu0 0.0
    %6456 = vmatprep.subr.mxu0 0.0
    %6457 = vmatpush2.msra.mxu0 0.0
    %6458 = vmatprep.subr.mxu0 0.0
    %6459 = vmatpush2.msra.mxu0 0.0
    %6460 = vmatprep.subr.mxu0 0.0
    %6461 = vmatpush2.msra.mxu0 0.0
    %6462 = vmatprep.subr.mxu0 0.0
    %6463 = vmatpush2.msra.mxu0 0.0
    %6464 = vmatprep.subr.mxu0 0.0
    %6465 = vmatpush2.msra.mxu0 0.0
    %6466 = vmatprep.subr.mxu0 0.0
    %6467 = vmatpush2.msra.mxu0 0.0
    %6468 = vmatprep.subr.mxu0 0.0
    %6469 = vmatpush2.msra.mxu0 0.0
    %6470 = vmatprep.mubr.f32.mxu0 0.0
    %6471 = vmatmul.mubr.f32.gmra.mxu0 %v6402
    %v6472 = vpop.f32.mrf.mxu0
    %v6473 = vadd.f32 0.0, %v6472
    %v6474 = vpop.f32.mrf.mxu0
    %6475 = vdwg.mxu0
    %6477 = vrot.lane.b32.xlu0 %v6473, 48
    %v6478 = vpop.permute.xlu0 %6477
    %vm6480 = vcmask 455040
    %6481 = vst.msk [vmem:[#allocation2] sm:$0x1f] %vm6480, %v6478
    %6482 = vrot.lane.b32.xlu0 %v5261, 72
    %v6483 = vpop.permute.xlu0 %6482
    %6484 = vrot.lane.b32.xlu0 %v5261, 8
    %v6485 = vpop.permute.xlu0 %6484
    %v6486 = vsel %vm666, %v6483, 0
    %v6488 = vsel %vm666, %v6485, 0
    %6490 = vmatprep.subr.mxu0 0.0
    %6491 = vmatpush1.xpose.msra.mxu0 0.0
    %6492 = vmatprep.subr.mxu0 0.0
    %6493 = vmatpush1.xpose.msra.mxu0 0.0
    %6494 = vmatprep.subr.mxu0 0.0
    %6495 = vmatpush1.xpose.msra.mxu0 0.0
    %6496 = vmatprep.subr.mxu0 0.0
    %6497 = vmatpush1.xpose.msra.mxu0 0.0
    %6498 = vmatprep.subr.mxu0 0.0
    %6499 = vmatpush1.xpose.msra.mxu0 0.0
    %6500 = vmatprep.subr.mxu0 0.0
    %6501 = vmatpush1.xpose.msra.mxu0 0.0
    %6502 = vmatprep.subr.mxu0 0.0
    %6503 = vmatpush1.xpose.msra.mxu0 0.0
    %6504 = vmatprep.subr.mxu0 0.0
    %6505 = vmatpush1.xpose.msra.mxu0 0.0
    %6506 = vmatprep.subr.mxu0 0.0
    %6507 = vmatpush1.xpose.msra.mxu0 0.0
    %6508 = vmatprep.subr.mxu0 0.0
    %6509 = vmatpush1.xpose.msra.mxu0 0.0
    %6510 = vmatprep.subr.mxu0 0.0
    %6511 = vmatpush1.xpose.msra.mxu0 0.0
    %6512 = vmatprep.subr.mxu0 0.0
    %6513 = vmatpush1.xpose.msra.mxu0 0.0
    %6514 = vmatprep.subr.mxu0 0.0
    %6515 = vmatpush1.xpose.msra.mxu0 0.0
    %6516 = vmatprep.subr.mxu0 0.0
    %6517 = vmatpush1.xpose.msra.mxu0 0.0
    %6518 = vmatprep.subr.mxu0 0.0
    %6519 = vmatpush1.xpose.msra.mxu0 0.0
    %6520 = vmatprep.subr.mxu0 0.0
    %6521 = vmatpush1.xpose.msra.mxu0 %v6488
    %6522 = vmatprep.subr.mxu0 0.0
    %6523 = vmatpush2.xpose.msra.mxu0 0.0
    %6524 = vmatprep.subr.mxu0 0.0
    %6525 = vmatpush2.xpose.msra.mxu0 0.0
    %6526 = vmatprep.subr.mxu0 0.0
    %6527 = vmatpush2.xpose.msra.mxu0 0.0
    %6528 = vmatprep.subr.mxu0 0.0
    %6529 = vmatpush2.xpose.msra.mxu0 0.0
    %6530 = vmatprep.subr.mxu0 0.0
    %6531 = vmatpush2.xpose.msra.mxu0 0.0
    %6532 = vmatprep.subr.mxu0 0.0
    %6533 = vmatpush2.xpose.msra.mxu0 0.0
    %6534 = vmatprep.subr.mxu0 0.0
    %6535 = vmatpush2.xpose.msra.mxu0 0.0
    %6536 = vmatprep.subr.mxu0 0.0
    %6537 = vmatpush2.xpose.msra.mxu0 0.0
    %6538 = vmatprep.subr.mxu0 0.0
    %6539 = vmatpush2.xpose.msra.mxu0 0.0
    %6540 = vmatprep.subr.mxu0 0.0
    %6541 = vmatpush2.xpose.msra.mxu0 0.0
    %6542 = vmatprep.subr.mxu0 0.0
    %6543 = vmatpush2.xpose.msra.mxu0 0.0
    %6544 = vmatprep.subr.mxu0 0.0
    %6545 = vmatpush2.xpose.msra.mxu0 0.0
    %6546 = vmatprep.subr.mxu0 0.0
    %6547 = vmatpush2.xpose.msra.mxu0 0.0
    %6548 = vmatprep.subr.mxu0 0.0
    %6549 = vmatpush2.xpose.msra.mxu0 0.0
    %6550 = vmatprep.subr.mxu0 0.0
    %6551 = vmatpush2.xpose.msra.mxu0 0.0
    %6552 = vmatprep.subr.mxu0 0.0
    %6553 = vmatpush2.xpose.msra.mxu0 0.0
    %6554 = vmatprep.mubr.f32.mxu0 0.0
    %6555 = vmatmul.mubr.f32.gmra.mxu0 %v6486
    %v6556 = vpop.f32.mrf.mxu0
    %v6557 = vadd.f32 0.0, %v6556
    %v6558 = vpop.f32.mrf.mxu0
    %6559 = vdwg.mxu0
    %v6560 = vmul.f32 %v6557, 0.35355338
    %v6561 = vsel %vm5352, %v6560, -inf
    %6562 = vmax.xlane.f32.xlu0 %v6561
    %v6563 = vpop.xlane.xlu0 %6562
    %v6564 = vsub.f32 %v6560, %v6563
    %v6565 = vmul.f32 %v6564, 1.442695
    %v6566 = vpow.pop %v6565
    %v6567 = vsel %vm5352, %v6566, 0.0
    %6568 = vadd.xlane.f32.xlu0 %v6567
    %v6569 = vpop.xlane.xlu0 %6568
    %v6570 = vrcp.pop %v6569
    %v6571 = vmul.f32 %v6566, %v6570
    %6572 = vrot.lane.b32.xlu0 %v5263, 72
    %v6573 = vpop.permute.xlu0 %6572
    %v6575 = vsel %vm5364, %v6571, 0
    %v6577 = vsel %vm5368, %v6573, 0
    %6579 = vmatprep.subr.mxu0 0.0
    %6580 = vmatpush1.msra.mxu0 0.0
    %6581 = vmatprep.subr.mxu0 0.0
    %6582 = vmatpush1.msra.mxu0 0.0
    %6583 = vmatprep.subr.mxu0 0.0
    %6584 = vmatpush1.msra.mxu0 0.0
    %6585 = vmatprep.subr.mxu0 0.0
    %6586 = vmatpush1.msra.mxu0 0.0
    %6587 = vmatprep.subr.mxu0 0.0
    %6588 = vmatpush1.msra.mxu0 0.0
    %6589 = vmatprep.subr.mxu0 0.0
    %6590 = vmatpush1.msra.mxu0 0.0
    %6591 = vmatprep.subr.mxu0 0.0
    %6592 = vmatpush1.msra.mxu0 0.0
    %6593 = vmatprep.subr.mxu0 0.0
    %6594 = vmatpush1.msra.mxu0 0.0
    %6595 = vmatprep.subr.mxu0 0.0
    %6596 = vmatpush1.msra.mxu0 0.0
    %6597 = vmatprep.subr.mxu0 0.0
    %6598 = vmatpush1.msra.mxu0 0.0
    %6599 = vmatprep.subr.mxu0 0.0
    %6600 = vmatpush1.msra.mxu0 0.0
    %6601 = vmatprep.subr.mxu0 0.0
    %6602 = vmatpush1.msra.mxu0 0.0
    %6603 = vmatprep.subr.mxu0 0.0
    %6604 = vmatpush1.msra.mxu0 0.0
    %6605 = vmatprep.subr.mxu0 0.0
    %6606 = vmatpush1.msra.mxu0 0.0
    %6607 = vmatprep.subr.mxu0 0.0
    %6608 = vmatpush1.msra.mxu0 0.0
    %6609 = vmatprep.subr.mxu0 0.0
    %6610 = vmatpush1.msra.mxu0 %v6577
    %6611 = vmatprep.subr.mxu0 0.0
    %6612 = vmatpush2.msra.mxu0 0.0
    %6613 = vmatprep.subr.mxu0 0.0
    %6614 = vmatpush2.msra.mxu0 0.0
    %6615 = vmatprep.subr.mxu0 0.0
    %6616 = vmatpush2.msra.mxu0 0.0
    %6617 = vmatprep.subr.mxu0 0.0
    %6618 = vmatpush2.msra.mxu0 0.0
    %6619 = vmatprep.subr.mxu0 0.0
    %6620 = vmatpush2.msra.mxu0 0.0
    %6621 = vmatprep.subr.mxu0 0.0
    %6622 = vmatpush2.msra.mxu0 0.0
    %6623 = vmatprep.subr.mxu0 0.0
    %6624 = vmatpush2.msra.mxu0 0.0
    %6625 = vmatprep.subr.mxu0 0.0
    %6626 = vmatpush2.msra.mxu0 0.0
    %6627 = vmatprep.subr.mxu0 0.0
    %6628 = vmatpush2.msra.mxu0 0.0
    %6629 = vmatprep.subr.mxu0 0.0
    %6630 = vmatpush2.msra.mxu0 0.0
    %6631 = vmatprep.subr.mxu0 0.0
    %6632 = vmatpush2.msra.mxu0 0.0
    %6633 = vmatprep.subr.mxu0 0.0
    %6634 = vmatpush2.msra.mxu0 0.0
    %6635 = vmatprep.subr.mxu0 0.0
    %6636 = vmatpush2.msra.mxu0 0.0
    %6637 = vmatprep.subr.mxu0 0.0
    %6638 = vmatpush2.msra.mxu0 0.0
    %6639 = vmatprep.subr.mxu0 0.0
    %6640 = vmatpush2.msra.mxu0 0.0
    %6641 = vmatprep.subr.mxu0 0.0
    %6642 = vmatpush2.msra.mxu0 0.0
    %6643 = vmatprep.mubr.f32.mxu0 0.0
    %6644 = vmatmul.mubr.f32.gmra.mxu0 %v6575
    %v6645 = vpop.f32.mrf.mxu0
    %v6646 = vadd.f32 0.0, %v6645
    %v6647 = vpop.f32.mrf.mxu0
    %6648 = vdwg.mxu0
    %6650 = vrot.lane.b32.xlu0 %v6646, 56
    %v6651 = vpop.permute.xlu0 %6650
    %vm6653 = vcmask 520640
    %6654 = vst.msk [vmem:[#allocation2] sm:$0x1f] %vm6653, %v6651
    %v6655 = vld [vmem:[#allocation2] sm:$0x1f]
    %v6657 = vsel %vm254, %v6655, 0
    %6659 = vmatprep.subr.mxu0 0.0
    %6660 = vmatpush1.msra.mxu0 0.0
    %6661 = vmatprep.subr.mxu0 0.0
    %6662 = vmatpush1.msra.mxu0 0.0
    %6663 = vmatprep.subr.mxu0 0.0
    %6664 = vmatpush1.msra.mxu0 0.0
    %6665 = vmatprep.subr.mxu0 0.0
    %6666 = vmatpush1.msra.mxu0 0.0
    %6667 = vmatprep.subr.mxu0 0.0
    %6668 = vmatpush1.msra.mxu0 0.0
    %6669 = vmatprep.subr.mxu0 0.0
    %6670 = vmatpush1.msra.mxu0 0.0
    %6671 = vmatprep.subr.mxu0 0.0
    %6672 = vmatpush1.msra.mxu0 0.0
    %6673 = vmatprep.subr.mxu0 0.0
    %6674 = vmatpush1.msra.mxu0 0.0
    %6675 = vmatprep.subr.mxu0 0.0
    %6676 = vmatpush1.msra.mxu0 %v5272
    %6677 = vmatprep.subr.mxu0 0.0
    %6678 = vmatpush1.msra.mxu0 %v5271
    %6679 = vmatprep.subr.mxu0 0.0
    %6680 = vmatpush1.msra.mxu0 %v5270
    %6681 = vmatprep.subr.mxu0 0.0
    %6682 = vmatpush1.msra.mxu0 %v5269
    %6683 = vmatprep.subr.mxu0 0.0
    %6684 = vmatpush1.msra.mxu0 %v5268
    %6685 = vmatprep.subr.mxu0 0.0
    %6686 = vmatpush1.msra.mxu0 %v5267
    %6687 = vmatprep.subr.mxu0 0.0
    %6688 = vmatpush1.msra.mxu0 %v5266
    %6689 = vmatprep.subr.mxu0 0.0
    %6690 = vmatpush1.msra.mxu0 %v5265
    %6691 = vmatprep.subr.mxu0 0.0
    %6692 = vmatpush2.msra.mxu0 0.0
    %6693 = vmatprep.subr.mxu0 0.0
    %6694 = vmatpush2.msra.mxu0 0.0
    %6695 = vmatprep.subr.mxu0 0.0
    %6696 = vmatpush2.msra.mxu0 0.0
    %6697 = vmatprep.subr.mxu0 0.0
    %6698 = vmatpush2.msra.mxu0 0.0
    %6699 = vmatprep.subr.mxu0 0.0
    %6700 = vmatpush2.msra.mxu0 0.0
    %6701 = vmatprep.subr.mxu0 0.0
    %6702 = vmatpush2.msra.mxu0 0.0
    %6703 = vmatprep.subr.mxu0 0.0
    %6704 = vmatpush2.msra.mxu0 0.0
    %6705 = vmatprep.subr.mxu0 0.0
    %6706 = vmatpush2.msra.mxu0 0.0
    %6707 = vmatprep.subr.mxu0 0.0
    %6708 = vmatpush2.msra.mxu0 0.0
    %6709 = vmatprep.subr.mxu0 0.0
    %6710 = vmatpush2.msra.mxu0 0.0
    %6711 = vmatprep.subr.mxu0 0.0
    %6712 = vmatpush2.msra.mxu0 0.0
    %6713 = vmatprep.subr.mxu0 0.0
    %6714 = vmatpush2.msra.mxu0 0.0
    %6715 = vmatprep.subr.mxu0 0.0
    %6716 = vmatpush2.msra.mxu0 0.0
    %6717 = vmatprep.subr.mxu0 0.0
    %6718 = vmatpush2.msra.mxu0 0.0
    %6719 = vmatprep.subr.mxu0 0.0
    %6720 = vmatpush2.msra.mxu0 0.0
    %6721 = vmatprep.subr.mxu0 0.0
    %6722 = vmatpush2.msra.mxu0 0.0
    %6723 = vmatprep.mubr.f32.mxu0 0.0
    %6724 = vmatmul.mubr.f32.gmra.mxu0 %v6657
    %v6725 = vpop.f32.mrf.mxu0
    %v6726 = vadd.f32 %v5273, %v6725
    %v6727 = vpop.f32.mrf.mxu0
    %6728 = vdwg.mxu0
    %v6729 = vadd.f32 %v5143, %v6726
    %v6730 = vld [vmem:[%s6 + $0x50] ss:$0 sm:$0xff]
    %v6731 = vld [vmem:[%s6 + $0x51] ss:$0 sm:$0xff]
    %v6732 = vsel %vm5146, %v6729, 0.0
    %6733 = vadd.xlane.f32.xlu0 %v6732
    %v6734 = vpop.xlane.xlu0 %6733
    %v6735 = vmul.f32 %v6734, %v2396
    %v6736 = vsub.f32 %v6729, %v6735
    %v6737 = vmul.f32 %v6736, %v6736
    %v6738 = vsel %vm5146, %v6737, 0.0
    %6739 = vadd.xlane.f32.xlu0 %v6738
    %v6740 = vpop.xlane.xlu0 %6739
    %v6741 = vmul.f32 %v6740, %v2396
    %v6742 = vadd.f32 %v6741, 1e-06
    %v6743 = vrsqrt.pop %v6742
    %v6744 = vmul.f32 %v6736, %v6743
    %v6745 = vmul.f32 %v6744, %v6730
    %v6746 = vadd.f32 %v6745, %v6731
    %v6747 = vld [vmem:[#allocation3 + $0x60] sm:$0xff]
    %v6748 = vld [vmem:[#allocation3 + $0x68] sm:$0xff]
    %v6749 = vld [vmem:[#allocation3 + $0x108] sm:$0xff]
    %v6750 = vld [vmem:[#allocation3 + $0x110] sm:$0xff]
    %v6751 = vld [vmem:[#allocation3 + $0x1b0] sm:$0xff]
    %v6752 = vld [vmem:[#allocation3 + $0x1b8] sm:$0xff]
    %v6753 = vld [vmem:[#allocation3 + $0x258] sm:$0xff]
    %v6754 = vld [vmem:[#allocation3 + $0x260] sm:$0xff]
    %v6755 = vld [vmem:[#allocation3 + $0x300] sm:$0xff]
    %v6756 = vld [vmem:[#allocation3 + $0x308] sm:$0xff]
    %v6757 = vld [vmem:[#allocation3 + $0x3a8] sm:$0xff]
    %v6758 = vld [vmem:[#allocation3 + $0x3b0] sm:$0xff]
    %v6759 = vld [vmem:[#allocation3 + $0x450] sm:$0xff]
    %v6760 = vld [vmem:[#allocation3 + $0x458] sm:$0xff]
    %v6761 = vld [vmem:[#allocation3 + $0x4f8] sm:$0xff]
    %v6762 = vld [vmem:[#allocation3 + $0x500] sm:$0xff]
    %s6763 = scalar_lea.vmem %s6, 82
    %v6764 = vld [vmem:[%s6763] ss:$8 sm:$0x3]
    %v6766 = vlaneseq
    %v6767 = vshrl.u32 %v6766, 7
    %v6768 = vsub.s32 0, %v6767
    %v6769 = vrot.slane %v6764, %v6768
    %v6770 = vlaneseq
    %v6771 = vshrl.u32 %v6770, 7
    %v6772 = vsub.s32 1, %v6771
    %v6773 = vrot.slane %v6764, %v6772
    %v6777 = vsel %vm254, %v6746, 0
    %6779 = vmatprep.subr.mxu0 0.0
    %6780 = vmatpush1.msra.mxu0 0.0
    %6781 = vmatprep.subr.mxu0 0.0
    %6782 = vmatpush1.msra.mxu0 0.0
    %6783 = vmatprep.subr.mxu0 0.0
    %6784 = vmatpush1.msra.mxu0 0.0
    %6785 = vmatprep.subr.mxu0 0.0
    %6786 = vmatpush1.msra.mxu0 0.0
    %6787 = vmatprep.subr.mxu0 0.0
    %6788 = vmatpush1.msra.mxu0 0.0
    %6789 = vmatprep.subr.mxu0 0.0
    %6790 = vmatpush1.msra.mxu0 0.0
    %6791 = vmatprep.subr.mxu0 0.0
    %6792 = vmatpush1.msra.mxu0 0.0
    %6793 = vmatprep.subr.mxu0 0.0
    %6794 = vmatpush1.msra.mxu0 0.0
    %6795 = vmatprep.subr.mxu0 %v6762
    %6796 = vmatpush1.msra.mxu0 %v6761
    %6797 = vmatprep.subr.mxu0 %v6760
    %6798 = vmatpush1.msra.mxu0 %v6759
    %6799 = vmatprep.subr.mxu0 %v6758
    %6800 = vmatpush1.msra.mxu0 %v6757
    %6801 = vmatprep.subr.mxu0 %v6756
    %6802 = vmatpush1.msra.mxu0 %v6755
    %6803 = vmatprep.subr.mxu0 %v6754
    %6804 = vmatpush1.msra.mxu0 %v6753
    %6805 = vmatprep.subr.mxu0 %v6752
    %6806 = vmatpush1.msra.mxu0 %v6751
    %6807 = vmatprep.subr.mxu0 %v6750
    %6808 = vmatpush1.msra.mxu0 %v6749
    %6809 = vmatprep.subr.mxu0 %v6748
    %6810 = vmatpush1.msra.mxu0 %v6747
    %6811 = vmatprep.subr.mxu0 0.0
    %6812 = vmatpush2.msra.mxu0 0.0
    %6813 = vmatprep.subr.mxu0 0.0
    %6814 = vmatpush2.msra.mxu0 0.0
    %6815 = vmatprep.subr.mxu0 0.0
    %6816 = vmatpush2.msra.mxu0 0.0
    %6817 = vmatprep.subr.mxu0 0.0
    %6818 = vmatpush2.msra.mxu0 0.0
    %6819 = vmatprep.subr.mxu0 0.0
    %6820 = vmatpush2.msra.mxu0 0.0
    %6821 = vmatprep.subr.mxu0 0.0
    %6822 = vmatpush2.msra.mxu0 0.0
    %6823 = vmatprep.subr.mxu0 0.0
    %6824 = vmatpush2.msra.mxu0 0.0
    %6825 = vmatprep.subr.mxu0 0.0
    %6826 = vmatpush2.msra.mxu0 0.0
    %6827 = vmatprep.subr.mxu0 0.0
    %6828 = vmatpush2.msra.mxu0 0.0
    %6829 = vmatprep.subr.mxu0 0.0
    %6830 = vmatpush2.msra.mxu0 0.0
    %6831 = vmatprep.subr.mxu0 0.0
    %6832 = vmatpush2.msra.mxu0 0.0
    %6833 = vmatprep.subr.mxu0 0.0
    %6834 = vmatpush2.msra.mxu0 0.0
    %6835 = vmatprep.subr.mxu0 0.0
    %6836 = vmatpush2.msra.mxu0 0.0
    %6837 = vmatprep.subr.mxu0 0.0
    %6838 = vmatpush2.msra.mxu0 0.0
    %6839 = vmatprep.subr.mxu0 0.0
    %6840 = vmatpush2.msra.mxu0 0.0
    %6841 = vmatprep.subr.mxu0 0.0
    %6842 = vmatpush2.msra.mxu0 0.0
    %6843 = vmatprep.mubr.f32.mxu0 0.0
    %6844 = vmatmul.mubr.f32.gmra.mxu0 %v6777
    %v6845 = vpop.f32.mrf.mxu0
    %v6846 = vadd.f32 %v6769, %v6845
    %v6847 = vpop.f32.mrf.mxu0
    %v6848 = vadd.f32 %v6773, %v6847
    %6849 = vdwg.mxu0
    %v6850 = vmul.f32 %v6846, %v6846
    %v6851 = vmul.f32 %v6848, %v6848
    %v6852 = vmul.f32 %v6846, %v6850
    %v6853 = vmul.f32 %v6848, %v6851
    %v6854 = vmul.f32 %v6852, 0.044715
    %v6855 = vmul.f32 %v6853, 0.044715
    %v6856 = vadd.f32 %v6846, %v6854
    %v6857 = vadd.f32 %v6848, %v6855
    %v6858 = vmul.f32 %v6856, 0.7978846
    %v6859 = vmul.f32 %v6857, 0.7978846
    %v6860 = vtanh.pop %v6858
    %v6861 = vtanh.pop %v6859
    %v6862 = vadd.f32 %v6860, 1.0
    %v6863 = vadd.f32 %v6861, 1.0
    %v6864 = vmul.f32 %v6862, 0.5
    %v6865 = vmul.f32 %v6863, 0.5
    %v6866 = vmul.f32 %v6846, %v6864
    %v6867 = vmul.f32 %v6848, %v6865
    %v6868 = vld [vmem:[#allocation6] sm:$0xff]
    %v6869 = vld [vmem:[#allocation6 + $0x10] sm:$0xff]
    %v6870 = vld [vmem:[#allocation6 + $0x20] sm:$0xff]
    %v6871 = vld [vmem:[#allocation6 + $0x30] sm:$0xff]
    %v6872 = vld [vmem:[#allocation6 + $0x40] sm:$0xff]
    %v6873 = vld [vmem:[#allocation6 + $0x50] sm:$0xff]
    %v6874 = vld [vmem:[#allocation6 + $0x60] sm:$0xff]
    %v6875 = vld [vmem:[#allocation6 + $0x70] sm:$0xff]
    %v6876 = vld [vmem:[#allocation6 + $0x80] sm:$0xff]
    %v6877 = vld [vmem:[#allocation6 + $0x90] sm:$0xff]
    %v6878 = vld [vmem:[#allocation6 + $0xa0] sm:$0xff]
    %v6879 = vld [vmem:[#allocation6 + $0xb0] sm:$0xff]
    %v6880 = vld [vmem:[#allocation6 + $0xc0] sm:$0xff]
    %v6881 = vld [vmem:[#allocation6 + $0xd0] sm:$0xff]
    %v6882 = vld [vmem:[#allocation6 + $0xe0] sm:$0xff]
    %v6883 = vld [vmem:[#allocation6 + $0xf0] sm:$0xff]
    %v6884 = vld [vmem:[#allocation6 + $0x100] sm:$0xff]
    %v6885 = vld [vmem:[#allocation6 + $0x110] sm:$0xff]
    %v6886 = vld [vmem:[#allocation6 + $0x120] sm:$0xff]
    %v6887 = vld [vmem:[#allocation6 + $0x130] sm:$0xff]
    %v6888 = vld [vmem:[#allocation6 + $0x140] sm:$0xff]
    %v6889 = vld [vmem:[#allocation6 + $0x150] sm:$0xff]
    %v6890 = vld [vmem:[#allocation6 + $0x160] sm:$0xff]
    %v6891 = vld [vmem:[#allocation6 + $0x170] sm:$0xff]
    %v6892 = vld [vmem:[#allocation6 + $0x180] sm:$0xff]
    %v6893 = vld [vmem:[#allocation6 + $0x190] sm:$0xff]
    %v6894 = vld [vmem:[#allocation6 + $0x1a0] sm:$0xff]
    %v6895 = vld [vmem:[#allocation6 + $0x1b0] sm:$0xff]
    %v6896 = vld [vmem:[#allocation6 + $0x1c0] sm:$0xff]
    %v6897 = vld [vmem:[#allocation6 + $0x1d0] sm:$0xff]
    %v6898 = vld [vmem:[#allocation6 + $0x1e0] sm:$0xff]
    %v6899 = vld [vmem:[#allocation6 + $0x1f0] sm:$0xff]
    %6900 = vmatprep.subr.mxu0 0.0
    %6901 = vmatpush1.msra.mxu0 %v6883
    %6902 = vmatprep.subr.mxu0 0.0
    %6903 = vmatpush1.msra.mxu0 %v6882
    %6904 = vmatprep.subr.mxu0 0.0
    %6905 = vmatpush1.msra.mxu0 %v6881
    %6906 = vmatprep.subr.mxu0 0.0
    %6907 = vmatpush1.msra.mxu0 %v6880
    %6908 = vmatprep.subr.mxu0 0.0
    %6909 = vmatpush1.msra.mxu0 %v6879
    %6910 = vmatprep.subr.mxu0 0.0
    %6911 = vmatpush1.msra.mxu0 %v6878
    %6912 = vmatprep.subr.mxu0 0.0
    %6913 = vmatpush1.msra.mxu0 %v6877
    %6914 = vmatprep.subr.mxu0 0.0
    %6915 = vmatpush1.msra.mxu0 %v6876
    %6916 = vmatprep.subr.mxu0 0.0
    %6917 = vmatpush1.msra.mxu0 %v6875
    %6918 = vmatprep.subr.mxu0 0.0
    %6919 = vmatpush1.msra.mxu0 %v6874
    %6920 = vmatprep.subr.mxu0 0.0
    %6921 = vmatpush1.msra.mxu0 %v6873
    %6922 = vmatprep.subr.mxu0 0.0
    %6923 = vmatpush1.msra.mxu0 %v6872
    %6924 = vmatprep.subr.mxu0 0.0
    %6925 = vmatpush1.msra.mxu0 %v6871
    %6926 = vmatprep.subr.mxu0 0.0
    %6927 = vmatpush1.msra.mxu0 %v6870
    %6928 = vmatprep.subr.mxu0 0.0
    %6929 = vmatpush1.msra.mxu0 %v6869
    %6930 = vmatprep.subr.mxu0 0.0
    %6931 = vmatpush1.msra.mxu0 %v6868
    %6932 = vmatprep.subr.mxu0 0.0
    %6933 = vmatpush2.msra.mxu0 %v6899
    %6934 = vmatprep.subr.mxu0 0.0
    %6935 = vmatpush2.msra.mxu0 %v6898
    %6936 = vmatprep.subr.mxu0 0.0
    %6937 = vmatpush2.msra.mxu0 %v6897
    %6938 = vmatprep.subr.mxu0 0.0
    %6939 = vmatpush2.msra.mxu0 %v6896
    %6940 = vmatprep.subr.mxu0 0.0
    %6941 = vmatpush2.msra.mxu0 %v6895
    %6942 = vmatprep.subr.mxu0 0.0
    %6943 = vmatpush2.msra.mxu0 %v6894
    %6944 = vmatprep.subr.mxu0 0.0
    %6945 = vmatpush2.msra.mxu0 %v6893
    %6946 = vmatprep.subr.mxu0 0.0
    %6947 = vmatpush2.msra.mxu0 %v6892
    %6948 = vmatprep.subr.mxu0 0.0
    %6949 = vmatpush2.msra.mxu0 %v6891
    %6950 = vmatprep.subr.mxu0 0.0
    %6951 = vmatpush2.msra.mxu0 %v6890
    %6952 = vmatprep.subr.mxu0 0.0
    %6953 = vmatpush2.msra.mxu0 %v6889
    %6954 = vmatprep.subr.mxu0 0.0
    %6955 = vmatpush2.msra.mxu0 %v6888
    %6956 = vmatprep.subr.mxu0 0.0
    %6957 = vmatpush2.msra.mxu0 %v6887
    %6958 = vmatprep.subr.mxu0 0.0
    %6959 = vmatpush2.msra.mxu0 %v6886
    %6960 = vmatprep.subr.mxu0 0.0
    %6961 = vmatpush2.msra.mxu0 %v6885
    %6962 = vmatprep.subr.mxu0 0.0
    %6963 = vmatpush2.msra.mxu0 %v6884
    %6964 = vmatprep.mubr.f32.mxu0 %v6867
    %6965 = vmatmul.mubr.f32.gmra.mxu0 %v6866
    %v6966 = vpop.f32.mrf.mxu0
    %v6967 = vadd.f32 0.0, %v6966
    %v6968 = vpop.f32.mrf.mxu0
    %6969 = vdwg.mxu0
    %v6970 = vadd.f32 %v6729, %v6967
    %v6971 = vld [vmem:[%s6 + $0x53] ss:$0 sm:$0xff]
    %v6972 = vadd.f32 %v6970, %v6971
    %v6973 = vld [vmem:[%s6 + $0x54] ss:$0 sm:$0xff]
    %v6974 = vld [vmem:[%s6 + $0x55] ss:$0 sm:$0xff]
    %v6975 = vsel %vm5146, %v6972, 0.0
    %6976 = vadd.xlane.f32.xlu0 %v6975
    %v6977 = vpop.xlane.xlu0 %6976
    %v6978 = vmul.f32 %v6977, %v2396
    %v6979 = vsub.f32 %v6972, %v6978
    %v6980 = vmul.f32 %v6979, %v6979
    %v6981 = vsel %vm5146, %v6980, 0.0
    %6982 = vadd.xlane.f32.xlu0 %v6981
    %v6983 = vpop.xlane.xlu0 %6982
    %v6984 = vmul.f32 %v6983, %v2396
    %v6985 = vadd.f32 %v6984, 1e-06
    %v6986 = vrsqrt.pop %v6985
    %v6987 = vmul.f32 %v6979, %v6986
    %v6988 = vmul.f32 %v6987, %v6973
    %v6989 = vadd.f32 %v6988, %v6974
    %v6990 = vld [vmem:[#allocation3 + $0x70] sm:$0xff]
    %v6991 = vld [vmem:[#allocation3 + $0x118] sm:$0xff]
    %v6992 = vld [vmem:[#allocation3 + $0x1c0] sm:$0xff]
    %v6993 = vld [vmem:[#allocation3 + $0x268] sm:$0xff]
    %v6994 = vld [vmem:[#allocation3 + $0x310] sm:$0xff]
    %v6995 = vld [vmem:[#allocation3 + $0x3b8] sm:$0xff]
    %v6996 = vld [vmem:[#allocation3 + $0x460] sm:$0xff]
    %v6997 = vld [vmem:[#allocation3 + $0x508] sm:$0xff]
    %v6998 = vld [vmem:[%s6 + $0x56] ss:$0 sm:$0xff]
    %v7000 = vsel %vm254, %v6989, 0
    %7002 = vmatprep.subr.mxu0 0.0
    %7003 = vmatpush1.msra.mxu0 0.0
    %7004 = vmatprep.subr.mxu0 0.0
    %7005 = vmatpush1.msra.mxu0 0.0
    %7006 = vmatprep.subr.mxu0 0.0
    %7007 = vmatpush1.msra.mxu0 0.0
    %7008 = vmatprep.subr.mxu0 0.0
    %7009 = vmatpush1.msra.mxu0 0.0
    %7010 = vmatprep.subr.mxu0 0.0
    %7011 = vmatpush1.msra.mxu0 0.0
    %7012 = vmatprep.subr.mxu0 0.0
    %7013 = vmatpush1.msra.mxu0 0.0
    %7014 = vmatprep.subr.mxu0 0.0
    %7015 = vmatpush1.msra.mxu0 0.0
    %7016 = vmatprep.subr.mxu0 0.0
    %7017 = vmatpush1.msra.mxu0 0.0
    %7018 = vmatprep.subr.mxu0 0.0
    %7019 = vmatpush1.msra.mxu0 %v6997
    %7020 = vmatprep.subr.mxu0 0.0
    %7021 = vmatpush1.msra.mxu0 %v6996
    %7022 = vmatprep.subr.mxu0 0.0
    %7023 = vmatpush1.msra.mxu0 %v6995
    %7024 = vmatprep.subr.mxu0 0.0
    %7025 = vmatpush1.msra.mxu0 %v6994
    %7026 = vmatprep.subr.mxu0 0.0
    %7027 = vmatpush1.msra.mxu0 %v6993
    %7028 = vmatprep.subr.mxu0 0.0
    %7029 = vmatpush1.msra.mxu0 %v6992
    %7030 = vmatprep.subr.mxu0 0.0
    %7031 = vmatpush1.msra.mxu0 %v6991
    %7032 = vmatprep.subr.mxu0 0.0
    %7033 = vmatpush1.msra.mxu0 %v6990
    %7034 = vmatprep.subr.mxu0 0.0
    %7035 = vmatpush2.msra.mxu0 0.0
    %7036 = vmatprep.subr.mxu0 0.0
    %7037 = vmatpush2.msra.mxu0 0.0
    %7038 = vmatprep.subr.mxu0 0.0
    %7039 = vmatpush2.msra.mxu0 0.0
    %7040 = vmatprep.subr.mxu0 0.0
    %7041 = vmatpush2.msra.mxu0 0.0
    %7042 = vmatprep.subr.mxu0 0.0
    %7043 = vmatpush2.msra.mxu0 0.0
    %7044 = vmatprep.subr.mxu0 0.0
    %7045 = vmatpush2.msra.mxu0 0.0
    %7046 = vmatprep.subr.mxu0 0.0
    %7047 = vmatpush2.msra.mxu0 0.0
    %7048 = vmatprep.subr.mxu0 0.0
    %7049 = vmatpush2.msra.mxu0 0.0
    %7050 = vmatprep.subr.mxu0 0.0
    %7051 = vmatpush2.msra.mxu0 0.0
    %7052 = vmatprep.subr.mxu0 0.0
    %7053 = vmatpush2.msra.mxu0 0.0
    %7054 = vmatprep.subr.mxu0 0.0
    %7055 = vmatpush2.msra.mxu0 0.0
    %7056 = vmatprep.subr.mxu0 0.0
    %7057 = vmatpush2.msra.mxu0 0.0
    %7058 = vmatprep.subr.mxu0 0.0
    %7059 = vmatpush2.msra.mxu0 0.0
    %7060 = vmatprep.subr.mxu0 0.0
    %7061 = vmatpush2.msra.mxu0 0.0
    %7062 = vmatprep.subr.mxu0 0.0
    %7063 = vmatpush2.msra.mxu0 0.0
    %7064 = vmatprep.subr.mxu0 0.0
    %7065 = vmatpush2.msra.mxu0 0.0
    %7066 = vmatprep.mubr.f32.mxu0 0.0
    %7067 = vmatmul.mubr.f32.gmra.mxu0 %v7000
    %v7068 = vpop.f32.mrf.mxu0
    %v7069 = vadd.f32 %v6998, %v7068
    %v7070 = vpop.f32.mrf.mxu0
    %7071 = vdwg.mxu0
    %vm7072 = vcmask 16384
    %7073 = vst.msk [vmem:[%s7] sm:$0x1] %vm7072, %v7069
    %v7074 = vld [vmem:[%s6 + $0x33] ss:$0 sm:$0xff]
    %7075 = vst.msk [vmem:[#allocation2] sm:$0x1] %vm5134, %v7074
    %vm7076 = vcmask 519168
    %7077 = vst.msk [vmem:[#allocation2 + $0x1] sm:$0xf] %vm7076, %v4829
    %v7078 = vld [vmem:[#allocation2] sm:$0x1f]
    %v7079 = vld [vmem:[%s6 + $0x57] ss:$0 sm:$0xff]
    %v7080 = vld [vmem:[%s6 + $0x60] ss:$0 sm:$0xff]
    %v7081 = vsel %vm5146, %v7078, 0.0
    %7082 = vadd.xlane.f32.xlu0 %v7081
    %v7083 = vpop.xlane.xlu0 %7082
    %v7084 = vmul.f32 %v7083, %v2396
    %v7085 = vsub.f32 %v7078, %v7084
    %v7086 = vmul.f32 %v7085, %v7085
    %v7087 = vsel %vm5146, %v7086, 0.0
    %7088 = vadd.xlane.f32.xlu0 %v7087
    %v7089 = vpop.xlane.xlu0 %7088
    %v7090 = vmul.f32 %v7089, %v2396
    %v7091 = vadd.f32 %v7090, 1e-06
    %v7092 = vrsqrt.pop %v7091
    %v7093 = vmul.f32 %v7085, %v7092
    %v7094 = vmul.f32 %v7093, %v7079
    %v7095 = vadd.f32 %v7094, %v7080
    %v7096 = vld [vmem:[#allocation3 + $0x78] sm:$0xff]
    %v7097 = vld [vmem:[#allocation3 + $0x80] sm:$0xff]
    %v7098 = vld [vmem:[#allocation3 + $0x120] sm:$0xff]
    %v7099 = vld [vmem:[#allocation3 + $0x128] sm:$0xff]
    %v7100 = vld [vmem:[#allocation3 + $0x1c8] sm:$0xff]
    %v7101 = vld [vmem:[#allocation3 + $0x1d0] sm:$0xff]
    %v7102 = vld [vmem:[#allocation3 + $0x270] sm:$0xff]
    %v7103 = vld [vmem:[#allocation3 + $0x278] sm:$0xff]
    %v7104 = vld [vmem:[#allocation3 + $0x318] sm:$0xff]
    %v7105 = vld [vmem:[#allocation3 + $0x320] sm:$0xff]
    %v7106 = vld [vmem:[#allocation3 + $0x3c0] sm:$0xff]
    %v7107 = vld [vmem:[#allocation3 + $0x3c8] sm:$0xff]
    %v7108 = vld [vmem:[#allocation3 + $0x468] sm:$0xff]
    %v7109 = vld [vmem:[#allocation3 + $0x470] sm:$0xff]
    %v7110 = vld [vmem:[#allocation3 + $0x510] sm:$0xff]
    %v7111 = vld [vmem:[#allocation3 + $0x518] sm:$0xff]
    %s7112 = scalar_lea.vmem %s6, 97
    %v7113 = vld [vmem:[%s7112] ss:$8 sm:$0x3]
    %v7115 = vlaneseq
    %v7116 = vshrl.u32 %v7115, 7
    %v7117 = vsub.s32 0, %v7116
    %v7118 = vrot.slane %v7113, %v7117
    %v7119 = vlaneseq
    %v7120 = vshrl.u32 %v7119, 7
    %v7121 = vsub.s32 1, %v7120
    %v7122 = vrot.slane %v7113, %v7121
    %v7126 = vsel %vm254, %v7095, 0
    %7128 = vmatprep.subr.mxu0 0.0
    %7129 = vmatpush1.msra.mxu0 0.0
    %7130 = vmatprep.subr.mxu0 0.0
    %7131 = vmatpush1.msra.mxu0 0.0
    %7132 = vmatprep.subr.mxu0 0.0
    %7133 = vmatpush1.msra.mxu0 0.0
    %7134 = vmatprep.subr.mxu0 0.0
    %7135 = vmatpush1.msra.mxu0 0.0
    %7136 = vmatprep.subr.mxu0 0.0
    %7137 = vmatpush1.msra.mxu0 0.0
    %7138 = vmatprep.subr.mxu0 0.0
    %7139 = vmatpush1.msra.mxu0 0.0
    %7140 = vmatprep.subr.mxu0 0.0
    %7141 = vmatpush1.msra.mxu0 0.0
    %7142 = vmatprep.subr.mxu0 0.0
    %7143 = vmatpush1.msra.mxu0 0.0
    %7144 = vmatprep.subr.mxu0 %v7111
    %7145 = vmatpush1.msra.mxu0 %v7110
    %7146 = vmatprep.subr.mxu0 %v7109
    %7147 = vmatpush1.msra.mxu0 %v7108
    %7148 = vmatprep.subr.mxu0 %v7107
    %7149 = vmatpush1.msra.mxu0 %v7106
    %7150 = vmatprep.subr.mxu0 %v7105
    %7151 = vmatpush1.msra.mxu0 %v7104
    %7152 = vmatprep.subr.mxu0 %v7103
    %7153 = vmatpush1.msra.mxu0 %v7102
    %7154 = vmatprep.subr.mxu0 %v7101
    %7155 = vmatpush1.msra.mxu0 %v7100
    %7156 = vmatprep.subr.mxu0 %v7099
    %7157 = vmatpush1.msra.mxu0 %v7098
    %7158 = vmatprep.subr.mxu0 %v7097
    %7159 = vmatpush1.msra.mxu0 %v7096
    %7160 = vmatprep.subr.mxu0 0.0
    %7161 = vmatpush2.msra.mxu0 0.0
    %7162 = vmatprep.subr.mxu0 0.0
    %7163 = vmatpush2.msra.mxu0 0.0
    %7164 = vmatprep.subr.mxu0 0.0
    %7165 = vmatpush2.msra.mxu0 0.0
    %7166 = vmatprep.subr.mxu0 0.0
    %7167 = vmatpush2.msra.mxu0 0.0
    %7168 = vmatprep.subr.mxu0 0.0
    %7169 = vmatpush2.msra.mxu0 0.0
    %7170 = vmatprep.subr.mxu0 0.0
    %7171 = vmatpush2.msra.mxu0 0.0
    %7172 = vmatprep.subr.mxu0 0.0
    %7173 = vmatpush2.msra.mxu0 0.0
    %7174 = vmatprep.subr.mxu0 0.0
    %7175 = vmatpush2.msra.mxu0 0.0
    %7176 = vmatprep.subr.mxu0 0.0
    %7177 = vmatpush2.msra.mxu0 0.0
    %7178 = vmatprep.subr.mxu0 0.0
    %7179 = vmatpush2.msra.mxu0 0.0
    %7180 = vmatprep.subr.mxu0 0.0
    %7181 = vmatpush2.msra.mxu0 0.0
    %7182 = vmatprep.subr.mxu0 0.0
    %7183 = vmatpush2.msra.mxu0 0.0
    %7184 = vmatprep.subr.mxu0 0.0
    %7185 = vmatpush2.msra.mxu0 0.0
    %7186 = vmatprep.subr.mxu0 0.0
    %7187 = vmatpush2.msra.mxu0 0.0
    %7188 = vmatprep.subr.mxu0 0.0
    %7189 = vmatpush2.msra.mxu0 0.0
    %7190 = vmatprep.subr.mxu0 0.0
    %7191 = vmatpush2.msra.mxu0 0.0
    %7192 = vmatprep.mubr.f32.mxu0 0.0
    %7193 = vmatmul.mubr.f32.gmra.mxu0 %v7126
    %v7194 = vpop.f32.mrf.mxu0
    %v7195 = vadd.f32 %v7118, %v7194
    %v7196 = vpop.f32.mrf.mxu0
    %v7197 = vadd.f32 %v7122, %v7196
    %7198 = vdwg.mxu0
    %v7199 = vld [vmem:[#allocation3 + $0x88] sm:$0xff]
    %v7200 = vld [vmem:[#allocation3 + $0x130] sm:$0xff]
    %v7201 = vld [vmem:[#allocation3 + $0x1d8] sm:$0xff]
    %v7202 = vld [vmem:[#allocation3 + $0x280] sm:$0xff]
    %v7203 = vld [vmem:[#allocation3 + $0x328] sm:$0xff]
    %v7204 = vld [vmem:[#allocation3 + $0x3d0] sm:$0xff]
    %v7205 = vld [vmem:[#allocation3 + $0x478] sm:$0xff]
    %v7206 = vld [vmem:[#allocation3 + $0x520] sm:$0xff]
    %v7207 = vld [vmem:[%s6 + $0x62] ss:$0 sm:$0xff]
    %7209 = vrot.lane.b32.xlu0 %v7195, 64
    %v7210 = vpop.permute.xlu0 %7209
    %v7211 = vsel %vm666, %v7195, 0
    %v7213 = vsel %vm666, %v7210, 0
    %7215 = vmatprep.subr.mxu0 0.0
    %7216 = vmatpush1.xpose.msra.mxu0 0.0
    %7217 = vmatprep.subr.mxu0 0.0
    %7218 = vmatpush1.xpose.msra.mxu0 0.0
    %7219 = vmatprep.subr.mxu0 0.0
    %7220 = vmatpush1.xpose.msra.mxu0 0.0
    %7221 = vmatprep.subr.mxu0 0.0
    %7222 = vmatpush1.xpose.msra.mxu0 0.0
    %7223 = vmatprep.subr.mxu0 0.0
    %7224 = vmatpush1.xpose.msra.mxu0 0.0
    %7225 = vmatprep.subr.mxu0 0.0
    %7226 = vmatpush1.xpose.msra.mxu0 0.0
    %7227 = vmatprep.subr.mxu0 0.0
    %7228 = vmatpush1.xpose.msra.mxu0 0.0
    %7229 = vmatprep.subr.mxu0 0.0
    %7230 = vmatpush1.xpose.msra.mxu0 0.0
    %7231 = vmatprep.subr.mxu0 0.0
    %7232 = vmatpush1.xpose.msra.mxu0 0.0
    %7233 = vmatprep.subr.mxu0 0.0
    %7234 = vmatpush1.xpose.msra.mxu0 0.0
    %7235 = vmatprep.subr.mxu0 0.0
    %7236 = vmatpush1.xpose.msra.mxu0 0.0
    %7237 = vmatprep.subr.mxu0 0.0
    %7238 = vmatpush1.xpose.msra.mxu0 0.0
    %7239 = vmatprep.subr.mxu0 0.0
    %7240 = vmatpush1.xpose.msra.mxu0 0.0
    %7241 = vmatprep.subr.mxu0 0.0
    %7242 = vmatpush1.xpose.msra.mxu0 0.0
    %7243 = vmatprep.subr.mxu0 0.0
    %7244 = vmatpush1.xpose.msra.mxu0 0.0
    %7245 = vmatprep.subr.mxu0 0.0
    %7246 = vmatpush1.xpose.msra.mxu0 %v7213
    %7247 = vmatprep.subr.mxu0 0.0
    %7248 = vmatpush2.xpose.msra.mxu0 0.0
    %7249 = vmatprep.subr.mxu0 0.0
    %7250 = vmatpush2.xpose.msra.mxu0 0.0
    %7251 = vmatprep.subr.mxu0 0.0
    %7252 = vmatpush2.xpose.msra.mxu0 0.0
    %7253 = vmatprep.subr.mxu0 0.0
    %7254 = vmatpush2.xpose.msra.mxu0 0.0
    %7255 = vmatprep.subr.mxu0 0.0
    %7256 = vmatpush2.xpose.msra.mxu0 0.0
    %7257 = vmatprep.subr.mxu0 0.0
    %7258 = vmatpush2.xpose.msra.mxu0 0.0
    %7259 = vmatprep.subr.mxu0 0.0
    %7260 = vmatpush2.xpose.msra.mxu0 0.0
    %7261 = vmatprep.subr.mxu0 0.0
    %7262 = vmatpush2.xpose.msra.mxu0 0.0
    %7263 = vmatprep.subr.mxu0 0.0
    %7264 = vmatpush2.xpose.msra.mxu0 0.0
    %7265 = vmatprep.subr.mxu0 0.0
    %7266 = vmatpush2.xpose.msra.mxu0 0.0
    %7267 = vmatprep.subr.mxu0 0.0
    %7268 = vmatpush2.xpose.msra.mxu0 0.0
    %7269 = vmatprep.subr.mxu0 0.0
    %7270 = vmatpush2.xpose.msra.mxu0 0.0
    %7271 = vmatprep.subr.mxu0 0.0
    %7272 = vmatpush2.xpose.msra.mxu0 0.0
    %7273 = vmatprep.subr.mxu0 0.0
    %7274 = vmatpush2.xpose.msra.mxu0 0.0
    %7275 = vmatprep.subr.mxu0 0.0
    %7276 = vmatpush2.xpose.msra.mxu0 0.0
    %7277 = vmatprep.subr.mxu0 0.0
    %7278 = vmatpush2.xpose.msra.mxu0 0.0
    %7279 = vmatprep.mubr.f32.mxu0 0.0
    %7280 = vmatmul.mubr.f32.gmra.mxu0 %v7211
    %v7281 = vpop.f32.mrf.mxu0
    %v7282 = vadd.f32 0.0, %v7281
    %v7283 = vpop.f32.mrf.mxu0
    %7284 = vdwg.mxu0
    %v7285 = vmul.f32 %v7282, 0.35355338
    %v7286 = vsel %vm5352, %v7285, -inf
    %7287 = vmax.xlane.f32.xlu0 %v7286
    %v7288 = vpop.xlane.xlu0 %7287
    %v7289 = vsub.f32 %v7285, %v7288
    %v7290 = vmul.f32 %v7289, 1.442695
    %v7291 = vpow.pop %v7290
    %v7292 = vsel %vm5352, %v7291, 0.0
    %7293 = vadd.xlane.f32.xlu0 %v7292
    %v7294 = vpop.xlane.xlu0 %7293
    %v7295 = vrcp.pop %v7294
    %v7296 = vmul.f32 %v7291, %v7295
    %v7298 = vsel %vm5364, %v7296, 0
    %v7301 = vsel %vm5368, %v7197, 0
    %7303 = vmatprep.subr.mxu0 0.0
    %7304 = vmatpush1.msra.mxu0 0.0
    %7305 = vmatprep.subr.mxu0 0.0
    %7306 = vmatpush1.msra.mxu0 0.0
    %7307 = vmatprep.subr.mxu0 0.0
    %7308 = vmatpush1.msra.mxu0 0.0
    %7309 = vmatprep.subr.mxu0 0.0
    %7310 = vmatpush1.msra.mxu0 0.0
    %7311 = vmatprep.subr.mxu0 0.0
    %7312 = vmatpush1.msra.mxu0 0.0
    %7313 = vmatprep.subr.mxu0 0.0
    %7314 = vmatpush1.msra.mxu0 0.0
    %7315 = vmatprep.subr.mxu0 0.0
    %7316 = vmatpush1.msra.mxu0 0.0
    %7317 = vmatprep.subr.mxu0 0.0
    %7318 = vmatpush1.msra.mxu0 0.0
    %7319 = vmatprep.subr.mxu0 0.0
    %7320 = vmatpush1.msra.mxu0 0.0
    %7321 = vmatprep.subr.mxu0 0.0
    %7322 = vmatpush1.msra.mxu0 0.0
    %7323 = vmatprep.subr.mxu0 0.0
    %7324 = vmatpush1.msra.mxu0 0.0
    %7325 = vmatprep.subr.mxu0 0.0
    %7326 = vmatpush1.msra.mxu0 0.0
    %7327 = vmatprep.subr.mxu0 0.0
    %7328 = vmatpush1.msra.mxu0 0.0
    %7329 = vmatprep.subr.mxu0 0.0
    %7330 = vmatpush1.msra.mxu0 0.0
    %7331 = vmatprep.subr.mxu0 0.0
    %7332 = vmatpush1.msra.mxu0 0.0
    %7333 = vmatprep.subr.mxu0 0.0
    %7334 = vmatpush1.msra.mxu0 %v7301
    %7335 = vmatprep.subr.mxu0 0.0
    %7336 = vmatpush2.msra.mxu0 0.0
    %7337 = vmatprep.subr.mxu0 0.0
    %7338 = vmatpush2.msra.mxu0 0.0
    %7339 = vmatprep.subr.mxu0 0.0
    %7340 = vmatpush2.msra.mxu0 0.0
    %7341 = vmatprep.subr.mxu0 0.0
    %7342 = vmatpush2.msra.mxu0 0.0
    %7343 = vmatprep.subr.mxu0 0.0
    %7344 = vmatpush2.msra.mxu0 0.0
    %7345 = vmatprep.subr.mxu0 0.0
    %7346 = vmatpush2.msra.mxu0 0.0
    %7347 = vmatprep.subr.mxu0 0.0
    %7348 = vmatpush2.msra.mxu0 0.0
    %7349 = vmatprep.subr.mxu0 0.0
    %7350 = vmatpush2.msra.mxu0 0.0
    %7351 = vmatprep.subr.mxu0 0.0
    %7352 = vmatpush2.msra.mxu0 0.0
    %7353 = vmatprep.subr.mxu0 0.0
    %7354 = vmatpush2.msra.mxu0 0.0
    %7355 = vmatprep.subr.mxu0 0.0
    %7356 = vmatpush2.msra.mxu0 0.0
    %7357 = vmatprep.subr.mxu0 0.0
    %7358 = vmatpush2.msra.mxu0 0.0
    %7359 = vmatprep.subr.mxu0 0.0
    %7360 = vmatpush2.msra.mxu0 0.0
    %7361 = vmatprep.subr.mxu0 0.0
    %7362 = vmatpush2.msra.mxu0 0.0
    %7363 = vmatprep.subr.mxu0 0.0
    %7364 = vmatpush2.msra.mxu0 0.0
    %7365 = vmatprep.subr.mxu0 0.0
    %7366 = vmatpush2.msra.mxu0 0.0
    %7367 = vmatprep.mubr.f32.mxu0 0.0
    %7368 = vmatmul.mubr.f32.gmra.mxu0 %v7298
    %v7369 = vpop.f32.mrf.mxu0
    %v7370 = vadd.f32 0.0, %v7369
    %v7371 = vpop.f32.mrf.mxu0
    %7372 = vdwg.mxu0
    %7373 = vst.msk [vmem:[#allocation2] sm:$0x1f] %vm5442, %v7370
    %7374 = vrot.lane.b32.xlu0 %v7195, 120
    %v7375 = vpop.permute.xlu0 %7374
    %7376 = vrot.lane.b32.xlu0 %v7195, 56
    %v7377 = vpop.permute.xlu0 %7376
    %v7378 = vsel %vm666, %v7375, 0
    %v7380 = vsel %vm666, %v7377, 0
    %7382 = vmatprep.subr.mxu0 0.0
    %7383 = vmatpush1.xpose.msra.mxu0 0.0
    %7384 = vmatprep.subr.mxu0 0.0
    %7385 = vmatpush1.xpose.msra.mxu0 0.0
    %7386 = vmatprep.subr.mxu0 0.0
    %7387 = vmatpush1.xpose.msra.mxu0 0.0
    %7388 = vmatprep.subr.mxu0 0.0
    %7389 = vmatpush1.xpose.msra.mxu0 0.0
    %7390 = vmatprep.subr.mxu0 0.0
    %7391 = vmatpush1.xpose.msra.mxu0 0.0
    %7392 = vmatprep.subr.mxu0 0.0
    %7393 = vmatpush1.xpose.msra.mxu0 0.0
    %7394 = vmatprep.subr.mxu0 0.0
    %7395 = vmatpush1.xpose.msra.mxu0 0.0
    %7396 = vmatprep.subr.mxu0 0.0
    %7397 = vmatpush1.xpose.msra.mxu0 0.0
    %7398 = vmatprep.subr.mxu0 0.0
    %7399 = vmatpush1.xpose.msra.mxu0 0.0
    %7400 = vmatprep.subr.mxu0 0.0
    %7401 = vmatpush1.xpose.msra.mxu0 0.0
    %7402 = vmatprep.subr.mxu0 0.0
    %7403 = vmatpush1.xpose.msra.mxu0 0.0
    %7404 = vmatprep.subr.mxu0 0.0
    %7405 = vmatpush1.xpose.msra.mxu0 0.0
    %7406 = vmatprep.subr.mxu0 0.0
    %7407 = vmatpush1.xpose.msra.mxu0 0.0
    %7408 = vmatprep.subr.mxu0 0.0
    %7409 = vmatpush1.xpose.msra.mxu0 0.0
    %7410 = vmatprep.subr.mxu0 0.0
    %7411 = vmatpush1.xpose.msra.mxu0 0.0
    %7412 = vmatprep.subr.mxu0 0.0
    %7413 = vmatpush1.xpose.msra.mxu0 %v7380
    %7414 = vmatprep.subr.mxu0 0.0
    %7415 = vmatpush2.xpose.msra.mxu0 0.0
    %7416 = vmatprep.subr.mxu0 0.0
    %7417 = vmatpush2.xpose.msra.mxu0 0.0
    %7418 = vmatprep.subr.mxu0 0.0
    %7419 = vmatpush2.xpose.msra.mxu0 0.0
    %7420 = vmatprep.subr.mxu0 0.0
    %7421 = vmatpush2.xpose.msra.mxu0 0.0
    %7422 = vmatprep.subr.mxu0 0.0
    %7423 = vmatpush2.xpose.msra.mxu0 0.0
    %7424 = vmatprep.subr.mxu0 0.0
    %7425 = vmatpush2.xpose.msra.mxu0 0.0
    %7426 = vmatprep.subr.mxu0 0.0
    %7427 = vmatpush2.xpose.msra.mxu0 0.0
    %7428 = vmatprep.subr.mxu0 0.0
    %7429 = vmatpush2.xpose.msra.mxu0 0.0
    %7430 = vmatprep.subr.mxu0 0.0
    %7431 = vmatpush2.xpose.msra.mxu0 0.0
    %7432 = vmatprep.subr.mxu0 0.0
    %7433 = vmatpush2.xpose.msra.mxu0 0.0
    %7434 = vmatprep.subr.mxu0 0.0
    %7435 = vmatpush2.xpose.msra.mxu0 0.0
    %7436 = vmatprep.subr.mxu0 0.0
    %7437 = vmatpush2.xpose.msra.mxu0 0.0
    %7438 = vmatprep.subr.mxu0 0.0
    %7439 = vmatpush2.xpose.msra.mxu0 0.0
    %7440 = vmatprep.subr.mxu0 0.0
    %7441 = vmatpush2.xpose.msra.mxu0 0.0
    %7442 = vmatprep.subr.mxu0 0.0
    %7443 = vmatpush2.xpose.msra.mxu0 0.0
    %7444 = vmatprep.subr.mxu0 0.0
    %7445 = vmatpush2.xpose.msra.mxu0 0.0
    %7446 = vmatprep.mubr.f32.mxu0 0.0
    %7447 = vmatmul.mubr.f32.gmra.mxu0 %v7378
    %v7448 = vpop.f32.mrf.mxu0
    %v7449 = vadd.f32 0.0, %v7448
    %v7450 = vpop.f32.mrf.mxu0
    %7451 = vdwg.mxu0
    %v7452 = vmul.f32 %v7449, 0.35355338
    %v7453 = vsel %vm5352, %v7452, -inf
    %7454 = vmax.xlane.f32.xlu0 %v7453
    %v7455 = vpop.xlane.xlu0 %7454
    %v7456 = vsub.f32 %v7452, %v7455
    %v7457 = vmul.f32 %v7456, 1.442695
    %v7458 = vpow.pop %v7457
    %v7459 = vsel %vm5352, %v7458, 0.0
    %7460 = vadd.xlane.f32.xlu0 %v7459
    %v7461 = vpop.xlane.xlu0 %7460
    %v7462 = vrcp.pop %v7461
    %v7463 = vmul.f32 %v7458, %v7462
    %7464 = vrot.lane.b32.xlu0 %v7197, 120
    %v7465 = vpop.permute.xlu0 %7464
    %v7467 = vsel %vm5364, %v7463, 0
    %v7469 = vsel %vm5368, %v7465, 0
    %7471 = vmatprep.subr.mxu0 0.0
    %7472 = vmatpush1.msra.mxu0 0.0
    %7473 = vmatprep.subr.mxu0 0.0
    %7474 = vmatpush1.msra.mxu0 0.0
    %7475 = vmatprep.subr.mxu0 0.0
    %7476 = vmatpush1.msra.mxu0 0.0
    %7477 = vmatprep.subr.mxu0 0.0
    %7478 = vmatpush1.msra.mxu0 0.0
    %7479 = vmatprep.subr.mxu0 0.0
    %7480 = vmatpush1.msra.mxu0 0.0
    %7481 = vmatprep.subr.mxu0 0.0
    %7482 = vmatpush1.msra.mxu0 0.0
    %7483 = vmatprep.subr.mxu0 0.0
    %7484 = vmatpush1.msra.mxu0 0.0
    %7485 = vmatprep.subr.mxu0 0.0
    %7486 = vmatpush1.msra.mxu0 0.0
    %7487 = vmatprep.subr.mxu0 0.0
    %7488 = vmatpush1.msra.mxu0 0.0
    %7489 = vmatprep.subr.mxu0 0.0
    %7490 = vmatpush1.msra.mxu0 0.0
    %7491 = vmatprep.subr.mxu0 0.0
    %7492 = vmatpush1.msra.mxu0 0.0
    %7493 = vmatprep.subr.mxu0 0.0
    %7494 = vmatpush1.msra.mxu0 0.0
    %7495 = vmatprep.subr.mxu0 0.0
    %7496 = vmatpush1.msra.mxu0 0.0
    %7497 = vmatprep.subr.mxu0 0.0
    %7498 = vmatpush1.msra.mxu0 0.0
    %7499 = vmatprep.subr.mxu0 0.0
    %7500 = vmatpush1.msra.mxu0 0.0
    %7501 = vmatprep.subr.mxu0 0.0
    %7502 = vmatpush1.msra.mxu0 %v7469
    %7503 = vmatprep.subr.mxu0 0.0
    %7504 = vmatpush2.msra.mxu0 0.0
    %7505 = vmatprep.subr.mxu0 0.0
    %7506 = vmatpush2.msra.mxu0 0.0
    %7507 = vmatprep.subr.mxu0 0.0
    %7508 = vmatpush2.msra.mxu0 0.0
    %7509 = vmatprep.subr.mxu0 0.0
    %7510 = vmatpush2.msra.mxu0 0.0
    %7511 = vmatprep.subr.mxu0 0.0
    %7512 = vmatpush2.msra.mxu0 0.0
    %7513 = vmatprep.subr.mxu0 0.0
    %7514 = vmatpush2.msra.mxu0 0.0
    %7515 = vmatprep.subr.mxu0 0.0
    %7516 = vmatpush2.msra.mxu0 0.0
    %7517 = vmatprep.subr.mxu0 0.0
    %7518 = vmatpush2.msra.mxu0 0.0
    %7519 = vmatprep.subr.mxu0 0.0
    %7520 = vmatpush2.msra.mxu0 0.0
    %7521 = vmatprep.subr.mxu0 0.0
    %7522 = vmatpush2.msra.mxu0 0.0
    %7523 = vmatprep.subr.mxu0 0.0
    %7524 = vmatpush2.msra.mxu0 0.0
    %7525 = vmatprep.subr.mxu0 0.0
    %7526 = vmatpush2.msra.mxu0 0.0
    %7527 = vmatprep.subr.mxu0 0.0
    %7528 = vmatpush2.msra.mxu0 0.0
    %7529 = vmatprep.subr.mxu0 0.0
    %7530 = vmatpush2.msra.mxu0 0.0
    %7531 = vmatprep.subr.mxu0 0.0
    %7532 = vmatpush2.msra.mxu0 0.0
    %7533 = vmatprep.subr.mxu0 0.0
    %7534 = vmatpush2.msra.mxu0 0.0
    %7535 = vmatprep.mubr.f32.mxu0 0.0
    %7536 = vmatmul.mubr.f32.gmra.mxu0 %v7467
    %v7537 = vpop.f32.mrf.mxu0
    %v7538 = vadd.f32 0.0, %v7537
    %v7539 = vpop.f32.mrf.mxu0
    %7540 = vdwg.mxu0
    %7542 = vrot.lane.b32.xlu0 %v7538, 8
    %v7543 = vpop.permute.xlu0 %7542
    %7545 = vst.msk [vmem:[#allocation2] sm:$0x1f] %vm5615, %v7543
    %7546 = vrot.lane.b32.xlu0 %v7195, 112
    %v7547 = vpop.permute.xlu0 %7546
    %7548 = vrot.lane.b32.xlu0 %v7195, 48
    %v7549 = vpop.permute.xlu0 %7548
    %v7550 = vsel %vm666, %v7547, 0
    %v7552 = vsel %vm666, %v7549, 0
    %7554 = vmatprep.subr.mxu0 0.0
    %7555 = vmatpush1.xpose.msra.mxu0 0.0
    %7556 = vmatprep.subr.mxu0 0.0
    %7557 = vmatpush1.xpose.msra.mxu0 0.0
    %7558 = vmatprep.subr.mxu0 0.0
    %7559 = vmatpush1.xpose.msra.mxu0 0.0
    %7560 = vmatprep.subr.mxu0 0.0
    %7561 = vmatpush1.xpose.msra.mxu0 0.0
    %7562 = vmatprep.subr.mxu0 0.0
    %7563 = vmatpush1.xpose.msra.mxu0 0.0
    %7564 = vmatprep.subr.mxu0 0.0
    %7565 = vmatpush1.xpose.msra.mxu0 0.0
    %7566 = vmatprep.subr.mxu0 0.0
    %7567 = vmatpush1.xpose.msra.mxu0 0.0
    %7568 = vmatprep.subr.mxu0 0.0
    %7569 = vmatpush1.xpose.msra.mxu0 0.0
    %7570 = vmatprep.subr.mxu0 0.0
    %7571 = vmatpush1.xpose.msra.mxu0 0.0
    %7572 = vmatprep.subr.mxu0 0.0
    %7573 = vmatpush1.xpose.msra.mxu0 0.0
    %7574 = vmatprep.subr.mxu0 0.0
    %7575 = vmatpush1.xpose.msra.mxu0 0.0
    %7576 = vmatprep.subr.mxu0 0.0
    %7577 = vmatpush1.xpose.msra.mxu0 0.0
    %7578 = vmatprep.subr.mxu0 0.0
    %7579 = vmatpush1.xpose.msra.mxu0 0.0
    %7580 = vmatprep.subr.mxu0 0.0
    %7581 = vmatpush1.xpose.msra.mxu0 0.0
    %7582 = vmatprep.subr.mxu0 0.0
    %7583 = vmatpush1.xpose.msra.mxu0 0.0
    %7584 = vmatprep.subr.mxu0 0.0
    %7585 = vmatpush1.xpose.msra.mxu0 %v7552
    %7586 = vmatprep.subr.mxu0 0.0
    %7587 = vmatpush2.xpose.msra.mxu0 0.0
    %7588 = vmatprep.subr.mxu0 0.0
    %7589 = vmatpush2.xpose.msra.mxu0 0.0
    %7590 = vmatprep.subr.mxu0 0.0
    %7591 = vmatpush2.xpose.msra.mxu0 0.0
    %7592 = vmatprep.subr.mxu0 0.0
    %7593 = vmatpush2.xpose.msra.mxu0 0.0
    %7594 = vmatprep.subr.mxu0 0.0
    %7595 = vmatpush2.xpose.msra.mxu0 0.0
    %7596 = vmatprep.subr.mxu0 0.0
    %7597 = vmatpush2.xpose.msra.mxu0 0.0
    %7598 = vmatprep.subr.mxu0 0.0
    %7599 = vmatpush2.xpose.msra.mxu0 0.0
    %7600 = vmatprep.subr.mxu0 0.0
    %7601 = vmatpush2.xpose.msra.mxu0 0.0
    %7602 = vmatprep.subr.mxu0 0.0
    %7603 = vmatpush2.xpose.msra.mxu0 0.0
    %7604 = vmatprep.subr.mxu0 0.0
    %7605 = vmatpush2.xpose.msra.mxu0 0.0
    %7606 = vmatprep.subr.mxu0 0.0
    %7607 = vmatpush2.xpose.msra.mxu0 0.0
    %7608 = vmatprep.subr.mxu0 0.0
    %7609 = vmatpush2.xpose.msra.mxu0 0.0
    %7610 = vmatprep.subr.mxu0 0.0
    %7611 = vmatpush2.xpose.msra.mxu0 0.0
    %7612 = vmatprep.subr.mxu0 0.0
    %7613 = vmatpush2.xpose.msra.mxu0 0.0
    %7614 = vmatprep.subr.mxu0 0.0
    %7615 = vmatpush2.xpose.msra.mxu0 0.0
    %7616 = vmatprep.subr.mxu0 0.0
    %7617 = vmatpush2.xpose.msra.mxu0 0.0
    %7618 = vmatprep.mubr.f32.mxu0 0.0
    %7619 = vmatmul.mubr.f32.gmra.mxu0 %v7550
    %v7620 = vpop.f32.mrf.mxu0
    %v7621 = vadd.f32 0.0, %v7620
    %v7622 = vpop.f32.mrf.mxu0
    %7623 = vdwg.mxu0
    %v7624 = vmul.f32 %v7621, 0.35355338
    %v7625 = vsel %vm5352, %v7624, -inf
    %7626 = vmax.xlane.f32.xlu0 %v7625
    %v7627 = vpop.xlane.xlu0 %7626
    %v7628 = vsub.f32 %v7624, %v7627
    %v7629 = vmul.f32 %v7628, 1.442695
    %v7630 = vpow.pop %v7629
    %v7631 = vsel %vm5352, %v7630, 0.0
    %7632 = vadd.xlane.f32.xlu0 %v7631
    %v7633 = vpop.xlane.xlu0 %7632
    %v7634 = vrcp.pop %v7633
    %v7635 = vmul.f32 %v7630, %v7634
    %7636 = vrot.lane.b32.xlu0 %v7197, 112
    %v7637 = vpop.permute.xlu0 %7636
    %v7639 = vsel %vm5364, %v7635, 0
    %v7641 = vsel %vm5368, %v7637, 0
    %7643 = vmatprep.subr.mxu0 0.0
    %7644 = vmatpush1.msra.mxu0 0.0
    %7645 = vmatprep.subr.mxu0 0.0
    %7646 = vmatpush1.msra.mxu0 0.0
    %7647 = vmatprep.subr.mxu0 0.0
    %7648 = vmatpush1.msra.mxu0 0.0
    %7649 = vmatprep.subr.mxu0 0.0
    %7650 = vmatpush1.msra.mxu0 0.0
    %7651 = vmatprep.subr.mxu0 0.0
    %7652 = vmatpush1.msra.mxu0 0.0
    %7653 = vmatprep.subr.mxu0 0.0
    %7654 = vmatpush1.msra.mxu0 0.0
    %7655 = vmatprep.subr.mxu0 0.0
    %7656 = vmatpush1.msra.mxu0 0.0
    %7657 = vmatprep.subr.mxu0 0.0
    %7658 = vmatpush1.msra.mxu0 0.0
    %7659 = vmatprep.subr.mxu0 0.0
    %7660 = vmatpush1.msra.mxu0 0.0
    %7661 = vmatprep.subr.mxu0 0.0
    %7662 = vmatpush1.msra.mxu0 0.0
    %7663 = vmatprep.subr.mxu0 0.0
    %7664 = vmatpush1.msra.mxu0 0.0
    %7665 = vmatprep.subr.mxu0 0.0
    %7666 = vmatpush1.msra.mxu0 0.0
    %7667 = vmatprep.subr.mxu0 0.0
    %7668 = vmatpush1.msra.mxu0 0.0
    %7669 = vmatprep.subr.mxu0 0.0
    %7670 = vmatpush1.msra.mxu0 0.0
    %7671 = vmatprep.subr.mxu0 0.0
    %7672 = vmatpush1.msra.mxu0 0.0
    %7673 = vmatprep.subr.mxu0 0.0
    %7674 = vmatpush1.msra.mxu0 %v7641
    %7675 = vmatprep.subr.mxu0 0.0
    %7676 = vmatpush2.msra.mxu0 0.0
    %7677 = vmatprep.subr.mxu0 0.0
    %7678 = vmatpush2.msra.mxu0 0.0
    %7679 = vmatprep.subr.mxu0 0.0
    %7680 = vmatpush2.msra.mxu0 0.0
    %7681 = vmatprep.subr.mxu0 0.0
    %7682 = vmatpush2.msra.mxu0 0.0
    %7683 = vmatprep.subr.mxu0 0.0
    %7684 = vmatpush2.msra.mxu0 0.0
    %7685 = vmatprep.subr.mxu0 0.0
    %7686 = vmatpush2.msra.mxu0 0.0
    %7687 = vmatprep.subr.mxu0 0.0
    %7688 = vmatpush2.msra.mxu0 0.0
    %7689 = vmatprep.subr.mxu0 0.0
    %7690 = vmatpush2.msra.mxu0 0.0
    %7691 = vmatprep.subr.mxu0 0.0
    %7692 = vmatpush2.msra.mxu0 0.0
    %7693 = vmatprep.subr.mxu0 0.0
    %7694 = vmatpush2.msra.mxu0 0.0
    %7695 = vmatprep.subr.mxu0 0.0
    %7696 = vmatpush2.msra.mxu0 0.0
    %7697 = vmatprep.subr.mxu0 0.0
    %7698 = vmatpush2.msra.mxu0 0.0
    %7699 = vmatprep.subr.mxu0 0.0
    %7700 = vmatpush2.msra.mxu0 0.0
    %7701 = vmatprep.subr.mxu0 0.0
    %7702 = vmatpush2.msra.mxu0 0.0
    %7703 = vmatprep.subr.mxu0 0.0
    %7704 = vmatpush2.msra.mxu0 0.0
    %7705 = vmatprep.subr.mxu0 0.0
    %7706 = vmatpush2.msra.mxu0 0.0
    %7707 = vmatprep.mubr.f32.mxu0 0.0
    %7708 = vmatmul.mubr.f32.gmra.mxu0 %v7639
    %v7709 = vpop.f32.mrf.mxu0
    %v7710 = vadd.f32 0.0, %v7709
    %v7711 = vpop.f32.mrf.mxu0
    %7712 = vdwg.mxu0
    %7714 = vrot.lane.b32.xlu0 %v7710, 16
    %v7715 = vpop.permute.xlu0 %7714
    %7717 = vst.msk [vmem:[#allocation2] sm:$0x1f] %vm5788, %v7715
    %7718 = vrot.lane.b32.xlu0 %v7195, 104
    %v7719 = vpop.permute.xlu0 %7718
    %7720 = vrot.lane.b32.xlu0 %v7195, 40
    %v7721 = vpop.permute.xlu0 %7720
    %v7722 = vsel %vm666, %v7719, 0
    %v7724 = vsel %vm666, %v7721, 0
    %7726 = vmatprep.subr.mxu0 0.0
    %7727 = vmatpush1.xpose.msra.mxu0 0.0
    %7728 = vmatprep.subr.mxu0 0.0
    %7729 = vmatpush1.xpose.msra.mxu0 0.0
    %7730 = vmatprep.subr.mxu0 0.0
    %7731 = vmatpush1.xpose.msra.mxu0 0.0
    %7732 = vmatprep.subr.mxu0 0.0
    %7733 = vmatpush1.xpose.msra.mxu0 0.0
    %7734 = vmatprep.subr.mxu0 0.0
    %7735 = vmatpush1.xpose.msra.mxu0 0.0
    %7736 = vmatprep.subr.mxu0 0.0
    %7737 = vmatpush1.xpose.msra.mxu0 0.0
    %7738 = vmatprep.subr.mxu0 0.0
    %7739 = vmatpush1.xpose.msra.mxu0 0.0
    %7740 = vmatprep.subr.mxu0 0.0
    %7741 = vmatpush1.xpose.msra.mxu0 0.0
    %7742 = vmatprep.subr.mxu0 0.0
    %7743 = vmatpush1.xpose.msra.mxu0 0.0
    %7744 = vmatprep.subr.mxu0 0.0
    %7745 = vmatpush1.xpose.msra.mxu0 0.0
    %7746 = vmatprep.subr.mxu0 0.0
    %7747 = vmatpush1.xpose.msra.mxu0 0.0
    %7748 = vmatprep.subr.mxu0 0.0
    %7749 = vmatpush1.xpose.msra.mxu0 0.0
    %7750 = vmatprep.subr.mxu0 0.0
    %7751 = vmatpush1.xpose.msra.mxu0 0.0
    %7752 = vmatprep.subr.mxu0 0.0
    %7753 = vmatpush1.xpose.msra.mxu0 0.0
    %7754 = vmatprep.subr.mxu0 0.0
    %7755 = vmatpush1.xpose.msra.mxu0 0.0
    %7756 = vmatprep.subr.mxu0 0.0
    %7757 = vmatpush1.xpose.msra.mxu0 %v7724
    %7758 = vmatprep.subr.mxu0 0.0
    %7759 = vmatpush2.xpose.msra.mxu0 0.0
    %7760 = vmatprep.subr.mxu0 0.0
    %7761 = vmatpush2.xpose.msra.mxu0 0.0
    %7762 = vmatprep.subr.mxu0 0.0
    %7763 = vmatpush2.xpose.msra.mxu0 0.0
    %7764 = vmatprep.subr.mxu0 0.0
    %7765 = vmatpush2.xpose.msra.mxu0 0.0
    %7766 = vmatprep.subr.mxu0 0.0
    %7767 = vmatpush2.xpose.msra.mxu0 0.0
    %7768 = vmatprep.subr.mxu0 0.0
    %7769 = vmatpush2.xpose.msra.mxu0 0.0
    %7770 = vmatprep.subr.mxu0 0.0
    %7771 = vmatpush2.xpose.msra.mxu0 0.0
    %7772 = vmatprep.subr.mxu0 0.0
    %7773 = vmatpush2.xpose.msra.mxu0 0.0
    %7774 = vmatprep.subr.mxu0 0.0
    %7775 = vmatpush2.xpose.msra.mxu0 0.0
    %7776 = vmatprep.subr.mxu0 0.0
    %7777 = vmatpush2.xpose.msra.mxu0 0.0
    %7778 = vmatprep.subr.mxu0 0.0
    %7779 = vmatpush2.xpose.msra.mxu0 0.0
    %7780 = vmatprep.subr.mxu0 0.0
    %7781 = vmatpush2.xpose.msra.mxu0 0.0
    %7782 = vmatprep.subr.mxu0 0.0
    %7783 = vmatpush2.xpose.msra.mxu0 0.0
    %7784 = vmatprep.subr.mxu0 0.0
    %7785 = vmatpush2.xpose.msra.mxu0 0.0
    %7786 = vmatprep.subr.mxu0 0.0
    %7787 = vmatpush2.xpose.msra.mxu0 0.0
    %7788 = vmatprep.subr.mxu0 0.0
    %7789 = vmatpush2.xpose.msra.mxu0 0.0
    %7790 = vmatprep.mubr.f32.mxu0 0.0
    %7791 = vmatmul.mubr.f32.gmra.mxu0 %v7722
    %v7792 = vpop.f32.mrf.mxu0
    %v7793 = vadd.f32 0.0, %v7792
    %v7794 = vpop.f32.mrf.mxu0
    %7795 = vdwg.mxu0
    %v7796 = vmul.f32 %v7793, 0.35355338
    %v7797 = vsel %vm5352, %v7796, -inf
    %7798 = vmax.xlane.f32.xlu0 %v7797
    %v7799 = vpop.xlane.xlu0 %7798
    %v7800 = vsub.f32 %v7796, %v7799
    %v7801 = vmul.f32 %v7800, 1.442695
    %v7802 = vpow.pop %v7801
    %v7803 = vsel %vm5352, %v7802, 0.0
    %7804 = vadd.xlane.f32.xlu0 %v7803
    %v7805 = vpop.xlane.xlu0 %7804
    %v7806 = vrcp.pop %v7805
    %v7807 = vmul.f32 %v7802, %v7806
    %7808 = vrot.lane.b32.xlu0 %v7197, 104
    %v7809 = vpop.permute.xlu0 %7808
    %v7811 = vsel %vm5364, %v7807, 0
    %v7813 = vsel %vm5368, %v7809, 0
    %7815 = vmatprep.subr.mxu0 0.0
    %7816 = vmatpush1.msra.mxu0 0.0
    %7817 = vmatprep.subr.mxu0 0.0
    %7818 = vmatpush1.msra.mxu0 0.0
    %7819 = vmatprep.subr.mxu0 0.0
    %7820 = vmatpush1.msra.mxu0 0.0
    %7821 = vmatprep.subr.mxu0 0.0
    %7822 = vmatpush1.msra.mxu0 0.0
    %7823 = vmatprep.subr.mxu0 0.0
    %7824 = vmatpush1.msra.mxu0 0.0
    %7825 = vmatprep.subr.mxu0 0.0
    %7826 = vmatpush1.msra.mxu0 0.0
    %7827 = vmatprep.subr.mxu0 0.0
    %7828 = vmatpush1.msra.mxu0 0.0
    %7829 = vmatprep.subr.mxu0 0.0
    %7830 = vmatpush1.msra.mxu0 0.0
    %7831 = vmatprep.subr.mxu0 0.0
    %7832 = vmatpush1.msra.mxu0 0.0
    %7833 = vmatprep.subr.mxu0 0.0
    %7834 = vmatpush1.msra.mxu0 0.0
    %7835 = vmatprep.subr.mxu0 0.0
    %7836 = vmatpush1.msra.mxu0 0.0
    %7837 = vmatprep.subr.mxu0 0.0
    %7838 = vmatpush1.msra.mxu0 0.0
    %7839 = vmatprep.subr.mxu0 0.0
    %7840 = vmatpush1.msra.mxu0 0.0
    %7841 = vmatprep.subr.mxu0 0.0
    %7842 = vmatpush1.msra.mxu0 0.0
    %7843 = vmatprep.subr.mxu0 0.0
    %7844 = vmatpush1.msra.mxu0 0.0
    %7845 = vmatprep.subr.mxu0 0.0
    %7846 = vmatpush1.msra.mxu0 %v7813
    %7847 = vmatprep.subr.mxu0 0.0
    %7848 = vmatpush2.msra.mxu0 0.0
    %7849 = vmatprep.subr.mxu0 0.0
    %7850 = vmatpush2.msra.mxu0 0.0
    %7851 = vmatprep.subr.mxu0 0.0
    %7852 = vmatpush2.msra.mxu0 0.0
    %7853 = vmatprep.subr.mxu0 0.0
    %7854 = vmatpush2.msra.mxu0 0.0
    %7855 = vmatprep.subr.mxu0 0.0
    %7856 = vmatpush2.msra.mxu0 0.0
    %7857 = vmatprep.subr.mxu0 0.0
    %7858 = vmatpush2.msra.mxu0 0.0
    %7859 = vmatprep.subr.mxu0 0.0
    %7860 = vmatpush2.msra.mxu0 0.0
    %7861 = vmatprep.subr.mxu0 0.0
    %7862 = vmatpush2.msra.mxu0 0.0
    %7863 = vmatprep.subr.mxu0 0.0
    %7864 = vmatpush2.msra.mxu0 0.0
    %7865 = vmatprep.subr.mxu0 0.0
    %7866 = vmatpush2.msra.mxu0 0.0
    %7867 = vmatprep.subr.mxu0 0.0
    %7868 = vmatpush2.msra.mxu0 0.0
    %7869 = vmatprep.subr.mxu0 0.0
    %7870 = vmatpush2.msra.mxu0 0.0
    %7871 = vmatprep.subr.mxu0 0.0
    %7872 = vmatpush2.msra.mxu0 0.0
    %7873 = vmatprep.subr.mxu0 0.0
    %7874 = vmatpush2.msra.mxu0 0.0
    %7875 = vmatprep.subr.mxu0 0.0
    %7876 = vmatpush2.msra.mxu0 0.0
    %7877 = vmatprep.subr.mxu0 0.0
    %7878 = vmatpush2.msra.mxu0 0.0
    %7879 = vmatprep.mubr.f32.mxu0 0.0
    %7880 = vmatmul.mubr.f32.gmra.mxu0 %v7811
    %v7881 = vpop.f32.mrf.mxu0
    %v7882 = vadd.f32 0.0, %v7881
    %v7883 = vpop.f32.mrf.mxu0
    %7884 = vdwg.mxu0
    %7886 = vrot.lane.b32.xlu0 %v7882, 24
    %v7887 = vpop.permute.xlu0 %7886
    %7889 = vst.msk [vmem:[#allocation2] sm:$0x1f] %vm5961, %v7887
    %7890 = vrot.lane.b32.xlu0 %v7195, 96
    %v7891 = vpop.permute.xlu0 %7890
    %7892 = vrot.lane.b32.xlu0 %v7195, 32
    %v7893 = vpop.permute.xlu0 %7892
    %v7894 = vsel %vm666, %v7891, 0
    %v7896 = vsel %vm666, %v7893, 0
    %7898 = vmatprep.subr.mxu0 0.0
    %7899 = vmatpush1.xpose.msra.mxu0 0.0
    %7900 = vmatprep.subr.mxu0 0.0
    %7901 = vmatpush1.xpose.msra.mxu0 0.0
    %7902 = vmatprep.subr.mxu0 0.0
    %7903 = vmatpush1.xpose.msra.mxu0 0.0
    %7904 = vmatprep.subr.mxu0 0.0
    %7905 = vmatpush1.xpose.msra.mxu0 0.0
    %7906 = vmatprep.subr.mxu0 0.0
    %7907 = vmatpush1.xpose.msra.mxu0 0.0
    %7908 = vmatprep.subr.mxu0 0.0
    %7909 = vmatpush1.xpose.msra.mxu0 0.0
    %7910 = vmatprep.subr.mxu0 0.0
    %7911 = vmatpush1.xpose.msra.mxu0 0.0
    %7912 = vmatprep.subr.mxu0 0.0
    %7913 = vmatpush1.xpose.msra.mxu0 0.0
    %7914 = vmatprep.subr.mxu0 0.0
    %7915 = vmatpush1.xpose.msra.mxu0 0.0
    %7916 = vmatprep.subr.mxu0 0.0
    %7917 = vmatpush1.xpose.msra.mxu0 0.0
    %7918 = vmatprep.subr.mxu0 0.0
    %7919 = vmatpush1.xpose.msra.mxu0 0.0
    %7920 = vmatprep.subr.mxu0 0.0
    %7921 = vmatpush1.xpose.msra.mxu0 0.0
    %7922 = vmatprep.subr.mxu0 0.0
    %7923 = vmatpush1.xpose.msra.mxu0 0.0
    %7924 = vmatprep.subr.mxu0 0.0
    %7925 = vmatpush1.xpose.msra.mxu0 0.0
    %7926 = vmatprep.subr.mxu0 0.0
    %7927 = vmatpush1.xpose.msra.mxu0 0.0
    %7928 = vmatprep.subr.mxu0 0.0
    %7929 = vmatpush1.xpose.msra.mxu0 %v7896
    %7930 = vmatprep.subr.mxu0 0.0
    %7931 = vmatpush2.xpose.msra.mxu0 0.0
    %7932 = vmatprep.subr.mxu0 0.0
    %7933 = vmatpush2.xpose.msra.mxu0 0.0
    %7934 = vmatprep.subr.mxu0 0.0
    %7935 = vmatpush2.xpose.msra.mxu0 0.0
    %7936 = vmatprep.subr.mxu0 0.0
    %7937 = vmatpush2.xpose.msra.mxu0 0.0
    %7938 = vmatprep.subr.mxu0 0.0
    %7939 = vmatpush2.xpose.msra.mxu0 0.0
    %7940 = vmatprep.subr.mxu0 0.0
    %7941 = vmatpush2.xpose.msra.mxu0 0.0
    %7942 = vmatprep.subr.mxu0 0.0
    %7943 = vmatpush2.xpose.msra.mxu0 0.0
    %7944 = vmatprep.subr.mxu0 0.0
    %7945 = vmatpush2.xpose.msra.mxu0 0.0
    %7946 = vmatprep.subr.mxu0 0.0
    %7947 = vmatpush2.xpose.msra.mxu0 0.0
    %7948 = vmatprep.subr.mxu0 0.0
    %7949 = vmatpush2.xpose.msra.mxu0 0.0
    %7950 = vmatprep.subr.mxu0 0.0
    %7951 = vmatpush2.xpose.msra.mxu0 0.0
    %7952 = vmatprep.subr.mxu0 0.0
    %7953 = vmatpush2.xpose.msra.mxu0 0.0
    %7954 = vmatprep.subr.mxu0 0.0
    %7955 = vmatpush2.xpose.msra.mxu0 0.0
    %7956 = vmatprep.subr.mxu0 0.0
    %7957 = vmatpush2.xpose.msra.mxu0 0.0
    %7958 = vmatprep.subr.mxu0 0.0
    %7959 = vmatpush2.xpose.msra.mxu0 0.0
    %7960 = vmatprep.subr.mxu0 0.0
    %7961 = vmatpush2.xpose.msra.mxu0 0.0
    %7962 = vmatprep.mubr.f32.mxu0 0.0
    %7963 = vmatmul.mubr.f32.gmra.mxu0 %v7894
    %v7964 = vpop.f32.mrf.mxu0
    %v7965 = vadd.f32 0.0, %v7964
    %v7966 = vpop.f32.mrf.mxu0
    %7967 = vdwg.mxu0
    %v7968 = vmul.f32 %v7965, 0.35355338
    %v7969 = vsel %vm5352, %v7968, -inf
    %7970 = vmax.xlane.f32.xlu0 %v7969
    %v7971 = vpop.xlane.xlu0 %7970
    %v7972 = vsub.f32 %v7968, %v7971
    %v7973 = vmul.f32 %v7972, 1.442695
    %v7974 = vpow.pop %v7973
    %v7975 = vsel %vm5352, %v7974, 0.0
    %7976 = vadd.xlane.f32.xlu0 %v7975
    %v7977 = vpop.xlane.xlu0 %7976
    %v7978 = vrcp.pop %v7977
    %v7979 = vmul.f32 %v7974, %v7978
    %7980 = vrot.lane.b32.xlu0 %v7197, 96
    %v7981 = vpop.permute.xlu0 %7980
    %v7983 = vsel %vm5364, %v7979, 0
    %v7985 = vsel %vm5368, %v7981, 0
    %7987 = vmatprep.subr.mxu0 0.0
    %7988 = vmatpush1.msra.mxu0 0.0
    %7989 = vmatprep.subr.mxu0 0.0
    %7990 = vmatpush1.msra.mxu0 0.0
    %7991 = vmatprep.subr.mxu0 0.0
    %7992 = vmatpush1.msra.mxu0 0.0
    %7993 = vmatprep.subr.mxu0 0.0
    %7994 = vmatpush1.msra.mxu0 0.0
    %7995 = vmatprep.subr.mxu0 0.0
    %7996 = vmatpush1.msra.mxu0 0.0
    %7997 = vmatprep.subr.mxu0 0.0
    %7998 = vmatpush1.msra.mxu0 0.0
    %7999 = vmatprep.subr.mxu0 0.0
    %8000 = vmatpush1.msra.mxu0 0.0
    %8001 = vmatprep.subr.mxu0 0.0
    %8002 = vmatpush1.msra.mxu0 0.0
    %8003 = vmatprep.subr.mxu0 0.0
    %8004 = vmatpush1.msra.mxu0 0.0
    %8005 = vmatprep.subr.mxu0 0.0
    %8006 = vmatpush1.msra.mxu0 0.0
    %8007 = vmatprep.subr.mxu0 0.0
    %8008 = vmatpush1.msra.mxu0 0.0
    %8009 = vmatprep.subr.mxu0 0.0
    %8010 = vmatpush1.msra.mxu0 0.0
    %8011 = vmatprep.subr.mxu0 0.0
    %8012 = vmatpush1.msra.mxu0 0.0
    %8013 = vmatprep.subr.mxu0 0.0
    %8014 = vmatpush1.msra.mxu0 0.0
    %8015 = vmatprep.subr.mxu0 0.0
    %8016 = vmatpush1.msra.mxu0 0.0
    %8017 = vmatprep.subr.mxu0 0.0
    %8018 = vmatpush1.msra.mxu0 %v7985
    %8019 = vmatprep.subr.mxu0 0.0
    %8020 = vmatpush2.msra.mxu0 0.0
    %8021 = vmatprep.subr.mxu0 0.0
    %8022 = vmatpush2.msra.mxu0 0.0
    %8023 = vmatprep.subr.mxu0 0.0
    %8024 = vmatpush2.msra.mxu0 0.0
    %8025 = vmatprep.subr.mxu0 0.0
    %8026 = vmatpush2.msra.mxu0 0.0
    %8027 = vmatprep.subr.mxu0 0.0
    %8028 = vmatpush2.msra.mxu0 0.0
    %8029 = vmatprep.subr.mxu0 0.0
    %8030 = vmatpush2.msra.mxu0 0.0
    %8031 = vmatprep.subr.mxu0 0.0
    %8032 = vmatpush2.msra.mxu0 0.0
    %8033 = vmatprep.subr.mxu0 0.0
    %8034 = vmatpush2.msra.mxu0 0.0
    %8035 = vmatprep.subr.mxu0 0.0
    %8036 = vmatpush2.msra.mxu0 0.0
    %8037 = vmatprep.subr.mxu0 0.0
    %8038 = vmatpush2.msra.mxu0 0.0
    %8039 = vmatprep.subr.mxu0 0.0
    %8040 = vmatpush2.msra.mxu0 0.0
    %8041 = vmatprep.subr.mxu0 0.0
    %8042 = vmatpush2.msra.mxu0 0.0
    %8043 = vmatprep.subr.mxu0 0.0
    %8044 = vmatpush2.msra.mxu0 0.0
    %8045 = vmatprep.subr.mxu0 0.0
    %8046 = vmatpush2.msra.mxu0 0.0
    %8047 = vmatprep.subr.mxu0 0.0
    %8048 = vmatpush2.msra.mxu0 0.0
    %8049 = vmatprep.subr.mxu0 0.0
    %8050 = vmatpush2.msra.mxu0 0.0
    %8051 = vmatprep.mubr.f32.mxu0 0.0
    %8052 = vmatmul.mubr.f32.gmra.mxu0 %v7983
    %v8053 = vpop.f32.mrf.mxu0
    %v8054 = vadd.f32 0.0, %v8053
    %v8055 = vpop.f32.mrf.mxu0
    %8056 = vdwg.mxu0
    %8058 = vrot.lane.b32.xlu0 %v8054, 32
    %v8059 = vpop.permute.xlu0 %8058
    %8061 = vst.msk [vmem:[#allocation2] sm:$0x1f] %vm6134, %v8059
    %8062 = vrot.lane.b32.xlu0 %v7195, 88
    %v8063 = vpop.permute.xlu0 %8062
    %8064 = vrot.lane.b32.xlu0 %v7195, 24
    %v8065 = vpop.permute.xlu0 %8064
    %v8066 = vsel %vm666, %v8063, 0
    %v8068 = vsel %vm666, %v8065, 0
    %8070 = vmatprep.subr.mxu0 0.0
    %8071 = vmatpush1.xpose.msra.mxu0 0.0
    %8072 = vmatprep.subr.mxu0 0.0
    %8073 = vmatpush1.xpose.msra.mxu0 0.0
    %8074 = vmatprep.subr.mxu0 0.0
    %8075 = vmatpush1.xpose.msra.mxu0 0.0
    %8076 = vmatprep.subr.mxu0 0.0
    %8077 = vmatpush1.xpose.msra.mxu0 0.0
    %8078 = vmatprep.subr.mxu0 0.0
    %8079 = vmatpush1.xpose.msra.mxu0 0.0
    %8080 = vmatprep.subr.mxu0 0.0
    %8081 = vmatpush1.xpose.msra.mxu0 0.0
    %8082 = vmatprep.subr.mxu0 0.0
    %8083 = vmatpush1.xpose.msra.mxu0 0.0
    %8084 = vmatprep.subr.mxu0 0.0
    %8085 = vmatpush1.xpose.msra.mxu0 0.0
    %8086 = vmatprep.subr.mxu0 0.0
    %8087 = vmatpush1.xpose.msra.mxu0 0.0
    %8088 = vmatprep.subr.mxu0 0.0
    %8089 = vmatpush1.xpose.msra.mxu0 0.0
    %8090 = vmatprep.subr.mxu0 0.0
    %8091 = vmatpush1.xpose.msra.mxu0 0.0
    %8092 = vmatprep.subr.mxu0 0.0
    %8093 = vmatpush1.xpose.msra.mxu0 0.0
    %8094 = vmatprep.subr.mxu0 0.0
    %8095 = vmatpush1.xpose.msra.mxu0 0.0
    %8096 = vmatprep.subr.mxu0 0.0
    %8097 = vmatpush1.xpose.msra.mxu0 0.0
    %8098 = vmatprep.subr.mxu0 0.0
    %8099 = vmatpush1.xpose.msra.mxu0 0.0
    %8100 = vmatprep.subr.mxu0 0.0
    %8101 = vmatpush1.xpose.msra.mxu0 %v8068
    %8102 = vmatprep.subr.mxu0 0.0
    %8103 = vmatpush2.xpose.msra.mxu0 0.0
    %8104 = vmatprep.subr.mxu0 0.0
    %8105 = vmatpush2.xpose.msra.mxu0 0.0
    %8106 = vmatprep.subr.mxu0 0.0
    %8107 = vmatpush2.xpose.msra.mxu0 0.0
    %8108 = vmatprep.subr.mxu0 0.0
    %8109 = vmatpush2.xpose.msra.mxu0 0.0
    %8110 = vmatprep.subr.mxu0 0.0
    %8111 = vmatpush2.xpose.msra.mxu0 0.0
    %8112 = vmatprep.subr.mxu0 0.0
    %8113 = vmatpush2.xpose.msra.mxu0 0.0
    %8114 = vmatprep.subr.mxu0 0.0
    %8115 = vmatpush2.xpose.msra.mxu0 0.0
    %8116 = vmatprep.subr.mxu0 0.0
    %8117 = vmatpush2.xpose.msra.mxu0 0.0
    %8118 = vmatprep.subr.mxu0 0.0
    %8119 = vmatpush2.xpose.msra.mxu0 0.0
    %8120 = vmatprep.subr.mxu0 0.0
    %8121 = vmatpush2.xpose.msra.mxu0 0.0
    %8122 = vmatprep.subr.mxu0 0.0
    %8123 = vmatpush2.xpose.msra.mxu0 0.0
    %8124 = vmatprep.subr.mxu0 0.0
    %8125 = vmatpush2.xpose.msra.mxu0 0.0
    %8126 = vmatprep.subr.mxu0 0.0
    %8127 = vmatpush2.xpose.msra.mxu0 0.0
    %8128 = vmatprep.subr.mxu0 0.0
    %8129 = vmatpush2.xpose.msra.mxu0 0.0
    %8130 = vmatprep.subr.mxu0 0.0
    %8131 = vmatpush2.xpose.msra.mxu0 0.0
    %8132 = vmatprep.subr.mxu0 0.0
    %8133 = vmatpush2.xpose.msra.mxu0 0.0
    %8134 = vmatprep.mubr.f32.mxu0 0.0
    %8135 = vmatmul.mubr.f32.gmra.mxu0 %v8066
    %v8136 = vpop.f32.mrf.mxu0
    %v8137 = vadd.f32 0.0, %v8136
    %v8138 = vpop.f32.mrf.mxu0
    %8139 = vdwg.mxu0
    %v8140 = vmul.f32 %v8137, 0.35355338
    %v8141 = vsel %vm5352, %v8140, -inf
    %8142 = vmax.xlane.f32.xlu0 %v8141
    %v8143 = vpop.xlane.xlu0 %8142
    %v8144 = vsub.f32 %v8140, %v8143
    %v8145 = vmul.f32 %v8144, 1.442695
    %v8146 = vpow.pop %v8145
    %v8147 = vsel %vm5352, %v8146, 0.0
    %8148 = vadd.xlane.f32.xlu0 %v8147
    %v8149 = vpop.xlane.xlu0 %8148
    %v8150 = vrcp.pop %v8149
    %v8151 = vmul.f32 %v8146, %v8150
    %8152 = vrot.lane.b32.xlu0 %v7197, 88
    %v8153 = vpop.permute.xlu0 %8152
    %v8155 = vsel %vm5364, %v8151, 0
    %v8157 = vsel %vm5368, %v8153, 0
    %8159 = vmatprep.subr.mxu0 0.0
    %8160 = vmatpush1.msra.mxu0 0.0
    %8161 = vmatprep.subr.mxu0 0.0
    %8162 = vmatpush1.msra.mxu0 0.0
    %8163 = vmatprep.subr.mxu0 0.0
    %8164 = vmatpush1.msra.mxu0 0.0
    %8165 = vmatprep.subr.mxu0 0.0
    %8166 = vmatpush1.msra.mxu0 0.0
    %8167 = vmatprep.subr.mxu0 0.0
    %8168 = vmatpush1.msra.mxu0 0.0
    %8169 = vmatprep.subr.mxu0 0.0
    %8170 = vmatpush1.msra.mxu0 0.0
    %8171 = vmatprep.subr.mxu0 0.0
    %8172 = vmatpush1.msra.mxu0 0.0
    %8173 = vmatprep.subr.mxu0 0.0
    %8174 = vmatpush1.msra.mxu0 0.0
    %8175 = vmatprep.subr.mxu0 0.0
    %8176 = vmatpush1.msra.mxu0 0.0
    %8177 = vmatprep.subr.mxu0 0.0
    %8178 = vmatpush1.msra.mxu0 0.0
    %8179 = vmatprep.subr.mxu0 0.0
    %8180 = vmatpush1.msra.mxu0 0.0
    %8181 = vmatprep.subr.mxu0 0.0
    %8182 = vmatpush1.msra.mxu0 0.0
    %8183 = vmatprep.subr.mxu0 0.0
    %8184 = vmatpush1.msra.mxu0 0.0
    %8185 = vmatprep.subr.mxu0 0.0
    %8186 = vmatpush1.msra.mxu0 0.0
    %8187 = vmatprep.subr.mxu0 0.0
    %8188 = vmatpush1.msra.mxu0 0.0
    %8189 = vmatprep.subr.mxu0 0.0
    %8190 = vmatpush1.msra.mxu0 %v8157
    %8191 = vmatprep.subr.mxu0 0.0
    %8192 = vmatpush2.msra.mxu0 0.0
    %8193 = vmatprep.subr.mxu0 0.0
    %8194 = vmatpush2.msra.mxu0 0.0
    %8195 = vmatprep.subr.mxu0 0.0
    %8196 = vmatpush2.msra.mxu0 0.0
    %8197 = vmatprep.subr.mxu0 0.0
    %8198 = vmatpush2.msra.mxu0 0.0
    %8199 = vmatprep.subr.mxu0 0.0
    %8200 = vmatpush2.msra.mxu0 0.0
    %8201 = vmatprep.subr.mxu0 0.0
    %8202 = vmatpush2.msra.mxu0 0.0
    %8203 = vmatprep.subr.mxu0 0.0
    %8204 = vmatpush2.msra.mxu0 0.0
    %8205 = vmatprep.subr.mxu0 0.0
    %8206 = vmatpush2.msra.mxu0 0.0
    %8207 = vmatprep.subr.mxu0 0.0
    %8208 = vmatpush2.msra.mxu0 0.0
    %8209 = vmatprep.subr.mxu0 0.0
    %8210 = vmatpush2.msra.mxu0 0.0
    %8211 = vmatprep.subr.mxu0 0.0
    %8212 = vmatpush2.msra.mxu0 0.0
    %8213 = vmatprep.subr.mxu0 0.0
    %8214 = vmatpush2.msra.mxu0 0.0
    %8215 = vmatprep.subr.mxu0 0.0
    %8216 = vmatpush2.msra.mxu0 0.0
    %8217 = vmatprep.subr.mxu0 0.0
    %8218 = vmatpush2.msra.mxu0 0.0
    %8219 = vmatprep.subr.mxu0 0.0
    %8220 = vmatpush2.msra.mxu0 0.0
    %8221 = vmatprep.subr.mxu0 0.0
    %8222 = vmatpush2.msra.mxu0 0.0
    %8223 = vmatprep.mubr.f32.mxu0 0.0
    %8224 = vmatmul.mubr.f32.gmra.mxu0 %v8155
    %v8225 = vpop.f32.mrf.mxu0
    %v8226 = vadd.f32 0.0, %v8225
    %v8227 = vpop.f32.mrf.mxu0
    %8228 = vdwg.mxu0
    %8230 = vrot.lane.b32.xlu0 %v8226, 40
    %v8231 = vpop.permute.xlu0 %8230
    %8233 = vst.msk [vmem:[#allocation2] sm:$0x1f] %vm6307, %v8231
    %8234 = vrot.lane.b32.xlu0 %v7195, 80
    %v8235 = vpop.permute.xlu0 %8234
    %8236 = vrot.lane.b32.xlu0 %v7195, 16
    %v8237 = vpop.permute.xlu0 %8236
    %v8238 = vsel %vm666, %v8235, 0
    %v8240 = vsel %vm666, %v8237, 0
    %8242 = vmatprep.subr.mxu0 0.0
    %8243 = vmatpush1.xpose.msra.mxu0 0.0
    %8244 = vmatprep.subr.mxu0 0.0
    %8245 = vmatpush1.xpose.msra.mxu0 0.0
    %8246 = vmatprep.subr.mxu0 0.0
    %8247 = vmatpush1.xpose.msra.mxu0 0.0
    %8248 = vmatprep.subr.mxu0 0.0
    %8249 = vmatpush1.xpose.msra.mxu0 0.0
    %8250 = vmatprep.subr.mxu0 0.0
    %8251 = vmatpush1.xpose.msra.mxu0 0.0
    %8252 = vmatprep.subr.mxu0 0.0
    %8253 = vmatpush1.xpose.msra.mxu0 0.0
    %8254 = vmatprep.subr.mxu0 0.0
    %8255 = vmatpush1.xpose.msra.mxu0 0.0
    %8256 = vmatprep.subr.mxu0 0.0
    %8257 = vmatpush1.xpose.msra.mxu0 0.0
    %8258 = vmatprep.subr.mxu0 0.0
    %8259 = vmatpush1.xpose.msra.mxu0 0.0
    %8260 = vmatprep.subr.mxu0 0.0
    %8261 = vmatpush1.xpose.msra.mxu0 0.0
    %8262 = vmatprep.subr.mxu0 0.0
    %8263 = vmatpush1.xpose.msra.mxu0 0.0
    %8264 = vmatprep.subr.mxu0 0.0
    %8265 = vmatpush1.xpose.msra.mxu0 0.0
    %8266 = vmatprep.subr.mxu0 0.0
    %8267 = vmatpush1.xpose.msra.mxu0 0.0
    %8268 = vmatprep.subr.mxu0 0.0
    %8269 = vmatpush1.xpose.msra.mxu0 0.0
    %8270 = vmatprep.subr.mxu0 0.0
    %8271 = vmatpush1.xpose.msra.mxu0 0.0
    %8272 = vmatprep.subr.mxu0 0.0
    %8273 = vmatpush1.xpose.msra.mxu0 %v8240
    %8274 = vmatprep.subr.mxu0 0.0
    %8275 = vmatpush2.xpose.msra.mxu0 0.0
    %8276 = vmatprep.subr.mxu0 0.0
    %8277 = vmatpush2.xpose.msra.mxu0 0.0
    %8278 = vmatprep.subr.mxu0 0.0
    %8279 = vmatpush2.xpose.msra.mxu0 0.0
    %8280 = vmatprep.subr.mxu0 0.0
    %8281 = vmatpush2.xpose.msra.mxu0 0.0
    %8282 = vmatprep.subr.mxu0 0.0
    %8283 = vmatpush2.xpose.msra.mxu0 0.0
    %8284 = vmatprep.subr.mxu0 0.0
    %8285 = vmatpush2.xpose.msra.mxu0 0.0
    %8286 = vmatprep.subr.mxu0 0.0
    %8287 = vmatpush2.xpose.msra.mxu0 0.0
    %8288 = vmatprep.subr.mxu0 0.0
    %8289 = vmatpush2.xpose.msra.mxu0 0.0
    %8290 = vmatprep.subr.mxu0 0.0
    %8291 = vmatpush2.xpose.msra.mxu0 0.0
    %8292 = vmatprep.subr.mxu0 0.0
    %8293 = vmatpush2.xpose.msra.mxu0 0.0
    %8294 = vmatprep.subr.mxu0 0.0
    %8295 = vmatpush2.xpose.msra.mxu0 0.0
    %8296 = vmatprep.subr.mxu0 0.0
    %8297 = vmatpush2.xpose.msra.mxu0 0.0
    %8298 = vmatprep.subr.mxu0 0.0
    %8299 = vmatpush2.xpose.msra.mxu0 0.0
    %8300 = vmatprep.subr.mxu0 0.0
    %8301 = vmatpush2.xpose.msra.mxu0 0.0
    %8302 = vmatprep.subr.mxu0 0.0
    %8303 = vmatpush2.xpose.msra.mxu0 0.0
    %8304 = vmatprep.subr.mxu0 0.0
    %8305 = vmatpush2.xpose.msra.mxu0 0.0
    %8306 = vmatprep.mubr.f32.mxu0 0.0
    %8307 = vmatmul.mubr.f32.gmra.mxu0 %v8238
    %v8308 = vpop.f32.mrf.mxu0
    %v8309 = vadd.f32 0.0, %v8308
    %v8310 = vpop.f32.mrf.mxu0
    %8311 = vdwg.mxu0
    %v8312 = vmul.f32 %v8309, 0.35355338
    %v8313 = vsel %vm5352, %v8312, -inf
    %8314 = vmax.xlane.f32.xlu0 %v8313
    %v8315 = vpop.xlane.xlu0 %8314
    %v8316 = vsub.f32 %v8312, %v8315
    %v8317 = vmul.f32 %v8316, 1.442695
    %v8318 = vpow.pop %v8317
    %v8319 = vsel %vm5352, %v8318, 0.0
    %8320 = vadd.xlane.f32.xlu0 %v8319
    %v8321 = vpop.xlane.xlu0 %8320
    %v8322 = vrcp.pop %v8321
    %v8323 = vmul.f32 %v8318, %v8322
    %8324 = vrot.lane.b32.xlu0 %v7197, 80
    %v8325 = vpop.permute.xlu0 %8324
    %v8327 = vsel %vm5364, %v8323, 0
    %v8329 = vsel %vm5368, %v8325, 0
    %8331 = vmatprep.subr.mxu0 0.0
    %8332 = vmatpush1.msra.mxu0 0.0
    %8333 = vmatprep.subr.mxu0 0.0
    %8334 = vmatpush1.msra.mxu0 0.0
    %8335 = vmatprep.subr.mxu0 0.0
    %8336 = vmatpush1.msra.mxu0 0.0
    %8337 = vmatprep.subr.mxu0 0.0
    %8338 = vmatpush1.msra.mxu0 0.0
    %8339 = vmatprep.subr.mxu0 0.0
    %8340 = vmatpush1.msra.mxu0 0.0
    %8341 = vmatprep.subr.mxu0 0.0
    %8342 = vmatpush1.msra.mxu0 0.0
    %8343 = vmatprep.subr.mxu0 0.0
    %8344 = vmatpush1.msra.mxu0 0.0
    %8345 = vmatprep.subr.mxu0 0.0
    %8346 = vmatpush1.msra.mxu0 0.0
    %8347 = vmatprep.subr.mxu0 0.0
    %8348 = vmatpush1.msra.mxu0 0.0
    %8349 = vmatprep.subr.mxu0 0.0
    %8350 = vmatpush1.msra.mxu0 0.0
    %8351 = vmatprep.subr.mxu0 0.0
    %8352 = vmatpush1.msra.mxu0 0.0
    %8353 = vmatprep.subr.mxu0 0.0
    %8354 = vmatpush1.msra.mxu0 0.0
    %8355 = vmatprep.subr.mxu0 0.0
    %8356 = vmatpush1.msra.mxu0 0.0
    %8357 = vmatprep.subr.mxu0 0.0
    %8358 = vmatpush1.msra.mxu0 0.0
    %8359 = vmatprep.subr.mxu0 0.0
    %8360 = vmatpush1.msra.mxu0 0.0
    %8361 = vmatprep.subr.mxu0 0.0
    %8362 = vmatpush1.msra.mxu0 %v8329
    %8363 = vmatprep.subr.mxu0 0.0
    %8364 = vmatpush2.msra.mxu0 0.0
    %8365 = vmatprep.subr.mxu0 0.0
    %8366 = vmatpush2.msra.mxu0 0.0
    %8367 = vmatprep.subr.mxu0 0.0
    %8368 = vmatpush2.msra.mxu0 0.0
    %8369 = vmatprep.subr.mxu0 0.0
    %8370 = vmatpush2.msra.mxu0 0.0
    %8371 = vmatprep.subr.mxu0 0.0
    %8372 = vmatpush2.msra.mxu0 0.0
    %8373 = vmatprep.subr.mxu0 0.0
    %8374 = vmatpush2.msra.mxu0 0.0
    %8375 = vmatprep.subr.mxu0 0.0
    %8376 = vmatpush2.msra.mxu0 0.0
    %8377 = vmatprep.subr.mxu0 0.0
    %8378 = vmatpush2.msra.mxu0 0.0
    %8379 = vmatprep.subr.mxu0 0.0
    %8380 = vmatpush2.msra.mxu0 0.0
    %8381 = vmatprep.subr.mxu0 0.0
    %8382 = vmatpush2.msra.mxu0 0.0
    %8383 = vmatprep.subr.mxu0 0.0
    %8384 = vmatpush2.msra.mxu0 0.0
    %8385 = vmatprep.subr.mxu0 0.0
    %8386 = vmatpush2.msra.mxu0 0.0
    %8387 = vmatprep.subr.mxu0 0.0
    %8388 = vmatpush2.msra.mxu0 0.0
    %8389 = vmatprep.subr.mxu0 0.0
    %8390 = vmatpush2.msra.mxu0 0.0
    %8391 = vmatprep.subr.mxu0 0.0
    %8392 = vmatpush2.msra.mxu0 0.0
    %8393 = vmatprep.subr.mxu0 0.0
    %8394 = vmatpush2.msra.mxu0 0.0
    %8395 = vmatprep.mubr.f32.mxu0 0.0
    %8396 = vmatmul.mubr.f32.gmra.mxu0 %v8327
    %v8397 = vpop.f32.mrf.mxu0
    %v8398 = vadd.f32 0.0, %v8397
    %v8399 = vpop.f32.mrf.mxu0
    %8400 = vdwg.mxu0
    %8402 = vrot.lane.b32.xlu0 %v8398, 48
    %v8403 = vpop.permute.xlu0 %8402
    %8405 = vst.msk [vmem:[#allocation2] sm:$0x1f] %vm6480, %v8403
    %8406 = vrot.lane.b32.xlu0 %v7195, 72
    %v8407 = vpop.permute.xlu0 %8406
    %8408 = vrot.lane.b32.xlu0 %v7195, 8
    %v8409 = vpop.permute.xlu0 %8408
    %v8410 = vsel %vm666, %v8407, 0
    %v8412 = vsel %vm666, %v8409, 0
    %8414 = vmatprep.subr.mxu0 0.0
    %8415 = vmatpush1.xpose.msra.mxu0 0.0
    %8416 = vmatprep.subr.mxu0 0.0
    %8417 = vmatpush1.xpose.msra.mxu0 0.0
    %8418 = vmatprep.subr.mxu0 0.0
    %8419 = vmatpush1.xpose.msra.mxu0 0.0
    %8420 = vmatprep.subr.mxu0 0.0
    %8421 = vmatpush1.xpose.msra.mxu0 0.0
    %8422 = vmatprep.subr.mxu0 0.0
    %8423 = vmatpush1.xpose.msra.mxu0 0.0
    %8424 = vmatprep.subr.mxu0 0.0
    %8425 = vmatpush1.xpose.msra.mxu0 0.0
    %8426 = vmatprep.subr.mxu0 0.0
    %8427 = vmatpush1.xpose.msra.mxu0 0.0
    %8428 = vmatprep.subr.mxu0 0.0
    %8429 = vmatpush1.xpose.msra.mxu0 0.0
    %8430 = vmatprep.subr.mxu0 0.0
    %8431 = vmatpush1.xpose.msra.mxu0 0.0
    %8432 = vmatprep.subr.mxu0 0.0
    %8433 = vmatpush1.xpose.msra.mxu0 0.0
    %8434 = vmatprep.subr.mxu0 0.0
    %8435 = vmatpush1.xpose.msra.mxu0 0.0
    %8436 = vmatprep.subr.mxu0 0.0
    %8437 = vmatpush1.xpose.msra.mxu0 0.0
    %8438 = vmatprep.subr.mxu0 0.0
    %8439 = vmatpush1.xpose.msra.mxu0 0.0
    %8440 = vmatprep.subr.mxu0 0.0
    %8441 = vmatpush1.xpose.msra.mxu0 0.0
    %8442 = vmatprep.subr.mxu0 0.0
    %8443 = vmatpush1.xpose.msra.mxu0 0.0
    %8444 = vmatprep.subr.mxu0 0.0
    %8445 = vmatpush1.xpose.msra.mxu0 %v8412
    %8446 = vmatprep.subr.mxu0 0.0
    %8447 = vmatpush2.xpose.msra.mxu0 0.0
    %8448 = vmatprep.subr.mxu0 0.0
    %8449 = vmatpush2.xpose.msra.mxu0 0.0
    %8450 = vmatprep.subr.mxu0 0.0
    %8451 = vmatpush2.xpose.msra.mxu0 0.0
    %8452 = vmatprep.subr.mxu0 0.0
    %8453 = vmatpush2.xpose.msra.mxu0 0.0
    %8454 = vmatprep.subr.mxu0 0.0
    %8455 = vmatpush2.xpose.msra.mxu0 0.0
    %8456 = vmatprep.subr.mxu0 0.0
    %8457 = vmatpush2.xpose.msra.mxu0 0.0
    %8458 = vmatprep.subr.mxu0 0.0
    %8459 = vmatpush2.xpose.msra.mxu0 0.0
    %8460 = vmatprep.subr.mxu0 0.0
    %8461 = vmatpush2.xpose.msra.mxu0 0.0
    %8462 = vmatprep.subr.mxu0 0.0
    %8463 = vmatpush2.xpose.msra.mxu0 0.0
    %8464 = vmatprep.subr.mxu0 0.0
    %8465 = vmatpush2.xpose.msra.mxu0 0.0
    %8466 = vmatprep.subr.mxu0 0.0
    %8467 = vmatpush2.xpose.msra.mxu0 0.0
    %8468 = vmatprep.subr.mxu0 0.0
    %8469 = vmatpush2.xpose.msra.mxu0 0.0
    %8470 = vmatprep.subr.mxu0 0.0
    %8471 = vmatpush2.xpose.msra.mxu0 0.0
    %8472 = vmatprep.subr.mxu0 0.0
    %8473 = vmatpush2.xpose.msra.mxu0 0.0
    %8474 = vmatprep.subr.mxu0 0.0
    %8475 = vmatpush2.xpose.msra.mxu0 0.0
    %8476 = vmatprep.subr.mxu0 0.0
    %8477 = vmatpush2.xpose.msra.mxu0 0.0
    %8478 = vmatprep.mubr.f32.mxu0 0.0
    %8479 = vmatmul.mubr.f32.gmra.mxu0 %v8410
    %v8480 = vpop.f32.mrf.mxu0
    %v8481 = vadd.f32 0.0, %v8480
    %v8482 = vpop.f32.mrf.mxu0
    %8483 = vdwg.mxu0
    %v8484 = vmul.f32 %v8481, 0.35355338
    %v8485 = vsel %vm5352, %v8484, -inf
    %8486 = vmax.xlane.f32.xlu0 %v8485
    %v8487 = vpop.xlane.xlu0 %8486
    %v8488 = vsub.f32 %v8484, %v8487
    %v8489 = vmul.f32 %v8488, 1.442695
    %v8490 = vpow.pop %v8489
    %v8491 = vsel %vm5352, %v8490, 0.0
    %8492 = vadd.xlane.f32.xlu0 %v8491
    %v8493 = vpop.xlane.xlu0 %8492
    %v8494 = vrcp.pop %v8493
    %v8495 = vmul.f32 %v8490, %v8494
    %8496 = vrot.lane.b32.xlu0 %v7197, 72
    %v8497 = vpop.permute.xlu0 %8496
    %v8499 = vsel %vm5364, %v8495, 0
    %v8501 = vsel %vm5368, %v8497, 0
    %8503 = vmatprep.subr.mxu0 0.0
    %8504 = vmatpush1.msra.mxu0 0.0
    %8505 = vmatprep.subr.mxu0 0.0
    %8506 = vmatpush1.msra.mxu0 0.0
    %8507 = vmatprep.subr.mxu0 0.0
    %8508 = vmatpush1.msra.mxu0 0.0
    %8509 = vmatprep.subr.mxu0 0.0
    %8510 = vmatpush1.msra.mxu0 0.0
    %8511 = vmatprep.subr.mxu0 0.0
    %8512 = vmatpush1.msra.mxu0 0.0
    %8513 = vmatprep.subr.mxu0 0.0
    %8514 = vmatpush1.msra.mxu0 0.0
    %8515 = vmatprep.subr.mxu0 0.0
    %8516 = vmatpush1.msra.mxu0 0.0
    %8517 = vmatprep.subr.mxu0 0.0
    %8518 = vmatpush1.msra.mxu0 0.0
    %8519 = vmatprep.subr.mxu0 0.0
    %8520 = vmatpush1.msra.mxu0 0.0
    %8521 = vmatprep.subr.mxu0 0.0
    %8522 = vmatpush1.msra.mxu0 0.0
    %8523 = vmatprep.subr.mxu0 0.0
    %8524 = vmatpush1.msra.mxu0 0.0
    %8525 = vmatprep.subr.mxu0 0.0
    %8526 = vmatpush1.msra.mxu0 0.0
    %8527 = vmatprep.subr.mxu0 0.0
    %8528 = vmatpush1.msra.mxu0 0.0
    %8529 = vmatprep.subr.mxu0 0.0
    %8530 = vmatpush1.msra.mxu0 0.0
    %8531 = vmatprep.subr.mxu0 0.0
    %8532 = vmatpush1.msra.mxu0 0.0
    %8533 = vmatprep.subr.mxu0 0.0
    %8534 = vmatpush1.msra.mxu0 %v8501
    %8535 = vmatprep.subr.mxu0 0.0
    %8536 = vmatpush2.msra.mxu0 0.0
    %8537 = vmatprep.subr.mxu0 0.0
    %8538 = vmatpush2.msra.mxu0 0.0
    %8539 = vmatprep.subr.mxu0 0.0
    %8540 = vmatpush2.msra.mxu0 0.0
    %8541 = vmatprep.subr.mxu0 0.0
    %8542 = vmatpush2.msra.mxu0 0.0
    %8543 = vmatprep.subr.mxu0 0.0
    %8544 = vmatpush2.msra.mxu0 0.0
    %8545 = vmatprep.subr.mxu0 0.0
    %8546 = vmatpush2.msra.mxu0 0.0
    %8547 = vmatprep.subr.mxu0 0.0
    %8548 = vmatpush2.msra.mxu0 0.0
    %8549 = vmatprep.subr.mxu0 0.0
    %8550 = vmatpush2.msra.mxu0 0.0
    %8551 = vmatprep.subr.mxu0 0.0
    %8552 = vmatpush2.msra.mxu0 0.0
    %8553 = vmatprep.subr.mxu0 0.0
    %8554 = vmatpush2.msra.mxu0 0.0
    %8555 = vmatprep.subr.mxu0 0.0
    %8556 = vmatpush2.msra.mxu0 0.0
    %8557 = vmatprep.subr.mxu0 0.0
    %8558 = vmatpush2.msra.mxu0 0.0
    %8559 = vmatprep.subr.mxu0 0.0
    %8560 = vmatpush2.msra.mxu0 0.0
    %8561 = vmatprep.subr.mxu0 0.0
    %8562 = vmatpush2.msra.mxu0 0.0
    %8563 = vmatprep.subr.mxu0 0.0
    %8564 = vmatpush2.msra.mxu0 0.0
    %8565 = vmatprep.subr.mxu0 0.0
    %8566 = vmatpush2.msra.mxu0 0.0
    %8567 = vmatprep.mubr.f32.mxu0 0.0
    %8568 = vmatmul.mubr.f32.gmra.mxu0 %v8499
    %v8569 = vpop.f32.mrf.mxu0
    %v8570 = vadd.f32 0.0, %v8569
    %v8571 = vpop.f32.mrf.mxu0
    %8572 = vdwg.mxu0
    %8574 = vrot.lane.b32.xlu0 %v8570, 56
    %v8575 = vpop.permute.xlu0 %8574
    %8577 = vst.msk [vmem:[#allocation2] sm:$0x1f] %vm6653, %v8575
    %v8578 = vld [vmem:[#allocation2] sm:$0x1f]
    %v8580 = vsel %vm254, %v8578, 0
    %8582 = vmatprep.subr.mxu0 0.0
    %8583 = vmatpush1.msra.mxu0 0.0
    %8584 = vmatprep.subr.mxu0 0.0
    %8585 = vmatpush1.msra.mxu0 0.0
    %8586 = vmatprep.subr.mxu0 0.0
    %8587 = vmatpush1.msra.mxu0 0.0
    %8588 = vmatprep.subr.mxu0 0.0
    %8589 = vmatpush1.msra.mxu0 0.0
    %8590 = vmatprep.subr.mxu0 0.0
    %8591 = vmatpush1.msra.mxu0 0.0
    %8592 = vmatprep.subr.mxu0 0.0
    %8593 = vmatpush1.msra.mxu0 0.0
    %8594 = vmatprep.subr.mxu0 0.0
    %8595 = vmatpush1.msra.mxu0 0.0
    %8596 = vmatprep.subr.mxu0 0.0
    %8597 = vmatpush1.msra.mxu0 0.0
    %8598 = vmatprep.subr.mxu0 0.0
    %8599 = vmatpush1.msra.mxu0 %v7206
    %8600 = vmatprep.subr.mxu0 0.0
    %8601 = vmatpush1.msra.mxu0 %v7205
    %8602 = vmatprep.subr.mxu0 0.0
    %8603 = vmatpush1.msra.mxu0 %v7204
    %8604 = vmatprep.subr.mxu0 0.0
    %8605 = vmatpush1.msra.mxu0 %v7203
    %8606 = vmatprep.subr.mxu0 0.0
    %8607 = vmatpush1.msra.mxu0 %v7202
    %8608 = vmatprep.subr.mxu0 0.0
    %8609 = vmatpush1.msra.mxu0 %v7201
    %8610 = vmatprep.subr.mxu0 0.0
    %8611 = vmatpush1.msra.mxu0 %v7200
    %8612 = vmatprep.subr.mxu0 0.0
    %8613 = vmatpush1.msra.mxu0 %v7199
    %8614 = vmatprep.subr.mxu0 0.0
    %8615 = vmatpush2.msra.mxu0 0.0
    %8616 = vmatprep.subr.mxu0 0.0
    %8617 = vmatpush2.msra.mxu0 0.0
    %8618 = vmatprep.subr.mxu0 0.0
    %8619 = vmatpush2.msra.mxu0 0.0
    %8620 = vmatprep.subr.mxu0 0.0
    %8621 = vmatpush2.msra.mxu0 0.0
    %8622 = vmatprep.subr.mxu0 0.0
    %8623 = vmatpush2.msra.mxu0 0.0
    %8624 = vmatprep.subr.mxu0 0.0
    %8625 = vmatpush2.msra.mxu0 0.0
    %8626 = vmatprep.subr.mxu0 0.0
    %8627 = vmatpush2.msra.mxu0 0.0
    %8628 = vmatprep.subr.mxu0 0.0
    %8629 = vmatpush2.msra.mxu0 0.0
    %8630 = vmatprep.subr.mxu0 0.0
    %8631 = vmatpush2.msra.mxu0 0.0
    %8632 = vmatprep.subr.mxu0 0.0
    %8633 = vmatpush2.msra.mxu0 0.0
    %8634 = vmatprep.subr.mxu0 0.0
    %8635 = vmatpush2.msra.mxu0 0.0
    %8636 = vmatprep.subr.mxu0 0.0
    %8637 = vmatpush2.msra.mxu0 0.0
    %8638 = vmatprep.subr.mxu0 0.0
    %8639 = vmatpush2.msra.mxu0 0.0
    %8640 = vmatprep.subr.mxu0 0.0
    %8641 = vmatpush2.msra.mxu0 0.0
    %8642 = vmatprep.subr.mxu0 0.0
    %8643 = vmatpush2.msra.mxu0 0.0
    %8644 = vmatprep.subr.mxu0 0.0
    %8645 = vmatpush2.msra.mxu0 0.0
    %8646 = vmatprep.mubr.f32.mxu0 0.0
    %8647 = vmatmul.mubr.f32.gmra.mxu0 %v8580
    %v8648 = vpop.f32.mrf.mxu0
    %v8649 = vadd.f32 %v7207, %v8648
    %v8650 = vpop.f32.mrf.mxu0
    %8651 = vdwg.mxu0
    %v8652 = vadd.f32 %v7078, %v8649
    %v8653 = vld [vmem:[%s6 + $0x63] ss:$0 sm:$0xff]
    %v8654 = vld [vmem:[%s6 + $0x64] ss:$0 sm:$0xff]
    %v8655 = vsel %vm5146, %v8652, 0.0
    %8656 = vadd.xlane.f32.xlu0 %v8655
    %v8657 = vpop.xlane.xlu0 %8656
    %v8658 = vmul.f32 %v8657, %v2396
    %v8659 = vsub.f32 %v8652, %v8658
    %v8660 = vmul.f32 %v8659, %v8659
    %v8661 = vsel %vm5146, %v8660, 0.0
    %8662 = vadd.xlane.f32.xlu0 %v8661
    %v8663 = vpop.xlane.xlu0 %8662
    %v8664 = vmul.f32 %v8663, %v2396
    %v8665 = vadd.f32 %v8664, 1e-06
    %v8666 = vrsqrt.pop %v8665
    %v8667 = vmul.f32 %v8659, %v8666
    %v8668 = vmul.f32 %v8667, %v8653
    %v8669 = vadd.f32 %v8668, %v8654
    %v8670 = vld [vmem:[#allocation3 + $0x90] sm:$0xff]
    %v8671 = vld [vmem:[#allocation3 + $0x98] sm:$0xff]
    %v8672 = vld [vmem:[#allocation3 + $0x138] sm:$0xff]
    %v8673 = vld [vmem:[#allocation3 + $0x140] sm:$0xff]
    %v8674 = vld [vmem:[#allocation3 + $0x1e0] sm:$0xff]
    %v8675 = vld [vmem:[#allocation3 + $0x1e8] sm:$0xff]
    %v8676 = vld [vmem:[#allocation3 + $0x288] sm:$0xff]
    %v8677 = vld [vmem:[#allocation3 + $0x290] sm:$0xff]
    %v8678 = vld [vmem:[#allocation3 + $0x330] sm:$0xff]
    %v8679 = vld [vmem:[#allocation3 + $0x338] sm:$0xff]
    %v8680 = vld [vmem:[#allocation3 + $0x3d8] sm:$0xff]
    %v8681 = vld [vmem:[#allocation3 + $0x3e0] sm:$0xff]
    %v8682 = vld [vmem:[#allocation3 + $0x480] sm:$0xff]
    %v8683 = vld [vmem:[#allocation3 + $0x488] sm:$0xff]
    %v8684 = vld [vmem:[#allocation3 + $0x528] sm:$0xff]
    %v8685 = vld [vmem:[#allocation3 + $0x530] sm:$0xff]
    %s8686 = scalar_lea.vmem %s6, 101
    %v8687 = vld [vmem:[%s8686] ss:$8 sm:$0x3]
    %v8689 = vlaneseq
    %v8690 = vshrl.u32 %v8689, 7
    %v8691 = vsub.s32 0, %v8690
    %v8692 = vrot.slane %v8687, %v8691
    %v8693 = vlaneseq
    %v8694 = vshrl.u32 %v8693, 7
    %v8695 = vsub.s32 1, %v8694
    %v8696 = vrot.slane %v8687, %v8695
    %v8700 = vsel %vm254, %v8669, 0
    %8702 = vmatprep.subr.mxu0 0.0
    %8703 = vmatpush1.msra.mxu0 0.0
    %8704 = vmatprep.subr.mxu0 0.0
    %8705 = vmatpush1.msra.mxu0 0.0
    %8706 = vmatprep.subr.mxu0 0.0
    %8707 = vmatpush1.msra.mxu0 0.0
    %8708 = vmatprep.subr.mxu0 0.0
    %8709 = vmatpush1.msra.mxu0 0.0
    %8710 = vmatprep.subr.mxu0 0.0
    %8711 = vmatpush1.msra.mxu0 0.0
    %8712 = vmatprep.subr.mxu0 0.0
    %8713 = vmatpush1.msra.mxu0 0.0
    %8714 = vmatprep.subr.mxu0 0.0
    %8715 = vmatpush1.msra.mxu0 0.0
    %8716 = vmatprep.subr.mxu0 0.0
    %8717 = vmatpush1.msra.mxu0 0.0
    %8718 = vmatprep.subr.mxu0 %v8685
    %8719 = vmatpush1.msra.mxu0 %v8684
    %8720 = vmatprep.subr.mxu0 %v8683
    %8721 = vmatpush1.msra.mxu0 %v8682
    %8722 = vmatprep.subr.mxu0 %v8681
    %8723 = vmatpush1.msra.mxu0 %v8680
    %8724 = vmatprep.subr.mxu0 %v8679
    %8725 = vmatpush1.msra.mxu0 %v8678
    %8726 = vmatprep.subr.mxu0 %v8677
    %8727 = vmatpush1.msra.mxu0 %v8676
    %8728 = vmatprep.subr.mxu0 %v8675
    %8729 = vmatpush1.msra.mxu0 %v8674
    %8730 = vmatprep.subr.mxu0 %v8673
    %8731 = vmatpush1.msra.mxu0 %v8672
    %8732 = vmatprep.subr.mxu0 %v8671
    %8733 = vmatpush1.msra.mxu0 %v8670
    %8734 = vmatprep.subr.mxu0 0.0
    %8735 = vmatpush2.msra.mxu0 0.0
    %8736 = vmatprep.subr.mxu0 0.0
    %8737 = vmatpush2.msra.mxu0 0.0
    %8738 = vmatprep.subr.mxu0 0.0
    %8739 = vmatpush2.msra.mxu0 0.0
    %8740 = vmatprep.subr.mxu0 0.0
    %8741 = vmatpush2.msra.mxu0 0.0
    %8742 = vmatprep.subr.mxu0 0.0
    %8743 = vmatpush2.msra.mxu0 0.0
    %8744 = vmatprep.subr.mxu0 0.0
    %8745 = vmatpush2.msra.mxu0 0.0
    %8746 = vmatprep.subr.mxu0 0.0
    %8747 = vmatpush2.msra.mxu0 0.0
    %8748 = vmatprep.subr.mxu0 0.0
    %8749 = vmatpush2.msra.mxu0 0.0
    %8750 = vmatprep.subr.mxu0 0.0
    %8751 = vmatpush2.msra.mxu0 0.0
    %8752 = vmatprep.subr.mxu0 0.0
    %8753 = vmatpush2.msra.mxu0 0.0
    %8754 = vmatprep.subr.mxu0 0.0
    %8755 = vmatpush2.msra.mxu0 0.0
    %8756 = vmatprep.subr.mxu0 0.0
    %8757 = vmatpush2.msra.mxu0 0.0
    %8758 = vmatprep.subr.mxu0 0.0
    %8759 = vmatpush2.msra.mxu0 0.0
    %8760 = vmatprep.subr.mxu0 0.0
    %8761 = vmatpush2.msra.mxu0 0.0
    %8762 = vmatprep.subr.mxu0 0.0
    %8763 = vmatpush2.msra.mxu0 0.0
    %8764 = vmatprep.subr.mxu0 0.0
    %8765 = vmatpush2.msra.mxu0 0.0
    %8766 = vmatprep.mubr.f32.mxu0 0.0
    %8767 = vmatmul.mubr.f32.gmra.mxu0 %v8700
    %v8768 = vpop.f32.mrf.mxu0
    %v8769 = vadd.f32 %v8692, %v8768
    %v8770 = vpop.f32.mrf.mxu0
    %v8771 = vadd.f32 %v8696, %v8770
    %8772 = vdwg.mxu0
    %v8773 = vmul.f32 %v8769, %v8769
    %v8774 = vmul.f32 %v8771, %v8771
    %v8775 = vmul.f32 %v8769, %v8773
    %v8776 = vmul.f32 %v8771, %v8774
    %v8777 = vmul.f32 %v8775, 0.044715
    %v8778 = vmul.f32 %v8776, 0.044715
    %v8779 = vadd.f32 %v8769, %v8777
    %v8780 = vadd.f32 %v8771, %v8778
    %v8781 = vmul.f32 %v8779, 0.7978846
    %v8782 = vmul.f32 %v8780, 0.7978846
    %v8783 = vtanh.pop %v8781
    %v8784 = vtanh.pop %v8782
    %v8785 = vadd.f32 %v8783, 1.0
    %v8786 = vadd.f32 %v8784, 1.0
    %v8787 = vmul.f32 %v8785, 0.5
    %v8788 = vmul.f32 %v8786, 0.5
    %v8789 = vmul.f32 %v8769, %v8787
    %v8790 = vmul.f32 %v8771, %v8788
    %v8791 = vld [vmem:[#allocation6 + $0x8] sm:$0xff]
    %v8792 = vld [vmem:[#allocation6 + $0x18] sm:$0xff]
    %v8793 = vld [vmem:[#allocation6 + $0x28] sm:$0xff]
    %v8794 = vld [vmem:[#allocation6 + $0x38] sm:$0xff]
    %v8795 = vld [vmem:[#allocation6 + $0x48] sm:$0xff]
    %v8796 = vld [vmem:[#allocation6 + $0x58] sm:$0xff]
    %v8797 = vld [vmem:[#allocation6 + $0x68] sm:$0xff]
    %v8798 = vld [vmem:[#allocation6 + $0x78] sm:$0xff]
    %v8799 = vld [vmem:[#allocation6 + $0x88] sm:$0xff]
    %v8800 = vld [vmem:[#allocation6 + $0x98] sm:$0xff]
    %v8801 = vld [vmem:[#allocation6 + $0xa8] sm:$0xff]
    %v8802 = vld [vmem:[#allocation6 + $0xb8] sm:$0xff]
    %v8803 = vld [vmem:[#allocation6 + $0xc8] sm:$0xff]
    %v8804 = vld [vmem:[#allocation6 + $0xd8] sm:$0xff]
    %v8805 = vld [vmem:[#allocation6 + $0xe8] sm:$0xff]
    %v8806 = vld [vmem:[#allocation6 + $0xf8] sm:$0xff]
    %v8807 = vld [vmem:[#allocation6 + $0x108] sm:$0xff]
    %v8808 = vld [vmem:[#allocation6 + $0x118] sm:$0xff]
    %v8809 = vld [vmem:[#allocation6 + $0x128] sm:$0xff]
    %v8810 = vld [vmem:[#allocation6 + $0x138] sm:$0xff]
    %v8811 = vld [vmem:[#allocation6 + $0x148] sm:$0xff]
    %v8812 = vld [vmem:[#allocation6 + $0x158] sm:$0xff]
    %v8813 = vld [vmem:[#allocation6 + $0x168] sm:$0xff]
    %v8814 = vld [vmem:[#allocation6 + $0x178] sm:$0xff]
    %v8815 = vld [vmem:[#allocation6 + $0x188] sm:$0xff]
    %v8816 = vld [vmem:[#allocation6 + $0x198] sm:$0xff]
    %v8817 = vld [vmem:[#allocation6 + $0x1a8] sm:$0xff]
    %v8818 = vld [vmem:[#allocation6 + $0x1b8] sm:$0xff]
    %v8819 = vld [vmem:[#allocation6 + $0x1c8] sm:$0xff]
    %v8820 = vld [vmem:[#allocation6 + $0x1d8] sm:$0xff]
    %v8821 = vld [vmem:[#allocation6 + $0x1e8] sm:$0xff]
    %v8822 = vld [vmem:[#allocation6 + $0x1f8] sm:$0xff]
    %8823 = vmatprep.subr.mxu0 0.0
    %8824 = vmatpush1.msra.mxu0 %v8806
    %8825 = vmatprep.subr.mxu0 0.0
    %8826 = vmatpush1.msra.mxu0 %v8805
    %8827 = vmatprep.subr.mxu0 0.0
    %8828 = vmatpush1.msra.mxu0 %v8804
    %8829 = vmatprep.subr.mxu0 0.0
    %8830 = vmatpush1.msra.mxu0 %v8803
    %8831 = vmatprep.subr.mxu0 0.0
    %8832 = vmatpush1.msra.mxu0 %v8802
    %8833 = vmatprep.subr.mxu0 0.0
    %8834 = vmatpush1.msra.mxu0 %v8801
    %8835 = vmatprep.subr.mxu0 0.0
    %8836 = vmatpush1.msra.mxu0 %v8800
    %8837 = vmatprep.subr.mxu0 0.0
    %8838 = vmatpush1.msra.mxu0 %v8799
    %8839 = vmatprep.subr.mxu0 0.0
    %8840 = vmatpush1.msra.mxu0 %v8798
    %8841 = vmatprep.subr.mxu0 0.0
    %8842 = vmatpush1.msra.mxu0 %v8797
    %8843 = vmatprep.subr.mxu0 0.0
    %8844 = vmatpush1.msra.mxu0 %v8796
    %8845 = vmatprep.subr.mxu0 0.0
    %8846 = vmatpush1.msra.mxu0 %v8795
    %8847 = vmatprep.subr.mxu0 0.0
    %8848 = vmatpush1.msra.mxu0 %v8794
    %8849 = vmatprep.subr.mxu0 0.0
    %8850 = vmatpush1.msra.mxu0 %v8793
    %8851 = vmatprep.subr.mxu0 0.0
    %8852 = vmatpush1.msra.mxu0 %v8792
    %8853 = vmatprep.subr.mxu0 0.0
    %8854 = vmatpush1.msra.mxu0 %v8791
    %8855 = vmatprep.subr.mxu0 0.0
    %8856 = vmatpush2.msra.mxu0 %v8822
    %8857 = vmatprep.subr.mxu0 0.0
    %8858 = vmatpush2.msra.mxu0 %v8821
    %8859 = vmatprep.subr.mxu0 0.0
    %8860 = vmatpush2.msra.mxu0 %v8820
    %8861 = vmatprep.subr.mxu0 0.0
    %8862 = vmatpush2.msra.mxu0 %v8819
    %8863 = vmatprep.subr.mxu0 0.0
    %8864 = vmatpush2.msra.mxu0 %v8818
    %8865 = vmatprep.subr.mxu0 0.0
    %8866 = vmatpush2.msra.mxu0 %v8817
    %8867 = vmatprep.subr.mxu0 0.0
    %8868 = vmatpush2.msra.mxu0 %v8816
    %8869 = vmatprep.subr.mxu0 0.0
    %8870 = vmatpush2.msra.mxu0 %v8815
    %8871 = vmatprep.subr.mxu0 0.0
    %8872 = vmatpush2.msra.mxu0 %v8814
    %8873 = vmatprep.subr.mxu0 0.0
    %8874 = vmatpush2.msra.mxu0 %v8813
    %8875 = vmatprep.subr.mxu0 0.0
    %8876 = vmatpush2.msra.mxu0 %v8812
    %8877 = vmatprep.subr.mxu0 0.0
    %8878 = vmatpush2.msra.mxu0 %v8811
    %8879 = vmatprep.subr.mxu0 0.0
    %8880 = vmatpush2.msra.mxu0 %v8810
    %8881 = vmatprep.subr.mxu0 0.0
    %8882 = vmatpush2.msra.mxu0 %v8809
    %8883 = vmatprep.subr.mxu0 0.0
    %8884 = vmatpush2.msra.mxu0 %v8808
    %8885 = vmatprep.subr.mxu0 0.0
    %8886 = vmatpush2.msra.mxu0 %v8807
    %8887 = vmatprep.mubr.f32.mxu0 %v8790
    %8888 = vmatmul.mubr.f32.gmra.mxu0 %v8789
    %v8889 = vpop.f32.mrf.mxu0
    %v8890 = vadd.f32 0.0, %v8889
    %v8891 = vpop.f32.mrf.mxu0
    %8892 = vdwg.mxu0
    %v8893 = vadd.f32 %v8652, %v8890
    %v8894 = vld [vmem:[%s6 + $0x66] ss:$0 sm:$0xff]
    %v8895 = vadd.f32 %v8893, %v8894
    %v8896 = vld [vmem:[%s6 + $0x67] ss:$0 sm:$0xff]
    %v8897 = vld [vmem:[%s6 + $0x70] ss:$0 sm:$0xff]
    %v8898 = vsel %vm5146, %v8895, 0.0
    %8899 = vadd.xlane.f32.xlu0 %v8898
    %v8900 = vpop.xlane.xlu0 %8899
    %v8901 = vmul.f32 %v8900, %v2396
    %v8902 = vsub.f32 %v8895, %v8901
    %v8903 = vmul.f32 %v8902, %v8902
    %v8904 = vsel %vm5146, %v8903, 0.0
    %8905 = vadd.xlane.f32.xlu0 %v8904
    %v8906 = vpop.xlane.xlu0 %8905
    %v8907 = vmul.f32 %v8906, %v2396
    %v8908 = vadd.f32 %v8907, 1e-06
    %v8909 = vrsqrt.pop %v8908
    %v8910 = vmul.f32 %v8902, %v8909
    %v8911 = vmul.f32 %v8910, %v8896
    %v8912 = vadd.f32 %v8911, %v8897
    %v8913 = vld [vmem:[#allocation3 + $0xa0] sm:$0xff]
    %v8914 = vld [vmem:[#allocation3 + $0x148] sm:$0xff]
    %v8915 = vld [vmem:[#allocation3 + $0x1f0] sm:$0xff]
    %v8916 = vld [vmem:[#allocation3 + $0x298] sm:$0xff]
    %v8917 = vld [vmem:[#allocation3 + $0x340] sm:$0xff]
    %v8918 = vld [vmem:[#allocation3 + $0x3e8] sm:$0xff]
    %v8919 = vld [vmem:[#allocation3 + $0x490] sm:$0xff]
    %v8920 = vld [vmem:[#allocation3 + $0x538] sm:$0xff]
    %v8921 = vld [vmem:[%s6 + $0x71] ss:$0 sm:$0xff]
    %v8923 = vsel %vm254, %v8912, 0
    %8925 = vmatprep.subr.mxu0 0.0
    %8926 = vmatpush1.msra.mxu0 0.0
    %8927 = vmatprep.subr.mxu0 0.0
    %8928 = vmatpush1.msra.mxu0 0.0
    %8929 = vmatprep.subr.mxu0 0.0
    %8930 = vmatpush1.msra.mxu0 0.0
    %8931 = vmatprep.subr.mxu0 0.0
    %8932 = vmatpush1.msra.mxu0 0.0
    %8933 = vmatprep.subr.mxu0 0.0
    %8934 = vmatpush1.msra.mxu0 0.0
    %8935 = vmatprep.subr.mxu0 0.0
    %8936 = vmatpush1.msra.mxu0 0.0
    %8937 = vmatprep.subr.mxu0 0.0
    %8938 = vmatpush1.msra.mxu0 0.0
    %8939 = vmatprep.subr.mxu0 0.0
    %8940 = vmatpush1.msra.mxu0 0.0
    %8941 = vmatprep.subr.mxu0 0.0
    %8942 = vmatpush1.msra.mxu0 %v8920
    %8943 = vmatprep.subr.mxu0 0.0
    %8944 = vmatpush1.msra.mxu0 %v8919
    %8945 = vmatprep.subr.mxu0 0.0
    %8946 = vmatpush1.msra.mxu0 %v8918
    %8947 = vmatprep.subr.mxu0 0.0
    %8948 = vmatpush1.msra.mxu0 %v8917
    %8949 = vmatprep.subr.mxu0 0.0
    %8950 = vmatpush1.msra.mxu0 %v8916
    %8951 = vmatprep.subr.mxu0 0.0
    %8952 = vmatpush1.msra.mxu0 %v8915
    %8953 = vmatprep.subr.mxu0 0.0
    %8954 = vmatpush1.msra.mxu0 %v8914
    %8955 = vmatprep.subr.mxu0 0.0
    %8956 = vmatpush1.msra.mxu0 %v8913
    %8957 = vmatprep.subr.mxu0 0.0
    %8958 = vmatpush2.msra.mxu0 0.0
    %8959 = vmatprep.subr.mxu0 0.0
    %8960 = vmatpush2.msra.mxu0 0.0
    %8961 = vmatprep.subr.mxu0 0.0
    %8962 = vmatpush2.msra.mxu0 0.0
    %8963 = vmatprep.subr.mxu0 0.0
    %8964 = vmatpush2.msra.mxu0 0.0
    %8965 = vmatprep.subr.mxu0 0.0
    %8966 = vmatpush2.msra.mxu0 0.0
    %8967 = vmatprep.subr.mxu0 0.0
    %8968 = vmatpush2.msra.mxu0 0.0
    %8969 = vmatprep.subr.mxu0 0.0
    %8970 = vmatpush2.msra.mxu0 0.0
    %8971 = vmatprep.subr.mxu0 0.0
    %8972 = vmatpush2.msra.mxu0 0.0
    %8973 = vmatprep.subr.mxu0 0.0
    %8974 = vmatpush2.msra.mxu0 0.0
    %8975 = vmatprep.subr.mxu0 0.0
    %8976 = vmatpush2.msra.mxu0 0.0
    %8977 = vmatprep.subr.mxu0 0.0
    %8978 = vmatpush2.msra.mxu0 0.0
    %8979 = vmatprep.subr.mxu0 0.0
    %8980 = vmatpush2.msra.mxu0 0.0
    %8981 = vmatprep.subr.mxu0 0.0
    %8982 = vmatpush2.msra.mxu0 0.0
    %8983 = vmatprep.subr.mxu0 0.0
    %8984 = vmatpush2.msra.mxu0 0.0
    %8985 = vmatprep.subr.mxu0 0.0
    %8986 = vmatpush2.msra.mxu0 0.0
    %8987 = vmatprep.subr.mxu0 0.0
    %8988 = vmatpush2.msra.mxu0 0.0
    %8989 = vmatprep.mubr.f32.mxu0 0.0
    %8990 = vmatmul.mubr.f32.gmra.mxu0 %v8923
    %v8991 = vpop.f32.mrf.mxu0
    %v8992 = vadd.f32 %v8921, %v8991
    %v8993 = vpop.f32.mrf.mxu0
    %8994 = vdwg.mxu0
    %vm8995 = vcmask 8192
    %8996 = vst.msk [vmem:[%s8] sm:$0x1] %vm8995, %v8992
    // Predicated region
    $region38: #{mulgt_forward.1} parent=1 // pred_check
      _
    $region39: #{mulgt_forward.1} parent=1 // pred_check_branch
      %8998 = sbr.rel (0) target = $region41
    $region40: #{mulgt_forward.1} parent=1 // pred_region
      _
    $region41: #{mulgt_forward.1} parent=1 // pred_fallthru
      _
    // Predicated region
    $region42: #{mulgt_forward.1} parent=1 // pred_check
      _
    $region43: #{mulgt_forward.1} parent=1 // pred_check_branch
      %9000 = sbr.rel (0) target = $region45
    $region44: #{mulgt_forward.1} parent=1 // pred_region
      _
    $region45: #{mulgt_forward.1} parent=1 // pred_fallthru
      _
    // Predicated region
    $region46: #{mulgt_forward.1} parent=1 // pred_check
      _
    $region47: #{mulgt_forward.1} parent=1 // pred_check_branch
      %9002 = sbr.rel (0) target = $region49
    $region48: #{mulgt_forward.1} parent=1 // pred_region
      %s9004 = ssub.s32 16, 16
      %9005 = vsyncadd [#allocation5], %s9004
      %s9007 = sshll.u32 [#allocation8], 4
      %s9008 = int_to_ptr.vmem [resolvable:$true] %s9007
      %9010 = dma.vmem_to_hbm [thread:$0]  %s9008, 16, %s9, [#allocation5]
    $region49: #{mulgt_forward.1} parent=1 // pred_fallthru
      _
    // Predicated region
    $region50: #{mulgt_forward.1} parent=1 // pred_check
      _
    $region51: #{mulgt_forward.1} parent=1 // pred_check_branch
      %9012 = sbr.rel (0) target = $region53
    $region52: #{mulgt_forward.1} parent=1 // pred_region
      %s9014 = ssub.s32 16, 16
      %9015 = vsyncadd [#allocation10], %s9014
      %s9017 = sshll.u32 [#allocation9], 4
      %s9018 = int_to_ptr.vmem [resolvable:$true] %s9017
      %9020 = dma.vmem_to_hbm [thread:$0]  %s9018, 16, %s10, [#allocation10]
    $region53: #{mulgt_forward.1} parent=1 // pred_fallthru
      _
    // Predicated region
    $region54: #{mulgt_forward.1} parent=1 // pred_check
      _
    $region55: #{mulgt_forward.1} parent=1 // pred_check_branch
      %9022 = sbr.rel (0) target = $region57
    $region56: #{mulgt_forward.1} parent=1 // pred_region
      _
    $region57: #{mulgt_forward.1} parent=1 // pred_fallthru
      _
    // Predicated region
    $region58: #{mulgt_forward.1} parent=1 // pred_check
      _
    $region59: #{mulgt_forward.1} parent=1 // pred_check_branch
      %9024 = sbr.rel (0) target = $region61
    $region60: #{mulgt_forward.1} parent=1 // pred_region
      _
    $region61: #{mulgt_forward.1} parent=1 // pred_fallthru
      _
    // Predicated region
    $region62: #{mulgt_forward.1} parent=1 // pred_check
      _
    $region63: #{mulgt_forward.1} parent=1 // pred_check_branch
      %9026 = sbr.rel (0) target = $region65
    $region64: #{mulgt_forward.1} parent=1 // pred_region
      %9027 = dma.done [#allocation5], 16
    $region65: #{mulgt_forward.1} parent=1 // pred_fallthru
      _
    // Predicated region
    $region66: #{mulgt_forward.1} parent=1 // pred_check
      _
    $region67: #{mulgt_forward.1} parent=1 // pred_check_branch
      %9029 = sbr.rel (0) target = $region69
    $region68: #{mulgt_forward.1} parent=1 // pred_region
      %9030 = dma.done [#allocation10], 16
    $region69: #{mulgt_forward.1} parent=1 // pred_fallthru
      _
    %9031 = vsyncpa [#allocation4], 1
    %9032 = vsyncpa [#allocation7], 1
    %9033 = vsyncpa [#allocation5], 1
    %9034 = vsyncpa [#allocation10], 1

</llo_original>
